<compile_context>
chip_gen: v5e
topology: v5e:2x2
jax: 0.10.0
libtpu: 0.0.40
codegen_flags: <defaults>
</compile_context>

<pallas_src>
import jax
import jax.numpy as jnp
from jax.experimental import pallas as pl
from jax.experimental.pallas import tpu as pltpu

NOISE_DIM = 100
NOISE_DIM_PADDED = 128          # pad layer-1 noise K to a full 128-lane group
EMBEDDING_DIM = 768             # 6 x 128, already lane-aligned
IMAGE_DIM = 64 * 64             # 4096 = 32 x 128 -> lane-dense, unmasked output stores
H1 = 256
H2 = 512


def generator_kernel(noise_ref, emb_ref,
                     w1n_ref, w1e_ref, b1_ref,
                     w2_ref, b2_ref,
                     w3_ref, b3_ref,
                     o_ref):
    # Layer 1: two aligned-K MXU dots (K=128 and K=768) replace one ragged K=868 dot.
    # Inputs arrive as bf16 already; accumulate in f32.
    h1 = jnp.dot(noise_ref[...], w1n_ref[...], preferred_element_type=jnp.float32)
    h1 = h1 + jnp.dot(emb_ref[...], w1e_ref[...], preferred_element_type=jnp.float32)
    h1 = jnp.maximum(h1 + b1_ref[...], 0.0)                      # bias + ReLU in f32

    # Layer 2
    h2 = jnp.dot(h1.astype(jnp.bfloat16), w2_ref[...],
                 preferred_element_type=jnp.float32) + b2_ref[...]
    h2 = jnp.maximum(h2, 0.0)

    # Layer 3 + Tanh; store bf16 (halves HBM writeback), tanh computed in f32.
    y = jnp.dot(h2.astype(jnp.bfloat16), w3_ref[...],
                preferred_element_type=jnp.float32) + b3_ref[...]
    o_ref[...] = jnp.tanh(y).astype(o_ref.dtype)


def _tile_cap_and_vmem():
    """Per-generation batch-tile cap and scoped-VMEM limit."""
    try:
        kind = jax.devices()[0].device_kind.lower()
    except Exception:  # pragma: no cover
        kind = ""
    if ("v5" in kind) or ("v6" in kind):
        # 128 MiB physical VMEM: bigger tiles amortize the ~0.35 us per-grid-step cost.
        return 512, 64 << 20
    # v7x (64 MiB physical VMEM) and unknown parts: stay conservative.
    return 256, 32 << 20


def generator_forward(noise, embedding, params, out_dtype=jnp.float32):
    """noise: (B, 100) f32, embedding: (B, 768) f32 -> (B, 1, 64, 64) out_dtype."""
    w1n, w1e, b1, w2, b2, w3, b3 = params
    B = noise.shape[0]

    tile_cap, vmem_limit = _tile_cap_and_vmem()
    # Small batch: full-extent batch block (no padding, single grid step).
    # Large batch: fixed sublane-aligned tile; Pallas masks the ragged last tile.
    tile_b = B if B <= tile_cap else tile_cap
    grid_b = pl.cdiv(B, tile_b)

    # bf16 casts ride on copies the wrapper needs anyway (noise 100->128 feature pad).
    noise_p = jnp.pad(noise.astype(jnp.bfloat16),
                      ((0, 0), (0, NOISE_DIM_PADDED - NOISE_DIM)))
    emb_b = embedding.astype(jnp.bfloat16)

    row_spec = lambda shape: pl.BlockSpec(shape, lambda i: (i, 0))      # per-batch-tile
    # VMEM-resident weights: constant index_map (DMA'd once) + single buffer (no wasted
    # second copy of the ~4.7 MB of weights).
    const_spec = lambda shape: pl.BlockSpec(shape, lambda i: (0, 0),
                                            pipeline_mode=pl.Buffered(1))

    weight_bytes = (w1n.size + w1e.size + w2.size + w3.size) * 2 \
        + (b1.size + b2.size + b3.size) * 4
    io_bytes = B * (NOISE_DIM_PADDED + EMBEDDING_DIM + IMAGE_DIM) * 2
    flops = 2 * B * (NOISE_DIM_PADDED * H1 + EMBEDDING_DIM * H1
                     + H1 * H2 + H2 * IMAGE_DIM)
    cost = pl.CostEstimate(flops=flops,
                           transcendentals=B * IMAGE_DIM,
                           bytes_accessed=weight_bytes + io_bytes)

    out2d = pl.pallas_call(
        generator_kernel,
        out_shape=jax.ShapeDtypeStruct((B, IMAGE_DIM), jnp.bfloat16),
        grid=(grid_b,),
        in_specs=[
            row_spec((tile_b, NOISE_DIM_PADDED)),
            row_spec((tile_b, EMBEDDING_DIM)),
            const_spec((NOISE_DIM_PADDED, H1)),
            const_spec((EMBEDDING_DIM, H1)),
            const_spec((1, H1)),
            const_spec((H1, H2)),
            const_spec((1, H2)),
            const_spec((H2, IMAGE_DIM)),
            const_spec((1, IMAGE_DIM)),
        ],
        out_specs=row_spec((tile_b, IMAGE_DIM)),
        compiler_params=pltpu.CompilerParams(
            # NOTE(v7x): if a profile shows one TensorCore idle at large B, switch this
            # axis to pltpu.CORE_PARALLEL; each core then holds its own weight copy.
            dimension_semantics=("parallel",),
            vmem_limit_bytes=vmem_limit,
        ),
        cost_estimate=cost,
    )(noise_p, emb_b, w1n, w1e, b1, w2, b2, w3, b3)

    return out2d.reshape(B, 1, 64, 64).astype(out_dtype)


def reference_forward(noise, embedding, params):
    """Pure-JAX reference mirroring the kernel's bf16-weight math (tanh kept in f32)."""
    w1n, w1e, b1, w2, b2, w3, b3 = params
    n = jnp.pad(noise, ((0, 0), (0, NOISE_DIM_PADDED - NOISE_DIM))).astype(jnp.bfloat16)
    e = embedding.astype(jnp.bfloat16)
    h1 = (jnp.dot(n, w1n, preferred_element_type=jnp.float32)
          + jnp.dot(e, w1e, preferred_element_type=jnp.float32) + b1)
    h1 = jnp.maximum(h1, 0.0)
    h2 = jnp.maximum(
        jnp.dot(h1.astype(jnp.bfloat16), w2, preferred_element_type=jnp.float32) + b2, 0.0)
    y = jnp.dot(h2.astype(jnp.bfloat16), w3, preferred_element_type=jnp.float32) + b3
    return jnp.tanh(y).reshape(-1, 1, 64, 64)


def init_params(key):
    """PyTorch nn.Linear-style init (U(-1/sqrt(fan_in), +1/sqrt(fan_in))); weights in bf16."""
    d_in = NOISE_DIM + EMBEDDING_DIM
    key, kw1, kb1, kw2, kb2, kw3, kb3 = jax.random.split(key, 7)

    def lin(kw, kb, fan_in, fan_out):
        bound = 1.0 / jnp.sqrt(jnp.float32(fan_in))
        w = jax.random.uniform(kw, (fan_in, fan_out), jnp.float32, -bound, bound)
        b = jax.random.uniform(kb, (1, fan_out), jnp.float32, -bound, bound)
        return w, b

    w1, b1 = lin(kw1, kb1, d_in, H1)          # (868, 256): rows 0..99 noise, 100.. embedding
    w2, b2 = lin(kw2, kb2, H1, H2)
    w3, b3 = lin(kw3, kb3, H2, IMAGE_DIM)

    # Split W1 and zero-pad the noise half to 128 rows (matches padded noise input).
    w1n = jnp.zeros((NOISE_DIM_PADDED, H1), jnp.float32).at[:NOISE_DIM].set(w1[:NOISE_DIM])
    w1e = w1[NOISE_DIM:]

    to_bf16 = lambda w: w.astype(jnp.bfloat16)
    return (to_bf16(w1n), to_bf16(w1e), b1,
            to_bf16(w2), b2,
            to_bf16(w3), b3)


if __name__ == "__main__":
    key = jax.random.PRNGKey(0)
    k_params, k_noise, k_emb = jax.random.split(key, 3)

    params = init_params(k_params)

    B = 2
    noise = jax.random.normal(k_noise, (B, NOISE_DIM), jnp.float32)
    embedding = jax.random.normal(k_emb, (B, EMBEDDING_DIM), jnp.float32)

    out = generator_forward(noise, embedding, params)
    jax.block_until_ready(out)

    assert out.shape == (B, 1, 64, 64), out.shape
    assert out.dtype == jnp.float32

    ref = reference_forward(noise, embedding, params)
    assert jnp.all(jnp.isfinite(out))
    assert jnp.allclose(out, ref, atol=2e-2, rtol=2e-2)

    print("KERNEL_OK")
</pallas_src>

<mosaic_0001>
module attributes {stable_mosaic.version = 11 : i64} {
  func.func @generator_kernel(%arg0: i32, %arg1: memref<2x128xbf16, #tpu.memory_space<vmem>>, %arg2: memref<2x768xbf16, #tpu.memory_space<vmem>>, %arg3: memref<128x256xbf16, #tpu.memory_space<vmem>>, %arg4: memref<768x256xbf16, #tpu.memory_space<vmem>>, %arg5: memref<1x256xf32, #tpu.memory_space<vmem>>, %arg6: memref<256x512xbf16, #tpu.memory_space<vmem>>, %arg7: memref<1x512xf32, #tpu.memory_space<vmem>>, %arg8: memref<512x4096xbf16, #tpu.memory_space<vmem>>, %arg9: memref<1x4096xf32, #tpu.memory_space<vmem>>, %arg10: memref<2x4096xbf16, #tpu.memory_space<vmem>>) attributes {dimension_semantics = [#tpu.dimension_semantics<parallel>], iteration_bounds = array<i64: 1>, scalar_prefetch = 0 : i64, scratch_operands = 0 : i64, tpu.core_type = #tpu.core_type<tc>, window_params = [{transform_indices = @transform_0, window_bounds = array<i64: 2, 128>}, {transform_indices = @transform_1, window_bounds = array<i64: 2, 768>}, {pipeline_mode = #tpu.pipeline_mode<synchronous>, transform_indices = @transform_2, window_bounds = array<i64: 128, 256>}, {pipeline_mode = #tpu.pipeline_mode<synchronous>, transform_indices = @transform_3, window_bounds = array<i64: 768, 256>}, {pipeline_mode = #tpu.pipeline_mode<synchronous>, transform_indices = @transform_4, window_bounds = array<i64: 1, 256>}, {pipeline_mode = #tpu.pipeline_mode<synchronous>, transform_indices = @transform_5, window_bounds = array<i64: 256, 512>}, {pipeline_mode = #tpu.pipeline_mode<synchronous>, transform_indices = @transform_6, window_bounds = array<i64: 1, 512>}, {pipeline_mode = #tpu.pipeline_mode<synchronous>, transform_indices = @transform_7, window_bounds = array<i64: 512, 4096>}, {pipeline_mode = #tpu.pipeline_mode<synchronous>, transform_indices = @transform_8, window_bounds = array<i64: 1, 4096>}, {transform_indices = @transform_9, window_bounds = array<i64: 2, 4096>}]} {
    %c0 = arith.constant 0 : index
    %c0_0 = arith.constant 0 : index
    %0 = vector.load %arg1[%c0, %c0_0] : memref<2x128xbf16, #tpu.memory_space<vmem>>, vector<2x128xbf16>
    %c0_1 = arith.constant 0 : index
    %c0_2 = arith.constant 0 : index
    %1 = vector.load %arg3[%c0_1, %c0_2] : memref<128x256xbf16, #tpu.memory_space<vmem>>, vector<128x256xbf16>
    %cst = arith.constant dense<0.000000e+00> : vector<2x256xf32>
    %2 = tpu.matmul %0, %1, %cst {dimension_numbers = #tpu.dot_dimension_numbers<[1], [0], [0], [1], [0, 0, 1, 1], [], []>} : vector<2x128xbf16>, vector<128x256xbf16>, vector<2x256xf32> -> vector<2x256xf32>
    %c0_3 = arith.constant 0 : index
    %c0_4 = arith.constant 0 : index
    %3 = vector.load %arg2[%c0_3, %c0_4] : memref<2x768xbf16, #tpu.memory_space<vmem>>, vector<2x768xbf16>
    %c0_5 = arith.constant 0 : index
    %c0_6 = arith.constant 0 : index
    %4 = vector.load %arg4[%c0_5, %c0_6] : memref<768x256xbf16, #tpu.memory_space<vmem>>, vector<768x256xbf16>
    %cst_7 = arith.constant dense<0.000000e+00> : vector<2x256xf32>
    %5 = tpu.matmul %3, %4, %cst_7 {dimension_numbers = #tpu.dot_dimension_numbers<[1], [0], [0], [1], [0, 0, 1, 1], [], []>} : vector<2x768xbf16>, vector<768x256xbf16>, vector<2x256xf32> -> vector<2x256xf32>
    %6 = arith.addf %2, %5 : vector<2x256xf32>
    %c0_8 = arith.constant 0 : index
    %c0_9 = arith.constant 0 : index
    %7 = vector.load %arg5[%c0_8, %c0_9] : memref<1x256xf32, #tpu.memory_space<vmem>>, vector<1x256xf32>
    %8 = vector.broadcast %7 : vector<1x256xf32> to vector<2x256xf32>
    %9 = arith.addf %6, %8 : vector<2x256xf32>
    %cst_10 = arith.constant 0.000000e+00 : f32
    %10 = vector.broadcast %cst_10 : f32 to vector<2x256xf32>
    %11 = arith.maximumf %9, %10 : vector<2x256xf32>
    %12 = arith.truncf %11 : vector<2x256xf32> to vector<2x256xbf16>
    %c0_11 = arith.constant 0 : index
    %c0_12 = arith.constant 0 : index
    %13 = vector.load %arg6[%c0_11, %c0_12] : memref<256x512xbf16, #tpu.memory_space<vmem>>, vector<256x512xbf16>
    %cst_13 = arith.constant dense<0.000000e+00> : vector<2x512xf32>
    %14 = tpu.matmul %12, %13, %cst_13 {dimension_numbers = #tpu.dot_dimension_numbers<[1], [0], [0], [1], [0, 0, 1, 1], [], []>} : vector<2x256xbf16>, vector<256x512xbf16>, vector<2x512xf32> -> vector<2x512xf32>
    %c0_14 = arith.constant 0 : index
    %c0_15 = arith.constant 0 : index
    %15 = vector.load %arg7[%c0_14, %c0_15] : memref<1x512xf32, #tpu.memory_space<vmem>>, vector<1x512xf32>
    %16 = vector.broadcast %15 : vector<1x512xf32> to vector<2x512xf32>
    %17 = arith.addf %14, %16 : vector<2x512xf32>
    %cst_16 = arith.constant 0.000000e+00 : f32
    %18 = vector.broadcast %cst_16 : f32 to vector<2x512xf32>
    %19 = arith.maximumf %17, %18 : vector<2x512xf32>
    %20 = arith.truncf %19 : vector<2x512xf32> to vector<2x512xbf16>
    %c0_17 = arith.constant 0 : index
    %c0_18 = arith.constant 0 : index
    %21 = vector.load %arg8[%c0_17, %c0_18] : memref<512x4096xbf16, #tpu.memory_space<vmem>>, vector<512x4096xbf16>
    %cst_19 = arith.constant dense<0.000000e+00> : vector<2x4096xf32>
    %22 = tpu.matmul %20, %21, %cst_19 {dimension_numbers = #tpu.dot_dimension_numbers<[1], [0], [0], [1], [0, 0, 1, 1], [], []>} : vector<2x512xbf16>, vector<512x4096xbf16>, vector<2x4096xf32> -> vector<2x4096xf32>
    %c0_20 = arith.constant 0 : index
    %c0_21 = arith.constant 0 : index
    %23 = vector.load %arg9[%c0_20, %c0_21] : memref<1x4096xf32, #tpu.memory_space<vmem>>, vector<1x4096xf32>
    %24 = vector.broadcast %23 : vector<1x4096xf32> to vector<2x4096xf32>
    %25 = arith.addf %22, %24 : vector<2x4096xf32>
    %26 = math.tanh %25 : vector<2x4096xf32>
    %27 = arith.truncf %26 : vector<2x4096xf32> to vector<2x4096xbf16>
    %c0_22 = arith.constant 0 : index
    %c0_23 = arith.constant 0 : index
    %28 = vector.load %arg10[%c0_22, %c0_23] : memref<2x4096xbf16, #tpu.memory_space<vmem>>, vector<2x4096xbf16>
    tpu.vector_store %arg10[%c0_22, %c0_23], %27 {strides = array<i32>} : memref<2x4096xbf16, #tpu.memory_space<vmem>>, vector<2x4096xbf16>,
    return
  }
  func.func @transform_0(%arg0: i32) -> (i32, i32) {
    %c0_i32 = arith.constant 0 : i32
    %c0_i32_0 = arith.constant 0 : i32
    return %arg0, %c0_i32 : i32, i32
  }
  func.func @transform_1(%arg0: i32) -> (i32, i32) {
    %c0_i32 = arith.constant 0 : i32
    %c0_i32_0 = arith.constant 0 : i32
    return %arg0, %c0_i32 : i32, i32
  }
  func.func @transform_2(%arg0: i32) -> (i32, i32) {
    %c0_i32 = arith.constant 0 : i32
    %c0_i32_0 = arith.constant 0 : i32
    %c0_i32_1 = arith.constant 0 : i32
    return %c0_i32, %c0_i32_0 : i32, i32
  }
  func.func @transform_3(%arg0: i32) -> (i32, i32) {
    %c0_i32 = arith.constant 0 : i32
    %c0_i32_0 = arith.constant 0 : i32
    %c0_i32_1 = arith.constant 0 : i32
    return %c0_i32, %c0_i32_0 : i32, i32
  }
  func.func @transform_4(%arg0: i32) -> (i32, i32) {
    %c0_i32 = arith.constant 0 : i32
    %c0_i32_0 = arith.constant 0 : i32
    %c0_i32_1 = arith.constant 0 : i32
    return %c0_i32, %c0_i32_0 : i32, i32
  }
  func.func @transform_5(%arg0: i32) -> (i32, i32) {
    %c0_i32 = arith.constant 0 : i32
    %c0_i32_0 = arith.constant 0 : i32
    %c0_i32_1 = arith.constant 0 : i32
    return %c0_i32, %c0_i32_0 : i32, i32
  }
  func.func @transform_6(%arg0: i32) -> (i32, i32) {
    %c0_i32 = arith.constant 0 : i32
    %c0_i32_0 = arith.constant 0 : i32
    %c0_i32_1 = arith.constant 0 : i32
    return %c0_i32, %c0_i32_0 : i32, i32
  }
  func.func @transform_7(%arg0: i32) -> (i32, i32) {
    %c0_i32 = arith.constant 0 : i32
    %c0_i32_0 = arith.constant 0 : i32
    %c0_i32_1 = arith.constant 0 : i32
    return %c0_i32, %c0_i32_0 : i32, i32
  }
  func.func @transform_8(%arg0: i32) -> (i32, i32) {
    %c0_i32 = arith.constant 0 : i32
    %c0_i32_0 = arith.constant 0 : i32
    %c0_i32_1 = arith.constant 0 : i32
    return %c0_i32, %c0_i32_0 : i32, i32
  }
  func.func @transform_9(%arg0: i32) -> (i32, i32) {
    %c0_i32 = arith.constant 0 : i32
    %c0_i32_0 = arith.constant 0 : i32
    return %arg0, %c0_i32 : i32, i32
  }
}

</mosaic_0001>

<llo_original>
// kernel: tpu_custom_call.1
$region0: #{tpu_custom_call.1}
  #allocation0 [shape = 'u32[]', space=smem, size = 0x4, offset = 0x4, fixed_abs, tag = 'smem constant byte address 0x4 - core index']
  #allocation1 [shape = 'u32[72,128]{1,0:T(1,128)}', space=vmem, size = 0x9000, scoped, tag = 'internal scratch']
  %s0 = inlined_call_operand.hbm [shape: bf16[2,128], index: 0, kind: input, shape index: {}]
  %s1 = inlined_call_operand.hbm [shape: bf16[2,768], index: 1, kind: input, shape index: {}]
  %s2 = inlined_call_operand.hbm [shape: bf16[128,256], index: 2, kind: input, shape index: {}]
  %s3 = inlined_call_operand.hbm [shape: bf16[768,256], index: 3, kind: input, shape index: {}]
  %s4 = inlined_call_operand.hbm [shape: f32[1,256], index: 4, kind: input, shape index: {}]
  %s5 = inlined_call_operand.hbm [shape: bf16[256,512], index: 5, kind: input, shape index: {}]
  %s6 = inlined_call_operand.hbm [shape: f32[1,512], index: 6, kind: input, shape index: {}]
  %s7 = inlined_call_operand.hbm [shape: bf16[512,4096], index: 7, kind: input, shape index: {}]
  %s8 = inlined_call_operand.hbm [shape: f32[1,4096], index: 8, kind: input, shape index: {}]
  %s9 = inlined_call_operand.hbm [shape: bf16[2,4096], index: 9, kind: output, shape index: {}]
  %s10 = sld [smem:[#allocation0]]
  $region82: #{tpu_custom_call.1} parent=0
    _
  %s12 = ssub.s32 1, %s10
  %s13 = scalar_select 0, %s12, %s10
  $region1: #{tpu_custom_call.1} parent=0
    #allocation2 [shape = 'u8[512]{0}', space=vmem, size = 0x400, scoped, tag = 'input window, operand 0, single buffered']
    #allocation3 [shape = 's32[1]{0}', space=sflag, size = 0x4, scoped, tag = 'scoped memory for tpu_custom_call.1']
    #allocation4 [shape = 's32[1]{0}', space=sflag, size = 0x4, scoped, tag = 'scoped memory for tpu_custom_call.1']
    #allocation5 [shape = 'u8[3072]{0}', space=vmem, size = 0xc00, scoped, tag = 'input window, operand 1, single buffered']
    #allocation6 [shape = 's32[1]{0}', space=sflag, size = 0x4, scoped, tag = 'scoped memory for tpu_custom_call.1']
    #allocation7 [shape = 'u8[65536]{0}', space=vmem, size = 0x10000, scoped, tag = 'input window, operand 2, single buffered']
    #allocation8 [shape = 'u8[393216]{0}', space=vmem, size = 0x60000, scoped, tag = 'input window, operand 3, single buffered']
    #allocation9 [shape = 's32[1]{0}', space=sflag, size = 0x4, scoped, tag = 'scoped memory for tpu_custom_call.1']
    #allocation10 [shape = 'u8[1024]{0}', space=vmem, size = 0x400, scoped, tag = 'input window, operand 4, single buffered']
    #allocation11 [shape = 'u8[262144]{0}', space=vmem, size = 0x40000, scoped, tag = 'input window, operand 5, single buffered']
    #allocation12 [shape = 's32[1]{0}', space=sflag, size = 0x4, scoped, tag = 'scoped memory for tpu_custom_call.1']
    #allocation13 [shape = 'u8[2048]{0}', space=vmem, size = 0x800, scoped, tag = 'input window, operand 6, single buffered']
    #allocation14 [shape = 'u8[4194304]{0}', space=vmem, size = 0x400000, scoped, tag = 'input window, operand 7, single buffered']
    #allocation15 [shape = 's32[1]{0}', space=sflag, size = 0x4, scoped, tag = 'scoped memory for tpu_custom_call.1']
    #allocation16 [shape = 'u8[16384]{0}', space=vmem, size = 0x4000, scoped, tag = 'input window, operand 8, single buffered']
    #allocation17 [shape = 'u8[16384]{0}', space=vmem, size = 0x4000, scoped, tag = 'output window, operand 0, single buffered']
    %14 = vsyncpa [#allocation3], 0
    %15 = vsyncpa [#allocation6], 0
    %16 = vsyncpa [#allocation9], 0
    %17 = vsyncpa [#allocation12], 0
    %18 = vsyncpa [#allocation15], 0
    %19 = vsyncpa [#allocation4], 0
    // Predicated region
    $region2: #{tpu_custom_call.1} parent=1 // pred_check
      _
    $region3: #{tpu_custom_call.1} parent=1 // pred_check_branch
      %21 = sbr.rel (0) target = $region5
    $region4: #{tpu_custom_call.1} parent=1 // pred_region
      %23 = vsyncadd [#allocation3], 0
      %s25 = sshll.u32 %s0, 4
      %s26 = int_to_ptr.hbm [resolvable:$true] %s25
      %s27 = sshll.u32 [#allocation2], 4
      %s28 = int_to_ptr.vmem [resolvable:$true] %s27
      %30 = dma.hbm_to_vmem [thread:$0]  %s26, 16, %s28, [#allocation3]
    $region5: #{tpu_custom_call.1} parent=1 // pred_fallthru
      _
    // Predicated region
    $region6: #{tpu_custom_call.1} parent=1 // pred_check
      _
    $region7: #{tpu_custom_call.1} parent=1 // pred_check_branch
      %32 = sbr.rel (0) target = $region9
    $region8: #{tpu_custom_call.1} parent=1 // pred_region
      %34 = vsyncadd [#allocation6], 0
      %s36 = sshll.u32 %s1, 4
      %s37 = int_to_ptr.hbm [resolvable:$true] %s36
      %s38 = sshll.u32 [#allocation5], 4
      %s39 = int_to_ptr.vmem [resolvable:$true] %s38
      %41 = dma.hbm_to_vmem [thread:$0]  %s37, 96, %s39, [#allocation6]
    $region9: #{tpu_custom_call.1} parent=1 // pred_fallthru
      _
    // Predicated region
    $region10: #{tpu_custom_call.1} parent=1 // pred_check
      _
    $region11: #{tpu_custom_call.1} parent=1 // pred_check_branch
      %43 = sbr.rel (0) target = $region13
    $region12: #{tpu_custom_call.1} parent=1 // pred_region
      %45 = vsyncadd [#allocation6], 0
      %s46 = sshll.u32 %s2, 4
      %s47 = int_to_ptr.hbm [resolvable:$true] %s46
      %s48 = sshll.u32 [#allocation7], 4
      %s49 = int_to_ptr.vmem [resolvable:$true] %s48
      %54 = dma.hbm_to_vmem [thread:$0]  %s47, 2048, %s49, [#allocation6], 128, 128, 8
    $region13: #{tpu_custom_call.1} parent=1 // pred_fallthru
      _
    // Predicated region
    $region14: #{tpu_custom_call.1} parent=1 // pred_check
      _
    $region15: #{tpu_custom_call.1} parent=1 // pred_check_branch
      %56 = sbr.rel (0) target = $region17
    $region16: #{tpu_custom_call.1} parent=1 // pred_region
      %58 = vsyncadd [#allocation9], 0
      %s59 = sshll.u32 %s3, 4
      %s60 = int_to_ptr.hbm [resolvable:$true] %s59
      %s61 = sshll.u32 [#allocation8], 4
      %s62 = int_to_ptr.vmem [resolvable:$true] %s61
      %67 = dma.hbm_to_vmem [thread:$0]  %s60, 12288, %s62, [#allocation9], 128, 128, 8
    $region17: #{tpu_custom_call.1} parent=1 // pred_fallthru
      _
    // Predicated region
    $region18: #{tpu_custom_call.1} parent=1 // pred_check
      _
    $region19: #{tpu_custom_call.1} parent=1 // pred_check_branch
      %69 = sbr.rel (0) target = $region21
    $region20: #{tpu_custom_call.1} parent=1 // pred_region
      %71 = vsyncadd [#allocation9], 0
      %s73 = sshll.u32 %s4, 4
      %s74 = int_to_ptr.hbm [resolvable:$true] %s73
      %s75 = sshll.u32 [#allocation10], 4
      %s76 = int_to_ptr.vmem [resolvable:$true] %s75
      %78 = dma.hbm_to_vmem [thread:$0]  %s74, 32, %s76, [#allocation9]
    $region21: #{tpu_custom_call.1} parent=1 // pred_fallthru
      _
    // Predicated region
    $region22: #{tpu_custom_call.1} parent=1 // pred_check
      _
    $region23: #{tpu_custom_call.1} parent=1 // pred_check_branch
      %80 = sbr.rel (0) target = $region25
    $region24: #{tpu_custom_call.1} parent=1 // pred_region
      %82 = vsyncadd [#allocation12], 0
      %s83 = sshll.u32 %s5, 4
      %s84 = int_to_ptr.hbm [resolvable:$true] %s83
      %s85 = sshll.u32 [#allocation11], 4
      %s86 = int_to_ptr.vmem [resolvable:$true] %s85
      %91 = dma.hbm_to_vmem [thread:$0]  %s84, 8192, %s86, [#allocation12], 256, 256, 16
    $region25: #{tpu_custom_call.1} parent=1 // pred_fallthru
      _
    // Predicated region
    $region26: #{tpu_custom_call.1} parent=1 // pred_check
      _
    $region27: #{tpu_custom_call.1} parent=1 // pred_check_branch
      %93 = sbr.rel (0) target = $region29
    $region28: #{tpu_custom_call.1} parent=1 // pred_region
      %95 = vsyncadd [#allocation12], 0
      %s97 = sshll.u32 %s6, 4
      %s98 = int_to_ptr.hbm [resolvable:$true] %s97
      %s99 = sshll.u32 [#allocation13], 4
      %s100 = int_to_ptr.vmem [resolvable:$true] %s99
      %102 = dma.hbm_to_vmem [thread:$0]  %s98, 64, %s100, [#allocation12]
    $region29: #{tpu_custom_call.1} parent=1 // pred_fallthru
      _
    // Predicated region
    $region30: #{tpu_custom_call.1} parent=1 // pred_check
      _
    $region31: #{tpu_custom_call.1} parent=1 // pred_check_branch
      %104 = sbr.rel (0) target = $region33
    $region32: #{tpu_custom_call.1} parent=1 // pred_region
      %106 = vsyncadd [#allocation15], 0
      %s107 = sshll.u32 %s7, 4
      %s108 = int_to_ptr.hbm [resolvable:$true] %s107
      %s109 = sshll.u32 [#allocation14], 4
      %s110 = int_to_ptr.vmem [resolvable:$true] %s109
      %115 = dma.hbm_to_vmem [thread:$0]  %s108, 131072, %s110, [#allocation15], 2048, 2048, 128
    $region33: #{tpu_custom_call.1} parent=1 // pred_fallthru
      _
    // Predicated region
    $region34: #{tpu_custom_call.1} parent=1 // pred_check
      _
    $region35: #{tpu_custom_call.1} parent=1 // pred_check_branch
      %117 = sbr.rel (0) target = $region37
    $region36: #{tpu_custom_call.1} parent=1 // pred_region
      %119 = vsyncadd [#allocation15], 0
      %s121 = sshll.u32 %s8, 4
      %s122 = int_to_ptr.hbm [resolvable:$true] %s121
      %s123 = sshll.u32 [#allocation16], 4
      %s124 = int_to_ptr.vmem [resolvable:$true] %s123
      %126 = dma.hbm_to_vmem [thread:$0]  %s122, 512, %s124, [#allocation15]
    $region37: #{tpu_custom_call.1} parent=1 // pred_fallthru
      _
    // Predicated region
    $region38: #{tpu_custom_call.1} parent=1 // pred_check
      _
    $region39: #{tpu_custom_call.1} parent=1 // pred_check_branch
      %128 = sbr.rel (0) target = $region41
    $region40: #{tpu_custom_call.1} parent=1 // pred_region
      %130 = dma.done [#allocation3], 16
    $region41: #{tpu_custom_call.1} parent=1 // pred_fallthru
      _
    // Predicated region
    $region42: #{tpu_custom_call.1} parent=1 // pred_check
      _
    $region43: #{tpu_custom_call.1} parent=1 // pred_check_branch
      %132 = sbr.rel (0) target = $region45
    $region44: #{tpu_custom_call.1} parent=1 // pred_region
      %134 = dma.done [#allocation6], 96
    $region45: #{tpu_custom_call.1} parent=1 // pred_fallthru
      _
    // Predicated region
    $region46: #{tpu_custom_call.1} parent=1 // pred_check
      _
    $region47: #{tpu_custom_call.1} parent=1 // pred_check_branch
      %136 = sbr.rel (0) target = $region49
    $region48: #{tpu_custom_call.1} parent=1 // pred_region
      %138 = dma.done [#allocation6], 2048
    $region49: #{tpu_custom_call.1} parent=1 // pred_fallthru
      _
    // Predicated region
    $region50: #{tpu_custom_call.1} parent=1 // pred_check
      _
    $region51: #{tpu_custom_call.1} parent=1 // pred_check_branch
      %140 = sbr.rel (0) target = $region53
    $region52: #{tpu_custom_call.1} parent=1 // pred_region
      %142 = dma.done [#allocation9], 12288
    $region53: #{tpu_custom_call.1} parent=1 // pred_fallthru
      _
    // Predicated region
    $region54: #{tpu_custom_call.1} parent=1 // pred_check
      _
    $region55: #{tpu_custom_call.1} parent=1 // pred_check_branch
      %144 = sbr.rel (0) target = $region57
    $region56: #{tpu_custom_call.1} parent=1 // pred_region
      %146 = dma.done [#allocation9], 32
    $region57: #{tpu_custom_call.1} parent=1 // pred_fallthru
      _
    // Predicated region
    $region58: #{tpu_custom_call.1} parent=1 // pred_check
      _
    $region59: #{tpu_custom_call.1} parent=1 // pred_check_branch
      %148 = sbr.rel (0) target = $region61
    $region60: #{tpu_custom_call.1} parent=1 // pred_region
      %150 = dma.done [#allocation12], 8192
    $region61: #{tpu_custom_call.1} parent=1 // pred_fallthru
      _
    // Predicated region
    $region62: #{tpu_custom_call.1} parent=1 // pred_check
      _
    $region63: #{tpu_custom_call.1} parent=1 // pred_check_branch
      %152 = sbr.rel (0) target = $region65
    $region64: #{tpu_custom_call.1} parent=1 // pred_region
      %154 = dma.done [#allocation12], 64
    $region65: #{tpu_custom_call.1} parent=1 // pred_fallthru
      _
    // Predicated region
    $region66: #{tpu_custom_call.1} parent=1 // pred_check
      _
    $region67: #{tpu_custom_call.1} parent=1 // pred_check_branch
      %156 = sbr.rel (0) target = $region69
    $region68: #{tpu_custom_call.1} parent=1 // pred_region
      %158 = dma.done [#allocation15], 131072
    $region69: #{tpu_custom_call.1} parent=1 // pred_fallthru
      _
    // Predicated region
    $region70: #{tpu_custom_call.1} parent=1 // pred_check
      _
    $region71: #{tpu_custom_call.1} parent=1 // pred_check_branch
      %160 = sbr.rel (0) target = $region73
    $region72: #{tpu_custom_call.1} parent=1 // pred_region
      %162 = dma.done [#allocation15], 512
    $region73: #{tpu_custom_call.1} parent=1 // pred_fallthru
      _
    %v163 = vld [vmem:[#allocation2] sm:$0x1]
    %v164 = vld [vmem:[#allocation7] sm:$0xff]
    %v165 = vld [vmem:[#allocation7 + $0x8] sm:$0xff]
    %v166 = vld [vmem:[#allocation7 + $0x10] sm:$0xff]
    %v167 = vld [vmem:[#allocation7 + $0x18] sm:$0xff]
    %v168 = vld [vmem:[#allocation7 + $0x20] sm:$0xff]
    %v169 = vld [vmem:[#allocation7 + $0x28] sm:$0xff]
    %v170 = vld [vmem:[#allocation7 + $0x30] sm:$0xff]
    %v171 = vld [vmem:[#allocation7 + $0x38] sm:$0xff]
    %v172 = vld [vmem:[#allocation7 + $0x40] sm:$0xff]
    %v173 = vld [vmem:[#allocation7 + $0x48] sm:$0xff]
    %v174 = vld [vmem:[#allocation7 + $0x50] sm:$0xff]
    %v175 = vld [vmem:[#allocation7 + $0x58] sm:$0xff]
    %v176 = vld [vmem:[#allocation7 + $0x60] sm:$0xff]
    %v177 = vld [vmem:[#allocation7 + $0x68] sm:$0xff]
    %v178 = vld [vmem:[#allocation7 + $0x70] sm:$0xff]
    %v179 = vld [vmem:[#allocation7 + $0x78] sm:$0xff]
    %v180 = vld [vmem:[#allocation5] sm:$0x3f]
    %v181 = vld [vmem:[#allocation8] sm:$0xff]
    %v182 = vld [vmem:[#allocation8 + $0x8] sm:$0xff]
    %v183 = vld [vmem:[#allocation8 + $0x10] sm:$0xff]
    %v184 = vld [vmem:[#allocation8 + $0x18] sm:$0xff]
    %v185 = vld [vmem:[#allocation8 + $0x20] sm:$0xff]
    %v186 = vld [vmem:[#allocation8 + $0x28] sm:$0xff]
    %v187 = vld [vmem:[#allocation8 + $0x30] sm:$0xff]
    %v188 = vld [vmem:[#allocation8 + $0x38] sm:$0xff]
    %v189 = vld [vmem:[#allocation8 + $0x40] sm:$0xff]
    %v190 = vld [vmem:[#allocation8 + $0x48] sm:$0xff]
    %v191 = vld [vmem:[#allocation8 + $0x50] sm:$0xff]
    %v192 = vld [vmem:[#allocation8 + $0x58] sm:$0xff]
    %v193 = vld [vmem:[#allocation8 + $0x60] sm:$0xff]
    %v194 = vld [vmem:[#allocation8 + $0x68] sm:$0xff]
    %v195 = vld [vmem:[#allocation8 + $0x70] sm:$0xff]
    %v196 = vld [vmem:[#allocation8 + $0x78] sm:$0xff]
    %v197 = vld [vmem:[#allocation8 + $0x80] sm:$0xff]
    %v198 = vld [vmem:[#allocation8 + $0x88] sm:$0xff]
    %v199 = vld [vmem:[#allocation8 + $0x90] sm:$0xff]
    %v200 = vld [vmem:[#allocation8 + $0x98] sm:$0xff]
    %v201 = vld [vmem:[#allocation8 + $0xa0] sm:$0xff]
    %v202 = vld [vmem:[#allocation8 + $0xa8] sm:$0xff]
    %v203 = vld [vmem:[#allocation8 + $0xb0] sm:$0xff]
    %v204 = vld [vmem:[#allocation8 + $0xb8] sm:$0xff]
    %v205 = vld [vmem:[#allocation8 + $0xc0] sm:$0xff]
    %v206 = vld [vmem:[#allocation8 + $0xc8] sm:$0xff]
    %v207 = vld [vmem:[#allocation8 + $0xd0] sm:$0xff]
    %v208 = vld [vmem:[#allocation8 + $0xd8] sm:$0xff]
    %v209 = vld [vmem:[#allocation8 + $0xe0] sm:$0xff]
    %v210 = vld [vmem:[#allocation8 + $0xe8] sm:$0xff]
    %v211 = vld [vmem:[#allocation8 + $0xf0] sm:$0xff]
    %v212 = vld [vmem:[#allocation8 + $0xf8] sm:$0xff]
    %v213 = vld [vmem:[#allocation8 + $0x100] sm:$0xff]
    %v214 = vld [vmem:[#allocation8 + $0x108] sm:$0xff]
    %v215 = vld [vmem:[#allocation8 + $0x110] sm:$0xff]
    %v216 = vld [vmem:[#allocation8 + $0x118] sm:$0xff]
    %v217 = vld [vmem:[#allocation8 + $0x120] sm:$0xff]
    %v218 = vld [vmem:[#allocation8 + $0x128] sm:$0xff]
    %v219 = vld [vmem:[#allocation8 + $0x130] sm:$0xff]
    %v220 = vld [vmem:[#allocation8 + $0x138] sm:$0xff]
    %v221 = vld [vmem:[#allocation8 + $0x140] sm:$0xff]
    %v222 = vld [vmem:[#allocation8 + $0x148] sm:$0xff]
    %v223 = vld [vmem:[#allocation8 + $0x150] sm:$0xff]
    %v224 = vld [vmem:[#allocation8 + $0x158] sm:$0xff]
    %v225 = vld [vmem:[#allocation8 + $0x160] sm:$0xff]
    %v226 = vld [vmem:[#allocation8 + $0x168] sm:$0xff]
    %v227 = vld [vmem:[#allocation8 + $0x170] sm:$0xff]
    %v228 = vld [vmem:[#allocation8 + $0x178] sm:$0xff]
    %v229 = vld [vmem:[#allocation8 + $0x180] sm:$0xff]
    %v230 = vld [vmem:[#allocation8 + $0x188] sm:$0xff]
    %v231 = vld [vmem:[#allocation8 + $0x190] sm:$0xff]
    %v232 = vld [vmem:[#allocation8 + $0x198] sm:$0xff]
    %v233 = vld [vmem:[#allocation8 + $0x1a0] sm:$0xff]
    %v234 = vld [vmem:[#allocation8 + $0x1a8] sm:$0xff]
    %v235 = vld [vmem:[#allocation8 + $0x1b0] sm:$0xff]
    %v236 = vld [vmem:[#allocation8 + $0x1b8] sm:$0xff]
    %v237 = vld [vmem:[#allocation8 + $0x1c0] sm:$0xff]
    %v238 = vld [vmem:[#allocation8 + $0x1c8] sm:$0xff]
    %v239 = vld [vmem:[#allocation8 + $0x1d0] sm:$0xff]
    %v240 = vld [vmem:[#allocation8 + $0x1d8] sm:$0xff]
    %v241 = vld [vmem:[#allocation8 + $0x1e0] sm:$0xff]
    %v242 = vld [vmem:[#allocation8 + $0x1e8] sm:$0xff]
    %v243 = vld [vmem:[#allocation8 + $0x1f0] sm:$0xff]
    %v244 = vld [vmem:[#allocation8 + $0x1f8] sm:$0xff]
    %v245 = vld [vmem:[#allocation8 + $0x200] sm:$0xff]
    %v246 = vld [vmem:[#allocation8 + $0x208] sm:$0xff]
    %v247 = vld [vmem:[#allocation8 + $0x210] sm:$0xff]
    %v248 = vld [vmem:[#allocation8 + $0x218] sm:$0xff]
    %v249 = vld [vmem:[#allocation8 + $0x220] sm:$0xff]
    %v250 = vld [vmem:[#allocation8 + $0x228] sm:$0xff]
    %v251 = vld [vmem:[#allocation8 + $0x230] sm:$0xff]
    %v252 = vld [vmem:[#allocation8 + $0x238] sm:$0xff]
    %v253 = vld [vmem:[#allocation8 + $0x240] sm:$0xff]
    %v254 = vld [vmem:[#allocation8 + $0x248] sm:$0xff]
    %v255 = vld [vmem:[#allocation8 + $0x250] sm:$0xff]
    %v256 = vld [vmem:[#allocation8 + $0x258] sm:$0xff]
    %v257 = vld [vmem:[#allocation8 + $0x260] sm:$0xff]
    %v258 = vld [vmem:[#allocation8 + $0x268] sm:$0xff]
    %v259 = vld [vmem:[#allocation8 + $0x270] sm:$0xff]
    %v260 = vld [vmem:[#allocation8 + $0x278] sm:$0xff]
    %v261 = vld [vmem:[#allocation8 + $0x280] sm:$0xff]
    %v262 = vld [vmem:[#allocation8 + $0x288] sm:$0xff]
    %v263 = vld [vmem:[#allocation8 + $0x290] sm:$0xff]
    %v264 = vld [vmem:[#allocation8 + $0x298] sm:$0xff]
    %v265 = vld [vmem:[#allocation8 + $0x2a0] sm:$0xff]
    %v266 = vld [vmem:[#allocation8 + $0x2a8] sm:$0xff]
    %v267 = vld [vmem:[#allocation8 + $0x2b0] sm:$0xff]
    %v268 = vld [vmem:[#allocation8 + $0x2b8] sm:$0xff]
    %v269 = vld [vmem:[#allocation8 + $0x2c0] sm:$0xff]
    %v270 = vld [vmem:[#allocation8 + $0x2c8] sm:$0xff]
    %v271 = vld [vmem:[#allocation8 + $0x2d0] sm:$0xff]
    %v272 = vld [vmem:[#allocation8 + $0x2d8] sm:$0xff]
    %v273 = vld [vmem:[#allocation8 + $0x2e0] sm:$0xff]
    %v274 = vld [vmem:[#allocation8 + $0x2e8] sm:$0xff]
    %v275 = vld [vmem:[#allocation8 + $0x2f0] sm:$0xff]
    %v276 = vld [vmem:[#allocation8 + $0x2f8] sm:$0xff]
    %278 = vst [vmem:[#allocation1] ss:$9 sm:$0xff] %v180
    %v279 = vld [vmem:[#allocation1] sm:$0xff]
    %v280 = vld [vmem:[#allocation1 + $0x9] sm:$0xff]
    %v281 = vld [vmem:[#allocation1 + $0x12] sm:$0xff]
    %v282 = vld [vmem:[#allocation1 + $0x1b] sm:$0xff]
    %v283 = vld [vmem:[#allocation1 + $0x24] sm:$0xff]
    %v284 = vld [vmem:[#allocation1 + $0x2d] sm:$0xff]
    %v387 = vunpack.c.l.b16 %v181
    %v388 = vunpack.c.h.b16 %v181
    %v389 = vunpack.c.l.b16 %v182
    %v390 = vunpack.c.h.b16 %v182
    %v391 = vunpack.c.l.b16 %v183
    %v392 = vunpack.c.h.b16 %v183
    %v393 = vunpack.c.l.b16 %v184
    %v394 = vunpack.c.h.b16 %v184
    %v395 = vunpack.c.l.b16 %v185
    %v396 = vunpack.c.h.b16 %v185
    %v397 = vunpack.c.l.b16 %v186
    %v398 = vunpack.c.h.b16 %v186
    %v399 = vunpack.c.l.b16 %v187
    %v400 = vunpack.c.h.b16 %v187
    %v401 = vunpack.c.l.b16 %v188
    %v402 = vunpack.c.h.b16 %v188
    %v403 = vunpack.c.l.b16 %v189
    %v404 = vunpack.c.h.b16 %v189
    %v405 = vunpack.c.l.b16 %v190
    %v406 = vunpack.c.h.b16 %v190
    %v407 = vunpack.c.l.b16 %v191
    %v408 = vunpack.c.h.b16 %v191
    %v409 = vunpack.c.l.b16 %v192
    %v410 = vunpack.c.h.b16 %v192
    %v411 = vunpack.c.l.b16 %v193
    %v412 = vunpack.c.h.b16 %v193
    %v413 = vunpack.c.l.b16 %v194
    %v414 = vunpack.c.h.b16 %v194
    %v415 = vunpack.c.l.b16 %v195
    %v416 = vunpack.c.h.b16 %v195
    %v417 = vunpack.c.l.b16 %v196
    %v418 = vunpack.c.h.b16 %v196
    %v419 = vunpack.c.l.b16 %v197
    %v420 = vunpack.c.h.b16 %v197
    %v421 = vunpack.c.l.b16 %v198
    %v422 = vunpack.c.h.b16 %v198
    %v423 = vunpack.c.l.b16 %v199
    %v424 = vunpack.c.h.b16 %v199
    %v425 = vunpack.c.l.b16 %v200
    %v426 = vunpack.c.h.b16 %v200
    %v427 = vunpack.c.l.b16 %v201
    %v428 = vunpack.c.h.b16 %v201
    %v429 = vunpack.c.l.b16 %v202
    %v430 = vunpack.c.h.b16 %v202
    %v431 = vunpack.c.l.b16 %v203
    %v432 = vunpack.c.h.b16 %v203
    %v433 = vunpack.c.l.b16 %v204
    %v434 = vunpack.c.h.b16 %v204
    %v435 = vunpack.c.l.b16 %v205
    %v436 = vunpack.c.h.b16 %v205
    %v437 = vunpack.c.l.b16 %v206
    %v438 = vunpack.c.h.b16 %v206
    %v439 = vunpack.c.l.b16 %v207
    %v440 = vunpack.c.h.b16 %v207
    %v441 = vunpack.c.l.b16 %v208
    %v442 = vunpack.c.h.b16 %v208
    %v443 = vunpack.c.l.b16 %v209
    %v444 = vunpack.c.h.b16 %v209
    %v445 = vunpack.c.l.b16 %v210
    %v446 = vunpack.c.h.b16 %v210
    %v447 = vunpack.c.l.b16 %v211
    %v448 = vunpack.c.h.b16 %v211
    %v449 = vunpack.c.l.b16 %v212
    %v450 = vunpack.c.h.b16 %v212
    %v451 = vunpack.c.l.b16 %v213
    %v452 = vunpack.c.h.b16 %v213
    %v453 = vunpack.c.l.b16 %v214
    %v454 = vunpack.c.h.b16 %v214
    %v455 = vunpack.c.l.b16 %v215
    %v456 = vunpack.c.h.b16 %v215
    %v457 = vunpack.c.l.b16 %v216
    %v458 = vunpack.c.h.b16 %v216
    %v459 = vunpack.c.l.b16 %v217
    %v460 = vunpack.c.h.b16 %v217
    %v461 = vunpack.c.l.b16 %v218
    %v462 = vunpack.c.h.b16 %v218
    %v463 = vunpack.c.l.b16 %v219
    %v464 = vunpack.c.h.b16 %v219
    %v465 = vunpack.c.l.b16 %v220
    %v466 = vunpack.c.h.b16 %v220
    %v467 = vunpack.c.l.b16 %v221
    %v468 = vunpack.c.h.b16 %v221
    %v469 = vunpack.c.l.b16 %v222
    %v470 = vunpack.c.h.b16 %v222
    %v471 = vunpack.c.l.b16 %v223
    %v472 = vunpack.c.h.b16 %v223
    %v473 = vunpack.c.l.b16 %v224
    %v474 = vunpack.c.h.b16 %v224
    %v475 = vunpack.c.l.b16 %v225
    %v476 = vunpack.c.h.b16 %v225
    %v477 = vunpack.c.l.b16 %v226
    %v478 = vunpack.c.h.b16 %v226
    %v479 = vunpack.c.l.b16 %v227
    %v480 = vunpack.c.h.b16 %v227
    %v481 = vunpack.c.l.b16 %v228
    %v482 = vunpack.c.h.b16 %v228
    %v483 = vunpack.c.l.b16 %v229
    %v484 = vunpack.c.h.b16 %v229
    %v485 = vunpack.c.l.b16 %v230
    %v486 = vunpack.c.h.b16 %v230
    %v487 = vunpack.c.l.b16 %v231
    %v488 = vunpack.c.h.b16 %v231
    %v489 = vunpack.c.l.b16 %v232
    %v490 = vunpack.c.h.b16 %v232
    %v491 = vunpack.c.l.b16 %v233
    %v492 = vunpack.c.h.b16 %v233
    %v493 = vunpack.c.l.b16 %v234
    %v494 = vunpack.c.h.b16 %v234
    %v495 = vunpack.c.l.b16 %v235
    %v496 = vunpack.c.h.b16 %v235
    %v497 = vunpack.c.l.b16 %v236
    %v498 = vunpack.c.h.b16 %v236
    %v499 = vunpack.c.l.b16 %v237
    %v500 = vunpack.c.h.b16 %v237
    %v501 = vunpack.c.l.b16 %v238
    %v502 = vunpack.c.h.b16 %v238
    %v503 = vunpack.c.l.b16 %v239
    %v504 = vunpack.c.h.b16 %v239
    %v505 = vunpack.c.l.b16 %v240
    %v506 = vunpack.c.h.b16 %v240
    %v507 = vunpack.c.l.b16 %v241
    %v508 = vunpack.c.h.b16 %v241
    %v509 = vunpack.c.l.b16 %v242
    %v510 = vunpack.c.h.b16 %v242
    %v511 = vunpack.c.l.b16 %v243
    %v512 = vunpack.c.h.b16 %v243
    %v513 = vunpack.c.l.b16 %v244
    %v514 = vunpack.c.h.b16 %v244
    %v515 = vunpack.c.l.b16 %v245
    %v516 = vunpack.c.h.b16 %v245
    %v517 = vunpack.c.l.b16 %v246
    %v518 = vunpack.c.h.b16 %v246
    %v519 = vunpack.c.l.b16 %v247
    %v520 = vunpack.c.h.b16 %v247
    %v521 = vunpack.c.l.b16 %v248
    %v522 = vunpack.c.h.b16 %v248
    %v523 = vunpack.c.l.b16 %v249
    %v524 = vunpack.c.h.b16 %v249
    %v525 = vunpack.c.l.b16 %v250
    %v526 = vunpack.c.h.b16 %v250
    %v527 = vunpack.c.l.b16 %v251
    %v528 = vunpack.c.h.b16 %v251
    %v529 = vunpack.c.l.b16 %v252
    %v530 = vunpack.c.h.b16 %v252
    %v531 = vunpack.c.l.b16 %v253
    %v532 = vunpack.c.h.b16 %v253
    %v533 = vunpack.c.l.b16 %v254
    %v534 = vunpack.c.h.b16 %v254
    %v535 = vunpack.c.l.b16 %v255
    %v536 = vunpack.c.h.b16 %v255
    %v537 = vunpack.c.l.b16 %v256
    %v538 = vunpack.c.h.b16 %v256
    %v539 = vunpack.c.l.b16 %v257
    %v540 = vunpack.c.h.b16 %v257
    %v541 = vunpack.c.l.b16 %v258
    %v542 = vunpack.c.h.b16 %v258
    %v543 = vunpack.c.l.b16 %v259
    %v544 = vunpack.c.h.b16 %v259
    %v545 = vunpack.c.l.b16 %v260
    %v546 = vunpack.c.h.b16 %v260
    %v547 = vunpack.c.l.b16 %v261
    %v548 = vunpack.c.h.b16 %v261
    %v549 = vunpack.c.l.b16 %v262
    %v550 = vunpack.c.h.b16 %v262
    %v551 = vunpack.c.l.b16 %v263
    %v552 = vunpack.c.h.b16 %v263
    %v553 = vunpack.c.l.b16 %v264
    %v554 = vunpack.c.h.b16 %v264
    %v555 = vunpack.c.l.b16 %v265
    %v556 = vunpack.c.h.b16 %v265
    %v557 = vunpack.c.l.b16 %v266
    %v558 = vunpack.c.h.b16 %v266
    %v559 = vunpack.c.l.b16 %v267
    %v560 = vunpack.c.h.b16 %v267
    %v561 = vunpack.c.l.b16 %v268
    %v562 = vunpack.c.h.b16 %v268
    %v563 = vunpack.c.l.b16 %v269
    %v564 = vunpack.c.h.b16 %v269
    %v565 = vunpack.c.l.b16 %v270
    %v566 = vunpack.c.h.b16 %v270
    %v567 = vunpack.c.l.b16 %v271
    %v568 = vunpack.c.h.b16 %v271
    %v569 = vunpack.c.l.b16 %v272
    %v570 = vunpack.c.h.b16 %v272
    %v571 = vunpack.c.l.b16 %v273
    %v572 = vunpack.c.h.b16 %v273
    %v573 = vunpack.c.l.b16 %v274
    %v574 = vunpack.c.h.b16 %v274
    %v575 = vunpack.c.l.b16 %v275
    %v576 = vunpack.c.h.b16 %v275
    %v577 = vunpack.c.l.b16 %v276
    %v578 = vunpack.c.h.b16 %v276
    %v579 = vpack.c.b16 %v389, %v387
    %v580 = vpack.c.b16 %v390, %v388
    %v581 = vpack.c.b16 %v393, %v391
    %v582 = vpack.c.b16 %v394, %v392
    %v583 = vpack.c.b16 %v397, %v395
    %v584 = vpack.c.b16 %v398, %v396
    %v585 = vpack.c.b16 %v401, %v399
    %v586 = vpack.c.b16 %v402, %v400
    %v587 = vpack.c.b16 %v405, %v403
    %v588 = vpack.c.b16 %v406, %v404
    %v589 = vpack.c.b16 %v409, %v407
    %v590 = vpack.c.b16 %v410, %v408
    %v591 = vpack.c.b16 %v413, %v411
    %v592 = vpack.c.b16 %v414, %v412
    %v593 = vpack.c.b16 %v417, %v415
    %v594 = vpack.c.b16 %v418, %v416
    %v595 = vpack.c.b16 %v421, %v419
    %v596 = vpack.c.b16 %v422, %v420
    %v597 = vpack.c.b16 %v425, %v423
    %v598 = vpack.c.b16 %v426, %v424
    %v599 = vpack.c.b16 %v429, %v427
    %v600 = vpack.c.b16 %v430, %v428
    %v601 = vpack.c.b16 %v433, %v431
    %v602 = vpack.c.b16 %v434, %v432
    %v603 = vpack.c.b16 %v437, %v435
    %v604 = vpack.c.b16 %v438, %v436
    %v605 = vpack.c.b16 %v441, %v439
    %v606 = vpack.c.b16 %v442, %v440
    %v607 = vpack.c.b16 %v445, %v443
    %v608 = vpack.c.b16 %v446, %v444
    %v609 = vpack.c.b16 %v449, %v447
    %v610 = vpack.c.b16 %v450, %v448
    %v611 = vpack.c.b16 %v453, %v451
    %v612 = vpack.c.b16 %v454, %v452
    %v613 = vpack.c.b16 %v457, %v455
    %v614 = vpack.c.b16 %v458, %v456
    %v615 = vpack.c.b16 %v461, %v459
    %v616 = vpack.c.b16 %v462, %v460
    %v617 = vpack.c.b16 %v465, %v463
    %v618 = vpack.c.b16 %v466, %v464
    %v619 = vpack.c.b16 %v469, %v467
    %v620 = vpack.c.b16 %v470, %v468
    %v621 = vpack.c.b16 %v473, %v471
    %v622 = vpack.c.b16 %v474, %v472
    %v623 = vpack.c.b16 %v477, %v475
    %v624 = vpack.c.b16 %v478, %v476
    %v625 = vpack.c.b16 %v481, %v479
    %v626 = vpack.c.b16 %v482, %v480
    %v627 = vpack.c.b16 %v485, %v483
    %v628 = vpack.c.b16 %v486, %v484
    %v629 = vpack.c.b16 %v489, %v487
    %v630 = vpack.c.b16 %v490, %v488
    %v631 = vpack.c.b16 %v493, %v491
    %v632 = vpack.c.b16 %v494, %v492
    %v633 = vpack.c.b16 %v497, %v495
    %v634 = vpack.c.b16 %v498, %v496
    %v635 = vpack.c.b16 %v501, %v499
    %v636 = vpack.c.b16 %v502, %v500
    %v637 = vpack.c.b16 %v505, %v503
    %v638 = vpack.c.b16 %v506, %v504
    %v639 = vpack.c.b16 %v509, %v507
    %v640 = vpack.c.b16 %v510, %v508
    %v641 = vpack.c.b16 %v513, %v511
    %v642 = vpack.c.b16 %v514, %v512
    %v643 = vpack.c.b16 %v517, %v515
    %v644 = vpack.c.b16 %v518, %v516
    %v645 = vpack.c.b16 %v521, %v519
    %v646 = vpack.c.b16 %v522, %v520
    %v647 = vpack.c.b16 %v525, %v523
    %v648 = vpack.c.b16 %v526, %v524
    %v649 = vpack.c.b16 %v529, %v527
    %v650 = vpack.c.b16 %v530, %v528
    %v651 = vpack.c.b16 %v533, %v531
    %v652 = vpack.c.b16 %v534, %v532
    %v653 = vpack.c.b16 %v537, %v535
    %v654 = vpack.c.b16 %v538, %v536
    %v655 = vpack.c.b16 %v541, %v539
    %v656 = vpack.c.b16 %v542, %v540
    %v657 = vpack.c.b16 %v545, %v543
    %v658 = vpack.c.b16 %v546, %v544
    %v659 = vpack.c.b16 %v549, %v547
    %v660 = vpack.c.b16 %v550, %v548
    %v661 = vpack.c.b16 %v553, %v551
    %v662 = vpack.c.b16 %v554, %v552
    %v663 = vpack.c.b16 %v557, %v555
    %v664 = vpack.c.b16 %v558, %v556
    %v665 = vpack.c.b16 %v561, %v559
    %v666 = vpack.c.b16 %v562, %v560
    %v667 = vpack.c.b16 %v565, %v563
    %v668 = vpack.c.b16 %v566, %v564
    %v669 = vpack.c.b16 %v569, %v567
    %v670 = vpack.c.b16 %v570, %v568
    %v671 = vpack.c.b16 %v573, %v571
    %v672 = vpack.c.b16 %v574, %v572
    %v673 = vpack.c.b16 %v577, %v575
    %v674 = vpack.c.b16 %v578, %v576
    %771 = vmatpush.bf16.msra.mxu0 %v593
    %772 = vmatpush.bf16.msra.mxu0 %v591
    %773 = vmatpush.bf16.msra.mxu0 %v589
    %774 = vmatpush.bf16.msra.mxu0 %v587
    %775 = vmatpush.bf16.msra.mxu0 %v585
    %776 = vmatpush.bf16.msra.mxu0 %v583
    %777 = vmatpush.bf16.msra.mxu0 %v581
    %778 = vmatpush.bf16.msra.mxu0 %v579
    %779 = vmatmul.bf16.gmra.mxu0 %v279
    %v780 = vpop.f32.mrf.mxu0
    %v781 = vadd.f32 0.0, %v780
    %v782 = vpop.f32.mrf.mxu0
    %783 = vdwg.mxu0
    %784 = vmatpush.bf16.msra.mxu0 %v609
    %785 = vmatpush.bf16.msra.mxu0 %v607
    %786 = vmatpush.bf16.msra.mxu0 %v605
    %787 = vmatpush.bf16.msra.mxu0 %v603
    %788 = vmatpush.bf16.msra.mxu0 %v601
    %789 = vmatpush.bf16.msra.mxu0 %v599
    %790 = vmatpush.bf16.msra.mxu0 %v597
    %791 = vmatpush.bf16.msra.mxu0 %v595
    %792 = vmatmul.bf16.gmra.mxu0 %v280
    %v793 = vpop.f32.mrf.mxu0
    %v794 = vadd.f32 %v781, %v793
    %v795 = vpop.f32.mrf.mxu0
    %796 = vdwg.mxu0
    %797 = vmatpush.bf16.msra.mxu0 %v625
    %798 = vmatpush.bf16.msra.mxu0 %v623
    %799 = vmatpush.bf16.msra.mxu0 %v621
    %800 = vmatpush.bf16.msra.mxu0 %v619
    %801 = vmatpush.bf16.msra.mxu0 %v617
    %802 = vmatpush.bf16.msra.mxu0 %v615
    %803 = vmatpush.bf16.msra.mxu0 %v613
    %804 = vmatpush.bf16.msra.mxu0 %v611
    %805 = vmatmul.bf16.gmra.mxu0 %v281
    %v806 = vpop.f32.mrf.mxu0
    %v807 = vadd.f32 %v794, %v806
    %v808 = vpop.f32.mrf.mxu0
    %809 = vdwg.mxu0
    %810 = vmatpush.bf16.msra.mxu0 %v641
    %811 = vmatpush.bf16.msra.mxu0 %v639
    %812 = vmatpush.bf16.msra.mxu0 %v637
    %813 = vmatpush.bf16.msra.mxu0 %v635
    %814 = vmatpush.bf16.msra.mxu0 %v633
    %815 = vmatpush.bf16.msra.mxu0 %v631
    %816 = vmatpush.bf16.msra.mxu0 %v629
    %817 = vmatpush.bf16.msra.mxu0 %v627
    %818 = vmatmul.bf16.gmra.mxu0 %v282
    %v819 = vpop.f32.mrf.mxu0
    %v820 = vadd.f32 %v807, %v819
    %v821 = vpop.f32.mrf.mxu0
    %822 = vdwg.mxu0
    %823 = vmatpush.bf16.msra.mxu0 %v657
    %824 = vmatpush.bf16.msra.mxu0 %v655
    %825 = vmatpush.bf16.msra.mxu0 %v653
    %826 = vmatpush.bf16.msra.mxu0 %v651
    %827 = vmatpush.bf16.msra.mxu0 %v649
    %828 = vmatpush.bf16.msra.mxu0 %v647
    %829 = vmatpush.bf16.msra.mxu0 %v645
    %830 = vmatpush.bf16.msra.mxu0 %v643
    %831 = vmatmul.bf16.gmra.mxu0 %v283
    %v832 = vpop.f32.mrf.mxu0
    %v833 = vadd.f32 %v820, %v832
    %v834 = vpop.f32.mrf.mxu0
    %835 = vdwg.mxu0
    %836 = vmatpush.bf16.msra.mxu0 %v673
    %837 = vmatpush.bf16.msra.mxu0 %v671
    %838 = vmatpush.bf16.msra.mxu0 %v669
    %839 = vmatpush.bf16.msra.mxu0 %v667
    %840 = vmatpush.bf16.msra.mxu0 %v665
    %841 = vmatpush.bf16.msra.mxu0 %v663
    %842 = vmatpush.bf16.msra.mxu0 %v661
    %843 = vmatpush.bf16.msra.mxu0 %v659
    %844 = vmatmul.bf16.gmra.mxu0 %v284
    %v845 = vpop.f32.mrf.mxu0
    %v846 = vadd.f32 %v833, %v845
    %v847 = vpop.f32.mrf.mxu0
    %848 = vdwg.mxu0
    %849 = vmatpush.bf16.msra.mxu0 %v594
    %850 = vmatpush.bf16.msra.mxu0 %v592
    %851 = vmatpush.bf16.msra.mxu0 %v590
    %852 = vmatpush.bf16.msra.mxu0 %v588
    %853 = vmatpush.bf16.msra.mxu0 %v586
    %854 = vmatpush.bf16.msra.mxu0 %v584
    %855 = vmatpush.bf16.msra.mxu0 %v582
    %856 = vmatpush.bf16.msra.mxu0 %v580
    %857 = vmatmul.bf16.gmra.mxu0 %v279
    %v858 = vpop.f32.mrf.mxu0
    %v859 = vadd.f32 0.0, %v858
    %v860 = vpop.f32.mrf.mxu0
    %861 = vdwg.mxu0
    %862 = vmatpush.bf16.msra.mxu0 %v610
    %863 = vmatpush.bf16.msra.mxu0 %v608
    %864 = vmatpush.bf16.msra.mxu0 %v606
    %865 = vmatpush.bf16.msra.mxu0 %v604
    %866 = vmatpush.bf16.msra.mxu0 %v602
    %867 = vmatpush.bf16.msra.mxu0 %v600
    %868 = vmatpush.bf16.msra.mxu0 %v598
    %869 = vmatpush.bf16.msra.mxu0 %v596
    %870 = vmatmul.bf16.gmra.mxu0 %v280
    %v871 = vpop.f32.mrf.mxu0
    %v872 = vadd.f32 %v859, %v871
    %v873 = vpop.f32.mrf.mxu0
    %874 = vdwg.mxu0
    %875 = vmatpush.bf16.msra.mxu0 %v626
    %876 = vmatpush.bf16.msra.mxu0 %v624
    %877 = vmatpush.bf16.msra.mxu0 %v622
    %878 = vmatpush.bf16.msra.mxu0 %v620
    %879 = vmatpush.bf16.msra.mxu0 %v618
    %880 = vmatpush.bf16.msra.mxu0 %v616
    %881 = vmatpush.bf16.msra.mxu0 %v614
    %882 = vmatpush.bf16.msra.mxu0 %v612
    %883 = vmatmul.bf16.gmra.mxu0 %v281
    %v884 = vpop.f32.mrf.mxu0
    %v885 = vadd.f32 %v872, %v884
    %v886 = vpop.f32.mrf.mxu0
    %887 = vdwg.mxu0
    %888 = vmatpush.bf16.msra.mxu0 %v642
    %889 = vmatpush.bf16.msra.mxu0 %v640
    %890 = vmatpush.bf16.msra.mxu0 %v638
    %891 = vmatpush.bf16.msra.mxu0 %v636
    %892 = vmatpush.bf16.msra.mxu0 %v634
    %893 = vmatpush.bf16.msra.mxu0 %v632
    %894 = vmatpush.bf16.msra.mxu0 %v630
    %895 = vmatpush.bf16.msra.mxu0 %v628
    %896 = vmatmul.bf16.gmra.mxu0 %v282
    %v897 = vpop.f32.mrf.mxu0
    %v898 = vadd.f32 %v885, %v897
    %v899 = vpop.f32.mrf.mxu0
    %900 = vdwg.mxu0
    %901 = vmatpush.bf16.msra.mxu0 %v658
    %902 = vmatpush.bf16.msra.mxu0 %v656
    %903 = vmatpush.bf16.msra.mxu0 %v654
    %904 = vmatpush.bf16.msra.mxu0 %v652
    %905 = vmatpush.bf16.msra.mxu0 %v650
    %906 = vmatpush.bf16.msra.mxu0 %v648
    %907 = vmatpush.bf16.msra.mxu0 %v646
    %908 = vmatpush.bf16.msra.mxu0 %v644
    %909 = vmatmul.bf16.gmra.mxu0 %v283
    %v910 = vpop.f32.mrf.mxu0
    %v911 = vadd.f32 %v898, %v910
    %v912 = vpop.f32.mrf.mxu0
    %913 = vdwg.mxu0
    %914 = vmatpush.bf16.msra.mxu0 %v674
    %915 = vmatpush.bf16.msra.mxu0 %v672
    %916 = vmatpush.bf16.msra.mxu0 %v670
    %917 = vmatpush.bf16.msra.mxu0 %v668
    %918 = vmatpush.bf16.msra.mxu0 %v666
    %919 = vmatpush.bf16.msra.mxu0 %v664
    %920 = vmatpush.bf16.msra.mxu0 %v662
    %921 = vmatpush.bf16.msra.mxu0 %v660
    %922 = vmatmul.bf16.gmra.mxu0 %v284
    %v923 = vpop.f32.mrf.mxu0
    %v924 = vadd.f32 %v911, %v923
    %v925 = vpop.f32.mrf.mxu0
    %926 = vdwg.mxu0
    %v943 = vunpack.c.l.b16 %v164
    %v944 = vunpack.c.h.b16 %v164
    %v945 = vunpack.c.l.b16 %v165
    %v946 = vunpack.c.h.b16 %v165
    %v947 = vunpack.c.l.b16 %v166
    %v948 = vunpack.c.h.b16 %v166
    %v949 = vunpack.c.l.b16 %v167
    %v950 = vunpack.c.h.b16 %v167
    %v951 = vunpack.c.l.b16 %v168
    %v952 = vunpack.c.h.b16 %v168
    %v953 = vunpack.c.l.b16 %v169
    %v954 = vunpack.c.h.b16 %v169
    %v955 = vunpack.c.l.b16 %v170
    %v956 = vunpack.c.h.b16 %v170
    %v957 = vunpack.c.l.b16 %v171
    %v958 = vunpack.c.h.b16 %v171
    %v959 = vunpack.c.l.b16 %v172
    %v960 = vunpack.c.h.b16 %v172
    %v961 = vunpack.c.l.b16 %v173
    %v962 = vunpack.c.h.b16 %v173
    %v963 = vunpack.c.l.b16 %v174
    %v964 = vunpack.c.h.b16 %v174
    %v965 = vunpack.c.l.b16 %v175
    %v966 = vunpack.c.h.b16 %v175
    %v967 = vunpack.c.l.b16 %v176
    %v968 = vunpack.c.h.b16 %v176
    %v969 = vunpack.c.l.b16 %v177
    %v970 = vunpack.c.h.b16 %v177
    %v971 = vunpack.c.l.b16 %v178
    %v972 = vunpack.c.h.b16 %v178
    %v973 = vunpack.c.l.b16 %v179
    %v974 = vunpack.c.h.b16 %v179
    %v975 = vpack.c.b16 %v945, %v943
    %v976 = vpack.c.b16 %v946, %v944
    %v977 = vpack.c.b16 %v949, %v947
    %v978 = vpack.c.b16 %v950, %v948
    %v979 = vpack.c.b16 %v953, %v951
    %v980 = vpack.c.b16 %v954, %v952
    %v981 = vpack.c.b16 %v957, %v955
    %v982 = vpack.c.b16 %v958, %v956
    %v983 = vpack.c.b16 %v961, %v959
    %v984 = vpack.c.b16 %v962, %v960
    %v985 = vpack.c.b16 %v965, %v963
    %v986 = vpack.c.b16 %v966, %v964
    %v987 = vpack.c.b16 %v969, %v967
    %v988 = vpack.c.b16 %v970, %v968
    %v989 = vpack.c.b16 %v973, %v971
    %v990 = vpack.c.b16 %v974, %v972
    %1007 = vmatpush.bf16.msra.mxu0 %v989
    %1008 = vmatpush.bf16.msra.mxu0 %v987
    %1009 = vmatpush.bf16.msra.mxu0 %v985
    %1010 = vmatpush.bf16.msra.mxu0 %v983
    %1011 = vmatpush.bf16.msra.mxu0 %v981
    %1012 = vmatpush.bf16.msra.mxu0 %v979
    %1013 = vmatpush.bf16.msra.mxu0 %v977
    %1014 = vmatpush.bf16.msra.mxu0 %v975
    %1015 = vmatmul.bf16.gmra.mxu0 %v163
    %v1016 = vpop.f32.mrf.mxu0
    %v1017 = vadd.f32 %v846, %v1016
    %v1018 = vpop.f32.mrf.mxu0
    %1019 = vdwg.mxu0
    %1020 = vmatpush.bf16.msra.mxu0 %v990
    %1021 = vmatpush.bf16.msra.mxu0 %v988
    %1022 = vmatpush.bf16.msra.mxu0 %v986
    %1023 = vmatpush.bf16.msra.mxu0 %v984
    %1024 = vmatpush.bf16.msra.mxu0 %v982
    %1025 = vmatpush.bf16.msra.mxu0 %v980
    %1026 = vmatpush.bf16.msra.mxu0 %v978
    %1027 = vmatpush.bf16.msra.mxu0 %v976
    %1028 = vmatmul.bf16.gmra.mxu0 %v163
    %v1029 = vpop.f32.mrf.mxu0
    %v1030 = vadd.f32 %v924, %v1029
    %v1031 = vpop.f32.mrf.mxu0
    %1032 = vdwg.mxu0
    %v1033 = vld [vmem:[#allocation10] sm:$0x3]
    %v1035 = vperm.slane %v1033, 0
    %v1036 = vperm.slane %v1033, 1
    %v1039 = vadd.f32 %v1017, %v1035
    %v1040 = vadd.f32 %v1030, %v1036
    %v1041 = vmax.f32 %v1039, 0.0
    %v1042 = vmax.f32 %v1040, 0.0
    %v1043 = vpack.c.bf16 %v1041, %v1041
    %v1044 = vpack.c.bf16 %v1042, %v1042
    %v1045 = vld [vmem:[#allocation11] sm:$0xff]
    %v1046 = vld [vmem:[#allocation11 + $0x8] sm:$0xff]
    %v1047 = vld [vmem:[#allocation11 + $0x10] sm:$0xff]
    %v1048 = vld [vmem:[#allocation11 + $0x18] sm:$0xff]
    %v1049 = vld [vmem:[#allocation11 + $0x20] sm:$0xff]
    %v1050 = vld [vmem:[#allocation11 + $0x28] sm:$0xff]
    %v1051 = vld [vmem:[#allocation11 + $0x30] sm:$0xff]
    %v1052 = vld [vmem:[#allocation11 + $0x38] sm:$0xff]
    %v1053 = vld [vmem:[#allocation11 + $0x40] sm:$0xff]
    %v1054 = vld [vmem:[#allocation11 + $0x48] sm:$0xff]
    %v1055 = vld [vmem:[#allocation11 + $0x50] sm:$0xff]
    %v1056 = vld [vmem:[#allocation11 + $0x58] sm:$0xff]
    %v1057 = vld [vmem:[#allocation11 + $0x60] sm:$0xff]
    %v1058 = vld [vmem:[#allocation11 + $0x68] sm:$0xff]
    %v1059 = vld [vmem:[#allocation11 + $0x70] sm:$0xff]
    %v1060 = vld [vmem:[#allocation11 + $0x78] sm:$0xff]
    %v1061 = vld [vmem:[#allocation11 + $0x80] sm:$0xff]
    %v1062 = vld [vmem:[#allocation11 + $0x88] sm:$0xff]
    %v1063 = vld [vmem:[#allocation11 + $0x90] sm:$0xff]
    %v1064 = vld [vmem:[#allocation11 + $0x98] sm:$0xff]
    %v1065 = vld [vmem:[#allocation11 + $0xa0] sm:$0xff]
    %v1066 = vld [vmem:[#allocation11 + $0xa8] sm:$0xff]
    %v1067 = vld [vmem:[#allocation11 + $0xb0] sm:$0xff]
    %v1068 = vld [vmem:[#allocation11 + $0xb8] sm:$0xff]
    %v1069 = vld [vmem:[#allocation11 + $0xc0] sm:$0xff]
    %v1070 = vld [vmem:[#allocation11 + $0xc8] sm:$0xff]
    %v1071 = vld [vmem:[#allocation11 + $0xd0] sm:$0xff]
    %v1072 = vld [vmem:[#allocation11 + $0xd8] sm:$0xff]
    %v1073 = vld [vmem:[#allocation11 + $0xe0] sm:$0xff]
    %v1074 = vld [vmem:[#allocation11 + $0xe8] sm:$0xff]
    %v1075 = vld [vmem:[#allocation11 + $0xf0] sm:$0xff]
    %v1076 = vld [vmem:[#allocation11 + $0xf8] sm:$0xff]
    %v1077 = vld [vmem:[#allocation11 + $0x100] sm:$0xff]
    %v1078 = vld [vmem:[#allocation11 + $0x108] sm:$0xff]
    %v1079 = vld [vmem:[#allocation11 + $0x110] sm:$0xff]
    %v1080 = vld [vmem:[#allocation11 + $0x118] sm:$0xff]
    %v1081 = vld [vmem:[#allocation11 + $0x120] sm:$0xff]
    %v1082 = vld [vmem:[#allocation11 + $0x128] sm:$0xff]
    %v1083 = vld [vmem:[#allocation11 + $0x130] sm:$0xff]
    %v1084 = vld [vmem:[#allocation11 + $0x138] sm:$0xff]
    %v1085 = vld [vmem:[#allocation11 + $0x140] sm:$0xff]
    %v1086 = vld [vmem:[#allocation11 + $0x148] sm:$0xff]
    %v1087 = vld [vmem:[#allocation11 + $0x150] sm:$0xff]
    %v1088 = vld [vmem:[#allocation11 + $0x158] sm:$0xff]
    %v1089 = vld [vmem:[#allocation11 + $0x160] sm:$0xff]
    %v1090 = vld [vmem:[#allocation11 + $0x168] sm:$0xff]
    %v1091 = vld [vmem:[#allocation11 + $0x170] sm:$0xff]
    %v1092 = vld [vmem:[#allocation11 + $0x178] sm:$0xff]
    %v1093 = vld [vmem:[#allocation11 + $0x180] sm:$0xff]
    %v1094 = vld [vmem:[#allocation11 + $0x188] sm:$0xff]
    %v1095 = vld [vmem:[#allocation11 + $0x190] sm:$0xff]
    %v1096 = vld [vmem:[#allocation11 + $0x198] sm:$0xff]
    %v1097 = vld [vmem:[#allocation11 + $0x1a0] sm:$0xff]
    %v1098 = vld [vmem:[#allocation11 + $0x1a8] sm:$0xff]
    %v1099 = vld [vmem:[#allocation11 + $0x1b0] sm:$0xff]
    %v1100 = vld [vmem:[#allocation11 + $0x1b8] sm:$0xff]
    %v1101 = vld [vmem:[#allocation11 + $0x1c0] sm:$0xff]
    %v1102 = vld [vmem:[#allocation11 + $0x1c8] sm:$0xff]
    %v1103 = vld [vmem:[#allocation11 + $0x1d0] sm:$0xff]
    %v1104 = vld [vmem:[#allocation11 + $0x1d8] sm:$0xff]
    %v1105 = vld [vmem:[#allocation11 + $0x1e0] sm:$0xff]
    %v1106 = vld [vmem:[#allocation11 + $0x1e8] sm:$0xff]
    %v1107 = vld [vmem:[#allocation11 + $0x1f0] sm:$0xff]
    %v1108 = vld [vmem:[#allocation11 + $0x1f8] sm:$0xff]
    %v1109 = vld [vmem:[#allocation13] sm:$0xf]
    %v1111 = vperm.slane %v1109, 0
    %v1112 = vperm.slane %v1109, 1
    %v1113 = vperm.slane %v1109, 2
    %v1114 = vperm.slane %v1109, 3
    %v1183 = vunpack.c.l.b16 %v1045
    %v1184 = vunpack.c.h.b16 %v1045
    %v1185 = vunpack.c.l.b16 %v1046
    %v1186 = vunpack.c.h.b16 %v1046
    %v1187 = vunpack.c.l.b16 %v1047
    %v1188 = vunpack.c.h.b16 %v1047
    %v1189 = vunpack.c.l.b16 %v1048
    %v1190 = vunpack.c.h.b16 %v1048
    %v1191 = vunpack.c.l.b16 %v1049
    %v1192 = vunpack.c.h.b16 %v1049
    %v1193 = vunpack.c.l.b16 %v1050
    %v1194 = vunpack.c.h.b16 %v1050
    %v1195 = vunpack.c.l.b16 %v1051
    %v1196 = vunpack.c.h.b16 %v1051
    %v1197 = vunpack.c.l.b16 %v1052
    %v1198 = vunpack.c.h.b16 %v1052
    %v1199 = vunpack.c.l.b16 %v1053
    %v1200 = vunpack.c.h.b16 %v1053
    %v1201 = vunpack.c.l.b16 %v1054
    %v1202 = vunpack.c.h.b16 %v1054
    %v1203 = vunpack.c.l.b16 %v1055
    %v1204 = vunpack.c.h.b16 %v1055
    %v1205 = vunpack.c.l.b16 %v1056
    %v1206 = vunpack.c.h.b16 %v1056
    %v1207 = vunpack.c.l.b16 %v1057
    %v1208 = vunpack.c.h.b16 %v1057
    %v1209 = vunpack.c.l.b16 %v1058
    %v1210 = vunpack.c.h.b16 %v1058
    %v1211 = vunpack.c.l.b16 %v1059
    %v1212 = vunpack.c.h.b16 %v1059
    %v1213 = vunpack.c.l.b16 %v1060
    %v1214 = vunpack.c.h.b16 %v1060
    %v1215 = vunpack.c.l.b16 %v1061
    %v1216 = vunpack.c.h.b16 %v1061
    %v1217 = vunpack.c.l.b16 %v1062
    %v1218 = vunpack.c.h.b16 %v1062
    %v1219 = vunpack.c.l.b16 %v1063
    %v1220 = vunpack.c.h.b16 %v1063
    %v1221 = vunpack.c.l.b16 %v1064
    %v1222 = vunpack.c.h.b16 %v1064
    %v1223 = vunpack.c.l.b16 %v1065
    %v1224 = vunpack.c.h.b16 %v1065
    %v1225 = vunpack.c.l.b16 %v1066
    %v1226 = vunpack.c.h.b16 %v1066
    %v1227 = vunpack.c.l.b16 %v1067
    %v1228 = vunpack.c.h.b16 %v1067
    %v1229 = vunpack.c.l.b16 %v1068
    %v1230 = vunpack.c.h.b16 %v1068
    %v1231 = vunpack.c.l.b16 %v1069
    %v1232 = vunpack.c.h.b16 %v1069
    %v1233 = vunpack.c.l.b16 %v1070
    %v1234 = vunpack.c.h.b16 %v1070
    %v1235 = vunpack.c.l.b16 %v1071
    %v1236 = vunpack.c.h.b16 %v1071
    %v1237 = vunpack.c.l.b16 %v1072
    %v1238 = vunpack.c.h.b16 %v1072
    %v1239 = vunpack.c.l.b16 %v1073
    %v1240 = vunpack.c.h.b16 %v1073
    %v1241 = vunpack.c.l.b16 %v1074
    %v1242 = vunpack.c.h.b16 %v1074
    %v1243 = vunpack.c.l.b16 %v1075
    %v1244 = vunpack.c.h.b16 %v1075
    %v1245 = vunpack.c.l.b16 %v1076
    %v1246 = vunpack.c.h.b16 %v1076
    %v1247 = vunpack.c.l.b16 %v1077
    %v1248 = vunpack.c.h.b16 %v1077
    %v1249 = vunpack.c.l.b16 %v1078
    %v1250 = vunpack.c.h.b16 %v1078
    %v1251 = vunpack.c.l.b16 %v1079
    %v1252 = vunpack.c.h.b16 %v1079
    %v1253 = vunpack.c.l.b16 %v1080
    %v1254 = vunpack.c.h.b16 %v1080
    %v1255 = vunpack.c.l.b16 %v1081
    %v1256 = vunpack.c.h.b16 %v1081
    %v1257 = vunpack.c.l.b16 %v1082
    %v1258 = vunpack.c.h.b16 %v1082
    %v1259 = vunpack.c.l.b16 %v1083
    %v1260 = vunpack.c.h.b16 %v1083
    %v1261 = vunpack.c.l.b16 %v1084
    %v1262 = vunpack.c.h.b16 %v1084
    %v1263 = vunpack.c.l.b16 %v1085
    %v1264 = vunpack.c.h.b16 %v1085
    %v1265 = vunpack.c.l.b16 %v1086
    %v1266 = vunpack.c.h.b16 %v1086
    %v1267 = vunpack.c.l.b16 %v1087
    %v1268 = vunpack.c.h.b16 %v1087
    %v1269 = vunpack.c.l.b16 %v1088
    %v1270 = vunpack.c.h.b16 %v1088
    %v1271 = vunpack.c.l.b16 %v1089
    %v1272 = vunpack.c.h.b16 %v1089
    %v1273 = vunpack.c.l.b16 %v1090
    %v1274 = vunpack.c.h.b16 %v1090
    %v1275 = vunpack.c.l.b16 %v1091
    %v1276 = vunpack.c.h.b16 %v1091
    %v1277 = vunpack.c.l.b16 %v1092
    %v1278 = vunpack.c.h.b16 %v1092
    %v1279 = vunpack.c.l.b16 %v1093
    %v1280 = vunpack.c.h.b16 %v1093
    %v1281 = vunpack.c.l.b16 %v1094
    %v1282 = vunpack.c.h.b16 %v1094
    %v1283 = vunpack.c.l.b16 %v1095
    %v1284 = vunpack.c.h.b16 %v1095
    %v1285 = vunpack.c.l.b16 %v1096
    %v1286 = vunpack.c.h.b16 %v1096
    %v1287 = vunpack.c.l.b16 %v1097
    %v1288 = vunpack.c.h.b16 %v1097
    %v1289 = vunpack.c.l.b16 %v1098
    %v1290 = vunpack.c.h.b16 %v1098
    %v1291 = vunpack.c.l.b16 %v1099
    %v1292 = vunpack.c.h.b16 %v1099
    %v1293 = vunpack.c.l.b16 %v1100
    %v1294 = vunpack.c.h.b16 %v1100
    %v1295 = vunpack.c.l.b16 %v1101
    %v1296 = vunpack.c.h.b16 %v1101
    %v1297 = vunpack.c.l.b16 %v1102
    %v1298 = vunpack.c.h.b16 %v1102
    %v1299 = vunpack.c.l.b16 %v1103
    %v1300 = vunpack.c.h.b16 %v1103
    %v1301 = vunpack.c.l.b16 %v1104
    %v1302 = vunpack.c.h.b16 %v1104
    %v1303 = vunpack.c.l.b16 %v1105
    %v1304 = vunpack.c.h.b16 %v1105
    %v1305 = vunpack.c.l.b16 %v1106
    %v1306 = vunpack.c.h.b16 %v1106
    %v1307 = vunpack.c.l.b16 %v1107
    %v1308 = vunpack.c.h.b16 %v1107
    %v1309 = vunpack.c.l.b16 %v1108
    %v1310 = vunpack.c.h.b16 %v1108
    %v1311 = vpack.c.b16 %v1187, %v1183
    %v1312 = vpack.c.b16 %v1188, %v1184
    %v1313 = vpack.c.b16 %v1189, %v1185
    %v1314 = vpack.c.b16 %v1190, %v1186
    %v1315 = vpack.c.b16 %v1195, %v1191
    %v1316 = vpack.c.b16 %v1196, %v1192
    %v1317 = vpack.c.b16 %v1197, %v1193
    %v1318 = vpack.c.b16 %v1198, %v1194
    %v1319 = vpack.c.b16 %v1203, %v1199
    %v1320 = vpack.c.b16 %v1204, %v1200
    %v1321 = vpack.c.b16 %v1205, %v1201
    %v1322 = vpack.c.b16 %v1206, %v1202
    %v1323 = vpack.c.b16 %v1211, %v1207
    %v1324 = vpack.c.b16 %v1212, %v1208
    %v1325 = vpack.c.b16 %v1213, %v1209
    %v1326 = vpack.c.b16 %v1214, %v1210
    %v1327 = vpack.c.b16 %v1219, %v1215
    %v1328 = vpack.c.b16 %v1220, %v1216
    %v1329 = vpack.c.b16 %v1221, %v1217
    %v1330 = vpack.c.b16 %v1222, %v1218
    %v1331 = vpack.c.b16 %v1227, %v1223
    %v1332 = vpack.c.b16 %v1228, %v1224
    %v1333 = vpack.c.b16 %v1229, %v1225
    %v1334 = vpack.c.b16 %v1230, %v1226
    %v1335 = vpack.c.b16 %v1235, %v1231
    %v1336 = vpack.c.b16 %v1236, %v1232
    %v1337 = vpack.c.b16 %v1237, %v1233
    %v1338 = vpack.c.b16 %v1238, %v1234
    %v1339 = vpack.c.b16 %v1243, %v1239
    %v1340 = vpack.c.b16 %v1244, %v1240
    %v1341 = vpack.c.b16 %v1245, %v1241
    %v1342 = vpack.c.b16 %v1246, %v1242
    %v1343 = vpack.c.b16 %v1251, %v1247
    %v1344 = vpack.c.b16 %v1252, %v1248
    %v1345 = vpack.c.b16 %v1253, %v1249
    %v1346 = vpack.c.b16 %v1254, %v1250
    %v1347 = vpack.c.b16 %v1259, %v1255
    %v1348 = vpack.c.b16 %v1260, %v1256
    %v1349 = vpack.c.b16 %v1261, %v1257
    %v1350 = vpack.c.b16 %v1262, %v1258
    %v1351 = vpack.c.b16 %v1267, %v1263
    %v1352 = vpack.c.b16 %v1268, %v1264
    %v1353 = vpack.c.b16 %v1269, %v1265
    %v1354 = vpack.c.b16 %v1270, %v1266
    %v1355 = vpack.c.b16 %v1275, %v1271
    %v1356 = vpack.c.b16 %v1276, %v1272
    %v1357 = vpack.c.b16 %v1277, %v1273
    %v1358 = vpack.c.b16 %v1278, %v1274
    %v1359 = vpack.c.b16 %v1283, %v1279
    %v1360 = vpack.c.b16 %v1284, %v1280
    %v1361 = vpack.c.b16 %v1285, %v1281
    %v1362 = vpack.c.b16 %v1286, %v1282
    %v1363 = vpack.c.b16 %v1291, %v1287
    %v1364 = vpack.c.b16 %v1292, %v1288
    %v1365 = vpack.c.b16 %v1293, %v1289
    %v1366 = vpack.c.b16 %v1294, %v1290
    %v1367 = vpack.c.b16 %v1299, %v1295
    %v1368 = vpack.c.b16 %v1300, %v1296
    %v1369 = vpack.c.b16 %v1301, %v1297
    %v1370 = vpack.c.b16 %v1302, %v1298
    %v1371 = vpack.c.b16 %v1307, %v1303
    %v1372 = vpack.c.b16 %v1308, %v1304
    %v1373 = vpack.c.b16 %v1309, %v1305
    %v1374 = vpack.c.b16 %v1310, %v1306
    %1439 = vmatpush.bf16.msra.mxu0 %v1339
    %1440 = vmatpush.bf16.msra.mxu0 %v1335
    %1441 = vmatpush.bf16.msra.mxu0 %v1331
    %1442 = vmatpush.bf16.msra.mxu0 %v1327
    %1443 = vmatpush.bf16.msra.mxu0 %v1323
    %1444 = vmatpush.bf16.msra.mxu0 %v1319
    %1445 = vmatpush.bf16.msra.mxu0 %v1315
    %1446 = vmatpush.bf16.msra.mxu0 %v1311
    %1447 = vmatmul.bf16.gmra.mxu0 %v1043
    %v1448 = vpop.f32.mrf.mxu0
    %v1449 = vadd.f32 %v1111, %v1448
    %v1450 = vpop.f32.mrf.mxu0
    %1451 = vdwg.mxu0
    %1452 = vmatpush.bf16.msra.mxu0 %v1371
    %1453 = vmatpush.bf16.msra.mxu0 %v1367
    %1454 = vmatpush.bf16.msra.mxu0 %v1363
    %1455 = vmatpush.bf16.msra.mxu0 %v1359
    %1456 = vmatpush.bf16.msra.mxu0 %v1355
    %1457 = vmatpush.bf16.msra.mxu0 %v1351
    %1458 = vmatpush.bf16.msra.mxu0 %v1347
    %1459 = vmatpush.bf16.msra.mxu0 %v1343
    %1460 = vmatmul.bf16.gmra.mxu0 %v1044
    %v1461 = vpop.f32.mrf.mxu0
    %v1462 = vadd.f32 %v1449, %v1461
    %v1463 = vpop.f32.mrf.mxu0
    %1464 = vdwg.mxu0
    %1465 = vmatpush.bf16.msra.mxu0 %v1340
    %1466 = vmatpush.bf16.msra.mxu0 %v1336
    %1467 = vmatpush.bf16.msra.mxu0 %v1332
    %1468 = vmatpush.bf16.msra.mxu0 %v1328
    %1469 = vmatpush.bf16.msra.mxu0 %v1324
    %1470 = vmatpush.bf16.msra.mxu0 %v1320
    %1471 = vmatpush.bf16.msra.mxu0 %v1316
    %1472 = vmatpush.bf16.msra.mxu0 %v1312
    %1473 = vmatmul.bf16.gmra.mxu0 %v1043
    %v1474 = vpop.f32.mrf.mxu0
    %v1475 = vadd.f32 %v1112, %v1474
    %v1476 = vpop.f32.mrf.mxu0
    %1477 = vdwg.mxu0
    %1478 = vmatpush.bf16.msra.mxu0 %v1372
    %1479 = vmatpush.bf16.msra.mxu0 %v1368
    %1480 = vmatpush.bf16.msra.mxu0 %v1364
    %1481 = vmatpush.bf16.msra.mxu0 %v1360
    %1482 = vmatpush.bf16.msra.mxu0 %v1356
    %1483 = vmatpush.bf16.msra.mxu0 %v1352
    %1484 = vmatpush.bf16.msra.mxu0 %v1348
    %1485 = vmatpush.bf16.msra.mxu0 %v1344
    %1486 = vmatmul.bf16.gmra.mxu0 %v1044
    %v1487 = vpop.f32.mrf.mxu0
    %v1488 = vadd.f32 %v1475, %v1487
    %v1489 = vpop.f32.mrf.mxu0
    %1490 = vdwg.mxu0
    %1491 = vmatpush.bf16.msra.mxu0 %v1341
    %1492 = vmatpush.bf16.msra.mxu0 %v1337
    %1493 = vmatpush.bf16.msra.mxu0 %v1333
    %1494 = vmatpush.bf16.msra.mxu0 %v1329
    %1495 = vmatpush.bf16.msra.mxu0 %v1325
    %1496 = vmatpush.bf16.msra.mxu0 %v1321
    %1497 = vmatpush.bf16.msra.mxu0 %v1317
    %1498 = vmatpush.bf16.msra.mxu0 %v1313
    %1499 = vmatmul.bf16.gmra.mxu0 %v1043
    %v1500 = vpop.f32.mrf.mxu0
    %v1501 = vadd.f32 %v1113, %v1500
    %v1502 = vpop.f32.mrf.mxu0
    %1503 = vdwg.mxu0
    %1504 = vmatpush.bf16.msra.mxu0 %v1373
    %1505 = vmatpush.bf16.msra.mxu0 %v1369
    %1506 = vmatpush.bf16.msra.mxu0 %v1365
    %1507 = vmatpush.bf16.msra.mxu0 %v1361
    %1508 = vmatpush.bf16.msra.mxu0 %v1357
    %1509 = vmatpush.bf16.msra.mxu0 %v1353
    %1510 = vmatpush.bf16.msra.mxu0 %v1349
    %1511 = vmatpush.bf16.msra.mxu0 %v1345
    %1512 = vmatmul.bf16.gmra.mxu0 %v1044
    %v1513 = vpop.f32.mrf.mxu0
    %v1514 = vadd.f32 %v1501, %v1513
    %v1515 = vpop.f32.mrf.mxu0
    %1516 = vdwg.mxu0
    %1517 = vmatpush.bf16.msra.mxu0 %v1342
    %1518 = vmatpush.bf16.msra.mxu0 %v1338
    %1519 = vmatpush.bf16.msra.mxu0 %v1334
    %1520 = vmatpush.bf16.msra.mxu0 %v1330
    %1521 = vmatpush.bf16.msra.mxu0 %v1326
    %1522 = vmatpush.bf16.msra.mxu0 %v1322
    %1523 = vmatpush.bf16.msra.mxu0 %v1318
    %1524 = vmatpush.bf16.msra.mxu0 %v1314
    %1525 = vmatmul.bf16.gmra.mxu0 %v1043
    %v1526 = vpop.f32.mrf.mxu0
    %v1527 = vadd.f32 %v1114, %v1526
    %v1528 = vpop.f32.mrf.mxu0
    %1529 = vdwg.mxu0
    %1530 = vmatpush.bf16.msra.mxu0 %v1374
    %1531 = vmatpush.bf16.msra.mxu0 %v1370
    %1532 = vmatpush.bf16.msra.mxu0 %v1366
    %1533 = vmatpush.bf16.msra.mxu0 %v1362
    %1534 = vmatpush.bf16.msra.mxu0 %v1358
    %1535 = vmatpush.bf16.msra.mxu0 %v1354
    %1536 = vmatpush.bf16.msra.mxu0 %v1350
    %1537 = vmatpush.bf16.msra.mxu0 %v1346
    %1538 = vmatmul.bf16.gmra.mxu0 %v1044
    %v1539 = vpop.f32.mrf.mxu0
    %v1540 = vadd.f32 %v1527, %v1539
    %v1541 = vpop.f32.mrf.mxu0
    %1542 = vdwg.mxu0
    %v1543 = vmax.f32 %v1462, 0.0
    %v1544 = vmax.f32 %v1488, 0.0
    %v1545 = vmax.f32 %v1514, 0.0
    %v1546 = vmax.f32 %v1540, 0.0
    %v1547 = vpack.c.bf16 %v1543, %v1543
    %v1548 = vpack.c.bf16 %v1544, %v1544
    %v1549 = vpack.c.bf16 %v1545, %v1545
    %v1550 = vpack.c.bf16 %v1546, %v1546
    %v1551 = vld [vmem:[#allocation14] sm:$0xff]
    %v1552 = vld [vmem:[#allocation14 + $0x8] sm:$0xff]
    %v1553 = vld [vmem:[#allocation14 + $0x10] sm:$0xff]
    %v1554 = vld [vmem:[#allocation14 + $0x18] sm:$0xff]
    %v1555 = vld [vmem:[#allocation14 + $0x20] sm:$0xff]
    %v1556 = vld [vmem:[#allocation14 + $0x28] sm:$0xff]
    %v1557 = vld [vmem:[#allocation14 + $0x30] sm:$0xff]
    %v1558 = vld [vmem:[#allocation14 + $0x38] sm:$0xff]
    %v1559 = vld [vmem:[#allocation14 + $0x40] sm:$0xff]
    %v1560 = vld [vmem:[#allocation14 + $0x48] sm:$0xff]
    %v1561 = vld [vmem:[#allocation14 + $0x50] sm:$0xff]
    %v1562 = vld [vmem:[#allocation14 + $0x58] sm:$0xff]
    %v1563 = vld [vmem:[#allocation14 + $0x60] sm:$0xff]
    %v1564 = vld [vmem:[#allocation14 + $0x68] sm:$0xff]
    %v1565 = vld [vmem:[#allocation14 + $0x70] sm:$0xff]
    %v1566 = vld [vmem:[#allocation14 + $0x78] sm:$0xff]
    %v1567 = vld [vmem:[#allocation14 + $0x80] sm:$0xff]
    %v1568 = vld [vmem:[#allocation14 + $0x88] sm:$0xff]
    %v1569 = vld [vmem:[#allocation14 + $0x90] sm:$0xff]
    %v1570 = vld [vmem:[#allocation14 + $0x98] sm:$0xff]
    %v1571 = vld [vmem:[#allocation14 + $0xa0] sm:$0xff]
    %v1572 = vld [vmem:[#allocation14 + $0xa8] sm:$0xff]
    %v1573 = vld [vmem:[#allocation14 + $0xb0] sm:$0xff]
    %v1574 = vld [vmem:[#allocation14 + $0xb8] sm:$0xff]
    %v1575 = vld [vmem:[#allocation14 + $0xc0] sm:$0xff]
    %v1576 = vld [vmem:[#allocation14 + $0xc8] sm:$0xff]
    %v1577 = vld [vmem:[#allocation14 + $0xd0] sm:$0xff]
    %v1578 = vld [vmem:[#allocation14 + $0xd8] sm:$0xff]
    %v1579 = vld [vmem:[#allocation14 + $0xe0] sm:$0xff]
    %v1580 = vld [vmem:[#allocation14 + $0xe8] sm:$0xff]
    %v1581 = vld [vmem:[#allocation14 + $0xf0] sm:$0xff]
    %v1582 = vld [vmem:[#allocation14 + $0xf8] sm:$0xff]
    %v1583 = vld [vmem:[#allocation14 + $0x100] sm:$0xff]
    %v1584 = vld [vmem:[#allocation14 + $0x108] sm:$0xff]
    %v1585 = vld [vmem:[#allocation14 + $0x110] sm:$0xff]
    %v1586 = vld [vmem:[#allocation14 + $0x118] sm:$0xff]
    %v1587 = vld [vmem:[#allocation14 + $0x120] sm:$0xff]
    %v1588 = vld [vmem:[#allocation14 + $0x128] sm:$0xff]
    %v1589 = vld [vmem:[#allocation14 + $0x130] sm:$0xff]
    %v1590 = vld [vmem:[#allocation14 + $0x138] sm:$0xff]
    %v1591 = vld [vmem:[#allocation14 + $0x140] sm:$0xff]
    %v1592 = vld [vmem:[#allocation14 + $0x148] sm:$0xff]
    %v1593 = vld [vmem:[#allocation14 + $0x150] sm:$0xff]
    %v1594 = vld [vmem:[#allocation14 + $0x158] sm:$0xff]
    %v1595 = vld [vmem:[#allocation14 + $0x160] sm:$0xff]
    %v1596 = vld [vmem:[#allocation14 + $0x168] sm:$0xff]
    %v1597 = vld [vmem:[#allocation14 + $0x170] sm:$0xff]
    %v1598 = vld [vmem:[#allocation14 + $0x178] sm:$0xff]
    %v1599 = vld [vmem:[#allocation14 + $0x180] sm:$0xff]
    %v1600 = vld [vmem:[#allocation14 + $0x188] sm:$0xff]
    %v1601 = vld [vmem:[#allocation14 + $0x190] sm:$0xff]
    %v1602 = vld [vmem:[#allocation14 + $0x198] sm:$0xff]
    %v1603 = vld [vmem:[#allocation14 + $0x1a0] sm:$0xff]
    %v1604 = vld [vmem:[#allocation14 + $0x1a8] sm:$0xff]
    %v1605 = vld [vmem:[#allocation14 + $0x1b0] sm:$0xff]
    %v1606 = vld [vmem:[#allocation14 + $0x1b8] sm:$0xff]
    %v1607 = vld [vmem:[#allocation14 + $0x1c0] sm:$0xff]
    %v1608 = vld [vmem:[#allocation14 + $0x1c8] sm:$0xff]
    %v1609 = vld [vmem:[#allocation14 + $0x1d0] sm:$0xff]
    %v1610 = vld [vmem:[#allocation14 + $0x1d8] sm:$0xff]
    %v1611 = vld [vmem:[#allocation14 + $0x1e0] sm:$0xff]
    %v1612 = vld [vmem:[#allocation14 + $0x1e8] sm:$0xff]
    %v1613 = vld [vmem:[#allocation14 + $0x1f0] sm:$0xff]
    %v1614 = vld [vmem:[#allocation14 + $0x1f8] sm:$0xff]
    %v1615 = vld [vmem:[#allocation14 + $0x200] sm:$0xff]
    %v1616 = vld [vmem:[#allocation14 + $0x208] sm:$0xff]
    %v1617 = vld [vmem:[#allocation14 + $0x210] sm:$0xff]
    %v1618 = vld [vmem:[#allocation14 + $0x218] sm:$0xff]
    %v1619 = vld [vmem:[#allocation14 + $0x220] sm:$0xff]
    %v1620 = vld [vmem:[#allocation14 + $0x228] sm:$0xff]
    %v1621 = vld [vmem:[#allocation14 + $0x230] sm:$0xff]
    %v1622 = vld [vmem:[#allocation14 + $0x238] sm:$0xff]
    %v1623 = vld [vmem:[#allocation14 + $0x240] sm:$0xff]
    %v1624 = vld [vmem:[#allocation14 + $0x248] sm:$0xff]
    %v1625 = vld [vmem:[#allocation14 + $0x250] sm:$0xff]
    %v1626 = vld [vmem:[#allocation14 + $0x258] sm:$0xff]
    %v1627 = vld [vmem:[#allocation14 + $0x260] sm:$0xff]
    %v1628 = vld [vmem:[#allocation14 + $0x268] sm:$0xff]
    %v1629 = vld [vmem:[#allocation14 + $0x270] sm:$0xff]
    %v1630 = vld [vmem:[#allocation14 + $0x278] sm:$0xff]
    %v1631 = vld [vmem:[#allocation14 + $0x280] sm:$0xff]
    %v1632 = vld [vmem:[#allocation14 + $0x288] sm:$0xff]
    %v1633 = vld [vmem:[#allocation14 + $0x290] sm:$0xff]
    %v1634 = vld [vmem:[#allocation14 + $0x298] sm:$0xff]
    %v1635 = vld [vmem:[#allocation14 + $0x2a0] sm:$0xff]
    %v1636 = vld [vmem:[#allocation14 + $0x2a8] sm:$0xff]
    %v1637 = vld [vmem:[#allocation14 + $0x2b0] sm:$0xff]
    %v1638 = vld [vmem:[#allocation14 + $0x2b8] sm:$0xff]
    %v1639 = vld [vmem:[#allocation14 + $0x2c0] sm:$0xff]
    %v1640 = vld [vmem:[#allocation14 + $0x2c8] sm:$0xff]
    %v1641 = vld [vmem:[#allocation14 + $0x2d0] sm:$0xff]
    %v1642 = vld [vmem:[#allocation14 + $0x2d8] sm:$0xff]
    %v1643 = vld [vmem:[#allocation14 + $0x2e0] sm:$0xff]
    %v1644 = vld [vmem:[#allocation14 + $0x2e8] sm:$0xff]
    %v1645 = vld [vmem:[#allocation14 + $0x2f0] sm:$0xff]
    %v1646 = vld [vmem:[#allocation14 + $0x2f8] sm:$0xff]
    %v1647 = vld [vmem:[#allocation14 + $0x300] sm:$0xff]
    %v1648 = vld [vmem:[#allocation14 + $0x308] sm:$0xff]
    %v1649 = vld [vmem:[#allocation14 + $0x310] sm:$0xff]
    %v1650 = vld [vmem:[#allocation14 + $0x318] sm:$0xff]
    %v1651 = vld [vmem:[#allocation14 + $0x320] sm:$0xff]
    %v1652 = vld [vmem:[#allocation14 + $0x328] sm:$0xff]
    %v1653 = vld [vmem:[#allocation14 + $0x330] sm:$0xff]
    %v1654 = vld [vmem:[#allocation14 + $0x338] sm:$0xff]
    %v1655 = vld [vmem:[#allocation14 + $0x340] sm:$0xff]
    %v1656 = vld [vmem:[#allocation14 + $0x348] sm:$0xff]
    %v1657 = vld [vmem:[#allocation14 + $0x350] sm:$0xff]
    %v1658 = vld [vmem:[#allocation14 + $0x358] sm:$0xff]
    %v1659 = vld [vmem:[#allocation14 + $0x360] sm:$0xff]
    %v1660 = vld [vmem:[#allocation14 + $0x368] sm:$0xff]
    %v1661 = vld [vmem:[#allocation14 + $0x370] sm:$0xff]
    %v1662 = vld [vmem:[#allocation14 + $0x378] sm:$0xff]
    %v1663 = vld [vmem:[#allocation14 + $0x380] sm:$0xff]
    %v1664 = vld [vmem:[#allocation14 + $0x388] sm:$0xff]
    %v1665 = vld [vmem:[#allocation14 + $0x390] sm:$0xff]
    %v1666 = vld [vmem:[#allocation14 + $0x398] sm:$0xff]
    %v1667 = vld [vmem:[#allocation14 + $0x3a0] sm:$0xff]
    %v1668 = vld [vmem:[#allocation14 + $0x3a8] sm:$0xff]
    %v1669 = vld [vmem:[#allocation14 + $0x3b0] sm:$0xff]
    %v1670 = vld [vmem:[#allocation14 + $0x3b8] sm:$0xff]
    %v1671 = vld [vmem:[#allocation14 + $0x3c0] sm:$0xff]
    %v1672 = vld [vmem:[#allocation14 + $0x3c8] sm:$0xff]
    %v1673 = vld [vmem:[#allocation14 + $0x3d0] sm:$0xff]
    %v1674 = vld [vmem:[#allocation14 + $0x3d8] sm:$0xff]
    %v1675 = vld [vmem:[#allocation14 + $0x3e0] sm:$0xff]
    %v1676 = vld [vmem:[#allocation14 + $0x3e8] sm:$0xff]
    %v1677 = vld [vmem:[#allocation14 + $0x3f0] sm:$0xff]
    %v1678 = vld [vmem:[#allocation14 + $0x3f8] sm:$0xff]
    %v1679 = vld [vmem:[#allocation14 + $0x400] sm:$0xff]
    %v1680 = vld [vmem:[#allocation14 + $0x408] sm:$0xff]
    %v1681 = vld [vmem:[#allocation14 + $0x410] sm:$0xff]
    %v1682 = vld [vmem:[#allocation14 + $0x418] sm:$0xff]
    %v1683 = vld [vmem:[#allocation14 + $0x420] sm:$0xff]
    %v1684 = vld [vmem:[#allocation14 + $0x428] sm:$0xff]
    %v1685 = vld [vmem:[#allocation14 + $0x430] sm:$0xff]
    %v1686 = vld [vmem:[#allocation14 + $0x438] sm:$0xff]
    %v1687 = vld [vmem:[#allocation14 + $0x440] sm:$0xff]
    %v1688 = vld [vmem:[#allocation14 + $0x448] sm:$0xff]
    %v1689 = vld [vmem:[#allocation14 + $0x450] sm:$0xff]
    %v1690 = vld [vmem:[#allocation14 + $0x458] sm:$0xff]
    %v1691 = vld [vmem:[#allocation14 + $0x460] sm:$0xff]
    %v1692 = vld [vmem:[#allocation14 + $0x468] sm:$0xff]
    %v1693 = vld [vmem:[#allocation14 + $0x470] sm:$0xff]
    %v1694 = vld [vmem:[#allocation14 + $0x478] sm:$0xff]
    %v1695 = vld [vmem:[#allocation14 + $0x480] sm:$0xff]
    %v1696 = vld [vmem:[#allocation14 + $0x488] sm:$0xff]
    %v1697 = vld [vmem:[#allocation14 + $0x490] sm:$0xff]
    %v1698 = vld [vmem:[#allocation14 + $0x498] sm:$0xff]
    %v1699 = vld [vmem:[#allocation14 + $0x4a0] sm:$0xff]
    %v1700 = vld [vmem:[#allocation14 + $0x4a8] sm:$0xff]
    %v1701 = vld [vmem:[#allocation14 + $0x4b0] sm:$0xff]
    %v1702 = vld [vmem:[#allocation14 + $0x4b8] sm:$0xff]
    %v1703 = vld [vmem:[#allocation14 + $0x4c0] sm:$0xff]
    %v1704 = vld [vmem:[#allocation14 + $0x4c8] sm:$0xff]
    %v1705 = vld [vmem:[#allocation14 + $0x4d0] sm:$0xff]
    %v1706 = vld [vmem:[#allocation14 + $0x4d8] sm:$0xff]
    %v1707 = vld [vmem:[#allocation14 + $0x4e0] sm:$0xff]
    %v1708 = vld [vmem:[#allocation14 + $0x4e8] sm:$0xff]
    %v1709 = vld [vmem:[#allocation14 + $0x4f0] sm:$0xff]
    %v1710 = vld [vmem:[#allocation14 + $0x4f8] sm:$0xff]
    %v1711 = vld [vmem:[#allocation14 + $0x500] sm:$0xff]
    %v1712 = vld [vmem:[#allocation14 + $0x508] sm:$0xff]
    %v1713 = vld [vmem:[#allocation14 + $0x510] sm:$0xff]
    %v1714 = vld [vmem:[#allocation14 + $0x518] sm:$0xff]
    %v1715 = vld [vmem:[#allocation14 + $0x520] sm:$0xff]
    %v1716 = vld [vmem:[#allocation14 + $0x528] sm:$0xff]
    %v1717 = vld [vmem:[#allocation14 + $0x530] sm:$0xff]
    %v1718 = vld [vmem:[#allocation14 + $0x538] sm:$0xff]
    %v1719 = vld [vmem:[#allocation14 + $0x540] sm:$0xff]
    %v1720 = vld [vmem:[#allocation14 + $0x548] sm:$0xff]
    %v1721 = vld [vmem:[#allocation14 + $0x550] sm:$0xff]
    %v1722 = vld [vmem:[#allocation14 + $0x558] sm:$0xff]
    %v1723 = vld [vmem:[#allocation14 + $0x560] sm:$0xff]
    %v1724 = vld [vmem:[#allocation14 + $0x568] sm:$0xff]
    %v1725 = vld [vmem:[#allocation14 + $0x570] sm:$0xff]
    %v1726 = vld [vmem:[#allocation14 + $0x578] sm:$0xff]
    %v1727 = vld [vmem:[#allocation14 + $0x580] sm:$0xff]
    %v1728 = vld [vmem:[#allocation14 + $0x588] sm:$0xff]
    %v1729 = vld [vmem:[#allocation14 + $0x590] sm:$0xff]
    %v1730 = vld [vmem:[#allocation14 + $0x598] sm:$0xff]
    %v1731 = vld [vmem:[#allocation14 + $0x5a0] sm:$0xff]
    %v1732 = vld [vmem:[#allocation14 + $0x5a8] sm:$0xff]
    %v1733 = vld [vmem:[#allocation14 + $0x5b0] sm:$0xff]
    %v1734 = vld [vmem:[#allocation14 + $0x5b8] sm:$0xff]
    %v1735 = vld [vmem:[#allocation14 + $0x5c0] sm:$0xff]
    %v1736 = vld [vmem:[#allocation14 + $0x5c8] sm:$0xff]
    %v1737 = vld [vmem:[#allocation14 + $0x5d0] sm:$0xff]
    %v1738 = vld [vmem:[#allocation14 + $0x5d8] sm:$0xff]
    %v1739 = vld [vmem:[#allocation14 + $0x5e0] sm:$0xff]
    %v1740 = vld [vmem:[#allocation14 + $0x5e8] sm:$0xff]
    %v1741 = vld [vmem:[#allocation14 + $0x5f0] sm:$0xff]
    %v1742 = vld [vmem:[#allocation14 + $0x5f8] sm:$0xff]
    %v1743 = vld [vmem:[#allocation14 + $0x600] sm:$0xff]
    %v1744 = vld [vmem:[#allocation14 + $0x608] sm:$0xff]
    %v1745 = vld [vmem:[#allocation14 + $0x610] sm:$0xff]
    %v1746 = vld [vmem:[#allocation14 + $0x618] sm:$0xff]
    %v1747 = vld [vmem:[#allocation14 + $0x620] sm:$0xff]
    %v1748 = vld [vmem:[#allocation14 + $0x628] sm:$0xff]
    %v1749 = vld [vmem:[#allocation14 + $0x630] sm:$0xff]
    %v1750 = vld [vmem:[#allocation14 + $0x638] sm:$0xff]
    %v1751 = vld [vmem:[#allocation14 + $0x640] sm:$0xff]
    %v1752 = vld [vmem:[#allocation14 + $0x648] sm:$0xff]
    %v1753 = vld [vmem:[#allocation14 + $0x650] sm:$0xff]
    %v1754 = vld [vmem:[#allocation14 + $0x658] sm:$0xff]
    %v1755 = vld [vmem:[#allocation14 + $0x660] sm:$0xff]
    %v1756 = vld [vmem:[#allocation14 + $0x668] sm:$0xff]
    %v1757 = vld [vmem:[#allocation14 + $0x670] sm:$0xff]
    %v1758 = vld [vmem:[#allocation14 + $0x678] sm:$0xff]
    %v1759 = vld [vmem:[#allocation14 + $0x680] sm:$0xff]
    %v1760 = vld [vmem:[#allocation14 + $0x688] sm:$0xff]
    %v1761 = vld [vmem:[#allocation14 + $0x690] sm:$0xff]
    %v1762 = vld [vmem:[#allocation14 + $0x698] sm:$0xff]
    %v1763 = vld [vmem:[#allocation14 + $0x6a0] sm:$0xff]
    %v1764 = vld [vmem:[#allocation14 + $0x6a8] sm:$0xff]
    %v1765 = vld [vmem:[#allocation14 + $0x6b0] sm:$0xff]
    %v1766 = vld [vmem:[#allocation14 + $0x6b8] sm:$0xff]
    %v1767 = vld [vmem:[#allocation14 + $0x6c0] sm:$0xff]
    %v1768 = vld [vmem:[#allocation14 + $0x6c8] sm:$0xff]
    %v1769 = vld [vmem:[#allocation14 + $0x6d0] sm:$0xff]
    %v1770 = vld [vmem:[#allocation14 + $0x6d8] sm:$0xff]
    %v1771 = vld [vmem:[#allocation14 + $0x6e0] sm:$0xff]
    %v1772 = vld [vmem:[#allocation14 + $0x6e8] sm:$0xff]
    %v1773 = vld [vmem:[#allocation14 + $0x6f0] sm:$0xff]
    %v1774 = vld [vmem:[#allocation14 + $0x6f8] sm:$0xff]
    %v1775 = vld [vmem:[#allocation14 + $0x700] sm:$0xff]
    %v1776 = vld [vmem:[#allocation14 + $0x708] sm:$0xff]
    %v1777 = vld [vmem:[#allocation14 + $0x710] sm:$0xff]
    %v1778 = vld [vmem:[#allocation14 + $0x718] sm:$0xff]
    %v1779 = vld [vmem:[#allocation14 + $0x720] sm:$0xff]
    %v1780 = vld [vmem:[#allocation14 + $0x728] sm:$0xff]
    %v1781 = vld [vmem:[#allocation14 + $0x730] sm:$0xff]
    %v1782 = vld [vmem:[#allocation14 + $0x738] sm:$0xff]
    %v1783 = vld [vmem:[#allocation14 + $0x740] sm:$0xff]
    %v1784 = vld [vmem:[#allocation14 + $0x748] sm:$0xff]
    %v1785 = vld [vmem:[#allocation14 + $0x750] sm:$0xff]
    %v1786 = vld [vmem:[#allocation14 + $0x758] sm:$0xff]
    %v1787 = vld [vmem:[#allocation14 + $0x760] sm:$0xff]
    %v1788 = vld [vmem:[#allocation14 + $0x768] sm:$0xff]
    %v1789 = vld [vmem:[#allocation14 + $0x770] sm:$0xff]
    %v1790 = vld [vmem:[#allocation14 + $0x778] sm:$0xff]
    %v1791 = vld [vmem:[#allocation14 + $0x780] sm:$0xff]
    %v1792 = vld [vmem:[#allocation14 + $0x788] sm:$0xff]
    %v1793 = vld [vmem:[#allocation14 + $0x790] sm:$0xff]
    %v1794 = vld [vmem:[#allocation14 + $0x798] sm:$0xff]
    %v1795 = vld [vmem:[#allocation14 + $0x7a0] sm:$0xff]
    %v1796 = vld [vmem:[#allocation14 + $0x7a8] sm:$0xff]
    %v1797 = vld [vmem:[#allocation14 + $0x7b0] sm:$0xff]
    %v1798 = vld [vmem:[#allocation14 + $0x7b8] sm:$0xff]
    %v1799 = vld [vmem:[#allocation14 + $0x7c0] sm:$0xff]
    %v1800 = vld [vmem:[#allocation14 + $0x7c8] sm:$0xff]
    %v1801 = vld [vmem:[#allocation14 + $0x7d0] sm:$0xff]
    %v1802 = vld [vmem:[#allocation14 + $0x7d8] sm:$0xff]
    %v1803 = vld [vmem:[#allocation14 + $0x7e0] sm:$0xff]
    %v1804 = vld [vmem:[#allocation14 + $0x7e8] sm:$0xff]
    %v1805 = vld [vmem:[#allocation14 + $0x7f0] sm:$0xff]
    %v1806 = vld [vmem:[#allocation14 + $0x7f8] sm:$0xff]
    %v1807 = vld [vmem:[#allocation14 + $0x800] sm:$0xff]
    %v1808 = vld [vmem:[#allocation14 + $0x808] sm:$0xff]
    %v1809 = vld [vmem:[#allocation14 + $0x810] sm:$0xff]
    %v1810 = vld [vmem:[#allocation14 + $0x818] sm:$0xff]
    %v1811 = vld [vmem:[#allocation14 + $0x820] sm:$0xff]
    %v1812 = vld [vmem:[#allocation14 + $0x828] sm:$0xff]
    %v1813 = vld [vmem:[#allocation14 + $0x830] sm:$0xff]
    %v1814 = vld [vmem:[#allocation14 + $0x838] sm:$0xff]
    %v1815 = vld [vmem:[#allocation14 + $0x840] sm:$0xff]
    %v1816 = vld [vmem:[#allocation14 + $0x848] sm:$0xff]
    %v1817 = vld [vmem:[#allocation14 + $0x850] sm:$0xff]
    %v1818 = vld [vmem:[#allocation14 + $0x858] sm:$0xff]
    %v1819 = vld [vmem:[#allocation14 + $0x860] sm:$0xff]
    %v1820 = vld [vmem:[#allocation14 + $0x868] sm:$0xff]
    %v1821 = vld [vmem:[#allocation14 + $0x870] sm:$0xff]
    %v1822 = vld [vmem:[#allocation14 + $0x878] sm:$0xff]
    %v1823 = vld [vmem:[#allocation14 + $0x880] sm:$0xff]
    %v1824 = vld [vmem:[#allocation14 + $0x888] sm:$0xff]
    %v1825 = vld [vmem:[#allocation14 + $0x890] sm:$0xff]
    %v1826 = vld [vmem:[#allocation14 + $0x898] sm:$0xff]
    %v1827 = vld [vmem:[#allocation14 + $0x8a0] sm:$0xff]
    %v1828 = vld [vmem:[#allocation14 + $0x8a8] sm:$0xff]
    %v1829 = vld [vmem:[#allocation14 + $0x8b0] sm:$0xff]
    %v1830 = vld [vmem:[#allocation14 + $0x8b8] sm:$0xff]
    %v1831 = vld [vmem:[#allocation14 + $0x8c0] sm:$0xff]
    %v1832 = vld [vmem:[#allocation14 + $0x8c8] sm:$0xff]
    %v1833 = vld [vmem:[#allocation14 + $0x8d0] sm:$0xff]
    %v1834 = vld [vmem:[#allocation14 + $0x8d8] sm:$0xff]
    %v1835 = vld [vmem:[#allocation14 + $0x8e0] sm:$0xff]
    %v1836 = vld [vmem:[#allocation14 + $0x8e8] sm:$0xff]
    %v1837 = vld [vmem:[#allocation14 + $0x8f0] sm:$0xff]
    %v1838 = vld [vmem:[#allocation14 + $0x8f8] sm:$0xff]
    %v1839 = vld [vmem:[#allocation14 + $0x900] sm:$0xff]
    %v1840 = vld [vmem:[#allocation14 + $0x908] sm:$0xff]
    %v1841 = vld [vmem:[#allocation14 + $0x910] sm:$0xff]
    %v1842 = vld [vmem:[#allocation14 + $0x918] sm:$0xff]
    %v1843 = vld [vmem:[#allocation14 + $0x920] sm:$0xff]
    %v1844 = vld [vmem:[#allocation14 + $0x928] sm:$0xff]
    %v1845 = vld [vmem:[#allocation14 + $0x930] sm:$0xff]
    %v1846 = vld [vmem:[#allocation14 + $0x938] sm:$0xff]
    %v1847 = vld [vmem:[#allocation14 + $0x940] sm:$0xff]
    %v1848 = vld [vmem:[#allocation14 + $0x948] sm:$0xff]
    %v1849 = vld [vmem:[#allocation14 + $0x950] sm:$0xff]
    %v1850 = vld [vmem:[#allocation14 + $0x958] sm:$0xff]
    %v1851 = vld [vmem:[#allocation14 + $0x960] sm:$0xff]
    %v1852 = vld [vmem:[#allocation14 + $0x968] sm:$0xff]
    %v1853 = vld [vmem:[#allocation14 + $0x970] sm:$0xff]
    %v1854 = vld [vmem:[#allocation14 + $0x978] sm:$0xff]
    %v1855 = vld [vmem:[#allocation14 + $0x980] sm:$0xff]
    %v1856 = vld [vmem:[#allocation14 + $0x988] sm:$0xff]
    %v1857 = vld [vmem:[#allocation14 + $0x990] sm:$0xff]
    %v1858 = vld [vmem:[#allocation14 + $0x998] sm:$0xff]
    %v1859 = vld [vmem:[#allocation14 + $0x9a0] sm:$0xff]
    %v1860 = vld [vmem:[#allocation14 + $0x9a8] sm:$0xff]
    %v1861 = vld [vmem:[#allocation14 + $0x9b0] sm:$0xff]
    %v1862 = vld [vmem:[#allocation14 + $0x9b8] sm:$0xff]
    %v1863 = vld [vmem:[#allocation14 + $0x9c0] sm:$0xff]
    %v1864 = vld [vmem:[#allocation14 + $0x9c8] sm:$0xff]
    %v1865 = vld [vmem:[#allocation14 + $0x9d0] sm:$0xff]
    %v1866 = vld [vmem:[#allocation14 + $0x9d8] sm:$0xff]
    %v1867 = vld [vmem:[#allocation14 + $0x9e0] sm:$0xff]
    %v1868 = vld [vmem:[#allocation14 + $0x9e8] sm:$0xff]
    %v1869 = vld [vmem:[#allocation14 + $0x9f0] sm:$0xff]
    %v1870 = vld [vmem:[#allocation14 + $0x9f8] sm:$0xff]
    %v1871 = vld [vmem:[#allocation14 + $0xa00] sm:$0xff]
    %v1872 = vld [vmem:[#allocation14 + $0xa08] sm:$0xff]
    %v1873 = vld [vmem:[#allocation14 + $0xa10] sm:$0xff]
    %v1874 = vld [vmem:[#allocation14 + $0xa18] sm:$0xff]
    %v1875 = vld [vmem:[#allocation14 + $0xa20] sm:$0xff]
    %v1876 = vld [vmem:[#allocation14 + $0xa28] sm:$0xff]
    %v1877 = vld [vmem:[#allocation14 + $0xa30] sm:$0xff]
    %v1878 = vld [vmem:[#allocation14 + $0xa38] sm:$0xff]
    %v1879 = vld [vmem:[#allocation14 + $0xa40] sm:$0xff]
    %v1880 = vld [vmem:[#allocation14 + $0xa48] sm:$0xff]
    %v1881 = vld [vmem:[#allocation14 + $0xa50] sm:$0xff]
    %v1882 = vld [vmem:[#allocation14 + $0xa58] sm:$0xff]
    %v1883 = vld [vmem:[#allocation14 + $0xa60] sm:$0xff]
    %v1884 = vld [vmem:[#allocation14 + $0xa68] sm:$0xff]
    %v1885 = vld [vmem:[#allocation14 + $0xa70] sm:$0xff]
    %v1886 = vld [vmem:[#allocation14 + $0xa78] sm:$0xff]
    %v1887 = vld [vmem:[#allocation14 + $0xa80] sm:$0xff]
    %v1888 = vld [vmem:[#allocation14 + $0xa88] sm:$0xff]
    %v1889 = vld [vmem:[#allocation14 + $0xa90] sm:$0xff]
    %v1890 = vld [vmem:[#allocation14 + $0xa98] sm:$0xff]
    %v1891 = vld [vmem:[#allocation14 + $0xaa0] sm:$0xff]
    %v1892 = vld [vmem:[#allocation14 + $0xaa8] sm:$0xff]
    %v1893 = vld [vmem:[#allocation14 + $0xab0] sm:$0xff]
    %v1894 = vld [vmem:[#allocation14 + $0xab8] sm:$0xff]
    %v1895 = vld [vmem:[#allocation14 + $0xac0] sm:$0xff]
    %v1896 = vld [vmem:[#allocation14 + $0xac8] sm:$0xff]
    %v1897 = vld [vmem:[#allocation14 + $0xad0] sm:$0xff]
    %v1898 = vld [vmem:[#allocation14 + $0xad8] sm:$0xff]
    %v1899 = vld [vmem:[#allocation14 + $0xae0] sm:$0xff]
    %v1900 = vld [vmem:[#allocation14 + $0xae8] sm:$0xff]
    %v1901 = vld [vmem:[#allocation14 + $0xaf0] sm:$0xff]
    %v1902 = vld [vmem:[#allocation14 + $0xaf8] sm:$0xff]
    %v1903 = vld [vmem:[#allocation14 + $0xb00] sm:$0xff]
    %v1904 = vld [vmem:[#allocation14 + $0xb08] sm:$0xff]
    %v1905 = vld [vmem:[#allocation14 + $0xb10] sm:$0xff]
    %v1906 = vld [vmem:[#allocation14 + $0xb18] sm:$0xff]
    %v1907 = vld [vmem:[#allocation14 + $0xb20] sm:$0xff]
    %v1908 = vld [vmem:[#allocation14 + $0xb28] sm:$0xff]
    %v1909 = vld [vmem:[#allocation14 + $0xb30] sm:$0xff]
    %v1910 = vld [vmem:[#allocation14 + $0xb38] sm:$0xff]
    %v1911 = vld [vmem:[#allocation14 + $0xb40] sm:$0xff]
    %v1912 = vld [vmem:[#allocation14 + $0xb48] sm:$0xff]
    %v1913 = vld [vmem:[#allocation14 + $0xb50] sm:$0xff]
    %v1914 = vld [vmem:[#allocation14 + $0xb58] sm:$0xff]
    %v1915 = vld [vmem:[#allocation14 + $0xb60] sm:$0xff]
    %v1916 = vld [vmem:[#allocation14 + $0xb68] sm:$0xff]
    %v1917 = vld [vmem:[#allocation14 + $0xb70] sm:$0xff]
    %v1918 = vld [vmem:[#allocation14 + $0xb78] sm:$0xff]
    %v1919 = vld [vmem:[#allocation14 + $0xb80] sm:$0xff]
    %v1920 = vld [vmem:[#allocation14 + $0xb88] sm:$0xff]
    %v1921 = vld [vmem:[#allocation14 + $0xb90] sm:$0xff]
    %v1922 = vld [vmem:[#allocation14 + $0xb98] sm:$0xff]
    %v1923 = vld [vmem:[#allocation14 + $0xba0] sm:$0xff]
    %v1924 = vld [vmem:[#allocation14 + $0xba8] sm:$0xff]
    %v1925 = vld [vmem:[#allocation14 + $0xbb0] sm:$0xff]
    %v1926 = vld [vmem:[#allocation14 + $0xbb8] sm:$0xff]
    %v1927 = vld [vmem:[#allocation14 + $0xbc0] sm:$0xff]
    %v1928 = vld [vmem:[#allocation14 + $0xbc8] sm:$0xff]
    %v1929 = vld [vmem:[#allocation14 + $0xbd0] sm:$0xff]
    %v1930 = vld [vmem:[#allocation14 + $0xbd8] sm:$0xff]
    %v1931 = vld [vmem:[#allocation14 + $0xbe0] sm:$0xff]
    %v1932 = vld [vmem:[#allocation14 + $0xbe8] sm:$0xff]
    %v1933 = vld [vmem:[#allocation14 + $0xbf0] sm:$0xff]
    %v1934 = vld [vmem:[#allocation14 + $0xbf8] sm:$0xff]
    %v1935 = vld [vmem:[#allocation14 + $0xc00] sm:$0xff]
    %v1936 = vld [vmem:[#allocation14 + $0xc08] sm:$0xff]
    %v1937 = vld [vmem:[#allocation14 + $0xc10] sm:$0xff]
    %v1938 = vld [vmem:[#allocation14 + $0xc18] sm:$0xff]
    %v1939 = vld [vmem:[#allocation14 + $0xc20] sm:$0xff]
    %v1940 = vld [vmem:[#allocation14 + $0xc28] sm:$0xff]
    %v1941 = vld [vmem:[#allocation14 + $0xc30] sm:$0xff]
    %v1942 = vld [vmem:[#allocation14 + $0xc38] sm:$0xff]
    %v1943 = vld [vmem:[#allocation14 + $0xc40] sm:$0xff]
    %v1944 = vld [vmem:[#allocation14 + $0xc48] sm:$0xff]
    %v1945 = vld [vmem:[#allocation14 + $0xc50] sm:$0xff]
    %v1946 = vld [vmem:[#allocation14 + $0xc58] sm:$0xff]
    %v1947 = vld [vmem:[#allocation14 + $0xc60] sm:$0xff]
    %v1948 = vld [vmem:[#allocation14 + $0xc68] sm:$0xff]
    %v1949 = vld [vmem:[#allocation14 + $0xc70] sm:$0xff]
    %v1950 = vld [vmem:[#allocation14 + $0xc78] sm:$0xff]
    %v1951 = vld [vmem:[#allocation14 + $0xc80] sm:$0xff]
    %v1952 = vld [vmem:[#allocation14 + $0xc88] sm:$0xff]
    %v1953 = vld [vmem:[#allocation14 + $0xc90] sm:$0xff]
    %v1954 = vld [vmem:[#allocation14 + $0xc98] sm:$0xff]
    %v1955 = vld [vmem:[#allocation14 + $0xca0] sm:$0xff]
    %v1956 = vld [vmem:[#allocation14 + $0xca8] sm:$0xff]
    %v1957 = vld [vmem:[#allocation14 + $0xcb0] sm:$0xff]
    %v1958 = vld [vmem:[#allocation14 + $0xcb8] sm:$0xff]
    %v1959 = vld [vmem:[#allocation14 + $0xcc0] sm:$0xff]
    %v1960 = vld [vmem:[#allocation14 + $0xcc8] sm:$0xff]
    %v1961 = vld [vmem:[#allocation14 + $0xcd0] sm:$0xff]
    %v1962 = vld [vmem:[#allocation14 + $0xcd8] sm:$0xff]
    %v1963 = vld [vmem:[#allocation14 + $0xce0] sm:$0xff]
    %v1964 = vld [vmem:[#allocation14 + $0xce8] sm:$0xff]
    %v1965 = vld [vmem:[#allocation14 + $0xcf0] sm:$0xff]
    %v1966 = vld [vmem:[#allocation14 + $0xcf8] sm:$0xff]
    %v1967 = vld [vmem:[#allocation14 + $0xd00] sm:$0xff]
    %v1968 = vld [vmem:[#allocation14 + $0xd08] sm:$0xff]
    %v1969 = vld [vmem:[#allocation14 + $0xd10] sm:$0xff]
    %v1970 = vld [vmem:[#allocation14 + $0xd18] sm:$0xff]
    %v1971 = vld [vmem:[#allocation14 + $0xd20] sm:$0xff]
    %v1972 = vld [vmem:[#allocation14 + $0xd28] sm:$0xff]
    %v1973 = vld [vmem:[#allocation14 + $0xd30] sm:$0xff]
    %v1974 = vld [vmem:[#allocation14 + $0xd38] sm:$0xff]
    %v1975 = vld [vmem:[#allocation14 + $0xd40] sm:$0xff]
    %v1976 = vld [vmem:[#allocation14 + $0xd48] sm:$0xff]
    %v1977 = vld [vmem:[#allocation14 + $0xd50] sm:$0xff]
    %v1978 = vld [vmem:[#allocation14 + $0xd58] sm:$0xff]
    %v1979 = vld [vmem:[#allocation14 + $0xd60] sm:$0xff]
    %v1980 = vld [vmem:[#allocation14 + $0xd68] sm:$0xff]
    %v1981 = vld [vmem:[#allocation14 + $0xd70] sm:$0xff]
    %v1982 = vld [vmem:[#allocation14 + $0xd78] sm:$0xff]
    %v1983 = vld [vmem:[#allocation14 + $0xd80] sm:$0xff]
    %v1984 = vld [vmem:[#allocation14 + $0xd88] sm:$0xff]
    %v1985 = vld [vmem:[#allocation14 + $0xd90] sm:$0xff]
    %v1986 = vld [vmem:[#allocation14 + $0xd98] sm:$0xff]
    %v1987 = vld [vmem:[#allocation14 + $0xda0] sm:$0xff]
    %v1988 = vld [vmem:[#allocation14 + $0xda8] sm:$0xff]
    %v1989 = vld [vmem:[#allocation14 + $0xdb0] sm:$0xff]
    %v1990 = vld [vmem:[#allocation14 + $0xdb8] sm:$0xff]
    %v1991 = vld [vmem:[#allocation14 + $0xdc0] sm:$0xff]
    %v1992 = vld [vmem:[#allocation14 + $0xdc8] sm:$0xff]
    %v1993 = vld [vmem:[#allocation14 + $0xdd0] sm:$0xff]
    %v1994 = vld [vmem:[#allocation14 + $0xdd8] sm:$0xff]
    %v1995 = vld [vmem:[#allocation14 + $0xde0] sm:$0xff]
    %v1996 = vld [vmem:[#allocation14 + $0xde8] sm:$0xff]
    %v1997 = vld [vmem:[#allocation14 + $0xdf0] sm:$0xff]
    %v1998 = vld [vmem:[#allocation14 + $0xdf8] sm:$0xff]
    %v1999 = vld [vmem:[#allocation14 + $0xe00] sm:$0xff]
    %v2000 = vld [vmem:[#allocation14 + $0xe08] sm:$0xff]
    %v2001 = vld [vmem:[#allocation14 + $0xe10] sm:$0xff]
    %v2002 = vld [vmem:[#allocation14 + $0xe18] sm:$0xff]
    %v2003 = vld [vmem:[#allocation14 + $0xe20] sm:$0xff]
    %v2004 = vld [vmem:[#allocation14 + $0xe28] sm:$0xff]
    %v2005 = vld [vmem:[#allocation14 + $0xe30] sm:$0xff]
    %v2006 = vld [vmem:[#allocation14 + $0xe38] sm:$0xff]
    %v2007 = vld [vmem:[#allocation14 + $0xe40] sm:$0xff]
    %v2008 = vld [vmem:[#allocation14 + $0xe48] sm:$0xff]
    %v2009 = vld [vmem:[#allocation14 + $0xe50] sm:$0xff]
    %v2010 = vld [vmem:[#allocation14 + $0xe58] sm:$0xff]
    %v2011 = vld [vmem:[#allocation14 + $0xe60] sm:$0xff]
    %v2012 = vld [vmem:[#allocation14 + $0xe68] sm:$0xff]
    %v2013 = vld [vmem:[#allocation14 + $0xe70] sm:$0xff]
    %v2014 = vld [vmem:[#allocation14 + $0xe78] sm:$0xff]
    %v2015 = vld [vmem:[#allocation14 + $0xe80] sm:$0xff]
    %v2016 = vld [vmem:[#allocation14 + $0xe88] sm:$0xff]
    %v2017 = vld [vmem:[#allocation14 + $0xe90] sm:$0xff]
    %v2018 = vld [vmem:[#allocation14 + $0xe98] sm:$0xff]
    %v2019 = vld [vmem:[#allocation14 + $0xea0] sm:$0xff]
    %v2020 = vld [vmem:[#allocation14 + $0xea8] sm:$0xff]
    %v2021 = vld [vmem:[#allocation14 + $0xeb0] sm:$0xff]
    %v2022 = vld [vmem:[#allocation14 + $0xeb8] sm:$0xff]
    %v2023 = vld [vmem:[#allocation14 + $0xec0] sm:$0xff]
    %v2024 = vld [vmem:[#allocation14 + $0xec8] sm:$0xff]
    %v2025 = vld [vmem:[#allocation14 + $0xed0] sm:$0xff]
    %v2026 = vld [vmem:[#allocation14 + $0xed8] sm:$0xff]
    %v2027 = vld [vmem:[#allocation14 + $0xee0] sm:$0xff]
    %v2028 = vld [vmem:[#allocation14 + $0xee8] sm:$0xff]
    %v2029 = vld [vmem:[#allocation14 + $0xef0] sm:$0xff]
    %v2030 = vld [vmem:[#allocation14 + $0xef8] sm:$0xff]
    %v2031 = vld [vmem:[#allocation14 + $0xf00] sm:$0xff]
    %v2032 = vld [vmem:[#allocation14 + $0xf08] sm:$0xff]
    %v2033 = vld [vmem:[#allocation14 + $0xf10] sm:$0xff]
    %v2034 = vld [vmem:[#allocation14 + $0xf18] sm:$0xff]
    %v2035 = vld [vmem:[#allocation14 + $0xf20] sm:$0xff]
    %v2036 = vld [vmem:[#allocation14 + $0xf28] sm:$0xff]
    %v2037 = vld [vmem:[#allocation14 + $0xf30] sm:$0xff]
    %v2038 = vld [vmem:[#allocation14 + $0xf38] sm:$0xff]
    %v2039 = vld [vmem:[#allocation14 + $0xf40] sm:$0xff]
    %v2040 = vld [vmem:[#allocation14 + $0xf48] sm:$0xff]
    %v2041 = vld [vmem:[#allocation14 + $0xf50] sm:$0xff]
    %v2042 = vld [vmem:[#allocation14 + $0xf58] sm:$0xff]
    %v2043 = vld [vmem:[#allocation14 + $0xf60] sm:$0xff]
    %v2044 = vld [vmem:[#allocation14 + $0xf68] sm:$0xff]
    %v2045 = vld [vmem:[#allocation14 + $0xf70] sm:$0xff]
    %v2046 = vld [vmem:[#allocation14 + $0xf78] sm:$0xff]
    %v2047 = vld [vmem:[#allocation14 + $0xf80] sm:$0xff]
    %v2048 = vld [vmem:[#allocation14 + $0xf88] sm:$0xff]
    %v2049 = vld [vmem:[#allocation14 + $0xf90] sm:$0xff]
    %v2050 = vld [vmem:[#allocation14 + $0xf98] sm:$0xff]
    %v2051 = vld [vmem:[#allocation14 + $0xfa0] sm:$0xff]
    %v2052 = vld [vmem:[#allocation14 + $0xfa8] sm:$0xff]
    %v2053 = vld [vmem:[#allocation14 + $0xfb0] sm:$0xff]
    %v2054 = vld [vmem:[#allocation14 + $0xfb8] sm:$0xff]
    %v2055 = vld [vmem:[#allocation14 + $0xfc0] sm:$0xff]
    %v2056 = vld [vmem:[#allocation14 + $0xfc8] sm:$0xff]
    %v2057 = vld [vmem:[#allocation14 + $0xfd0] sm:$0xff]
    %v2058 = vld [vmem:[#allocation14 + $0xfd8] sm:$0xff]
    %v2059 = vld [vmem:[#allocation14 + $0xfe0] sm:$0xff]
    %v2060 = vld [vmem:[#allocation14 + $0xfe8] sm:$0xff]
    %v2061 = vld [vmem:[#allocation14 + $0xff0] sm:$0xff]
    %v2062 = vld [vmem:[#allocation14 + $0xff8] sm:$0xff]
    %v2063 = vld [vmem:[#allocation14 + $0x1000] sm:$0xff]
    %v2064 = vld [vmem:[#allocation14 + $0x1008] sm:$0xff]
    %v2065 = vld [vmem:[#allocation14 + $0x1010] sm:$0xff]
    %v2066 = vld [vmem:[#allocation14 + $0x1018] sm:$0xff]
    %v2067 = vld [vmem:[#allocation14 + $0x1020] sm:$0xff]
    %v2068 = vld [vmem:[#allocation14 + $0x1028] sm:$0xff]
    %v2069 = vld [vmem:[#allocation14 + $0x1030] sm:$0xff]
    %v2070 = vld [vmem:[#allocation14 + $0x1038] sm:$0xff]
    %v2071 = vld [vmem:[#allocation14 + $0x1040] sm:$0xff]
    %v2072 = vld [vmem:[#allocation14 + $0x1048] sm:$0xff]
    %v2073 = vld [vmem:[#allocation14 + $0x1050] sm:$0xff]
    %v2074 = vld [vmem:[#allocation14 + $0x1058] sm:$0xff]
    %v2075 = vld [vmem:[#allocation14 + $0x1060] sm:$0xff]
    %v2076 = vld [vmem:[#allocation14 + $0x1068] sm:$0xff]
    %v2077 = vld [vmem:[#allocation14 + $0x1070] sm:$0xff]
    %v2078 = vld [vmem:[#allocation14 + $0x1078] sm:$0xff]
    %v2079 = vld [vmem:[#allocation14 + $0x1080] sm:$0xff]
    %v2080 = vld [vmem:[#allocation14 + $0x1088] sm:$0xff]
    %v2081 = vld [vmem:[#allocation14 + $0x1090] sm:$0xff]
    %v2082 = vld [vmem:[#allocation14 + $0x1098] sm:$0xff]
    %v2083 = vld [vmem:[#allocation14 + $0x10a0] sm:$0xff]
    %v2084 = vld [vmem:[#allocation14 + $0x10a8] sm:$0xff]
    %v2085 = vld [vmem:[#allocation14 + $0x10b0] sm:$0xff]
    %v2086 = vld [vmem:[#allocation14 + $0x10b8] sm:$0xff]
    %v2087 = vld [vmem:[#allocation14 + $0x10c0] sm:$0xff]
    %v2088 = vld [vmem:[#allocation14 + $0x10c8] sm:$0xff]
    %v2089 = vld [vmem:[#allocation14 + $0x10d0] sm:$0xff]
    %v2090 = vld [vmem:[#allocation14 + $0x10d8] sm:$0xff]
    %v2091 = vld [vmem:[#allocation14 + $0x10e0] sm:$0xff]
    %v2092 = vld [vmem:[#allocation14 + $0x10e8] sm:$0xff]
    %v2093 = vld [vmem:[#allocation14 + $0x10f0] sm:$0xff]
    %v2094 = vld [vmem:[#allocation14 + $0x10f8] sm:$0xff]
    %v2095 = vld [vmem:[#allocation14 + $0x1100] sm:$0xff]
    %v2096 = vld [vmem:[#allocation14 + $0x1108] sm:$0xff]
    %v2097 = vld [vmem:[#allocation14 + $0x1110] sm:$0xff]
    %v2098 = vld [vmem:[#allocation14 + $0x1118] sm:$0xff]
    %v2099 = vld [vmem:[#allocation14 + $0x1120] sm:$0xff]
    %v2100 = vld [vmem:[#allocation14 + $0x1128] sm:$0xff]
    %v2101 = vld [vmem:[#allocation14 + $0x1130] sm:$0xff]
    %v2102 = vld [vmem:[#allocation14 + $0x1138] sm:$0xff]
    %v2103 = vld [vmem:[#allocation14 + $0x1140] sm:$0xff]
    %v2104 = vld [vmem:[#allocation14 + $0x1148] sm:$0xff]
    %v2105 = vld [vmem:[#allocation14 + $0x1150] sm:$0xff]
    %v2106 = vld [vmem:[#allocation14 + $0x1158] sm:$0xff]
    %v2107 = vld [vmem:[#allocation14 + $0x1160] sm:$0xff]
    %v2108 = vld [vmem:[#allocation14 + $0x1168] sm:$0xff]
    %v2109 = vld [vmem:[#allocation14 + $0x1170] sm:$0xff]
    %v2110 = vld [vmem:[#allocation14 + $0x1178] sm:$0xff]
    %v2111 = vld [vmem:[#allocation14 + $0x1180] sm:$0xff]
    %v2112 = vld [vmem:[#allocation14 + $0x1188] sm:$0xff]
    %v2113 = vld [vmem:[#allocation14 + $0x1190] sm:$0xff]
    %v2114 = vld [vmem:[#allocation14 + $0x1198] sm:$0xff]
    %v2115 = vld [vmem:[#allocation14 + $0x11a0] sm:$0xff]
    %v2116 = vld [vmem:[#allocation14 + $0x11a8] sm:$0xff]
    %v2117 = vld [vmem:[#allocation14 + $0x11b0] sm:$0xff]
    %v2118 = vld [vmem:[#allocation14 + $0x11b8] sm:$0xff]
    %v2119 = vld [vmem:[#allocation14 + $0x11c0] sm:$0xff]
    %v2120 = vld [vmem:[#allocation14 + $0x11c8] sm:$0xff]
    %v2121 = vld [vmem:[#allocation14 + $0x11d0] sm:$0xff]
    %v2122 = vld [vmem:[#allocation14 + $0x11d8] sm:$0xff]
    %v2123 = vld [vmem:[#allocation14 + $0x11e0] sm:$0xff]
    %v2124 = vld [vmem:[#allocation14 + $0x11e8] sm:$0xff]
    %v2125 = vld [vmem:[#allocation14 + $0x11f0] sm:$0xff]
    %v2126 = vld [vmem:[#allocation14 + $0x11f8] sm:$0xff]
    %v2127 = vld [vmem:[#allocation14 + $0x1200] sm:$0xff]
    %v2128 = vld [vmem:[#allocation14 + $0x1208] sm:$0xff]
    %v2129 = vld [vmem:[#allocation14 + $0x1210] sm:$0xff]
    %v2130 = vld [vmem:[#allocation14 + $0x1218] sm:$0xff]
    %v2131 = vld [vmem:[#allocation14 + $0x1220] sm:$0xff]
    %v2132 = vld [vmem:[#allocation14 + $0x1228] sm:$0xff]
    %v2133 = vld [vmem:[#allocation14 + $0x1230] sm:$0xff]
    %v2134 = vld [vmem:[#allocation14 + $0x1238] sm:$0xff]
    %v2135 = vld [vmem:[#allocation14 + $0x1240] sm:$0xff]
    %v2136 = vld [vmem:[#allocation14 + $0x1248] sm:$0xff]
    %v2137 = vld [vmem:[#allocation14 + $0x1250] sm:$0xff]
    %v2138 = vld [vmem:[#allocation14 + $0x1258] sm:$0xff]
    %v2139 = vld [vmem:[#allocation14 + $0x1260] sm:$0xff]
    %v2140 = vld [vmem:[#allocation14 + $0x1268] sm:$0xff]
    %v2141 = vld [vmem:[#allocation14 + $0x1270] sm:$0xff]
    %v2142 = vld [vmem:[#allocation14 + $0x1278] sm:$0xff]
    %v2143 = vld [vmem:[#allocation14 + $0x1280] sm:$0xff]
    %v2144 = vld [vmem:[#allocation14 + $0x1288] sm:$0xff]
    %v2145 = vld [vmem:[#allocation14 + $0x1290] sm:$0xff]
    %v2146 = vld [vmem:[#allocation14 + $0x1298] sm:$0xff]
    %v2147 = vld [vmem:[#allocation14 + $0x12a0] sm:$0xff]
    %v2148 = vld [vmem:[#allocation14 + $0x12a8] sm:$0xff]
    %v2149 = vld [vmem:[#allocation14 + $0x12b0] sm:$0xff]
    %v2150 = vld [vmem:[#allocation14 + $0x12b8] sm:$0xff]
    %v2151 = vld [vmem:[#allocation14 + $0x12c0] sm:$0xff]
    %v2152 = vld [vmem:[#allocation14 + $0x12c8] sm:$0xff]
    %v2153 = vld [vmem:[#allocation14 + $0x12d0] sm:$0xff]
    %v2154 = vld [vmem:[#allocation14 + $0x12d8] sm:$0xff]
    %v2155 = vld [vmem:[#allocation14 + $0x12e0] sm:$0xff]
    %v2156 = vld [vmem:[#allocation14 + $0x12e8] sm:$0xff]
    %v2157 = vld [vmem:[#allocation14 + $0x12f0] sm:$0xff]
    %v2158 = vld [vmem:[#allocation14 + $0x12f8] sm:$0xff]
    %v2159 = vld [vmem:[#allocation14 + $0x1300] sm:$0xff]
    %v2160 = vld [vmem:[#allocation14 + $0x1308] sm:$0xff]
    %v2161 = vld [vmem:[#allocation14 + $0x1310] sm:$0xff]
    %v2162 = vld [vmem:[#allocation14 + $0x1318] sm:$0xff]
    %v2163 = vld [vmem:[#allocation14 + $0x1320] sm:$0xff]
    %v2164 = vld [vmem:[#allocation14 + $0x1328] sm:$0xff]
    %v2165 = vld [vmem:[#allocation14 + $0x1330] sm:$0xff]
    %v2166 = vld [vmem:[#allocation14 + $0x1338] sm:$0xff]
    %v2167 = vld [vmem:[#allocation14 + $0x1340] sm:$0xff]
    %v2168 = vld [vmem:[#allocation14 + $0x1348] sm:$0xff]
    %v2169 = vld [vmem:[#allocation14 + $0x1350] sm:$0xff]
    %v2170 = vld [vmem:[#allocation14 + $0x1358] sm:$0xff]
    %v2171 = vld [vmem:[#allocation14 + $0x1360] sm:$0xff]
    %v2172 = vld [vmem:[#allocation14 + $0x1368] sm:$0xff]
    %v2173 = vld [vmem:[#allocation14 + $0x1370] sm:$0xff]
    %v2174 = vld [vmem:[#allocation14 + $0x1378] sm:$0xff]
    %v2175 = vld [vmem:[#allocation14 + $0x1380] sm:$0xff]
    %v2176 = vld [vmem:[#allocation14 + $0x1388] sm:$0xff]
    %v2177 = vld [vmem:[#allocation14 + $0x1390] sm:$0xff]
    %v2178 = vld [vmem:[#allocation14 + $0x1398] sm:$0xff]
    %v2179 = vld [vmem:[#allocation14 + $0x13a0] sm:$0xff]
    %v2180 = vld [vmem:[#allocation14 + $0x13a8] sm:$0xff]
    %v2181 = vld [vmem:[#allocation14 + $0x13b0] sm:$0xff]
    %v2182 = vld [vmem:[#allocation14 + $0x13b8] sm:$0xff]
    %v2183 = vld [vmem:[#allocation14 + $0x13c0] sm:$0xff]
    %v2184 = vld [vmem:[#allocation14 + $0x13c8] sm:$0xff]
    %v2185 = vld [vmem:[#allocation14 + $0x13d0] sm:$0xff]
    %v2186 = vld [vmem:[#allocation14 + $0x13d8] sm:$0xff]
    %v2187 = vld [vmem:[#allocation14 + $0x13e0] sm:$0xff]
    %v2188 = vld [vmem:[#allocation14 + $0x13e8] sm:$0xff]
    %v2189 = vld [vmem:[#allocation14 + $0x13f0] sm:$0xff]
    %v2190 = vld [vmem:[#allocation14 + $0x13f8] sm:$0xff]
    %v2191 = vld [vmem:[#allocation14 + $0x1400] sm:$0xff]
    %v2192 = vld [vmem:[#allocation14 + $0x1408] sm:$0xff]
    %v2193 = vld [vmem:[#allocation14 + $0x1410] sm:$0xff]
    %v2194 = vld [vmem:[#allocation14 + $0x1418] sm:$0xff]
    %v2195 = vld [vmem:[#allocation14 + $0x1420] sm:$0xff]
    %v2196 = vld [vmem:[#allocation14 + $0x1428] sm:$0xff]
    %v2197 = vld [vmem:[#allocation14 + $0x1430] sm:$0xff]
    %v2198 = vld [vmem:[#allocation14 + $0x1438] sm:$0xff]
    %v2199 = vld [vmem:[#allocation14 + $0x1440] sm:$0xff]
    %v2200 = vld [vmem:[#allocation14 + $0x1448] sm:$0xff]
    %v2201 = vld [vmem:[#allocation14 + $0x1450] sm:$0xff]
    %v2202 = vld [vmem:[#allocation14 + $0x1458] sm:$0xff]
    %v2203 = vld [vmem:[#allocation14 + $0x1460] sm:$0xff]
    %v2204 = vld [vmem:[#allocation14 + $0x1468] sm:$0xff]
    %v2205 = vld [vmem:[#allocation14 + $0x1470] sm:$0xff]
    %v2206 = vld [vmem:[#allocation14 + $0x1478] sm:$0xff]
    %v2207 = vld [vmem:[#allocation14 + $0x1480] sm:$0xff]
    %v2208 = vld [vmem:[#allocation14 + $0x1488] sm:$0xff]
    %v2209 = vld [vmem:[#allocation14 + $0x1490] sm:$0xff]
    %v2210 = vld [vmem:[#allocation14 + $0x1498] sm:$0xff]
    %v2211 = vld [vmem:[#allocation14 + $0x14a0] sm:$0xff]
    %v2212 = vld [vmem:[#allocation14 + $0x14a8] sm:$0xff]
    %v2213 = vld [vmem:[#allocation14 + $0x14b0] sm:$0xff]
    %v2214 = vld [vmem:[#allocation14 + $0x14b8] sm:$0xff]
    %v2215 = vld [vmem:[#allocation14 + $0x14c0] sm:$0xff]
    %v2216 = vld [vmem:[#allocation14 + $0x14c8] sm:$0xff]
    %v2217 = vld [vmem:[#allocation14 + $0x14d0] sm:$0xff]
    %v2218 = vld [vmem:[#allocation14 + $0x14d8] sm:$0xff]
    %v2219 = vld [vmem:[#allocation14 + $0x14e0] sm:$0xff]
    %v2220 = vld [vmem:[#allocation14 + $0x14e8] sm:$0xff]
    %v2221 = vld [vmem:[#allocation14 + $0x14f0] sm:$0xff]
    %v2222 = vld [vmem:[#allocation14 + $0x14f8] sm:$0xff]
    %v2223 = vld [vmem:[#allocation14 + $0x1500] sm:$0xff]
    %v2224 = vld [vmem:[#allocation14 + $0x1508] sm:$0xff]
    %v2225 = vld [vmem:[#allocation14 + $0x1510] sm:$0xff]
    %v2226 = vld [vmem:[#allocation14 + $0x1518] sm:$0xff]
    %v2227 = vld [vmem:[#allocation14 + $0x1520] sm:$0xff]
    %v2228 = vld [vmem:[#allocation14 + $0x1528] sm:$0xff]
    %v2229 = vld [vmem:[#allocation14 + $0x1530] sm:$0xff]
    %v2230 = vld [vmem:[#allocation14 + $0x1538] sm:$0xff]
    %v2231 = vld [vmem:[#allocation14 + $0x1540] sm:$0xff]
    %v2232 = vld [vmem:[#allocation14 + $0x1548] sm:$0xff]
    %v2233 = vld [vmem:[#allocation14 + $0x1550] sm:$0xff]
    %v2234 = vld [vmem:[#allocation14 + $0x1558] sm:$0xff]
    %v2235 = vld [vmem:[#allocation14 + $0x1560] sm:$0xff]
    %v2236 = vld [vmem:[#allocation14 + $0x1568] sm:$0xff]
    %v2237 = vld [vmem:[#allocation14 + $0x1570] sm:$0xff]
    %v2238 = vld [vmem:[#allocation14 + $0x1578] sm:$0xff]
    %v2239 = vld [vmem:[#allocation14 + $0x1580] sm:$0xff]
    %v2240 = vld [vmem:[#allocation14 + $0x1588] sm:$0xff]
    %v2241 = vld [vmem:[#allocation14 + $0x1590] sm:$0xff]
    %v2242 = vld [vmem:[#allocation14 + $0x1598] sm:$0xff]
    %v2243 = vld [vmem:[#allocation14 + $0x15a0] sm:$0xff]
    %v2244 = vld [vmem:[#allocation14 + $0x15a8] sm:$0xff]
    %v2245 = vld [vmem:[#allocation14 + $0x15b0] sm:$0xff]
    %v2246 = vld [vmem:[#allocation14 + $0x15b8] sm:$0xff]
    %v2247 = vld [vmem:[#allocation14 + $0x15c0] sm:$0xff]
    %v2248 = vld [vmem:[#allocation14 + $0x15c8] sm:$0xff]
    %v2249 = vld [vmem:[#allocation14 + $0x15d0] sm:$0xff]
    %v2250 = vld [vmem:[#allocation14 + $0x15d8] sm:$0xff]
    %v2251 = vld [vmem:[#allocation14 + $0x15e0] sm:$0xff]
    %v2252 = vld [vmem:[#allocation14 + $0x15e8] sm:$0xff]
    %v2253 = vld [vmem:[#allocation14 + $0x15f0] sm:$0xff]
    %v2254 = vld [vmem:[#allocation14 + $0x15f8] sm:$0xff]
    %v2255 = vld [vmem:[#allocation14 + $0x1600] sm:$0xff]
    %v2256 = vld [vmem:[#allocation14 + $0x1608] sm:$0xff]
    %v2257 = vld [vmem:[#allocation14 + $0x1610] sm:$0xff]
    %v2258 = vld [vmem:[#allocation14 + $0x1618] sm:$0xff]
    %v2259 = vld [vmem:[#allocation14 + $0x1620] sm:$0xff]
    %v2260 = vld [vmem:[#allocation14 + $0x1628] sm:$0xff]
    %v2261 = vld [vmem:[#allocation14 + $0x1630] sm:$0xff]
    %v2262 = vld [vmem:[#allocation14 + $0x1638] sm:$0xff]
    %v2263 = vld [vmem:[#allocation14 + $0x1640] sm:$0xff]
    %v2264 = vld [vmem:[#allocation14 + $0x1648] sm:$0xff]
    %v2265 = vld [vmem:[#allocation14 + $0x1650] sm:$0xff]
    %v2266 = vld [vmem:[#allocation14 + $0x1658] sm:$0xff]
    %v2267 = vld [vmem:[#allocation14 + $0x1660] sm:$0xff]
    %v2268 = vld [vmem:[#allocation14 + $0x1668] sm:$0xff]
    %v2269 = vld [vmem:[#allocation14 + $0x1670] sm:$0xff]
    %v2270 = vld [vmem:[#allocation14 + $0x1678] sm:$0xff]
    %v2271 = vld [vmem:[#allocation14 + $0x1680] sm:$0xff]
    %v2272 = vld [vmem:[#allocation14 + $0x1688] sm:$0xff]
    %v2273 = vld [vmem:[#allocation14 + $0x1690] sm:$0xff]
    %v2274 = vld [vmem:[#allocation14 + $0x1698] sm:$0xff]
    %v2275 = vld [vmem:[#allocation14 + $0x16a0] sm:$0xff]
    %v2276 = vld [vmem:[#allocation14 + $0x16a8] sm:$0xff]
    %v2277 = vld [vmem:[#allocation14 + $0x16b0] sm:$0xff]
    %v2278 = vld [vmem:[#allocation14 + $0x16b8] sm:$0xff]
    %v2279 = vld [vmem:[#allocation14 + $0x16c0] sm:$0xff]
    %v2280 = vld [vmem:[#allocation14 + $0x16c8] sm:$0xff]
    %v2281 = vld [vmem:[#allocation14 + $0x16d0] sm:$0xff]
    %v2282 = vld [vmem:[#allocation14 + $0x16d8] sm:$0xff]
    %v2283 = vld [vmem:[#allocation14 + $0x16e0] sm:$0xff]
    %v2284 = vld [vmem:[#allocation14 + $0x16e8] sm:$0xff]
    %v2285 = vld [vmem:[#allocation14 + $0x16f0] sm:$0xff]
    %v2286 = vld [vmem:[#allocation14 + $0x16f8] sm:$0xff]
    %v2287 = vld [vmem:[#allocation14 + $0x1700] sm:$0xff]
    %v2288 = vld [vmem:[#allocation14 + $0x1708] sm:$0xff]
    %v2289 = vld [vmem:[#allocation14 + $0x1710] sm:$0xff]
    %v2290 = vld [vmem:[#allocation14 + $0x1718] sm:$0xff]
    %v2291 = vld [vmem:[#allocation14 + $0x1720] sm:$0xff]
    %v2292 = vld [vmem:[#allocation14 + $0x1728] sm:$0xff]
    %v2293 = vld [vmem:[#allocation14 + $0x1730] sm:$0xff]
    %v2294 = vld [vmem:[#allocation14 + $0x1738] sm:$0xff]
    %v2295 = vld [vmem:[#allocation14 + $0x1740] sm:$0xff]
    %v2296 = vld [vmem:[#allocation14 + $0x1748] sm:$0xff]
    %v2297 = vld [vmem:[#allocation14 + $0x1750] sm:$0xff]
    %v2298 = vld [vmem:[#allocation14 + $0x1758] sm:$0xff]
    %v2299 = vld [vmem:[#allocation14 + $0x1760] sm:$0xff]
    %v2300 = vld [vmem:[#allocation14 + $0x1768] sm:$0xff]
    %v2301 = vld [vmem:[#allocation14 + $0x1770] sm:$0xff]
    %v2302 = vld [vmem:[#allocation14 + $0x1778] sm:$0xff]
    %v2303 = vld [vmem:[#allocation14 + $0x1780] sm:$0xff]
    %v2304 = vld [vmem:[#allocation14 + $0x1788] sm:$0xff]
    %v2305 = vld [vmem:[#allocation14 + $0x1790] sm:$0xff]
    %v2306 = vld [vmem:[#allocation14 + $0x1798] sm:$0xff]
    %v2307 = vld [vmem:[#allocation14 + $0x17a0] sm:$0xff]
    %v2308 = vld [vmem:[#allocation14 + $0x17a8] sm:$0xff]
    %v2309 = vld [vmem:[#allocation14 + $0x17b0] sm:$0xff]
    %v2310 = vld [vmem:[#allocation14 + $0x17b8] sm:$0xff]
    %v2311 = vld [vmem:[#allocation14 + $0x17c0] sm:$0xff]
    %v2312 = vld [vmem:[#allocation14 + $0x17c8] sm:$0xff]
    %v2313 = vld [vmem:[#allocation14 + $0x17d0] sm:$0xff]
    %v2314 = vld [vmem:[#allocation14 + $0x17d8] sm:$0xff]
    %v2315 = vld [vmem:[#allocation14 + $0x17e0] sm:$0xff]
    %v2316 = vld [vmem:[#allocation14 + $0x17e8] sm:$0xff]
    %v2317 = vld [vmem:[#allocation14 + $0x17f0] sm:$0xff]
    %v2318 = vld [vmem:[#allocation14 + $0x17f8] sm:$0xff]
    %v2319 = vld [vmem:[#allocation14 + $0x1800] sm:$0xff]
    %v2320 = vld [vmem:[#allocation14 + $0x1808] sm:$0xff]
    %v2321 = vld [vmem:[#allocation14 + $0x1810] sm:$0xff]
    %v2322 = vld [vmem:[#allocation14 + $0x1818] sm:$0xff]
    %v2323 = vld [vmem:[#allocation14 + $0x1820] sm:$0xff]
    %v2324 = vld [vmem:[#allocation14 + $0x1828] sm:$0xff]
    %v2325 = vld [vmem:[#allocation14 + $0x1830] sm:$0xff]
    %v2326 = vld [vmem:[#allocation14 + $0x1838] sm:$0xff]
    %v2327 = vld [vmem:[#allocation14 + $0x1840] sm:$0xff]
    %v2328 = vld [vmem:[#allocation14 + $0x1848] sm:$0xff]
    %v2329 = vld [vmem:[#allocation14 + $0x1850] sm:$0xff]
    %v2330 = vld [vmem:[#allocation14 + $0x1858] sm:$0xff]
    %v2331 = vld [vmem:[#allocation14 + $0x1860] sm:$0xff]
    %v2332 = vld [vmem:[#allocation14 + $0x1868] sm:$0xff]
    %v2333 = vld [vmem:[#allocation14 + $0x1870] sm:$0xff]
    %v2334 = vld [vmem:[#allocation14 + $0x1878] sm:$0xff]
    %v2335 = vld [vmem:[#allocation14 + $0x1880] sm:$0xff]
    %v2336 = vld [vmem:[#allocation14 + $0x1888] sm:$0xff]
    %v2337 = vld [vmem:[#allocation14 + $0x1890] sm:$0xff]
    %v2338 = vld [vmem:[#allocation14 + $0x1898] sm:$0xff]
    %v2339 = vld [vmem:[#allocation14 + $0x18a0] sm:$0xff]
    %v2340 = vld [vmem:[#allocation14 + $0x18a8] sm:$0xff]
    %v2341 = vld [vmem:[#allocation14 + $0x18b0] sm:$0xff]
    %v2342 = vld [vmem:[#allocation14 + $0x18b8] sm:$0xff]
    %v2343 = vld [vmem:[#allocation14 + $0x18c0] sm:$0xff]
    %v2344 = vld [vmem:[#allocation14 + $0x18c8] sm:$0xff]
    %v2345 = vld [vmem:[#allocation14 + $0x18d0] sm:$0xff]
    %v2346 = vld [vmem:[#allocation14 + $0x18d8] sm:$0xff]
    %v2347 = vld [vmem:[#allocation14 + $0x18e0] sm:$0xff]
    %v2348 = vld [vmem:[#allocation14 + $0x18e8] sm:$0xff]
    %v2349 = vld [vmem:[#allocation14 + $0x18f0] sm:$0xff]
    %v2350 = vld [vmem:[#allocation14 + $0x18f8] sm:$0xff]
    %v2351 = vld [vmem:[#allocation14 + $0x1900] sm:$0xff]
    %v2352 = vld [vmem:[#allocation14 + $0x1908] sm:$0xff]
    %v2353 = vld [vmem:[#allocation14 + $0x1910] sm:$0xff]
    %v2354 = vld [vmem:[#allocation14 + $0x1918] sm:$0xff]
    %v2355 = vld [vmem:[#allocation14 + $0x1920] sm:$0xff]
    %v2356 = vld [vmem:[#allocation14 + $0x1928] sm:$0xff]
    %v2357 = vld [vmem:[#allocation14 + $0x1930] sm:$0xff]
    %v2358 = vld [vmem:[#allocation14 + $0x1938] sm:$0xff]
    %v2359 = vld [vmem:[#allocation14 + $0x1940] sm:$0xff]
    %v2360 = vld [vmem:[#allocation14 + $0x1948] sm:$0xff]
    %v2361 = vld [vmem:[#allocation14 + $0x1950] sm:$0xff]
    %v2362 = vld [vmem:[#allocation14 + $0x1958] sm:$0xff]
    %v2363 = vld [vmem:[#allocation14 + $0x1960] sm:$0xff]
    %v2364 = vld [vmem:[#allocation14 + $0x1968] sm:$0xff]
    %v2365 = vld [vmem:[#allocation14 + $0x1970] sm:$0xff]
    %v2366 = vld [vmem:[#allocation14 + $0x1978] sm:$0xff]
    %v2367 = vld [vmem:[#allocation14 + $0x1980] sm:$0xff]
    %v2368 = vld [vmem:[#allocation14 + $0x1988] sm:$0xff]
    %v2369 = vld [vmem:[#allocation14 + $0x1990] sm:$0xff]
    %v2370 = vld [vmem:[#allocation14 + $0x1998] sm:$0xff]
    %v2371 = vld [vmem:[#allocation14 + $0x19a0] sm:$0xff]
    %v2372 = vld [vmem:[#allocation14 + $0x19a8] sm:$0xff]
    %v2373 = vld [vmem:[#allocation14 + $0x19b0] sm:$0xff]
    %v2374 = vld [vmem:[#allocation14 + $0x19b8] sm:$0xff]
    %v2375 = vld [vmem:[#allocation14 + $0x19c0] sm:$0xff]
    %v2376 = vld [vmem:[#allocation14 + $0x19c8] sm:$0xff]
    %v2377 = vld [vmem:[#allocation14 + $0x19d0] sm:$0xff]
    %v2378 = vld [vmem:[#allocation14 + $0x19d8] sm:$0xff]
    %v2379 = vld [vmem:[#allocation14 + $0x19e0] sm:$0xff]
    %v2380 = vld [vmem:[#allocation14 + $0x19e8] sm:$0xff]
    %v2381 = vld [vmem:[#allocation14 + $0x19f0] sm:$0xff]
    %v2382 = vld [vmem:[#allocation14 + $0x19f8] sm:$0xff]
    %v2383 = vld [vmem:[#allocation14 + $0x1a00] sm:$0xff]
    %v2384 = vld [vmem:[#allocation14 + $0x1a08] sm:$0xff]
    %v2385 = vld [vmem:[#allocation14 + $0x1a10] sm:$0xff]
    %v2386 = vld [vmem:[#allocation14 + $0x1a18] sm:$0xff]
    %v2387 = vld [vmem:[#allocation14 + $0x1a20] sm:$0xff]
    %v2388 = vld [vmem:[#allocation14 + $0x1a28] sm:$0xff]
    %v2389 = vld [vmem:[#allocation14 + $0x1a30] sm:$0xff]
    %v2390 = vld [vmem:[#allocation14 + $0x1a38] sm:$0xff]
    %v2391 = vld [vmem:[#allocation14 + $0x1a40] sm:$0xff]
    %v2392 = vld [vmem:[#allocation14 + $0x1a48] sm:$0xff]
    %v2393 = vld [vmem:[#allocation14 + $0x1a50] sm:$0xff]
    %v2394 = vld [vmem:[#allocation14 + $0x1a58] sm:$0xff]
    %v2395 = vld [vmem:[#allocation14 + $0x1a60] sm:$0xff]
    %v2396 = vld [vmem:[#allocation14 + $0x1a68] sm:$0xff]
    %v2397 = vld [vmem:[#allocation14 + $0x1a70] sm:$0xff]
    %v2398 = vld [vmem:[#allocation14 + $0x1a78] sm:$0xff]
    %v2399 = vld [vmem:[#allocation14 + $0x1a80] sm:$0xff]
    %v2400 = vld [vmem:[#allocation14 + $0x1a88] sm:$0xff]
    %v2401 = vld [vmem:[#allocation14 + $0x1a90] sm:$0xff]
    %v2402 = vld [vmem:[#allocation14 + $0x1a98] sm:$0xff]
    %v2403 = vld [vmem:[#allocation14 + $0x1aa0] sm:$0xff]
    %v2404 = vld [vmem:[#allocation14 + $0x1aa8] sm:$0xff]
    %v2405 = vld [vmem:[#allocation14 + $0x1ab0] sm:$0xff]
    %v2406 = vld [vmem:[#allocation14 + $0x1ab8] sm:$0xff]
    %v2407 = vld [vmem:[#allocation14 + $0x1ac0] sm:$0xff]
    %v2408 = vld [vmem:[#allocation14 + $0x1ac8] sm:$0xff]
    %v2409 = vld [vmem:[#allocation14 + $0x1ad0] sm:$0xff]
    %v2410 = vld [vmem:[#allocation14 + $0x1ad8] sm:$0xff]
    %v2411 = vld [vmem:[#allocation14 + $0x1ae0] sm:$0xff]
    %v2412 = vld [vmem:[#allocation14 + $0x1ae8] sm:$0xff]
    %v2413 = vld [vmem:[#allocation14 + $0x1af0] sm:$0xff]
    %v2414 = vld [vmem:[#allocation14 + $0x1af8] sm:$0xff]
    %v2415 = vld [vmem:[#allocation14 + $0x1b00] sm:$0xff]
    %v2416 = vld [vmem:[#allocation14 + $0x1b08] sm:$0xff]
    %v2417 = vld [vmem:[#allocation14 + $0x1b10] sm:$0xff]
    %v2418 = vld [vmem:[#allocation14 + $0x1b18] sm:$0xff]
    %v2419 = vld [vmem:[#allocation14 + $0x1b20] sm:$0xff]
    %v2420 = vld [vmem:[#allocation14 + $0x1b28] sm:$0xff]
    %v2421 = vld [vmem:[#allocation14 + $0x1b30] sm:$0xff]
    %v2422 = vld [vmem:[#allocation14 + $0x1b38] sm:$0xff]
    %v2423 = vld [vmem:[#allocation14 + $0x1b40] sm:$0xff]
    %v2424 = vld [vmem:[#allocation14 + $0x1b48] sm:$0xff]
    %v2425 = vld [vmem:[#allocation14 + $0x1b50] sm:$0xff]
    %v2426 = vld [vmem:[#allocation14 + $0x1b58] sm:$0xff]
    %v2427 = vld [vmem:[#allocation14 + $0x1b60] sm:$0xff]
    %v2428 = vld [vmem:[#allocation14 + $0x1b68] sm:$0xff]
    %v2429 = vld [vmem:[#allocation14 + $0x1b70] sm:$0xff]
    %v2430 = vld [vmem:[#allocation14 + $0x1b78] sm:$0xff]
    %v2431 = vld [vmem:[#allocation14 + $0x1b80] sm:$0xff]
    %v2432 = vld [vmem:[#allocation14 + $0x1b88] sm:$0xff]
    %v2433 = vld [vmem:[#allocation14 + $0x1b90] sm:$0xff]
    %v2434 = vld [vmem:[#allocation14 + $0x1b98] sm:$0xff]
    %v2435 = vld [vmem:[#allocation14 + $0x1ba0] sm:$0xff]
    %v2436 = vld [vmem:[#allocation14 + $0x1ba8] sm:$0xff]
    %v2437 = vld [vmem:[#allocation14 + $0x1bb0] sm:$0xff]
    %v2438 = vld [vmem:[#allocation14 + $0x1bb8] sm:$0xff]
    %v2439 = vld [vmem:[#allocation14 + $0x1bc0] sm:$0xff]
    %v2440 = vld [vmem:[#allocation14 + $0x1bc8] sm:$0xff]
    %v2441 = vld [vmem:[#allocation14 + $0x1bd0] sm:$0xff]
    %v2442 = vld [vmem:[#allocation14 + $0x1bd8] sm:$0xff]
    %v2443 = vld [vmem:[#allocation14 + $0x1be0] sm:$0xff]
    %v2444 = vld [vmem:[#allocation14 + $0x1be8] sm:$0xff]
    %v2445 = vld [vmem:[#allocation14 + $0x1bf0] sm:$0xff]
    %v2446 = vld [vmem:[#allocation14 + $0x1bf8] sm:$0xff]
    %v2447 = vld [vmem:[#allocation14 + $0x1c00] sm:$0xff]
    %v2448 = vld [vmem:[#allocation14 + $0x1c08] sm:$0xff]
    %v2449 = vld [vmem:[#allocation14 + $0x1c10] sm:$0xff]
    %v2450 = vld [vmem:[#allocation14 + $0x1c18] sm:$0xff]
    %v2451 = vld [vmem:[#allocation14 + $0x1c20] sm:$0xff]
    %v2452 = vld [vmem:[#allocation14 + $0x1c28] sm:$0xff]
    %v2453 = vld [vmem:[#allocation14 + $0x1c30] sm:$0xff]
    %v2454 = vld [vmem:[#allocation14 + $0x1c38] sm:$0xff]
    %v2455 = vld [vmem:[#allocation14 + $0x1c40] sm:$0xff]
    %v2456 = vld [vmem:[#allocation14 + $0x1c48] sm:$0xff]
    %v2457 = vld [vmem:[#allocation14 + $0x1c50] sm:$0xff]
    %v2458 = vld [vmem:[#allocation14 + $0x1c58] sm:$0xff]
    %v2459 = vld [vmem:[#allocation14 + $0x1c60] sm:$0xff]
    %v2460 = vld [vmem:[#allocation14 + $0x1c68] sm:$0xff]
    %v2461 = vld [vmem:[#allocation14 + $0x1c70] sm:$0xff]
    %v2462 = vld [vmem:[#allocation14 + $0x1c78] sm:$0xff]
    %v2463 = vld [vmem:[#allocation14 + $0x1c80] sm:$0xff]
    %v2464 = vld [vmem:[#allocation14 + $0x1c88] sm:$0xff]
    %v2465 = vld [vmem:[#allocation14 + $0x1c90] sm:$0xff]
    %v2466 = vld [vmem:[#allocation14 + $0x1c98] sm:$0xff]
    %v2467 = vld [vmem:[#allocation14 + $0x1ca0] sm:$0xff]
    %v2468 = vld [vmem:[#allocation14 + $0x1ca8] sm:$0xff]
    %v2469 = vld [vmem:[#allocation14 + $0x1cb0] sm:$0xff]
    %v2470 = vld [vmem:[#allocation14 + $0x1cb8] sm:$0xff]
    %v2471 = vld [vmem:[#allocation14 + $0x1cc0] sm:$0xff]
    %v2472 = vld [vmem:[#allocation14 + $0x1cc8] sm:$0xff]
    %v2473 = vld [vmem:[#allocation14 + $0x1cd0] sm:$0xff]
    %v2474 = vld [vmem:[#allocation14 + $0x1cd8] sm:$0xff]
    %v2475 = vld [vmem:[#allocation14 + $0x1ce0] sm:$0xff]
    %v2476 = vld [vmem:[#allocation14 + $0x1ce8] sm:$0xff]
    %v2477 = vld [vmem:[#allocation14 + $0x1cf0] sm:$0xff]
    %v2478 = vld [vmem:[#allocation14 + $0x1cf8] sm:$0xff]
    %v2479 = vld [vmem:[#allocation14 + $0x1d00] sm:$0xff]
    %v2480 = vld [vmem:[#allocation14 + $0x1d08] sm:$0xff]
    %v2481 = vld [vmem:[#allocation14 + $0x1d10] sm:$0xff]
    %v2482 = vld [vmem:[#allocation14 + $0x1d18] sm:$0xff]
    %v2483 = vld [vmem:[#allocation14 + $0x1d20] sm:$0xff]
    %v2484 = vld [vmem:[#allocation14 + $0x1d28] sm:$0xff]
    %v2485 = vld [vmem:[#allocation14 + $0x1d30] sm:$0xff]
    %v2486 = vld [vmem:[#allocation14 + $0x1d38] sm:$0xff]
    %v2487 = vld [vmem:[#allocation14 + $0x1d40] sm:$0xff]
    %v2488 = vld [vmem:[#allocation14 + $0x1d48] sm:$0xff]
    %v2489 = vld [vmem:[#allocation14 + $0x1d50] sm:$0xff]
    %v2490 = vld [vmem:[#allocation14 + $0x1d58] sm:$0xff]
    %v2491 = vld [vmem:[#allocation14 + $0x1d60] sm:$0xff]
    %v2492 = vld [vmem:[#allocation14 + $0x1d68] sm:$0xff]
    %v2493 = vld [vmem:[#allocation14 + $0x1d70] sm:$0xff]
    %v2494 = vld [vmem:[#allocation14 + $0x1d78] sm:$0xff]
    %v2495 = vld [vmem:[#allocation14 + $0x1d80] sm:$0xff]
    %v2496 = vld [vmem:[#allocation14 + $0x1d88] sm:$0xff]
    %v2497 = vld [vmem:[#allocation14 + $0x1d90] sm:$0xff]
    %v2498 = vld [vmem:[#allocation14 + $0x1d98] sm:$0xff]
    %v2499 = vld [vmem:[#allocation14 + $0x1da0] sm:$0xff]
    %v2500 = vld [vmem:[#allocation14 + $0x1da8] sm:$0xff]
    %v2501 = vld [vmem:[#allocation14 + $0x1db0] sm:$0xff]
    %v2502 = vld [vmem:[#allocation14 + $0x1db8] sm:$0xff]
    %v2503 = vld [vmem:[#allocation14 + $0x1dc0] sm:$0xff]
    %v2504 = vld [vmem:[#allocation14 + $0x1dc8] sm:$0xff]
    %v2505 = vld [vmem:[#allocation14 + $0x1dd0] sm:$0xff]
    %v2506 = vld [vmem:[#allocation14 + $0x1dd8] sm:$0xff]
    %v2507 = vld [vmem:[#allocation14 + $0x1de0] sm:$0xff]
    %v2508 = vld [vmem:[#allocation14 + $0x1de8] sm:$0xff]
    %v2509 = vld [vmem:[#allocation14 + $0x1df0] sm:$0xff]
    %v2510 = vld [vmem:[#allocation14 + $0x1df8] sm:$0xff]
    %v2511 = vld [vmem:[#allocation14 + $0x1e00] sm:$0xff]
    %v2512 = vld [vmem:[#allocation14 + $0x1e08] sm:$0xff]
    %v2513 = vld [vmem:[#allocation14 + $0x1e10] sm:$0xff]
    %v2514 = vld [vmem:[#allocation14 + $0x1e18] sm:$0xff]
    %v2515 = vld [vmem:[#allocation14 + $0x1e20] sm:$0xff]
    %v2516 = vld [vmem:[#allocation14 + $0x1e28] sm:$0xff]
    %v2517 = vld [vmem:[#allocation14 + $0x1e30] sm:$0xff]
    %v2518 = vld [vmem:[#allocation14 + $0x1e38] sm:$0xff]
    %v2519 = vld [vmem:[#allocation14 + $0x1e40] sm:$0xff]
    %v2520 = vld [vmem:[#allocation14 + $0x1e48] sm:$0xff]
    %v2521 = vld [vmem:[#allocation14 + $0x1e50] sm:$0xff]
    %v2522 = vld [vmem:[#allocation14 + $0x1e58] sm:$0xff]
    %v2523 = vld [vmem:[#allocation14 + $0x1e60] sm:$0xff]
    %v2524 = vld [vmem:[#allocation14 + $0x1e68] sm:$0xff]
    %v2525 = vld [vmem:[#allocation14 + $0x1e70] sm:$0xff]
    %v2526 = vld [vmem:[#allocation14 + $0x1e78] sm:$0xff]
    %v2527 = vld [vmem:[#allocation14 + $0x1e80] sm:$0xff]
    %v2528 = vld [vmem:[#allocation14 + $0x1e88] sm:$0xff]
    %v2529 = vld [vmem:[#allocation14 + $0x1e90] sm:$0xff]
    %v2530 = vld [vmem:[#allocation14 + $0x1e98] sm:$0xff]
    %v2531 = vld [vmem:[#allocation14 + $0x1ea0] sm:$0xff]
    %v2532 = vld [vmem:[#allocation14 + $0x1ea8] sm:$0xff]
    %v2533 = vld [vmem:[#allocation14 + $0x1eb0] sm:$0xff]
    %v2534 = vld [vmem:[#allocation14 + $0x1eb8] sm:$0xff]
    %v2535 = vld [vmem:[#allocation14 + $0x1ec0] sm:$0xff]
    %v2536 = vld [vmem:[#allocation14 + $0x1ec8] sm:$0xff]
    %v2537 = vld [vmem:[#allocation14 + $0x1ed0] sm:$0xff]
    %v2538 = vld [vmem:[#allocation14 + $0x1ed8] sm:$0xff]
    %v2539 = vld [vmem:[#allocation14 + $0x1ee0] sm:$0xff]
    %v2540 = vld [vmem:[#allocation14 + $0x1ee8] sm:$0xff]
    %v2541 = vld [vmem:[#allocation14 + $0x1ef0] sm:$0xff]
    %v2542 = vld [vmem:[#allocation14 + $0x1ef8] sm:$0xff]
    %v2543 = vld [vmem:[#allocation14 + $0x1f00] sm:$0xff]
    %v2544 = vld [vmem:[#allocation14 + $0x1f08] sm:$0xff]
    %v2545 = vld [vmem:[#allocation14 + $0x1f10] sm:$0xff]
    %v2546 = vld [vmem:[#allocation14 + $0x1f18] sm:$0xff]
    %v2547 = vld [vmem:[#allocation14 + $0x1f20] sm:$0xff]
    %v2548 = vld [vmem:[#allocation14 + $0x1f28] sm:$0xff]
    %v2549 = vld [vmem:[#allocation14 + $0x1f30] sm:$0xff]
    %v2550 = vld [vmem:[#allocation14 + $0x1f38] sm:$0xff]
    %v2551 = vld [vmem:[#allocation14 + $0x1f40] sm:$0xff]
    %v2552 = vld [vmem:[#allocation14 + $0x1f48] sm:$0xff]
    %v2553 = vld [vmem:[#allocation14 + $0x1f50] sm:$0xff]
    %v2554 = vld [vmem:[#allocation14 + $0x1f58] sm:$0xff]
    %v2555 = vld [vmem:[#allocation14 + $0x1f60] sm:$0xff]
    %v2556 = vld [vmem:[#allocation14 + $0x1f68] sm:$0xff]
    %v2557 = vld [vmem:[#allocation14 + $0x1f70] sm:$0xff]
    %v2558 = vld [vmem:[#allocation14 + $0x1f78] sm:$0xff]
    %v2559 = vld [vmem:[#allocation14 + $0x1f80] sm:$0xff]
    %v2560 = vld [vmem:[#allocation14 + $0x1f88] sm:$0xff]
    %v2561 = vld [vmem:[#allocation14 + $0x1f90] sm:$0xff]
    %v2562 = vld [vmem:[#allocation14 + $0x1f98] sm:$0xff]
    %v2563 = vld [vmem:[#allocation14 + $0x1fa0] sm:$0xff]
    %v2564 = vld [vmem:[#allocation14 + $0x1fa8] sm:$0xff]
    %v2565 = vld [vmem:[#allocation14 + $0x1fb0] sm:$0xff]
    %v2566 = vld [vmem:[#allocation14 + $0x1fb8] sm:$0xff]
    %v2567 = vld [vmem:[#allocation14 + $0x1fc0] sm:$0xff]
    %v2568 = vld [vmem:[#allocation14 + $0x1fc8] sm:$0xff]
    %v2569 = vld [vmem:[#allocation14 + $0x1fd0] sm:$0xff]
    %v2570 = vld [vmem:[#allocation14 + $0x1fd8] sm:$0xff]
    %v2571 = vld [vmem:[#allocation14 + $0x1fe0] sm:$0xff]
    %v2572 = vld [vmem:[#allocation14 + $0x1fe8] sm:$0xff]
    %v2573 = vld [vmem:[#allocation14 + $0x1ff0] sm:$0xff]
    %v2574 = vld [vmem:[#allocation14 + $0x1ff8] sm:$0xff]
    %v2575 = vld [vmem:[#allocation16] sm:$0xff]
    %v2576 = vld [vmem:[#allocation16 + $0x8] sm:$0xff]
    %v2577 = vld [vmem:[#allocation16 + $0x10] sm:$0xff]
    %v2578 = vld [vmem:[#allocation16 + $0x18] sm:$0xff]
    %v2583 = vperm.slane %v2575, 0
    %v2584 = vperm.slane %v2575, 1
    %v2585 = vperm.slane %v2575, 2
    %v2586 = vperm.slane %v2575, 3
    %v2587 = vperm.slane %v2575, 4
    %v2588 = vperm.slane %v2575, 5
    %v2589 = vperm.slane %v2575, 6
    %v2590 = vperm.slane %v2575, 7
    %v2591 = vperm.slane %v2576, 0
    %v2592 = vperm.slane %v2576, 1
    %v2593 = vperm.slane %v2576, 2
    %v2594 = vperm.slane %v2576, 3
    %v2595 = vperm.slane %v2576, 4
    %v2596 = vperm.slane %v2576, 5
    %v2597 = vperm.slane %v2576, 6
    %v2598 = vperm.slane %v2576, 7
    %v2599 = vperm.slane %v2577, 0
    %v2600 = vperm.slane %v2577, 1
    %v2601 = vperm.slane %v2577, 2
    %v2602 = vperm.slane %v2577, 3
    %v2603 = vperm.slane %v2577, 4
    %v2604 = vperm.slane %v2577, 5
    %v2605 = vperm.slane %v2577, 6
    %v2606 = vperm.slane %v2577, 7
    %v2607 = vperm.slane %v2578, 0
    %v2608 = vperm.slane %v2578, 1
    %v2609 = vperm.slane %v2578, 2
    %v2610 = vperm.slane %v2578, 3
    %v2611 = vperm.slane %v2578, 4
    %v2612 = vperm.slane %v2578, 5
    %v2613 = vperm.slane %v2578, 6
    %v2614 = vperm.slane %v2578, 7
    %v3671 = vunpack.c.l.b16 %v1551
    %v3672 = vunpack.c.h.b16 %v1551
    %v3673 = vunpack.c.l.b16 %v1552
    %v3674 = vunpack.c.h.b16 %v1552
    %v3675 = vunpack.c.l.b16 %v1553
    %v3676 = vunpack.c.h.b16 %v1553
    %v3677 = vunpack.c.l.b16 %v1554
    %v3678 = vunpack.c.h.b16 %v1554
    %v3679 = vunpack.c.l.b16 %v1555
    %v3680 = vunpack.c.h.b16 %v1555
    %v3681 = vunpack.c.l.b16 %v1556
    %v3682 = vunpack.c.h.b16 %v1556
    %v3683 = vunpack.c.l.b16 %v1557
    %v3684 = vunpack.c.h.b16 %v1557
    %v3685 = vunpack.c.l.b16 %v1558
    %v3686 = vunpack.c.h.b16 %v1558
    %v3687 = vunpack.c.l.b16 %v1559
    %v3688 = vunpack.c.h.b16 %v1559
    %v3689 = vunpack.c.l.b16 %v1560
    %v3690 = vunpack.c.h.b16 %v1560
    %v3691 = vunpack.c.l.b16 %v1561
    %v3692 = vunpack.c.h.b16 %v1561
    %v3693 = vunpack.c.l.b16 %v1562
    %v3694 = vunpack.c.h.b16 %v1562
    %v3695 = vunpack.c.l.b16 %v1563
    %v3696 = vunpack.c.h.b16 %v1563
    %v3697 = vunpack.c.l.b16 %v1564
    %v3698 = vunpack.c.h.b16 %v1564
    %v3699 = vunpack.c.l.b16 %v1565
    %v3700 = vunpack.c.h.b16 %v1565
    %v3701 = vunpack.c.l.b16 %v1566
    %v3702 = vunpack.c.h.b16 %v1566
    %v3703 = vunpack.c.l.b16 %v1567
    %v3704 = vunpack.c.h.b16 %v1567
    %v3705 = vunpack.c.l.b16 %v1568
    %v3706 = vunpack.c.h.b16 %v1568
    %v3707 = vunpack.c.l.b16 %v1569
    %v3708 = vunpack.c.h.b16 %v1569
    %v3709 = vunpack.c.l.b16 %v1570
    %v3710 = vunpack.c.h.b16 %v1570
    %v3711 = vunpack.c.l.b16 %v1571
    %v3712 = vunpack.c.h.b16 %v1571
    %v3713 = vunpack.c.l.b16 %v1572
    %v3714 = vunpack.c.h.b16 %v1572
    %v3715 = vunpack.c.l.b16 %v1573
    %v3716 = vunpack.c.h.b16 %v1573
    %v3717 = vunpack.c.l.b16 %v1574
    %v3718 = vunpack.c.h.b16 %v1574
    %v3719 = vunpack.c.l.b16 %v1575
    %v3720 = vunpack.c.h.b16 %v1575
    %v3721 = vunpack.c.l.b16 %v1576
    %v3722 = vunpack.c.h.b16 %v1576
    %v3723 = vunpack.c.l.b16 %v1577
    %v3724 = vunpack.c.h.b16 %v1577
    %v3725 = vunpack.c.l.b16 %v1578
    %v3726 = vunpack.c.h.b16 %v1578
    %v3727 = vunpack.c.l.b16 %v1579
    %v3728 = vunpack.c.h.b16 %v1579
    %v3729 = vunpack.c.l.b16 %v1580
    %v3730 = vunpack.c.h.b16 %v1580
    %v3731 = vunpack.c.l.b16 %v1581
    %v3732 = vunpack.c.h.b16 %v1581
    %v3733 = vunpack.c.l.b16 %v1582
    %v3734 = vunpack.c.h.b16 %v1582
    %v3735 = vunpack.c.l.b16 %v1583
    %v3736 = vunpack.c.h.b16 %v1583
    %v3737 = vunpack.c.l.b16 %v1584
    %v3738 = vunpack.c.h.b16 %v1584
    %v3739 = vunpack.c.l.b16 %v1585
    %v3740 = vunpack.c.h.b16 %v1585
    %v3741 = vunpack.c.l.b16 %v1586
    %v3742 = vunpack.c.h.b16 %v1586
    %v3743 = vunpack.c.l.b16 %v1587
    %v3744 = vunpack.c.h.b16 %v1587
    %v3745 = vunpack.c.l.b16 %v1588
    %v3746 = vunpack.c.h.b16 %v1588
    %v3747 = vunpack.c.l.b16 %v1589
    %v3748 = vunpack.c.h.b16 %v1589
    %v3749 = vunpack.c.l.b16 %v1590
    %v3750 = vunpack.c.h.b16 %v1590
    %v3751 = vunpack.c.l.b16 %v1591
    %v3752 = vunpack.c.h.b16 %v1591
    %v3753 = vunpack.c.l.b16 %v1592
    %v3754 = vunpack.c.h.b16 %v1592
    %v3755 = vunpack.c.l.b16 %v1593
    %v3756 = vunpack.c.h.b16 %v1593
    %v3757 = vunpack.c.l.b16 %v1594
    %v3758 = vunpack.c.h.b16 %v1594
    %v3759 = vunpack.c.l.b16 %v1595
    %v3760 = vunpack.c.h.b16 %v1595
    %v3761 = vunpack.c.l.b16 %v1596
    %v3762 = vunpack.c.h.b16 %v1596
    %v3763 = vunpack.c.l.b16 %v1597
    %v3764 = vunpack.c.h.b16 %v1597
    %v3765 = vunpack.c.l.b16 %v1598
    %v3766 = vunpack.c.h.b16 %v1598
    %v3767 = vunpack.c.l.b16 %v1599
    %v3768 = vunpack.c.h.b16 %v1599
    %v3769 = vunpack.c.l.b16 %v1600
    %v3770 = vunpack.c.h.b16 %v1600
    %v3771 = vunpack.c.l.b16 %v1601
    %v3772 = vunpack.c.h.b16 %v1601
    %v3773 = vunpack.c.l.b16 %v1602
    %v3774 = vunpack.c.h.b16 %v1602
    %v3775 = vunpack.c.l.b16 %v1603
    %v3776 = vunpack.c.h.b16 %v1603
    %v3777 = vunpack.c.l.b16 %v1604
    %v3778 = vunpack.c.h.b16 %v1604
    %v3779 = vunpack.c.l.b16 %v1605
    %v3780 = vunpack.c.h.b16 %v1605
    %v3781 = vunpack.c.l.b16 %v1606
    %v3782 = vunpack.c.h.b16 %v1606
    %v3783 = vunpack.c.l.b16 %v1607
    %v3784 = vunpack.c.h.b16 %v1607
    %v3785 = vunpack.c.l.b16 %v1608
    %v3786 = vunpack.c.h.b16 %v1608
    %v3787 = vunpack.c.l.b16 %v1609
    %v3788 = vunpack.c.h.b16 %v1609
    %v3789 = vunpack.c.l.b16 %v1610
    %v3790 = vunpack.c.h.b16 %v1610
    %v3791 = vunpack.c.l.b16 %v1611
    %v3792 = vunpack.c.h.b16 %v1611
    %v3793 = vunpack.c.l.b16 %v1612
    %v3794 = vunpack.c.h.b16 %v1612
    %v3795 = vunpack.c.l.b16 %v1613
    %v3796 = vunpack.c.h.b16 %v1613
    %v3797 = vunpack.c.l.b16 %v1614
    %v3798 = vunpack.c.h.b16 %v1614
    %v3799 = vunpack.c.l.b16 %v1615
    %v3800 = vunpack.c.h.b16 %v1615
    %v3801 = vunpack.c.l.b16 %v1616
    %v3802 = vunpack.c.h.b16 %v1616
    %v3803 = vunpack.c.l.b16 %v1617
    %v3804 = vunpack.c.h.b16 %v1617
    %v3805 = vunpack.c.l.b16 %v1618
    %v3806 = vunpack.c.h.b16 %v1618
    %v3807 = vunpack.c.l.b16 %v1619
    %v3808 = vunpack.c.h.b16 %v1619
    %v3809 = vunpack.c.l.b16 %v1620
    %v3810 = vunpack.c.h.b16 %v1620
    %v3811 = vunpack.c.l.b16 %v1621
    %v3812 = vunpack.c.h.b16 %v1621
    %v3813 = vunpack.c.l.b16 %v1622
    %v3814 = vunpack.c.h.b16 %v1622
    %v3815 = vunpack.c.l.b16 %v1623
    %v3816 = vunpack.c.h.b16 %v1623
    %v3817 = vunpack.c.l.b16 %v1624
    %v3818 = vunpack.c.h.b16 %v1624
    %v3819 = vunpack.c.l.b16 %v1625
    %v3820 = vunpack.c.h.b16 %v1625
    %v3821 = vunpack.c.l.b16 %v1626
    %v3822 = vunpack.c.h.b16 %v1626
    %v3823 = vunpack.c.l.b16 %v1627
    %v3824 = vunpack.c.h.b16 %v1627
    %v3825 = vunpack.c.l.b16 %v1628
    %v3826 = vunpack.c.h.b16 %v1628
    %v3827 = vunpack.c.l.b16 %v1629
    %v3828 = vunpack.c.h.b16 %v1629
    %v3829 = vunpack.c.l.b16 %v1630
    %v3830 = vunpack.c.h.b16 %v1630
    %v3831 = vunpack.c.l.b16 %v1631
    %v3832 = vunpack.c.h.b16 %v1631
    %v3833 = vunpack.c.l.b16 %v1632
    %v3834 = vunpack.c.h.b16 %v1632
    %v3835 = vunpack.c.l.b16 %v1633
    %v3836 = vunpack.c.h.b16 %v1633
    %v3837 = vunpack.c.l.b16 %v1634
    %v3838 = vunpack.c.h.b16 %v1634
    %v3839 = vunpack.c.l.b16 %v1635
    %v3840 = vunpack.c.h.b16 %v1635
    %v3841 = vunpack.c.l.b16 %v1636
    %v3842 = vunpack.c.h.b16 %v1636
    %v3843 = vunpack.c.l.b16 %v1637
    %v3844 = vunpack.c.h.b16 %v1637
    %v3845 = vunpack.c.l.b16 %v1638
    %v3846 = vunpack.c.h.b16 %v1638
    %v3847 = vunpack.c.l.b16 %v1639
    %v3848 = vunpack.c.h.b16 %v1639
    %v3849 = vunpack.c.l.b16 %v1640
    %v3850 = vunpack.c.h.b16 %v1640
    %v3851 = vunpack.c.l.b16 %v1641
    %v3852 = vunpack.c.h.b16 %v1641
    %v3853 = vunpack.c.l.b16 %v1642
    %v3854 = vunpack.c.h.b16 %v1642
    %v3855 = vunpack.c.l.b16 %v1643
    %v3856 = vunpack.c.h.b16 %v1643
    %v3857 = vunpack.c.l.b16 %v1644
    %v3858 = vunpack.c.h.b16 %v1644
    %v3859 = vunpack.c.l.b16 %v1645
    %v3860 = vunpack.c.h.b16 %v1645
    %v3861 = vunpack.c.l.b16 %v1646
    %v3862 = vunpack.c.h.b16 %v1646
    %v3863 = vunpack.c.l.b16 %v1647
    %v3864 = vunpack.c.h.b16 %v1647
    %v3865 = vunpack.c.l.b16 %v1648
    %v3866 = vunpack.c.h.b16 %v1648
    %v3867 = vunpack.c.l.b16 %v1649
    %v3868 = vunpack.c.h.b16 %v1649
    %v3869 = vunpack.c.l.b16 %v1650
    %v3870 = vunpack.c.h.b16 %v1650
    %v3871 = vunpack.c.l.b16 %v1651
    %v3872 = vunpack.c.h.b16 %v1651
    %v3873 = vunpack.c.l.b16 %v1652
    %v3874 = vunpack.c.h.b16 %v1652
    %v3875 = vunpack.c.l.b16 %v1653
    %v3876 = vunpack.c.h.b16 %v1653
    %v3877 = vunpack.c.l.b16 %v1654
    %v3878 = vunpack.c.h.b16 %v1654
    %v3879 = vunpack.c.l.b16 %v1655
    %v3880 = vunpack.c.h.b16 %v1655
    %v3881 = vunpack.c.l.b16 %v1656
    %v3882 = vunpack.c.h.b16 %v1656
    %v3883 = vunpack.c.l.b16 %v1657
    %v3884 = vunpack.c.h.b16 %v1657
    %v3885 = vunpack.c.l.b16 %v1658
    %v3886 = vunpack.c.h.b16 %v1658
    %v3887 = vunpack.c.l.b16 %v1659
    %v3888 = vunpack.c.h.b16 %v1659
    %v3889 = vunpack.c.l.b16 %v1660
    %v3890 = vunpack.c.h.b16 %v1660
    %v3891 = vunpack.c.l.b16 %v1661
    %v3892 = vunpack.c.h.b16 %v1661
    %v3893 = vunpack.c.l.b16 %v1662
    %v3894 = vunpack.c.h.b16 %v1662
    %v3895 = vunpack.c.l.b16 %v1663
    %v3896 = vunpack.c.h.b16 %v1663
    %v3897 = vunpack.c.l.b16 %v1664
    %v3898 = vunpack.c.h.b16 %v1664
    %v3899 = vunpack.c.l.b16 %v1665
    %v3900 = vunpack.c.h.b16 %v1665
    %v3901 = vunpack.c.l.b16 %v1666
    %v3902 = vunpack.c.h.b16 %v1666
    %v3903 = vunpack.c.l.b16 %v1667
    %v3904 = vunpack.c.h.b16 %v1667
    %v3905 = vunpack.c.l.b16 %v1668
    %v3906 = vunpack.c.h.b16 %v1668
    %v3907 = vunpack.c.l.b16 %v1669
    %v3908 = vunpack.c.h.b16 %v1669
    %v3909 = vunpack.c.l.b16 %v1670
    %v3910 = vunpack.c.h.b16 %v1670
    %v3911 = vunpack.c.l.b16 %v1671
    %v3912 = vunpack.c.h.b16 %v1671
    %v3913 = vunpack.c.l.b16 %v1672
    %v3914 = vunpack.c.h.b16 %v1672
    %v3915 = vunpack.c.l.b16 %v1673
    %v3916 = vunpack.c.h.b16 %v1673
    %v3917 = vunpack.c.l.b16 %v1674
    %v3918 = vunpack.c.h.b16 %v1674
    %v3919 = vunpack.c.l.b16 %v1675
    %v3920 = vunpack.c.h.b16 %v1675
    %v3921 = vunpack.c.l.b16 %v1676
    %v3922 = vunpack.c.h.b16 %v1676
    %v3923 = vunpack.c.l.b16 %v1677
    %v3924 = vunpack.c.h.b16 %v1677
    %v3925 = vunpack.c.l.b16 %v1678
    %v3926 = vunpack.c.h.b16 %v1678
    %v3927 = vunpack.c.l.b16 %v1679
    %v3928 = vunpack.c.h.b16 %v1679
    %v3929 = vunpack.c.l.b16 %v1680
    %v3930 = vunpack.c.h.b16 %v1680
    %v3931 = vunpack.c.l.b16 %v1681
    %v3932 = vunpack.c.h.b16 %v1681
    %v3933 = vunpack.c.l.b16 %v1682
    %v3934 = vunpack.c.h.b16 %v1682
    %v3935 = vunpack.c.l.b16 %v1683
    %v3936 = vunpack.c.h.b16 %v1683
    %v3937 = vunpack.c.l.b16 %v1684
    %v3938 = vunpack.c.h.b16 %v1684
    %v3939 = vunpack.c.l.b16 %v1685
    %v3940 = vunpack.c.h.b16 %v1685
    %v3941 = vunpack.c.l.b16 %v1686
    %v3942 = vunpack.c.h.b16 %v1686
    %v3943 = vunpack.c.l.b16 %v1687
    %v3944 = vunpack.c.h.b16 %v1687
    %v3945 = vunpack.c.l.b16 %v1688
    %v3946 = vunpack.c.h.b16 %v1688
    %v3947 = vunpack.c.l.b16 %v1689
    %v3948 = vunpack.c.h.b16 %v1689
    %v3949 = vunpack.c.l.b16 %v1690
    %v3950 = vunpack.c.h.b16 %v1690
    %v3951 = vunpack.c.l.b16 %v1691
    %v3952 = vunpack.c.h.b16 %v1691
    %v3953 = vunpack.c.l.b16 %v1692
    %v3954 = vunpack.c.h.b16 %v1692
    %v3955 = vunpack.c.l.b16 %v1693
    %v3956 = vunpack.c.h.b16 %v1693
    %v3957 = vunpack.c.l.b16 %v1694
    %v3958 = vunpack.c.h.b16 %v1694
    %v3959 = vunpack.c.l.b16 %v1695
    %v3960 = vunpack.c.h.b16 %v1695
    %v3961 = vunpack.c.l.b16 %v1696
    %v3962 = vunpack.c.h.b16 %v1696
    %v3963 = vunpack.c.l.b16 %v1697
    %v3964 = vunpack.c.h.b16 %v1697
    %v3965 = vunpack.c.l.b16 %v1698
    %v3966 = vunpack.c.h.b16 %v1698
    %v3967 = vunpack.c.l.b16 %v1699
    %v3968 = vunpack.c.h.b16 %v1699
    %v3969 = vunpack.c.l.b16 %v1700
    %v3970 = vunpack.c.h.b16 %v1700
    %v3971 = vunpack.c.l.b16 %v1701
    %v3972 = vunpack.c.h.b16 %v1701
    %v3973 = vunpack.c.l.b16 %v1702
    %v3974 = vunpack.c.h.b16 %v1702
    %v3975 = vunpack.c.l.b16 %v1703
    %v3976 = vunpack.c.h.b16 %v1703
    %v3977 = vunpack.c.l.b16 %v1704
    %v3978 = vunpack.c.h.b16 %v1704
    %v3979 = vunpack.c.l.b16 %v1705
    %v3980 = vunpack.c.h.b16 %v1705
    %v3981 = vunpack.c.l.b16 %v1706
    %v3982 = vunpack.c.h.b16 %v1706
    %v3983 = vunpack.c.l.b16 %v1707
    %v3984 = vunpack.c.h.b16 %v1707
    %v3985 = vunpack.c.l.b16 %v1708
    %v3986 = vunpack.c.h.b16 %v1708
    %v3987 = vunpack.c.l.b16 %v1709
    %v3988 = vunpack.c.h.b16 %v1709
    %v3989 = vunpack.c.l.b16 %v1710
    %v3990 = vunpack.c.h.b16 %v1710
    %v3991 = vunpack.c.l.b16 %v1711
    %v3992 = vunpack.c.h.b16 %v1711
    %v3993 = vunpack.c.l.b16 %v1712
    %v3994 = vunpack.c.h.b16 %v1712
    %v3995 = vunpack.c.l.b16 %v1713
    %v3996 = vunpack.c.h.b16 %v1713
    %v3997 = vunpack.c.l.b16 %v1714
    %v3998 = vunpack.c.h.b16 %v1714
    %v3999 = vunpack.c.l.b16 %v1715
    %v4000 = vunpack.c.h.b16 %v1715
    %v4001 = vunpack.c.l.b16 %v1716
    %v4002 = vunpack.c.h.b16 %v1716
    %v4003 = vunpack.c.l.b16 %v1717
    %v4004 = vunpack.c.h.b16 %v1717
    %v4005 = vunpack.c.l.b16 %v1718
    %v4006 = vunpack.c.h.b16 %v1718
    %v4007 = vunpack.c.l.b16 %v1719
    %v4008 = vunpack.c.h.b16 %v1719
    %v4009 = vunpack.c.l.b16 %v1720
    %v4010 = vunpack.c.h.b16 %v1720
    %v4011 = vunpack.c.l.b16 %v1721
    %v4012 = vunpack.c.h.b16 %v1721
    %v4013 = vunpack.c.l.b16 %v1722
    %v4014 = vunpack.c.h.b16 %v1722
    %v4015 = vunpack.c.l.b16 %v1723
    %v4016 = vunpack.c.h.b16 %v1723
    %v4017 = vunpack.c.l.b16 %v1724
    %v4018 = vunpack.c.h.b16 %v1724
    %v4019 = vunpack.c.l.b16 %v1725
    %v4020 = vunpack.c.h.b16 %v1725
    %v4021 = vunpack.c.l.b16 %v1726
    %v4022 = vunpack.c.h.b16 %v1726
    %v4023 = vunpack.c.l.b16 %v1727
    %v4024 = vunpack.c.h.b16 %v1727
    %v4025 = vunpack.c.l.b16 %v1728
    %v4026 = vunpack.c.h.b16 %v1728
    %v4027 = vunpack.c.l.b16 %v1729
    %v4028 = vunpack.c.h.b16 %v1729
    %v4029 = vunpack.c.l.b16 %v1730
    %v4030 = vunpack.c.h.b16 %v1730
    %v4031 = vunpack.c.l.b16 %v1731
    %v4032 = vunpack.c.h.b16 %v1731
    %v4033 = vunpack.c.l.b16 %v1732
    %v4034 = vunpack.c.h.b16 %v1732
    %v4035 = vunpack.c.l.b16 %v1733
    %v4036 = vunpack.c.h.b16 %v1733
    %v4037 = vunpack.c.l.b16 %v1734
    %v4038 = vunpack.c.h.b16 %v1734
    %v4039 = vunpack.c.l.b16 %v1735
    %v4040 = vunpack.c.h.b16 %v1735
    %v4041 = vunpack.c.l.b16 %v1736
    %v4042 = vunpack.c.h.b16 %v1736
    %v4043 = vunpack.c.l.b16 %v1737
    %v4044 = vunpack.c.h.b16 %v1737
    %v4045 = vunpack.c.l.b16 %v1738
    %v4046 = vunpack.c.h.b16 %v1738
    %v4047 = vunpack.c.l.b16 %v1739
    %v4048 = vunpack.c.h.b16 %v1739
    %v4049 = vunpack.c.l.b16 %v1740
    %v4050 = vunpack.c.h.b16 %v1740
    %v4051 = vunpack.c.l.b16 %v1741
    %v4052 = vunpack.c.h.b16 %v1741
    %v4053 = vunpack.c.l.b16 %v1742
    %v4054 = vunpack.c.h.b16 %v1742
    %v4055 = vunpack.c.l.b16 %v1743
    %v4056 = vunpack.c.h.b16 %v1743
    %v4057 = vunpack.c.l.b16 %v1744
    %v4058 = vunpack.c.h.b16 %v1744
    %v4059 = vunpack.c.l.b16 %v1745
    %v4060 = vunpack.c.h.b16 %v1745
    %v4061 = vunpack.c.l.b16 %v1746
    %v4062 = vunpack.c.h.b16 %v1746
    %v4063 = vunpack.c.l.b16 %v1747
    %v4064 = vunpack.c.h.b16 %v1747
    %v4065 = vunpack.c.l.b16 %v1748
    %v4066 = vunpack.c.h.b16 %v1748
    %v4067 = vunpack.c.l.b16 %v1749
    %v4068 = vunpack.c.h.b16 %v1749
    %v4069 = vunpack.c.l.b16 %v1750
    %v4070 = vunpack.c.h.b16 %v1750
    %v4071 = vunpack.c.l.b16 %v1751
    %v4072 = vunpack.c.h.b16 %v1751
    %v4073 = vunpack.c.l.b16 %v1752
    %v4074 = vunpack.c.h.b16 %v1752
    %v4075 = vunpack.c.l.b16 %v1753
    %v4076 = vunpack.c.h.b16 %v1753
    %v4077 = vunpack.c.l.b16 %v1754
    %v4078 = vunpack.c.h.b16 %v1754
    %v4079 = vunpack.c.l.b16 %v1755
    %v4080 = vunpack.c.h.b16 %v1755
    %v4081 = vunpack.c.l.b16 %v1756
    %v4082 = vunpack.c.h.b16 %v1756
    %v4083 = vunpack.c.l.b16 %v1757
    %v4084 = vunpack.c.h.b16 %v1757
    %v4085 = vunpack.c.l.b16 %v1758
    %v4086 = vunpack.c.h.b16 %v1758
    %v4087 = vunpack.c.l.b16 %v1759
    %v4088 = vunpack.c.h.b16 %v1759
    %v4089 = vunpack.c.l.b16 %v1760
    %v4090 = vunpack.c.h.b16 %v1760
    %v4091 = vunpack.c.l.b16 %v1761
    %v4092 = vunpack.c.h.b16 %v1761
    %v4093 = vunpack.c.l.b16 %v1762
    %v4094 = vunpack.c.h.b16 %v1762
    %v4095 = vunpack.c.l.b16 %v1763
    %v4096 = vunpack.c.h.b16 %v1763
    %v4097 = vunpack.c.l.b16 %v1764
    %v4098 = vunpack.c.h.b16 %v1764
    %v4099 = vunpack.c.l.b16 %v1765
    %v4100 = vunpack.c.h.b16 %v1765
    %v4101 = vunpack.c.l.b16 %v1766
    %v4102 = vunpack.c.h.b16 %v1766
    %v4103 = vunpack.c.l.b16 %v1767
    %v4104 = vunpack.c.h.b16 %v1767
    %v4105 = vunpack.c.l.b16 %v1768
    %v4106 = vunpack.c.h.b16 %v1768
    %v4107 = vunpack.c.l.b16 %v1769
    %v4108 = vunpack.c.h.b16 %v1769
    %v4109 = vunpack.c.l.b16 %v1770
    %v4110 = vunpack.c.h.b16 %v1770
    %v4111 = vunpack.c.l.b16 %v1771
    %v4112 = vunpack.c.h.b16 %v1771
    %v4113 = vunpack.c.l.b16 %v1772
    %v4114 = vunpack.c.h.b16 %v1772
    %v4115 = vunpack.c.l.b16 %v1773
    %v4116 = vunpack.c.h.b16 %v1773
    %v4117 = vunpack.c.l.b16 %v1774
    %v4118 = vunpack.c.h.b16 %v1774
    %v4119 = vunpack.c.l.b16 %v1775
    %v4120 = vunpack.c.h.b16 %v1775
    %v4121 = vunpack.c.l.b16 %v1776
    %v4122 = vunpack.c.h.b16 %v1776
    %v4123 = vunpack.c.l.b16 %v1777
    %v4124 = vunpack.c.h.b16 %v1777
    %v4125 = vunpack.c.l.b16 %v1778
    %v4126 = vunpack.c.h.b16 %v1778
    %v4127 = vunpack.c.l.b16 %v1779
    %v4128 = vunpack.c.h.b16 %v1779
    %v4129 = vunpack.c.l.b16 %v1780
    %v4130 = vunpack.c.h.b16 %v1780
    %v4131 = vunpack.c.l.b16 %v1781
    %v4132 = vunpack.c.h.b16 %v1781
    %v4133 = vunpack.c.l.b16 %v1782
    %v4134 = vunpack.c.h.b16 %v1782
    %v4135 = vunpack.c.l.b16 %v1783
    %v4136 = vunpack.c.h.b16 %v1783
    %v4137 = vunpack.c.l.b16 %v1784
    %v4138 = vunpack.c.h.b16 %v1784
    %v4139 = vunpack.c.l.b16 %v1785
    %v4140 = vunpack.c.h.b16 %v1785
    %v4141 = vunpack.c.l.b16 %v1786
    %v4142 = vunpack.c.h.b16 %v1786
    %v4143 = vunpack.c.l.b16 %v1787
    %v4144 = vunpack.c.h.b16 %v1787
    %v4145 = vunpack.c.l.b16 %v1788
    %v4146 = vunpack.c.h.b16 %v1788
    %v4147 = vunpack.c.l.b16 %v1789
    %v4148 = vunpack.c.h.b16 %v1789
    %v4149 = vunpack.c.l.b16 %v1790
    %v4150 = vunpack.c.h.b16 %v1790
    %v4151 = vunpack.c.l.b16 %v1791
    %v4152 = vunpack.c.h.b16 %v1791
    %v4153 = vunpack.c.l.b16 %v1792
    %v4154 = vunpack.c.h.b16 %v1792
    %v4155 = vunpack.c.l.b16 %v1793
    %v4156 = vunpack.c.h.b16 %v1793
    %v4157 = vunpack.c.l.b16 %v1794
    %v4158 = vunpack.c.h.b16 %v1794
    %v4159 = vunpack.c.l.b16 %v1795
    %v4160 = vunpack.c.h.b16 %v1795
    %v4161 = vunpack.c.l.b16 %v1796
    %v4162 = vunpack.c.h.b16 %v1796
    %v4163 = vunpack.c.l.b16 %v1797
    %v4164 = vunpack.c.h.b16 %v1797
    %v4165 = vunpack.c.l.b16 %v1798
    %v4166 = vunpack.c.h.b16 %v1798
    %v4167 = vunpack.c.l.b16 %v1799
    %v4168 = vunpack.c.h.b16 %v1799
    %v4169 = vunpack.c.l.b16 %v1800
    %v4170 = vunpack.c.h.b16 %v1800
    %v4171 = vunpack.c.l.b16 %v1801
    %v4172 = vunpack.c.h.b16 %v1801
    %v4173 = vunpack.c.l.b16 %v1802
    %v4174 = vunpack.c.h.b16 %v1802
    %v4175 = vunpack.c.l.b16 %v1803
    %v4176 = vunpack.c.h.b16 %v1803
    %v4177 = vunpack.c.l.b16 %v1804
    %v4178 = vunpack.c.h.b16 %v1804
    %v4179 = vunpack.c.l.b16 %v1805
    %v4180 = vunpack.c.h.b16 %v1805
    %v4181 = vunpack.c.l.b16 %v1806
    %v4182 = vunpack.c.h.b16 %v1806
    %v4183 = vunpack.c.l.b16 %v1807
    %v4184 = vunpack.c.h.b16 %v1807
    %v4185 = vunpack.c.l.b16 %v1808
    %v4186 = vunpack.c.h.b16 %v1808
    %v4187 = vunpack.c.l.b16 %v1809
    %v4188 = vunpack.c.h.b16 %v1809
    %v4189 = vunpack.c.l.b16 %v1810
    %v4190 = vunpack.c.h.b16 %v1810
    %v4191 = vunpack.c.l.b16 %v1811
    %v4192 = vunpack.c.h.b16 %v1811
    %v4193 = vunpack.c.l.b16 %v1812
    %v4194 = vunpack.c.h.b16 %v1812
    %v4195 = vunpack.c.l.b16 %v1813
    %v4196 = vunpack.c.h.b16 %v1813
    %v4197 = vunpack.c.l.b16 %v1814
    %v4198 = vunpack.c.h.b16 %v1814
    %v4199 = vunpack.c.l.b16 %v1815
    %v4200 = vunpack.c.h.b16 %v1815
    %v4201 = vunpack.c.l.b16 %v1816
    %v4202 = vunpack.c.h.b16 %v1816
    %v4203 = vunpack.c.l.b16 %v1817
    %v4204 = vunpack.c.h.b16 %v1817
    %v4205 = vunpack.c.l.b16 %v1818
    %v4206 = vunpack.c.h.b16 %v1818
    %v4207 = vunpack.c.l.b16 %v1819
    %v4208 = vunpack.c.h.b16 %v1819
    %v4209 = vunpack.c.l.b16 %v1820
    %v4210 = vunpack.c.h.b16 %v1820
    %v4211 = vunpack.c.l.b16 %v1821
    %v4212 = vunpack.c.h.b16 %v1821
    %v4213 = vunpack.c.l.b16 %v1822
    %v4214 = vunpack.c.h.b16 %v1822
    %v4215 = vunpack.c.l.b16 %v1823
    %v4216 = vunpack.c.h.b16 %v1823
    %v4217 = vunpack.c.l.b16 %v1824
    %v4218 = vunpack.c.h.b16 %v1824
    %v4219 = vunpack.c.l.b16 %v1825
    %v4220 = vunpack.c.h.b16 %v1825
    %v4221 = vunpack.c.l.b16 %v1826
    %v4222 = vunpack.c.h.b16 %v1826
    %v4223 = vunpack.c.l.b16 %v1827
    %v4224 = vunpack.c.h.b16 %v1827
    %v4225 = vunpack.c.l.b16 %v1828
    %v4226 = vunpack.c.h.b16 %v1828
    %v4227 = vunpack.c.l.b16 %v1829
    %v4228 = vunpack.c.h.b16 %v1829
    %v4229 = vunpack.c.l.b16 %v1830
    %v4230 = vunpack.c.h.b16 %v1830
    %v4231 = vunpack.c.l.b16 %v1831
    %v4232 = vunpack.c.h.b16 %v1831
    %v4233 = vunpack.c.l.b16 %v1832
    %v4234 = vunpack.c.h.b16 %v1832
    %v4235 = vunpack.c.l.b16 %v1833
    %v4236 = vunpack.c.h.b16 %v1833
    %v4237 = vunpack.c.l.b16 %v1834
    %v4238 = vunpack.c.h.b16 %v1834
    %v4239 = vunpack.c.l.b16 %v1835
    %v4240 = vunpack.c.h.b16 %v1835
    %v4241 = vunpack.c.l.b16 %v1836
    %v4242 = vunpack.c.h.b16 %v1836
    %v4243 = vunpack.c.l.b16 %v1837
    %v4244 = vunpack.c.h.b16 %v1837
    %v4245 = vunpack.c.l.b16 %v1838
    %v4246 = vunpack.c.h.b16 %v1838
    %v4247 = vunpack.c.l.b16 %v1839
    %v4248 = vunpack.c.h.b16 %v1839
    %v4249 = vunpack.c.l.b16 %v1840
    %v4250 = vunpack.c.h.b16 %v1840
    %v4251 = vunpack.c.l.b16 %v1841
    %v4252 = vunpack.c.h.b16 %v1841
    %v4253 = vunpack.c.l.b16 %v1842
    %v4254 = vunpack.c.h.b16 %v1842
    %v4255 = vunpack.c.l.b16 %v1843
    %v4256 = vunpack.c.h.b16 %v1843
    %v4257 = vunpack.c.l.b16 %v1844
    %v4258 = vunpack.c.h.b16 %v1844
    %v4259 = vunpack.c.l.b16 %v1845
    %v4260 = vunpack.c.h.b16 %v1845
    %v4261 = vunpack.c.l.b16 %v1846
    %v4262 = vunpack.c.h.b16 %v1846
    %v4263 = vunpack.c.l.b16 %v1847
    %v4264 = vunpack.c.h.b16 %v1847
    %v4265 = vunpack.c.l.b16 %v1848
    %v4266 = vunpack.c.h.b16 %v1848
    %v4267 = vunpack.c.l.b16 %v1849
    %v4268 = vunpack.c.h.b16 %v1849
    %v4269 = vunpack.c.l.b16 %v1850
    %v4270 = vunpack.c.h.b16 %v1850
    %v4271 = vunpack.c.l.b16 %v1851
    %v4272 = vunpack.c.h.b16 %v1851
    %v4273 = vunpack.c.l.b16 %v1852
    %v4274 = vunpack.c.h.b16 %v1852
    %v4275 = vunpack.c.l.b16 %v1853
    %v4276 = vunpack.c.h.b16 %v1853
    %v4277 = vunpack.c.l.b16 %v1854
    %v4278 = vunpack.c.h.b16 %v1854
    %v4279 = vunpack.c.l.b16 %v1855
    %v4280 = vunpack.c.h.b16 %v1855
    %v4281 = vunpack.c.l.b16 %v1856
    %v4282 = vunpack.c.h.b16 %v1856
    %v4283 = vunpack.c.l.b16 %v1857
    %v4284 = vunpack.c.h.b16 %v1857
    %v4285 = vunpack.c.l.b16 %v1858
    %v4286 = vunpack.c.h.b16 %v1858
    %v4287 = vunpack.c.l.b16 %v1859
    %v4288 = vunpack.c.h.b16 %v1859
    %v4289 = vunpack.c.l.b16 %v1860
    %v4290 = vunpack.c.h.b16 %v1860
    %v4291 = vunpack.c.l.b16 %v1861
    %v4292 = vunpack.c.h.b16 %v1861
    %v4293 = vunpack.c.l.b16 %v1862
    %v4294 = vunpack.c.h.b16 %v1862
    %v4295 = vunpack.c.l.b16 %v1863
    %v4296 = vunpack.c.h.b16 %v1863
    %v4297 = vunpack.c.l.b16 %v1864
    %v4298 = vunpack.c.h.b16 %v1864
    %v4299 = vunpack.c.l.b16 %v1865
    %v4300 = vunpack.c.h.b16 %v1865
    %v4301 = vunpack.c.l.b16 %v1866
    %v4302 = vunpack.c.h.b16 %v1866
    %v4303 = vunpack.c.l.b16 %v1867
    %v4304 = vunpack.c.h.b16 %v1867
    %v4305 = vunpack.c.l.b16 %v1868
    %v4306 = vunpack.c.h.b16 %v1868
    %v4307 = vunpack.c.l.b16 %v1869
    %v4308 = vunpack.c.h.b16 %v1869
    %v4309 = vunpack.c.l.b16 %v1870
    %v4310 = vunpack.c.h.b16 %v1870
    %v4311 = vunpack.c.l.b16 %v1871
    %v4312 = vunpack.c.h.b16 %v1871
    %v4313 = vunpack.c.l.b16 %v1872
    %v4314 = vunpack.c.h.b16 %v1872
    %v4315 = vunpack.c.l.b16 %v1873
    %v4316 = vunpack.c.h.b16 %v1873
    %v4317 = vunpack.c.l.b16 %v1874
    %v4318 = vunpack.c.h.b16 %v1874
    %v4319 = vunpack.c.l.b16 %v1875
    %v4320 = vunpack.c.h.b16 %v1875
    %v4321 = vunpack.c.l.b16 %v1876
    %v4322 = vunpack.c.h.b16 %v1876
    %v4323 = vunpack.c.l.b16 %v1877
    %v4324 = vunpack.c.h.b16 %v1877
    %v4325 = vunpack.c.l.b16 %v1878
    %v4326 = vunpack.c.h.b16 %v1878
    %v4327 = vunpack.c.l.b16 %v1879
    %v4328 = vunpack.c.h.b16 %v1879
    %v4329 = vunpack.c.l.b16 %v1880
    %v4330 = vunpack.c.h.b16 %v1880
    %v4331 = vunpack.c.l.b16 %v1881
    %v4332 = vunpack.c.h.b16 %v1881
    %v4333 = vunpack.c.l.b16 %v1882
    %v4334 = vunpack.c.h.b16 %v1882
    %v4335 = vunpack.c.l.b16 %v1883
    %v4336 = vunpack.c.h.b16 %v1883
    %v4337 = vunpack.c.l.b16 %v1884
    %v4338 = vunpack.c.h.b16 %v1884
    %v4339 = vunpack.c.l.b16 %v1885
    %v4340 = vunpack.c.h.b16 %v1885
    %v4341 = vunpack.c.l.b16 %v1886
    %v4342 = vunpack.c.h.b16 %v1886
    %v4343 = vunpack.c.l.b16 %v1887
    %v4344 = vunpack.c.h.b16 %v1887
    %v4345 = vunpack.c.l.b16 %v1888
    %v4346 = vunpack.c.h.b16 %v1888
    %v4347 = vunpack.c.l.b16 %v1889
    %v4348 = vunpack.c.h.b16 %v1889
    %v4349 = vunpack.c.l.b16 %v1890
    %v4350 = vunpack.c.h.b16 %v1890
    %v4351 = vunpack.c.l.b16 %v1891
    %v4352 = vunpack.c.h.b16 %v1891
    %v4353 = vunpack.c.l.b16 %v1892
    %v4354 = vunpack.c.h.b16 %v1892
    %v4355 = vunpack.c.l.b16 %v1893
    %v4356 = vunpack.c.h.b16 %v1893
    %v4357 = vunpack.c.l.b16 %v1894
    %v4358 = vunpack.c.h.b16 %v1894
    %v4359 = vunpack.c.l.b16 %v1895
    %v4360 = vunpack.c.h.b16 %v1895
    %v4361 = vunpack.c.l.b16 %v1896
    %v4362 = vunpack.c.h.b16 %v1896
    %v4363 = vunpack.c.l.b16 %v1897
    %v4364 = vunpack.c.h.b16 %v1897
    %v4365 = vunpack.c.l.b16 %v1898
    %v4366 = vunpack.c.h.b16 %v1898
    %v4367 = vunpack.c.l.b16 %v1899
    %v4368 = vunpack.c.h.b16 %v1899
    %v4369 = vunpack.c.l.b16 %v1900
    %v4370 = vunpack.c.h.b16 %v1900
    %v4371 = vunpack.c.l.b16 %v1901
    %v4372 = vunpack.c.h.b16 %v1901
    %v4373 = vunpack.c.l.b16 %v1902
    %v4374 = vunpack.c.h.b16 %v1902
    %v4375 = vunpack.c.l.b16 %v1903
    %v4376 = vunpack.c.h.b16 %v1903
    %v4377 = vunpack.c.l.b16 %v1904
    %v4378 = vunpack.c.h.b16 %v1904
    %v4379 = vunpack.c.l.b16 %v1905
    %v4380 = vunpack.c.h.b16 %v1905
    %v4381 = vunpack.c.l.b16 %v1906
    %v4382 = vunpack.c.h.b16 %v1906
    %v4383 = vunpack.c.l.b16 %v1907
    %v4384 = vunpack.c.h.b16 %v1907
    %v4385 = vunpack.c.l.b16 %v1908
    %v4386 = vunpack.c.h.b16 %v1908
    %v4387 = vunpack.c.l.b16 %v1909
    %v4388 = vunpack.c.h.b16 %v1909
    %v4389 = vunpack.c.l.b16 %v1910
    %v4390 = vunpack.c.h.b16 %v1910
    %v4391 = vunpack.c.l.b16 %v1911
    %v4392 = vunpack.c.h.b16 %v1911
    %v4393 = vunpack.c.l.b16 %v1912
    %v4394 = vunpack.c.h.b16 %v1912
    %v4395 = vunpack.c.l.b16 %v1913
    %v4396 = vunpack.c.h.b16 %v1913
    %v4397 = vunpack.c.l.b16 %v1914
    %v4398 = vunpack.c.h.b16 %v1914
    %v4399 = vunpack.c.l.b16 %v1915
    %v4400 = vunpack.c.h.b16 %v1915
    %v4401 = vunpack.c.l.b16 %v1916
    %v4402 = vunpack.c.h.b16 %v1916
    %v4403 = vunpack.c.l.b16 %v1917
    %v4404 = vunpack.c.h.b16 %v1917
    %v4405 = vunpack.c.l.b16 %v1918
    %v4406 = vunpack.c.h.b16 %v1918
    %v4407 = vunpack.c.l.b16 %v1919
    %v4408 = vunpack.c.h.b16 %v1919
    %v4409 = vunpack.c.l.b16 %v1920
    %v4410 = vunpack.c.h.b16 %v1920
    %v4411 = vunpack.c.l.b16 %v1921
    %v4412 = vunpack.c.h.b16 %v1921
    %v4413 = vunpack.c.l.b16 %v1922
    %v4414 = vunpack.c.h.b16 %v1922
    %v4415 = vunpack.c.l.b16 %v1923
    %v4416 = vunpack.c.h.b16 %v1923
    %v4417 = vunpack.c.l.b16 %v1924
    %v4418 = vunpack.c.h.b16 %v1924
    %v4419 = vunpack.c.l.b16 %v1925
    %v4420 = vunpack.c.h.b16 %v1925
    %v4421 = vunpack.c.l.b16 %v1926
    %v4422 = vunpack.c.h.b16 %v1926
    %v4423 = vunpack.c.l.b16 %v1927
    %v4424 = vunpack.c.h.b16 %v1927
    %v4425 = vunpack.c.l.b16 %v1928
    %v4426 = vunpack.c.h.b16 %v1928
    %v4427 = vunpack.c.l.b16 %v1929
    %v4428 = vunpack.c.h.b16 %v1929
    %v4429 = vunpack.c.l.b16 %v1930
    %v4430 = vunpack.c.h.b16 %v1930
    %v4431 = vunpack.c.l.b16 %v1931
    %v4432 = vunpack.c.h.b16 %v1931
    %v4433 = vunpack.c.l.b16 %v1932
    %v4434 = vunpack.c.h.b16 %v1932
    %v4435 = vunpack.c.l.b16 %v1933
    %v4436 = vunpack.c.h.b16 %v1933
    %v4437 = vunpack.c.l.b16 %v1934
    %v4438 = vunpack.c.h.b16 %v1934
    %v4439 = vunpack.c.l.b16 %v1935
    %v4440 = vunpack.c.h.b16 %v1935
    %v4441 = vunpack.c.l.b16 %v1936
    %v4442 = vunpack.c.h.b16 %v1936
    %v4443 = vunpack.c.l.b16 %v1937
    %v4444 = vunpack.c.h.b16 %v1937
    %v4445 = vunpack.c.l.b16 %v1938
    %v4446 = vunpack.c.h.b16 %v1938
    %v4447 = vunpack.c.l.b16 %v1939
    %v4448 = vunpack.c.h.b16 %v1939
    %v4449 = vunpack.c.l.b16 %v1940
    %v4450 = vunpack.c.h.b16 %v1940
    %v4451 = vunpack.c.l.b16 %v1941
    %v4452 = vunpack.c.h.b16 %v1941
    %v4453 = vunpack.c.l.b16 %v1942
    %v4454 = vunpack.c.h.b16 %v1942
    %v4455 = vunpack.c.l.b16 %v1943
    %v4456 = vunpack.c.h.b16 %v1943
    %v4457 = vunpack.c.l.b16 %v1944
    %v4458 = vunpack.c.h.b16 %v1944
    %v4459 = vunpack.c.l.b16 %v1945
    %v4460 = vunpack.c.h.b16 %v1945
    %v4461 = vunpack.c.l.b16 %v1946
    %v4462 = vunpack.c.h.b16 %v1946
    %v4463 = vunpack.c.l.b16 %v1947
    %v4464 = vunpack.c.h.b16 %v1947
    %v4465 = vunpack.c.l.b16 %v1948
    %v4466 = vunpack.c.h.b16 %v1948
    %v4467 = vunpack.c.l.b16 %v1949
    %v4468 = vunpack.c.h.b16 %v1949
    %v4469 = vunpack.c.l.b16 %v1950
    %v4470 = vunpack.c.h.b16 %v1950
    %v4471 = vunpack.c.l.b16 %v1951
    %v4472 = vunpack.c.h.b16 %v1951
    %v4473 = vunpack.c.l.b16 %v1952
    %v4474 = vunpack.c.h.b16 %v1952
    %v4475 = vunpack.c.l.b16 %v1953
    %v4476 = vunpack.c.h.b16 %v1953
    %v4477 = vunpack.c.l.b16 %v1954
    %v4478 = vunpack.c.h.b16 %v1954
    %v4479 = vunpack.c.l.b16 %v1955
    %v4480 = vunpack.c.h.b16 %v1955
    %v4481 = vunpack.c.l.b16 %v1956
    %v4482 = vunpack.c.h.b16 %v1956
    %v4483 = vunpack.c.l.b16 %v1957
    %v4484 = vunpack.c.h.b16 %v1957
    %v4485 = vunpack.c.l.b16 %v1958
    %v4486 = vunpack.c.h.b16 %v1958
    %v4487 = vunpack.c.l.b16 %v1959
    %v4488 = vunpack.c.h.b16 %v1959
    %v4489 = vunpack.c.l.b16 %v1960
    %v4490 = vunpack.c.h.b16 %v1960
    %v4491 = vunpack.c.l.b16 %v1961
    %v4492 = vunpack.c.h.b16 %v1961
    %v4493 = vunpack.c.l.b16 %v1962
    %v4494 = vunpack.c.h.b16 %v1962
    %v4495 = vunpack.c.l.b16 %v1963
    %v4496 = vunpack.c.h.b16 %v1963
    %v4497 = vunpack.c.l.b16 %v1964
    %v4498 = vunpack.c.h.b16 %v1964
    %v4499 = vunpack.c.l.b16 %v1965
    %v4500 = vunpack.c.h.b16 %v1965
    %v4501 = vunpack.c.l.b16 %v1966
    %v4502 = vunpack.c.h.b16 %v1966
    %v4503 = vunpack.c.l.b16 %v1967
    %v4504 = vunpack.c.h.b16 %v1967
    %v4505 = vunpack.c.l.b16 %v1968
    %v4506 = vunpack.c.h.b16 %v1968
    %v4507 = vunpack.c.l.b16 %v1969
    %v4508 = vunpack.c.h.b16 %v1969
    %v4509 = vunpack.c.l.b16 %v1970
    %v4510 = vunpack.c.h.b16 %v1970
    %v4511 = vunpack.c.l.b16 %v1971
    %v4512 = vunpack.c.h.b16 %v1971
    %v4513 = vunpack.c.l.b16 %v1972
    %v4514 = vunpack.c.h.b16 %v1972
    %v4515 = vunpack.c.l.b16 %v1973
    %v4516 = vunpack.c.h.b16 %v1973
    %v4517 = vunpack.c.l.b16 %v1974
    %v4518 = vunpack.c.h.b16 %v1974
    %v4519 = vunpack.c.l.b16 %v1975
    %v4520 = vunpack.c.h.b16 %v1975
    %v4521 = vunpack.c.l.b16 %v1976
    %v4522 = vunpack.c.h.b16 %v1976
    %v4523 = vunpack.c.l.b16 %v1977
    %v4524 = vunpack.c.h.b16 %v1977
    %v4525 = vunpack.c.l.b16 %v1978
    %v4526 = vunpack.c.h.b16 %v1978
    %v4527 = vunpack.c.l.b16 %v1979
    %v4528 = vunpack.c.h.b16 %v1979
    %v4529 = vunpack.c.l.b16 %v1980
    %v4530 = vunpack.c.h.b16 %v1980
    %v4531 = vunpack.c.l.b16 %v1981
    %v4532 = vunpack.c.h.b16 %v1981
    %v4533 = vunpack.c.l.b16 %v1982
    %v4534 = vunpack.c.h.b16 %v1982
    %v4535 = vunpack.c.l.b16 %v1983
    %v4536 = vunpack.c.h.b16 %v1983
    %v4537 = vunpack.c.l.b16 %v1984
    %v4538 = vunpack.c.h.b16 %v1984
    %v4539 = vunpack.c.l.b16 %v1985
    %v4540 = vunpack.c.h.b16 %v1985
    %v4541 = vunpack.c.l.b16 %v1986
    %v4542 = vunpack.c.h.b16 %v1986
    %v4543 = vunpack.c.l.b16 %v1987
    %v4544 = vunpack.c.h.b16 %v1987
    %v4545 = vunpack.c.l.b16 %v1988
    %v4546 = vunpack.c.h.b16 %v1988
    %v4547 = vunpack.c.l.b16 %v1989
    %v4548 = vunpack.c.h.b16 %v1989
    %v4549 = vunpack.c.l.b16 %v1990
    %v4550 = vunpack.c.h.b16 %v1990
    %v4551 = vunpack.c.l.b16 %v1991
    %v4552 = vunpack.c.h.b16 %v1991
    %v4553 = vunpack.c.l.b16 %v1992
    %v4554 = vunpack.c.h.b16 %v1992
    %v4555 = vunpack.c.l.b16 %v1993
    %v4556 = vunpack.c.h.b16 %v1993
    %v4557 = vunpack.c.l.b16 %v1994
    %v4558 = vunpack.c.h.b16 %v1994
    %v4559 = vunpack.c.l.b16 %v1995
    %v4560 = vunpack.c.h.b16 %v1995
    %v4561 = vunpack.c.l.b16 %v1996
    %v4562 = vunpack.c.h.b16 %v1996
    %v4563 = vunpack.c.l.b16 %v1997
    %v4564 = vunpack.c.h.b16 %v1997
    %v4565 = vunpack.c.l.b16 %v1998
    %v4566 = vunpack.c.h.b16 %v1998
    %v4567 = vunpack.c.l.b16 %v1999
    %v4568 = vunpack.c.h.b16 %v1999
    %v4569 = vunpack.c.l.b16 %v2000
    %v4570 = vunpack.c.h.b16 %v2000
    %v4571 = vunpack.c.l.b16 %v2001
    %v4572 = vunpack.c.h.b16 %v2001
    %v4573 = vunpack.c.l.b16 %v2002
    %v4574 = vunpack.c.h.b16 %v2002
    %v4575 = vunpack.c.l.b16 %v2003
    %v4576 = vunpack.c.h.b16 %v2003
    %v4577 = vunpack.c.l.b16 %v2004
    %v4578 = vunpack.c.h.b16 %v2004
    %v4579 = vunpack.c.l.b16 %v2005
    %v4580 = vunpack.c.h.b16 %v2005
    %v4581 = vunpack.c.l.b16 %v2006
    %v4582 = vunpack.c.h.b16 %v2006
    %v4583 = vunpack.c.l.b16 %v2007
    %v4584 = vunpack.c.h.b16 %v2007
    %v4585 = vunpack.c.l.b16 %v2008
    %v4586 = vunpack.c.h.b16 %v2008
    %v4587 = vunpack.c.l.b16 %v2009
    %v4588 = vunpack.c.h.b16 %v2009
    %v4589 = vunpack.c.l.b16 %v2010
    %v4590 = vunpack.c.h.b16 %v2010
    %v4591 = vunpack.c.l.b16 %v2011
    %v4592 = vunpack.c.h.b16 %v2011
    %v4593 = vunpack.c.l.b16 %v2012
    %v4594 = vunpack.c.h.b16 %v2012
    %v4595 = vunpack.c.l.b16 %v2013
    %v4596 = vunpack.c.h.b16 %v2013
    %v4597 = vunpack.c.l.b16 %v2014
    %v4598 = vunpack.c.h.b16 %v2014
    %v4599 = vunpack.c.l.b16 %v2015
    %v4600 = vunpack.c.h.b16 %v2015
    %v4601 = vunpack.c.l.b16 %v2016
    %v4602 = vunpack.c.h.b16 %v2016
    %v4603 = vunpack.c.l.b16 %v2017
    %v4604 = vunpack.c.h.b16 %v2017
    %v4605 = vunpack.c.l.b16 %v2018
    %v4606 = vunpack.c.h.b16 %v2018
    %v4607 = vunpack.c.l.b16 %v2019
    %v4608 = vunpack.c.h.b16 %v2019
    %v4609 = vunpack.c.l.b16 %v2020
    %v4610 = vunpack.c.h.b16 %v2020
    %v4611 = vunpack.c.l.b16 %v2021
    %v4612 = vunpack.c.h.b16 %v2021
    %v4613 = vunpack.c.l.b16 %v2022
    %v4614 = vunpack.c.h.b16 %v2022
    %v4615 = vunpack.c.l.b16 %v2023
    %v4616 = vunpack.c.h.b16 %v2023
    %v4617 = vunpack.c.l.b16 %v2024
    %v4618 = vunpack.c.h.b16 %v2024
    %v4619 = vunpack.c.l.b16 %v2025
    %v4620 = vunpack.c.h.b16 %v2025
    %v4621 = vunpack.c.l.b16 %v2026
    %v4622 = vunpack.c.h.b16 %v2026
    %v4623 = vunpack.c.l.b16 %v2027
    %v4624 = vunpack.c.h.b16 %v2027
    %v4625 = vunpack.c.l.b16 %v2028
    %v4626 = vunpack.c.h.b16 %v2028
    %v4627 = vunpack.c.l.b16 %v2029
    %v4628 = vunpack.c.h.b16 %v2029
    %v4629 = vunpack.c.l.b16 %v2030
    %v4630 = vunpack.c.h.b16 %v2030
    %v4631 = vunpack.c.l.b16 %v2031
    %v4632 = vunpack.c.h.b16 %v2031
    %v4633 = vunpack.c.l.b16 %v2032
    %v4634 = vunpack.c.h.b16 %v2032
    %v4635 = vunpack.c.l.b16 %v2033
    %v4636 = vunpack.c.h.b16 %v2033
    %v4637 = vunpack.c.l.b16 %v2034
    %v4638 = vunpack.c.h.b16 %v2034
    %v4639 = vunpack.c.l.b16 %v2035
    %v4640 = vunpack.c.h.b16 %v2035
    %v4641 = vunpack.c.l.b16 %v2036
    %v4642 = vunpack.c.h.b16 %v2036
    %v4643 = vunpack.c.l.b16 %v2037
    %v4644 = vunpack.c.h.b16 %v2037
    %v4645 = vunpack.c.l.b16 %v2038
    %v4646 = vunpack.c.h.b16 %v2038
    %v4647 = vunpack.c.l.b16 %v2039
    %v4648 = vunpack.c.h.b16 %v2039
    %v4649 = vunpack.c.l.b16 %v2040
    %v4650 = vunpack.c.h.b16 %v2040
    %v4651 = vunpack.c.l.b16 %v2041
    %v4652 = vunpack.c.h.b16 %v2041
    %v4653 = vunpack.c.l.b16 %v2042
    %v4654 = vunpack.c.h.b16 %v2042
    %v4655 = vunpack.c.l.b16 %v2043
    %v4656 = vunpack.c.h.b16 %v2043
    %v4657 = vunpack.c.l.b16 %v2044
    %v4658 = vunpack.c.h.b16 %v2044
    %v4659 = vunpack.c.l.b16 %v2045
    %v4660 = vunpack.c.h.b16 %v2045
    %v4661 = vunpack.c.l.b16 %v2046
    %v4662 = vunpack.c.h.b16 %v2046
    %v4663 = vunpack.c.l.b16 %v2047
    %v4664 = vunpack.c.h.b16 %v2047
    %v4665 = vunpack.c.l.b16 %v2048
    %v4666 = vunpack.c.h.b16 %v2048
    %v4667 = vunpack.c.l.b16 %v2049
    %v4668 = vunpack.c.h.b16 %v2049
    %v4669 = vunpack.c.l.b16 %v2050
    %v4670 = vunpack.c.h.b16 %v2050
    %v4671 = vunpack.c.l.b16 %v2051
    %v4672 = vunpack.c.h.b16 %v2051
    %v4673 = vunpack.c.l.b16 %v2052
    %v4674 = vunpack.c.h.b16 %v2052
    %v4675 = vunpack.c.l.b16 %v2053
    %v4676 = vunpack.c.h.b16 %v2053
    %v4677 = vunpack.c.l.b16 %v2054
    %v4678 = vunpack.c.h.b16 %v2054
    %v4679 = vunpack.c.l.b16 %v2055
    %v4680 = vunpack.c.h.b16 %v2055
    %v4681 = vunpack.c.l.b16 %v2056
    %v4682 = vunpack.c.h.b16 %v2056
    %v4683 = vunpack.c.l.b16 %v2057
    %v4684 = vunpack.c.h.b16 %v2057
    %v4685 = vunpack.c.l.b16 %v2058
    %v4686 = vunpack.c.h.b16 %v2058
    %v4687 = vunpack.c.l.b16 %v2059
    %v4688 = vunpack.c.h.b16 %v2059
    %v4689 = vunpack.c.l.b16 %v2060
    %v4690 = vunpack.c.h.b16 %v2060
    %v4691 = vunpack.c.l.b16 %v2061
    %v4692 = vunpack.c.h.b16 %v2061
    %v4693 = vunpack.c.l.b16 %v2062
    %v4694 = vunpack.c.h.b16 %v2062
    %v4695 = vunpack.c.l.b16 %v2063
    %v4696 = vunpack.c.h.b16 %v2063
    %v4697 = vunpack.c.l.b16 %v2064
    %v4698 = vunpack.c.h.b16 %v2064
    %v4699 = vunpack.c.l.b16 %v2065
    %v4700 = vunpack.c.h.b16 %v2065
    %v4701 = vunpack.c.l.b16 %v2066
    %v4702 = vunpack.c.h.b16 %v2066
    %v4703 = vunpack.c.l.b16 %v2067
    %v4704 = vunpack.c.h.b16 %v2067
    %v4705 = vunpack.c.l.b16 %v2068
    %v4706 = vunpack.c.h.b16 %v2068
    %v4707 = vunpack.c.l.b16 %v2069
    %v4708 = vunpack.c.h.b16 %v2069
    %v4709 = vunpack.c.l.b16 %v2070
    %v4710 = vunpack.c.h.b16 %v2070
    %v4711 = vunpack.c.l.b16 %v2071
    %v4712 = vunpack.c.h.b16 %v2071
    %v4713 = vunpack.c.l.b16 %v2072
    %v4714 = vunpack.c.h.b16 %v2072
    %v4715 = vunpack.c.l.b16 %v2073
    %v4716 = vunpack.c.h.b16 %v2073
    %v4717 = vunpack.c.l.b16 %v2074
    %v4718 = vunpack.c.h.b16 %v2074
    %v4719 = vunpack.c.l.b16 %v2075
    %v4720 = vunpack.c.h.b16 %v2075
    %v4721 = vunpack.c.l.b16 %v2076
    %v4722 = vunpack.c.h.b16 %v2076
    %v4723 = vunpack.c.l.b16 %v2077
    %v4724 = vunpack.c.h.b16 %v2077
    %v4725 = vunpack.c.l.b16 %v2078
    %v4726 = vunpack.c.h.b16 %v2078
    %v4727 = vunpack.c.l.b16 %v2079
    %v4728 = vunpack.c.h.b16 %v2079
    %v4729 = vunpack.c.l.b16 %v2080
    %v4730 = vunpack.c.h.b16 %v2080
    %v4731 = vunpack.c.l.b16 %v2081
    %v4732 = vunpack.c.h.b16 %v2081
    %v4733 = vunpack.c.l.b16 %v2082
    %v4734 = vunpack.c.h.b16 %v2082
    %v4735 = vunpack.c.l.b16 %v2083
    %v4736 = vunpack.c.h.b16 %v2083
    %v4737 = vunpack.c.l.b16 %v2084
    %v4738 = vunpack.c.h.b16 %v2084
    %v4739 = vunpack.c.l.b16 %v2085
    %v4740 = vunpack.c.h.b16 %v2085
    %v4741 = vunpack.c.l.b16 %v2086
    %v4742 = vunpack.c.h.b16 %v2086
    %v4743 = vunpack.c.l.b16 %v2087
    %v4744 = vunpack.c.h.b16 %v2087
    %v4745 = vunpack.c.l.b16 %v2088
    %v4746 = vunpack.c.h.b16 %v2088
    %v4747 = vunpack.c.l.b16 %v2089
    %v4748 = vunpack.c.h.b16 %v2089
    %v4749 = vunpack.c.l.b16 %v2090
    %v4750 = vunpack.c.h.b16 %v2090
    %v4751 = vunpack.c.l.b16 %v2091
    %v4752 = vunpack.c.h.b16 %v2091
    %v4753 = vunpack.c.l.b16 %v2092
    %v4754 = vunpack.c.h.b16 %v2092
    %v4755 = vunpack.c.l.b16 %v2093
    %v4756 = vunpack.c.h.b16 %v2093
    %v4757 = vunpack.c.l.b16 %v2094
    %v4758 = vunpack.c.h.b16 %v2094
    %v4759 = vunpack.c.l.b16 %v2095
    %v4760 = vunpack.c.h.b16 %v2095
    %v4761 = vunpack.c.l.b16 %v2096
    %v4762 = vunpack.c.h.b16 %v2096
    %v4763 = vunpack.c.l.b16 %v2097
    %v4764 = vunpack.c.h.b16 %v2097
    %v4765 = vunpack.c.l.b16 %v2098
    %v4766 = vunpack.c.h.b16 %v2098
    %v4767 = vunpack.c.l.b16 %v2099
    %v4768 = vunpack.c.h.b16 %v2099
    %v4769 = vunpack.c.l.b16 %v2100
    %v4770 = vunpack.c.h.b16 %v2100
    %v4771 = vunpack.c.l.b16 %v2101
    %v4772 = vunpack.c.h.b16 %v2101
    %v4773 = vunpack.c.l.b16 %v2102
    %v4774 = vunpack.c.h.b16 %v2102
    %v4775 = vunpack.c.l.b16 %v2103
    %v4776 = vunpack.c.h.b16 %v2103
    %v4777 = vunpack.c.l.b16 %v2104
    %v4778 = vunpack.c.h.b16 %v2104
    %v4779 = vunpack.c.l.b16 %v2105
    %v4780 = vunpack.c.h.b16 %v2105
    %v4781 = vunpack.c.l.b16 %v2106
    %v4782 = vunpack.c.h.b16 %v2106
    %v4783 = vunpack.c.l.b16 %v2107
    %v4784 = vunpack.c.h.b16 %v2107
    %v4785 = vunpack.c.l.b16 %v2108
    %v4786 = vunpack.c.h.b16 %v2108
    %v4787 = vunpack.c.l.b16 %v2109
    %v4788 = vunpack.c.h.b16 %v2109
    %v4789 = vunpack.c.l.b16 %v2110
    %v4790 = vunpack.c.h.b16 %v2110
    %v4791 = vunpack.c.l.b16 %v2111
    %v4792 = vunpack.c.h.b16 %v2111
    %v4793 = vunpack.c.l.b16 %v2112
    %v4794 = vunpack.c.h.b16 %v2112
    %v4795 = vunpack.c.l.b16 %v2113
    %v4796 = vunpack.c.h.b16 %v2113
    %v4797 = vunpack.c.l.b16 %v2114
    %v4798 = vunpack.c.h.b16 %v2114
    %v4799 = vunpack.c.l.b16 %v2115
    %v4800 = vunpack.c.h.b16 %v2115
    %v4801 = vunpack.c.l.b16 %v2116
    %v4802 = vunpack.c.h.b16 %v2116
    %v4803 = vunpack.c.l.b16 %v2117
    %v4804 = vunpack.c.h.b16 %v2117
    %v4805 = vunpack.c.l.b16 %v2118
    %v4806 = vunpack.c.h.b16 %v2118
    %v4807 = vunpack.c.l.b16 %v2119
    %v4808 = vunpack.c.h.b16 %v2119
    %v4809 = vunpack.c.l.b16 %v2120
    %v4810 = vunpack.c.h.b16 %v2120
    %v4811 = vunpack.c.l.b16 %v2121
    %v4812 = vunpack.c.h.b16 %v2121
    %v4813 = vunpack.c.l.b16 %v2122
    %v4814 = vunpack.c.h.b16 %v2122
    %v4815 = vunpack.c.l.b16 %v2123
    %v4816 = vunpack.c.h.b16 %v2123
    %v4817 = vunpack.c.l.b16 %v2124
    %v4818 = vunpack.c.h.b16 %v2124
    %v4819 = vunpack.c.l.b16 %v2125
    %v4820 = vunpack.c.h.b16 %v2125
    %v4821 = vunpack.c.l.b16 %v2126
    %v4822 = vunpack.c.h.b16 %v2126
    %v4823 = vunpack.c.l.b16 %v2127
    %v4824 = vunpack.c.h.b16 %v2127
    %v4825 = vunpack.c.l.b16 %v2128
    %v4826 = vunpack.c.h.b16 %v2128
    %v4827 = vunpack.c.l.b16 %v2129
    %v4828 = vunpack.c.h.b16 %v2129
    %v4829 = vunpack.c.l.b16 %v2130
    %v4830 = vunpack.c.h.b16 %v2130
    %v4831 = vunpack.c.l.b16 %v2131
    %v4832 = vunpack.c.h.b16 %v2131
    %v4833 = vunpack.c.l.b16 %v2132
    %v4834 = vunpack.c.h.b16 %v2132
    %v4835 = vunpack.c.l.b16 %v2133
    %v4836 = vunpack.c.h.b16 %v2133
    %v4837 = vunpack.c.l.b16 %v2134
    %v4838 = vunpack.c.h.b16 %v2134
    %v4839 = vunpack.c.l.b16 %v2135
    %v4840 = vunpack.c.h.b16 %v2135
    %v4841 = vunpack.c.l.b16 %v2136
    %v4842 = vunpack.c.h.b16 %v2136
    %v4843 = vunpack.c.l.b16 %v2137
    %v4844 = vunpack.c.h.b16 %v2137
    %v4845 = vunpack.c.l.b16 %v2138
    %v4846 = vunpack.c.h.b16 %v2138
    %v4847 = vunpack.c.l.b16 %v2139
    %v4848 = vunpack.c.h.b16 %v2139
    %v4849 = vunpack.c.l.b16 %v2140
    %v4850 = vunpack.c.h.b16 %v2140
    %v4851 = vunpack.c.l.b16 %v2141
    %v4852 = vunpack.c.h.b16 %v2141
    %v4853 = vunpack.c.l.b16 %v2142
    %v4854 = vunpack.c.h.b16 %v2142
    %v4855 = vunpack.c.l.b16 %v2143
    %v4856 = vunpack.c.h.b16 %v2143
    %v4857 = vunpack.c.l.b16 %v2144
    %v4858 = vunpack.c.h.b16 %v2144
    %v4859 = vunpack.c.l.b16 %v2145
    %v4860 = vunpack.c.h.b16 %v2145
    %v4861 = vunpack.c.l.b16 %v2146
    %v4862 = vunpack.c.h.b16 %v2146
    %v4863 = vunpack.c.l.b16 %v2147
    %v4864 = vunpack.c.h.b16 %v2147
    %v4865 = vunpack.c.l.b16 %v2148
    %v4866 = vunpack.c.h.b16 %v2148
    %v4867 = vunpack.c.l.b16 %v2149
    %v4868 = vunpack.c.h.b16 %v2149
    %v4869 = vunpack.c.l.b16 %v2150
    %v4870 = vunpack.c.h.b16 %v2150
    %v4871 = vunpack.c.l.b16 %v2151
    %v4872 = vunpack.c.h.b16 %v2151
    %v4873 = vunpack.c.l.b16 %v2152
    %v4874 = vunpack.c.h.b16 %v2152
    %v4875 = vunpack.c.l.b16 %v2153
    %v4876 = vunpack.c.h.b16 %v2153
    %v4877 = vunpack.c.l.b16 %v2154
    %v4878 = vunpack.c.h.b16 %v2154
    %v4879 = vunpack.c.l.b16 %v2155
    %v4880 = vunpack.c.h.b16 %v2155
    %v4881 = vunpack.c.l.b16 %v2156
    %v4882 = vunpack.c.h.b16 %v2156
    %v4883 = vunpack.c.l.b16 %v2157
    %v4884 = vunpack.c.h.b16 %v2157
    %v4885 = vunpack.c.l.b16 %v2158
    %v4886 = vunpack.c.h.b16 %v2158
    %v4887 = vunpack.c.l.b16 %v2159
    %v4888 = vunpack.c.h.b16 %v2159
    %v4889 = vunpack.c.l.b16 %v2160
    %v4890 = vunpack.c.h.b16 %v2160
    %v4891 = vunpack.c.l.b16 %v2161
    %v4892 = vunpack.c.h.b16 %v2161
    %v4893 = vunpack.c.l.b16 %v2162
    %v4894 = vunpack.c.h.b16 %v2162
    %v4895 = vunpack.c.l.b16 %v2163
    %v4896 = vunpack.c.h.b16 %v2163
    %v4897 = vunpack.c.l.b16 %v2164
    %v4898 = vunpack.c.h.b16 %v2164
    %v4899 = vunpack.c.l.b16 %v2165
    %v4900 = vunpack.c.h.b16 %v2165
    %v4901 = vunpack.c.l.b16 %v2166
    %v4902 = vunpack.c.h.b16 %v2166
    %v4903 = vunpack.c.l.b16 %v2167
    %v4904 = vunpack.c.h.b16 %v2167
    %v4905 = vunpack.c.l.b16 %v2168
    %v4906 = vunpack.c.h.b16 %v2168
    %v4907 = vunpack.c.l.b16 %v2169
    %v4908 = vunpack.c.h.b16 %v2169
    %v4909 = vunpack.c.l.b16 %v2170
    %v4910 = vunpack.c.h.b16 %v2170
    %v4911 = vunpack.c.l.b16 %v2171
    %v4912 = vunpack.c.h.b16 %v2171
    %v4913 = vunpack.c.l.b16 %v2172
    %v4914 = vunpack.c.h.b16 %v2172
    %v4915 = vunpack.c.l.b16 %v2173
    %v4916 = vunpack.c.h.b16 %v2173
    %v4917 = vunpack.c.l.b16 %v2174
    %v4918 = vunpack.c.h.b16 %v2174
    %v4919 = vunpack.c.l.b16 %v2175
    %v4920 = vunpack.c.h.b16 %v2175
    %v4921 = vunpack.c.l.b16 %v2176
    %v4922 = vunpack.c.h.b16 %v2176
    %v4923 = vunpack.c.l.b16 %v2177
    %v4924 = vunpack.c.h.b16 %v2177
    %v4925 = vunpack.c.l.b16 %v2178
    %v4926 = vunpack.c.h.b16 %v2178
    %v4927 = vunpack.c.l.b16 %v2179
    %v4928 = vunpack.c.h.b16 %v2179
    %v4929 = vunpack.c.l.b16 %v2180
    %v4930 = vunpack.c.h.b16 %v2180
    %v4931 = vunpack.c.l.b16 %v2181
    %v4932 = vunpack.c.h.b16 %v2181
    %v4933 = vunpack.c.l.b16 %v2182
    %v4934 = vunpack.c.h.b16 %v2182
    %v4935 = vunpack.c.l.b16 %v2183
    %v4936 = vunpack.c.h.b16 %v2183
    %v4937 = vunpack.c.l.b16 %v2184
    %v4938 = vunpack.c.h.b16 %v2184
    %v4939 = vunpack.c.l.b16 %v2185
    %v4940 = vunpack.c.h.b16 %v2185
    %v4941 = vunpack.c.l.b16 %v2186
    %v4942 = vunpack.c.h.b16 %v2186
    %v4943 = vunpack.c.l.b16 %v2187
    %v4944 = vunpack.c.h.b16 %v2187
    %v4945 = vunpack.c.l.b16 %v2188
    %v4946 = vunpack.c.h.b16 %v2188
    %v4947 = vunpack.c.l.b16 %v2189
    %v4948 = vunpack.c.h.b16 %v2189
    %v4949 = vunpack.c.l.b16 %v2190
    %v4950 = vunpack.c.h.b16 %v2190
    %v4951 = vunpack.c.l.b16 %v2191
    %v4952 = vunpack.c.h.b16 %v2191
    %v4953 = vunpack.c.l.b16 %v2192
    %v4954 = vunpack.c.h.b16 %v2192
    %v4955 = vunpack.c.l.b16 %v2193
    %v4956 = vunpack.c.h.b16 %v2193
    %v4957 = vunpack.c.l.b16 %v2194
    %v4958 = vunpack.c.h.b16 %v2194
    %v4959 = vunpack.c.l.b16 %v2195
    %v4960 = vunpack.c.h.b16 %v2195
    %v4961 = vunpack.c.l.b16 %v2196
    %v4962 = vunpack.c.h.b16 %v2196
    %v4963 = vunpack.c.l.b16 %v2197
    %v4964 = vunpack.c.h.b16 %v2197
    %v4965 = vunpack.c.l.b16 %v2198
    %v4966 = vunpack.c.h.b16 %v2198
    %v4967 = vunpack.c.l.b16 %v2199
    %v4968 = vunpack.c.h.b16 %v2199
    %v4969 = vunpack.c.l.b16 %v2200
    %v4970 = vunpack.c.h.b16 %v2200
    %v4971 = vunpack.c.l.b16 %v2201
    %v4972 = vunpack.c.h.b16 %v2201
    %v4973 = vunpack.c.l.b16 %v2202
    %v4974 = vunpack.c.h.b16 %v2202
    %v4975 = vunpack.c.l.b16 %v2203
    %v4976 = vunpack.c.h.b16 %v2203
    %v4977 = vunpack.c.l.b16 %v2204
    %v4978 = vunpack.c.h.b16 %v2204
    %v4979 = vunpack.c.l.b16 %v2205
    %v4980 = vunpack.c.h.b16 %v2205
    %v4981 = vunpack.c.l.b16 %v2206
    %v4982 = vunpack.c.h.b16 %v2206
    %v4983 = vunpack.c.l.b16 %v2207
    %v4984 = vunpack.c.h.b16 %v2207
    %v4985 = vunpack.c.l.b16 %v2208
    %v4986 = vunpack.c.h.b16 %v2208
    %v4987 = vunpack.c.l.b16 %v2209
    %v4988 = vunpack.c.h.b16 %v2209
    %v4989 = vunpack.c.l.b16 %v2210
    %v4990 = vunpack.c.h.b16 %v2210
    %v4991 = vunpack.c.l.b16 %v2211
    %v4992 = vunpack.c.h.b16 %v2211
    %v4993 = vunpack.c.l.b16 %v2212
    %v4994 = vunpack.c.h.b16 %v2212
    %v4995 = vunpack.c.l.b16 %v2213
    %v4996 = vunpack.c.h.b16 %v2213
    %v4997 = vunpack.c.l.b16 %v2214
    %v4998 = vunpack.c.h.b16 %v2214
    %v4999 = vunpack.c.l.b16 %v2215
    %v5000 = vunpack.c.h.b16 %v2215
    %v5001 = vunpack.c.l.b16 %v2216
    %v5002 = vunpack.c.h.b16 %v2216
    %v5003 = vunpack.c.l.b16 %v2217
    %v5004 = vunpack.c.h.b16 %v2217
    %v5005 = vunpack.c.l.b16 %v2218
    %v5006 = vunpack.c.h.b16 %v2218
    %v5007 = vunpack.c.l.b16 %v2219
    %v5008 = vunpack.c.h.b16 %v2219
    %v5009 = vunpack.c.l.b16 %v2220
    %v5010 = vunpack.c.h.b16 %v2220
    %v5011 = vunpack.c.l.b16 %v2221
    %v5012 = vunpack.c.h.b16 %v2221
    %v5013 = vunpack.c.l.b16 %v2222
    %v5014 = vunpack.c.h.b16 %v2222
    %v5015 = vunpack.c.l.b16 %v2223
    %v5016 = vunpack.c.h.b16 %v2223
    %v5017 = vunpack.c.l.b16 %v2224
    %v5018 = vunpack.c.h.b16 %v2224
    %v5019 = vunpack.c.l.b16 %v2225
    %v5020 = vunpack.c.h.b16 %v2225
    %v5021 = vunpack.c.l.b16 %v2226
    %v5022 = vunpack.c.h.b16 %v2226
    %v5023 = vunpack.c.l.b16 %v2227
    %v5024 = vunpack.c.h.b16 %v2227
    %v5025 = vunpack.c.l.b16 %v2228
    %v5026 = vunpack.c.h.b16 %v2228
    %v5027 = vunpack.c.l.b16 %v2229
    %v5028 = vunpack.c.h.b16 %v2229
    %v5029 = vunpack.c.l.b16 %v2230
    %v5030 = vunpack.c.h.b16 %v2230
    %v5031 = vunpack.c.l.b16 %v2231
    %v5032 = vunpack.c.h.b16 %v2231
    %v5033 = vunpack.c.l.b16 %v2232
    %v5034 = vunpack.c.h.b16 %v2232
    %v5035 = vunpack.c.l.b16 %v2233
    %v5036 = vunpack.c.h.b16 %v2233
    %v5037 = vunpack.c.l.b16 %v2234
    %v5038 = vunpack.c.h.b16 %v2234
    %v5039 = vunpack.c.l.b16 %v2235
    %v5040 = vunpack.c.h.b16 %v2235
    %v5041 = vunpack.c.l.b16 %v2236
    %v5042 = vunpack.c.h.b16 %v2236
    %v5043 = vunpack.c.l.b16 %v2237
    %v5044 = vunpack.c.h.b16 %v2237
    %v5045 = vunpack.c.l.b16 %v2238
    %v5046 = vunpack.c.h.b16 %v2238
    %v5047 = vunpack.c.l.b16 %v2239
    %v5048 = vunpack.c.h.b16 %v2239
    %v5049 = vunpack.c.l.b16 %v2240
    %v5050 = vunpack.c.h.b16 %v2240
    %v5051 = vunpack.c.l.b16 %v2241
    %v5052 = vunpack.c.h.b16 %v2241
    %v5053 = vunpack.c.l.b16 %v2242
    %v5054 = vunpack.c.h.b16 %v2242
    %v5055 = vunpack.c.l.b16 %v2243
    %v5056 = vunpack.c.h.b16 %v2243
    %v5057 = vunpack.c.l.b16 %v2244
    %v5058 = vunpack.c.h.b16 %v2244
    %v5059 = vunpack.c.l.b16 %v2245
    %v5060 = vunpack.c.h.b16 %v2245
    %v5061 = vunpack.c.l.b16 %v2246
    %v5062 = vunpack.c.h.b16 %v2246
    %v5063 = vunpack.c.l.b16 %v2247
    %v5064 = vunpack.c.h.b16 %v2247
    %v5065 = vunpack.c.l.b16 %v2248
    %v5066 = vunpack.c.h.b16 %v2248
    %v5067 = vunpack.c.l.b16 %v2249
    %v5068 = vunpack.c.h.b16 %v2249
    %v5069 = vunpack.c.l.b16 %v2250
    %v5070 = vunpack.c.h.b16 %v2250
    %v5071 = vunpack.c.l.b16 %v2251
    %v5072 = vunpack.c.h.b16 %v2251
    %v5073 = vunpack.c.l.b16 %v2252
    %v5074 = vunpack.c.h.b16 %v2252
    %v5075 = vunpack.c.l.b16 %v2253
    %v5076 = vunpack.c.h.b16 %v2253
    %v5077 = vunpack.c.l.b16 %v2254
    %v5078 = vunpack.c.h.b16 %v2254
    %v5079 = vunpack.c.l.b16 %v2255
    %v5080 = vunpack.c.h.b16 %v2255
    %v5081 = vunpack.c.l.b16 %v2256
    %v5082 = vunpack.c.h.b16 %v2256
    %v5083 = vunpack.c.l.b16 %v2257
    %v5084 = vunpack.c.h.b16 %v2257
    %v5085 = vunpack.c.l.b16 %v2258
    %v5086 = vunpack.c.h.b16 %v2258
    %v5087 = vunpack.c.l.b16 %v2259
    %v5088 = vunpack.c.h.b16 %v2259
    %v5089 = vunpack.c.l.b16 %v2260
    %v5090 = vunpack.c.h.b16 %v2260
    %v5091 = vunpack.c.l.b16 %v2261
    %v5092 = vunpack.c.h.b16 %v2261
    %v5093 = vunpack.c.l.b16 %v2262
    %v5094 = vunpack.c.h.b16 %v2262
    %v5095 = vunpack.c.l.b16 %v2263
    %v5096 = vunpack.c.h.b16 %v2263
    %v5097 = vunpack.c.l.b16 %v2264
    %v5098 = vunpack.c.h.b16 %v2264
    %v5099 = vunpack.c.l.b16 %v2265
    %v5100 = vunpack.c.h.b16 %v2265
    %v5101 = vunpack.c.l.b16 %v2266
    %v5102 = vunpack.c.h.b16 %v2266
    %v5103 = vunpack.c.l.b16 %v2267
    %v5104 = vunpack.c.h.b16 %v2267
    %v5105 = vunpack.c.l.b16 %v2268
    %v5106 = vunpack.c.h.b16 %v2268
    %v5107 = vunpack.c.l.b16 %v2269
    %v5108 = vunpack.c.h.b16 %v2269
    %v5109 = vunpack.c.l.b16 %v2270
    %v5110 = vunpack.c.h.b16 %v2270
    %v5111 = vunpack.c.l.b16 %v2271
    %v5112 = vunpack.c.h.b16 %v2271
    %v5113 = vunpack.c.l.b16 %v2272
    %v5114 = vunpack.c.h.b16 %v2272
    %v5115 = vunpack.c.l.b16 %v2273
    %v5116 = vunpack.c.h.b16 %v2273
    %v5117 = vunpack.c.l.b16 %v2274
    %v5118 = vunpack.c.h.b16 %v2274
    %v5119 = vunpack.c.l.b16 %v2275
    %v5120 = vunpack.c.h.b16 %v2275
    %v5121 = vunpack.c.l.b16 %v2276
    %v5122 = vunpack.c.h.b16 %v2276
    %v5123 = vunpack.c.l.b16 %v2277
    %v5124 = vunpack.c.h.b16 %v2277
    %v5125 = vunpack.c.l.b16 %v2278
    %v5126 = vunpack.c.h.b16 %v2278
    %v5127 = vunpack.c.l.b16 %v2279
    %v5128 = vunpack.c.h.b16 %v2279
    %v5129 = vunpack.c.l.b16 %v2280
    %v5130 = vunpack.c.h.b16 %v2280
    %v5131 = vunpack.c.l.b16 %v2281
    %v5132 = vunpack.c.h.b16 %v2281
    %v5133 = vunpack.c.l.b16 %v2282
    %v5134 = vunpack.c.h.b16 %v2282
    %v5135 = vunpack.c.l.b16 %v2283
    %v5136 = vunpack.c.h.b16 %v2283
    %v5137 = vunpack.c.l.b16 %v2284
    %v5138 = vunpack.c.h.b16 %v2284
    %v5139 = vunpack.c.l.b16 %v2285
    %v5140 = vunpack.c.h.b16 %v2285
    %v5141 = vunpack.c.l.b16 %v2286
    %v5142 = vunpack.c.h.b16 %v2286
    %v5143 = vunpack.c.l.b16 %v2287
    %v5144 = vunpack.c.h.b16 %v2287
    %v5145 = vunpack.c.l.b16 %v2288
    %v5146 = vunpack.c.h.b16 %v2288
    %v5147 = vunpack.c.l.b16 %v2289
    %v5148 = vunpack.c.h.b16 %v2289
    %v5149 = vunpack.c.l.b16 %v2290
    %v5150 = vunpack.c.h.b16 %v2290
    %v5151 = vunpack.c.l.b16 %v2291
    %v5152 = vunpack.c.h.b16 %v2291
    %v5153 = vunpack.c.l.b16 %v2292
    %v5154 = vunpack.c.h.b16 %v2292
    %v5155 = vunpack.c.l.b16 %v2293
    %v5156 = vunpack.c.h.b16 %v2293
    %v5157 = vunpack.c.l.b16 %v2294
    %v5158 = vunpack.c.h.b16 %v2294
    %v5159 = vunpack.c.l.b16 %v2295
    %v5160 = vunpack.c.h.b16 %v2295
    %v5161 = vunpack.c.l.b16 %v2296
    %v5162 = vunpack.c.h.b16 %v2296
    %v5163 = vunpack.c.l.b16 %v2297
    %v5164 = vunpack.c.h.b16 %v2297
    %v5165 = vunpack.c.l.b16 %v2298
    %v5166 = vunpack.c.h.b16 %v2298
    %v5167 = vunpack.c.l.b16 %v2299
    %v5168 = vunpack.c.h.b16 %v2299
    %v5169 = vunpack.c.l.b16 %v2300
    %v5170 = vunpack.c.h.b16 %v2300
    %v5171 = vunpack.c.l.b16 %v2301
    %v5172 = vunpack.c.h.b16 %v2301
    %v5173 = vunpack.c.l.b16 %v2302
    %v5174 = vunpack.c.h.b16 %v2302
    %v5175 = vunpack.c.l.b16 %v2303
    %v5176 = vunpack.c.h.b16 %v2303
    %v5177 = vunpack.c.l.b16 %v2304
    %v5178 = vunpack.c.h.b16 %v2304
    %v5179 = vunpack.c.l.b16 %v2305
    %v5180 = vunpack.c.h.b16 %v2305
    %v5181 = vunpack.c.l.b16 %v2306
    %v5182 = vunpack.c.h.b16 %v2306
    %v5183 = vunpack.c.l.b16 %v2307
    %v5184 = vunpack.c.h.b16 %v2307
    %v5185 = vunpack.c.l.b16 %v2308
    %v5186 = vunpack.c.h.b16 %v2308
    %v5187 = vunpack.c.l.b16 %v2309
    %v5188 = vunpack.c.h.b16 %v2309
    %v5189 = vunpack.c.l.b16 %v2310
    %v5190 = vunpack.c.h.b16 %v2310
    %v5191 = vunpack.c.l.b16 %v2311
    %v5192 = vunpack.c.h.b16 %v2311
    %v5193 = vunpack.c.l.b16 %v2312
    %v5194 = vunpack.c.h.b16 %v2312
    %v5195 = vunpack.c.l.b16 %v2313
    %v5196 = vunpack.c.h.b16 %v2313
    %v5197 = vunpack.c.l.b16 %v2314
    %v5198 = vunpack.c.h.b16 %v2314
    %v5199 = vunpack.c.l.b16 %v2315
    %v5200 = vunpack.c.h.b16 %v2315
    %v5201 = vunpack.c.l.b16 %v2316
    %v5202 = vunpack.c.h.b16 %v2316
    %v5203 = vunpack.c.l.b16 %v2317
    %v5204 = vunpack.c.h.b16 %v2317
    %v5205 = vunpack.c.l.b16 %v2318
    %v5206 = vunpack.c.h.b16 %v2318
    %v5207 = vunpack.c.l.b16 %v2319
    %v5208 = vunpack.c.h.b16 %v2319
    %v5209 = vunpack.c.l.b16 %v2320
    %v5210 = vunpack.c.h.b16 %v2320
    %v5211 = vunpack.c.l.b16 %v2321
    %v5212 = vunpack.c.h.b16 %v2321
    %v5213 = vunpack.c.l.b16 %v2322
    %v5214 = vunpack.c.h.b16 %v2322
    %v5215 = vunpack.c.l.b16 %v2323
    %v5216 = vunpack.c.h.b16 %v2323
    %v5217 = vunpack.c.l.b16 %v2324
    %v5218 = vunpack.c.h.b16 %v2324
    %v5219 = vunpack.c.l.b16 %v2325
    %v5220 = vunpack.c.h.b16 %v2325
    %v5221 = vunpack.c.l.b16 %v2326
    %v5222 = vunpack.c.h.b16 %v2326
    %v5223 = vunpack.c.l.b16 %v2327
    %v5224 = vunpack.c.h.b16 %v2327
    %v5225 = vunpack.c.l.b16 %v2328
    %v5226 = vunpack.c.h.b16 %v2328
    %v5227 = vunpack.c.l.b16 %v2329
    %v5228 = vunpack.c.h.b16 %v2329
    %v5229 = vunpack.c.l.b16 %v2330
    %v5230 = vunpack.c.h.b16 %v2330
    %v5231 = vunpack.c.l.b16 %v2331
    %v5232 = vunpack.c.h.b16 %v2331
    %v5233 = vunpack.c.l.b16 %v2332
    %v5234 = vunpack.c.h.b16 %v2332
    %v5235 = vunpack.c.l.b16 %v2333
    %v5236 = vunpack.c.h.b16 %v2333
    %v5237 = vunpack.c.l.b16 %v2334
    %v5238 = vunpack.c.h.b16 %v2334
    %v5239 = vunpack.c.l.b16 %v2335
    %v5240 = vunpack.c.h.b16 %v2335
    %v5241 = vunpack.c.l.b16 %v2336
    %v5242 = vunpack.c.h.b16 %v2336
    %v5243 = vunpack.c.l.b16 %v2337
    %v5244 = vunpack.c.h.b16 %v2337
    %v5245 = vunpack.c.l.b16 %v2338
    %v5246 = vunpack.c.h.b16 %v2338
    %v5247 = vunpack.c.l.b16 %v2339
    %v5248 = vunpack.c.h.b16 %v2339
    %v5249 = vunpack.c.l.b16 %v2340
    %v5250 = vunpack.c.h.b16 %v2340
    %v5251 = vunpack.c.l.b16 %v2341
    %v5252 = vunpack.c.h.b16 %v2341
    %v5253 = vunpack.c.l.b16 %v2342
    %v5254 = vunpack.c.h.b16 %v2342
    %v5255 = vunpack.c.l.b16 %v2343
    %v5256 = vunpack.c.h.b16 %v2343
    %v5257 = vunpack.c.l.b16 %v2344
    %v5258 = vunpack.c.h.b16 %v2344
    %v5259 = vunpack.c.l.b16 %v2345
    %v5260 = vunpack.c.h.b16 %v2345
    %v5261 = vunpack.c.l.b16 %v2346
    %v5262 = vunpack.c.h.b16 %v2346
    %v5263 = vunpack.c.l.b16 %v2347
    %v5264 = vunpack.c.h.b16 %v2347
    %v5265 = vunpack.c.l.b16 %v2348
    %v5266 = vunpack.c.h.b16 %v2348
    %v5267 = vunpack.c.l.b16 %v2349
    %v5268 = vunpack.c.h.b16 %v2349
    %v5269 = vunpack.c.l.b16 %v2350
    %v5270 = vunpack.c.h.b16 %v2350
    %v5271 = vunpack.c.l.b16 %v2351
    %v5272 = vunpack.c.h.b16 %v2351
    %v5273 = vunpack.c.l.b16 %v2352
    %v5274 = vunpack.c.h.b16 %v2352
    %v5275 = vunpack.c.l.b16 %v2353
    %v5276 = vunpack.c.h.b16 %v2353
    %v5277 = vunpack.c.l.b16 %v2354
    %v5278 = vunpack.c.h.b16 %v2354
    %v5279 = vunpack.c.l.b16 %v2355
    %v5280 = vunpack.c.h.b16 %v2355
    %v5281 = vunpack.c.l.b16 %v2356
    %v5282 = vunpack.c.h.b16 %v2356
    %v5283 = vunpack.c.l.b16 %v2357
    %v5284 = vunpack.c.h.b16 %v2357
    %v5285 = vunpack.c.l.b16 %v2358
    %v5286 = vunpack.c.h.b16 %v2358
    %v5287 = vunpack.c.l.b16 %v2359
    %v5288 = vunpack.c.h.b16 %v2359
    %v5289 = vunpack.c.l.b16 %v2360
    %v5290 = vunpack.c.h.b16 %v2360
    %v5291 = vunpack.c.l.b16 %v2361
    %v5292 = vunpack.c.h.b16 %v2361
    %v5293 = vunpack.c.l.b16 %v2362
    %v5294 = vunpack.c.h.b16 %v2362
    %v5295 = vunpack.c.l.b16 %v2363
    %v5296 = vunpack.c.h.b16 %v2363
    %v5297 = vunpack.c.l.b16 %v2364
    %v5298 = vunpack.c.h.b16 %v2364
    %v5299 = vunpack.c.l.b16 %v2365
    %v5300 = vunpack.c.h.b16 %v2365
    %v5301 = vunpack.c.l.b16 %v2366
    %v5302 = vunpack.c.h.b16 %v2366
    %v5303 = vunpack.c.l.b16 %v2367
    %v5304 = vunpack.c.h.b16 %v2367
    %v5305 = vunpack.c.l.b16 %v2368
    %v5306 = vunpack.c.h.b16 %v2368
    %v5307 = vunpack.c.l.b16 %v2369
    %v5308 = vunpack.c.h.b16 %v2369
    %v5309 = vunpack.c.l.b16 %v2370
    %v5310 = vunpack.c.h.b16 %v2370
    %v5311 = vunpack.c.l.b16 %v2371
    %v5312 = vunpack.c.h.b16 %v2371
    %v5313 = vunpack.c.l.b16 %v2372
    %v5314 = vunpack.c.h.b16 %v2372
    %v5315 = vunpack.c.l.b16 %v2373
    %v5316 = vunpack.c.h.b16 %v2373
    %v5317 = vunpack.c.l.b16 %v2374
    %v5318 = vunpack.c.h.b16 %v2374
    %v5319 = vunpack.c.l.b16 %v2375
    %v5320 = vunpack.c.h.b16 %v2375
    %v5321 = vunpack.c.l.b16 %v2376
    %v5322 = vunpack.c.h.b16 %v2376
    %v5323 = vunpack.c.l.b16 %v2377
    %v5324 = vunpack.c.h.b16 %v2377
    %v5325 = vunpack.c.l.b16 %v2378
    %v5326 = vunpack.c.h.b16 %v2378
    %v5327 = vunpack.c.l.b16 %v2379
    %v5328 = vunpack.c.h.b16 %v2379
    %v5329 = vunpack.c.l.b16 %v2380
    %v5330 = vunpack.c.h.b16 %v2380
    %v5331 = vunpack.c.l.b16 %v2381
    %v5332 = vunpack.c.h.b16 %v2381
    %v5333 = vunpack.c.l.b16 %v2382
    %v5334 = vunpack.c.h.b16 %v2382
    %v5335 = vunpack.c.l.b16 %v2383
    %v5336 = vunpack.c.h.b16 %v2383
    %v5337 = vunpack.c.l.b16 %v2384
    %v5338 = vunpack.c.h.b16 %v2384
    %v5339 = vunpack.c.l.b16 %v2385
    %v5340 = vunpack.c.h.b16 %v2385
    %v5341 = vunpack.c.l.b16 %v2386
    %v5342 = vunpack.c.h.b16 %v2386
    %v5343 = vunpack.c.l.b16 %v2387
    %v5344 = vunpack.c.h.b16 %v2387
    %v5345 = vunpack.c.l.b16 %v2388
    %v5346 = vunpack.c.h.b16 %v2388
    %v5347 = vunpack.c.l.b16 %v2389
    %v5348 = vunpack.c.h.b16 %v2389
    %v5349 = vunpack.c.l.b16 %v2390
    %v5350 = vunpack.c.h.b16 %v2390
    %v5351 = vunpack.c.l.b16 %v2391
    %v5352 = vunpack.c.h.b16 %v2391
    %v5353 = vunpack.c.l.b16 %v2392
    %v5354 = vunpack.c.h.b16 %v2392
    %v5355 = vunpack.c.l.b16 %v2393
    %v5356 = vunpack.c.h.b16 %v2393
    %v5357 = vunpack.c.l.b16 %v2394
    %v5358 = vunpack.c.h.b16 %v2394
    %v5359 = vunpack.c.l.b16 %v2395
    %v5360 = vunpack.c.h.b16 %v2395
    %v5361 = vunpack.c.l.b16 %v2396
    %v5362 = vunpack.c.h.b16 %v2396
    %v5363 = vunpack.c.l.b16 %v2397
    %v5364 = vunpack.c.h.b16 %v2397
    %v5365 = vunpack.c.l.b16 %v2398
    %v5366 = vunpack.c.h.b16 %v2398
    %v5367 = vunpack.c.l.b16 %v2399
    %v5368 = vunpack.c.h.b16 %v2399
    %v5369 = vunpack.c.l.b16 %v2400
    %v5370 = vunpack.c.h.b16 %v2400
    %v5371 = vunpack.c.l.b16 %v2401
    %v5372 = vunpack.c.h.b16 %v2401
    %v5373 = vunpack.c.l.b16 %v2402
    %v5374 = vunpack.c.h.b16 %v2402
    %v5375 = vunpack.c.l.b16 %v2403
    %v5376 = vunpack.c.h.b16 %v2403
    %v5377 = vunpack.c.l.b16 %v2404
    %v5378 = vunpack.c.h.b16 %v2404
    %v5379 = vunpack.c.l.b16 %v2405
    %v5380 = vunpack.c.h.b16 %v2405
    %v5381 = vunpack.c.l.b16 %v2406
    %v5382 = vunpack.c.h.b16 %v2406
    %v5383 = vunpack.c.l.b16 %v2407
    %v5384 = vunpack.c.h.b16 %v2407
    %v5385 = vunpack.c.l.b16 %v2408
    %v5386 = vunpack.c.h.b16 %v2408
    %v5387 = vunpack.c.l.b16 %v2409
    %v5388 = vunpack.c.h.b16 %v2409
    %v5389 = vunpack.c.l.b16 %v2410
    %v5390 = vunpack.c.h.b16 %v2410
    %v5391 = vunpack.c.l.b16 %v2411
    %v5392 = vunpack.c.h.b16 %v2411
    %v5393 = vunpack.c.l.b16 %v2412
    %v5394 = vunpack.c.h.b16 %v2412
    %v5395 = vunpack.c.l.b16 %v2413
    %v5396 = vunpack.c.h.b16 %v2413
    %v5397 = vunpack.c.l.b16 %v2414
    %v5398 = vunpack.c.h.b16 %v2414
    %v5399 = vunpack.c.l.b16 %v2415
    %v5400 = vunpack.c.h.b16 %v2415
    %v5401 = vunpack.c.l.b16 %v2416
    %v5402 = vunpack.c.h.b16 %v2416
    %v5403 = vunpack.c.l.b16 %v2417
    %v5404 = vunpack.c.h.b16 %v2417
    %v5405 = vunpack.c.l.b16 %v2418
    %v5406 = vunpack.c.h.b16 %v2418
    %v5407 = vunpack.c.l.b16 %v2419
    %v5408 = vunpack.c.h.b16 %v2419
    %v5409 = vunpack.c.l.b16 %v2420
    %v5410 = vunpack.c.h.b16 %v2420
    %v5411 = vunpack.c.l.b16 %v2421
    %v5412 = vunpack.c.h.b16 %v2421
    %v5413 = vunpack.c.l.b16 %v2422
    %v5414 = vunpack.c.h.b16 %v2422
    %v5415 = vunpack.c.l.b16 %v2423
    %v5416 = vunpack.c.h.b16 %v2423
    %v5417 = vunpack.c.l.b16 %v2424
    %v5418 = vunpack.c.h.b16 %v2424
    %v5419 = vunpack.c.l.b16 %v2425
    %v5420 = vunpack.c.h.b16 %v2425
    %v5421 = vunpack.c.l.b16 %v2426
    %v5422 = vunpack.c.h.b16 %v2426
    %v5423 = vunpack.c.l.b16 %v2427
    %v5424 = vunpack.c.h.b16 %v2427
    %v5425 = vunpack.c.l.b16 %v2428
    %v5426 = vunpack.c.h.b16 %v2428
    %v5427 = vunpack.c.l.b16 %v2429
    %v5428 = vunpack.c.h.b16 %v2429
    %v5429 = vunpack.c.l.b16 %v2430
    %v5430 = vunpack.c.h.b16 %v2430
    %v5431 = vunpack.c.l.b16 %v2431
    %v5432 = vunpack.c.h.b16 %v2431
    %v5433 = vunpack.c.l.b16 %v2432
    %v5434 = vunpack.c.h.b16 %v2432
    %v5435 = vunpack.c.l.b16 %v2433
    %v5436 = vunpack.c.h.b16 %v2433
    %v5437 = vunpack.c.l.b16 %v2434
    %v5438 = vunpack.c.h.b16 %v2434
    %v5439 = vunpack.c.l.b16 %v2435
    %v5440 = vunpack.c.h.b16 %v2435
    %v5441 = vunpack.c.l.b16 %v2436
    %v5442 = vunpack.c.h.b16 %v2436
    %v5443 = vunpack.c.l.b16 %v2437
    %v5444 = vunpack.c.h.b16 %v2437
    %v5445 = vunpack.c.l.b16 %v2438
    %v5446 = vunpack.c.h.b16 %v2438
    %v5447 = vunpack.c.l.b16 %v2439
    %v5448 = vunpack.c.h.b16 %v2439
    %v5449 = vunpack.c.l.b16 %v2440
    %v5450 = vunpack.c.h.b16 %v2440
    %v5451 = vunpack.c.l.b16 %v2441
    %v5452 = vunpack.c.h.b16 %v2441
    %v5453 = vunpack.c.l.b16 %v2442
    %v5454 = vunpack.c.h.b16 %v2442
    %v5455 = vunpack.c.l.b16 %v2443
    %v5456 = vunpack.c.h.b16 %v2443
    %v5457 = vunpack.c.l.b16 %v2444
    %v5458 = vunpack.c.h.b16 %v2444
    %v5459 = vunpack.c.l.b16 %v2445
    %v5460 = vunpack.c.h.b16 %v2445
    %v5461 = vunpack.c.l.b16 %v2446
    %v5462 = vunpack.c.h.b16 %v2446
    %v5463 = vunpack.c.l.b16 %v2447
    %v5464 = vunpack.c.h.b16 %v2447
    %v5465 = vunpack.c.l.b16 %v2448
    %v5466 = vunpack.c.h.b16 %v2448
    %v5467 = vunpack.c.l.b16 %v2449
    %v5468 = vunpack.c.h.b16 %v2449
    %v5469 = vunpack.c.l.b16 %v2450
    %v5470 = vunpack.c.h.b16 %v2450
    %v5471 = vunpack.c.l.b16 %v2451
    %v5472 = vunpack.c.h.b16 %v2451
    %v5473 = vunpack.c.l.b16 %v2452
    %v5474 = vunpack.c.h.b16 %v2452
    %v5475 = vunpack.c.l.b16 %v2453
    %v5476 = vunpack.c.h.b16 %v2453
    %v5477 = vunpack.c.l.b16 %v2454
    %v5478 = vunpack.c.h.b16 %v2454
    %v5479 = vunpack.c.l.b16 %v2455
    %v5480 = vunpack.c.h.b16 %v2455
    %v5481 = vunpack.c.l.b16 %v2456
    %v5482 = vunpack.c.h.b16 %v2456
    %v5483 = vunpack.c.l.b16 %v2457
    %v5484 = vunpack.c.h.b16 %v2457
    %v5485 = vunpack.c.l.b16 %v2458
    %v5486 = vunpack.c.h.b16 %v2458
    %v5487 = vunpack.c.l.b16 %v2459
    %v5488 = vunpack.c.h.b16 %v2459
    %v5489 = vunpack.c.l.b16 %v2460
    %v5490 = vunpack.c.h.b16 %v2460
    %v5491 = vunpack.c.l.b16 %v2461
    %v5492 = vunpack.c.h.b16 %v2461
    %v5493 = vunpack.c.l.b16 %v2462
    %v5494 = vunpack.c.h.b16 %v2462
    %v5495 = vunpack.c.l.b16 %v2463
    %v5496 = vunpack.c.h.b16 %v2463
    %v5497 = vunpack.c.l.b16 %v2464
    %v5498 = vunpack.c.h.b16 %v2464
    %v5499 = vunpack.c.l.b16 %v2465
    %v5500 = vunpack.c.h.b16 %v2465
    %v5501 = vunpack.c.l.b16 %v2466
    %v5502 = vunpack.c.h.b16 %v2466
    %v5503 = vunpack.c.l.b16 %v2467
    %v5504 = vunpack.c.h.b16 %v2467
    %v5505 = vunpack.c.l.b16 %v2468
    %v5506 = vunpack.c.h.b16 %v2468
    %v5507 = vunpack.c.l.b16 %v2469
    %v5508 = vunpack.c.h.b16 %v2469
    %v5509 = vunpack.c.l.b16 %v2470
    %v5510 = vunpack.c.h.b16 %v2470
    %v5511 = vunpack.c.l.b16 %v2471
    %v5512 = vunpack.c.h.b16 %v2471
    %v5513 = vunpack.c.l.b16 %v2472
    %v5514 = vunpack.c.h.b16 %v2472
    %v5515 = vunpack.c.l.b16 %v2473
    %v5516 = vunpack.c.h.b16 %v2473
    %v5517 = vunpack.c.l.b16 %v2474
    %v5518 = vunpack.c.h.b16 %v2474
    %v5519 = vunpack.c.l.b16 %v2475
    %v5520 = vunpack.c.h.b16 %v2475
    %v5521 = vunpack.c.l.b16 %v2476
    %v5522 = vunpack.c.h.b16 %v2476
    %v5523 = vunpack.c.l.b16 %v2477
    %v5524 = vunpack.c.h.b16 %v2477
    %v5525 = vunpack.c.l.b16 %v2478
    %v5526 = vunpack.c.h.b16 %v2478
    %v5527 = vunpack.c.l.b16 %v2479
    %v5528 = vunpack.c.h.b16 %v2479
    %v5529 = vunpack.c.l.b16 %v2480
    %v5530 = vunpack.c.h.b16 %v2480
    %v5531 = vunpack.c.l.b16 %v2481
    %v5532 = vunpack.c.h.b16 %v2481
    %v5533 = vunpack.c.l.b16 %v2482
    %v5534 = vunpack.c.h.b16 %v2482
    %v5535 = vunpack.c.l.b16 %v2483
    %v5536 = vunpack.c.h.b16 %v2483
    %v5537 = vunpack.c.l.b16 %v2484
    %v5538 = vunpack.c.h.b16 %v2484
    %v5539 = vunpack.c.l.b16 %v2485
    %v5540 = vunpack.c.h.b16 %v2485
    %v5541 = vunpack.c.l.b16 %v2486
    %v5542 = vunpack.c.h.b16 %v2486
    %v5543 = vunpack.c.l.b16 %v2487
    %v5544 = vunpack.c.h.b16 %v2487
    %v5545 = vunpack.c.l.b16 %v2488
    %v5546 = vunpack.c.h.b16 %v2488
    %v5547 = vunpack.c.l.b16 %v2489
    %v5548 = vunpack.c.h.b16 %v2489
    %v5549 = vunpack.c.l.b16 %v2490
    %v5550 = vunpack.c.h.b16 %v2490
    %v5551 = vunpack.c.l.b16 %v2491
    %v5552 = vunpack.c.h.b16 %v2491
    %v5553 = vunpack.c.l.b16 %v2492
    %v5554 = vunpack.c.h.b16 %v2492
    %v5555 = vunpack.c.l.b16 %v2493
    %v5556 = vunpack.c.h.b16 %v2493
    %v5557 = vunpack.c.l.b16 %v2494
    %v5558 = vunpack.c.h.b16 %v2494
    %v5559 = vunpack.c.l.b16 %v2495
    %v5560 = vunpack.c.h.b16 %v2495
    %v5561 = vunpack.c.l.b16 %v2496
    %v5562 = vunpack.c.h.b16 %v2496
    %v5563 = vunpack.c.l.b16 %v2497
    %v5564 = vunpack.c.h.b16 %v2497
    %v5565 = vunpack.c.l.b16 %v2498
    %v5566 = vunpack.c.h.b16 %v2498
    %v5567 = vunpack.c.l.b16 %v2499
    %v5568 = vunpack.c.h.b16 %v2499
    %v5569 = vunpack.c.l.b16 %v2500
    %v5570 = vunpack.c.h.b16 %v2500
    %v5571 = vunpack.c.l.b16 %v2501
    %v5572 = vunpack.c.h.b16 %v2501
    %v5573 = vunpack.c.l.b16 %v2502
    %v5574 = vunpack.c.h.b16 %v2502
    %v5575 = vunpack.c.l.b16 %v2503
    %v5576 = vunpack.c.h.b16 %v2503
    %v5577 = vunpack.c.l.b16 %v2504
    %v5578 = vunpack.c.h.b16 %v2504
    %v5579 = vunpack.c.l.b16 %v2505
    %v5580 = vunpack.c.h.b16 %v2505
    %v5581 = vunpack.c.l.b16 %v2506
    %v5582 = vunpack.c.h.b16 %v2506
    %v5583 = vunpack.c.l.b16 %v2507
    %v5584 = vunpack.c.h.b16 %v2507
    %v5585 = vunpack.c.l.b16 %v2508
    %v5586 = vunpack.c.h.b16 %v2508
    %v5587 = vunpack.c.l.b16 %v2509
    %v5588 = vunpack.c.h.b16 %v2509
    %v5589 = vunpack.c.l.b16 %v2510
    %v5590 = vunpack.c.h.b16 %v2510
    %v5591 = vunpack.c.l.b16 %v2511
    %v5592 = vunpack.c.h.b16 %v2511
    %v5593 = vunpack.c.l.b16 %v2512
    %v5594 = vunpack.c.h.b16 %v2512
    %v5595 = vunpack.c.l.b16 %v2513
    %v5596 = vunpack.c.h.b16 %v2513
    %v5597 = vunpack.c.l.b16 %v2514
    %v5598 = vunpack.c.h.b16 %v2514
    %v5599 = vunpack.c.l.b16 %v2515
    %v5600 = vunpack.c.h.b16 %v2515
    %v5601 = vunpack.c.l.b16 %v2516
    %v5602 = vunpack.c.h.b16 %v2516
    %v5603 = vunpack.c.l.b16 %v2517
    %v5604 = vunpack.c.h.b16 %v2517
    %v5605 = vunpack.c.l.b16 %v2518
    %v5606 = vunpack.c.h.b16 %v2518
    %v5607 = vunpack.c.l.b16 %v2519
    %v5608 = vunpack.c.h.b16 %v2519
    %v5609 = vunpack.c.l.b16 %v2520
    %v5610 = vunpack.c.h.b16 %v2520
    %v5611 = vunpack.c.l.b16 %v2521
    %v5612 = vunpack.c.h.b16 %v2521
    %v5613 = vunpack.c.l.b16 %v2522
    %v5614 = vunpack.c.h.b16 %v2522
    %v5615 = vunpack.c.l.b16 %v2523
    %v5616 = vunpack.c.h.b16 %v2523
    %v5617 = vunpack.c.l.b16 %v2524
    %v5618 = vunpack.c.h.b16 %v2524
    %v5619 = vunpack.c.l.b16 %v2525
    %v5620 = vunpack.c.h.b16 %v2525
    %v5621 = vunpack.c.l.b16 %v2526
    %v5622 = vunpack.c.h.b16 %v2526
    %v5623 = vunpack.c.l.b16 %v2527
    %v5624 = vunpack.c.h.b16 %v2527
    %v5625 = vunpack.c.l.b16 %v2528
    %v5626 = vunpack.c.h.b16 %v2528
    %v5627 = vunpack.c.l.b16 %v2529
    %v5628 = vunpack.c.h.b16 %v2529
    %v5629 = vunpack.c.l.b16 %v2530
    %v5630 = vunpack.c.h.b16 %v2530
    %v5631 = vunpack.c.l.b16 %v2531
    %v5632 = vunpack.c.h.b16 %v2531
    %v5633 = vunpack.c.l.b16 %v2532
    %v5634 = vunpack.c.h.b16 %v2532
    %v5635 = vunpack.c.l.b16 %v2533
    %v5636 = vunpack.c.h.b16 %v2533
    %v5637 = vunpack.c.l.b16 %v2534
    %v5638 = vunpack.c.h.b16 %v2534
    %v5639 = vunpack.c.l.b16 %v2535
    %v5640 = vunpack.c.h.b16 %v2535
    %v5641 = vunpack.c.l.b16 %v2536
    %v5642 = vunpack.c.h.b16 %v2536
    %v5643 = vunpack.c.l.b16 %v2537
    %v5644 = vunpack.c.h.b16 %v2537
    %v5645 = vunpack.c.l.b16 %v2538
    %v5646 = vunpack.c.h.b16 %v2538
    %v5647 = vunpack.c.l.b16 %v2539
    %v5648 = vunpack.c.h.b16 %v2539
    %v5649 = vunpack.c.l.b16 %v2540
    %v5650 = vunpack.c.h.b16 %v2540
    %v5651 = vunpack.c.l.b16 %v2541
    %v5652 = vunpack.c.h.b16 %v2541
    %v5653 = vunpack.c.l.b16 %v2542
    %v5654 = vunpack.c.h.b16 %v2542
    %v5655 = vunpack.c.l.b16 %v2543
    %v5656 = vunpack.c.h.b16 %v2543
    %v5657 = vunpack.c.l.b16 %v2544
    %v5658 = vunpack.c.h.b16 %v2544
    %v5659 = vunpack.c.l.b16 %v2545
    %v5660 = vunpack.c.h.b16 %v2545
    %v5661 = vunpack.c.l.b16 %v2546
    %v5662 = vunpack.c.h.b16 %v2546
    %v5663 = vunpack.c.l.b16 %v2547
    %v5664 = vunpack.c.h.b16 %v2547
    %v5665 = vunpack.c.l.b16 %v2548
    %v5666 = vunpack.c.h.b16 %v2548
    %v5667 = vunpack.c.l.b16 %v2549
    %v5668 = vunpack.c.h.b16 %v2549
    %v5669 = vunpack.c.l.b16 %v2550
    %v5670 = vunpack.c.h.b16 %v2550
    %v5671 = vunpack.c.l.b16 %v2551
    %v5672 = vunpack.c.h.b16 %v2551
    %v5673 = vunpack.c.l.b16 %v2552
    %v5674 = vunpack.c.h.b16 %v2552
    %v5675 = vunpack.c.l.b16 %v2553
    %v5676 = vunpack.c.h.b16 %v2553
    %v5677 = vunpack.c.l.b16 %v2554
    %v5678 = vunpack.c.h.b16 %v2554
    %v5679 = vunpack.c.l.b16 %v2555
    %v5680 = vunpack.c.h.b16 %v2555
    %v5681 = vunpack.c.l.b16 %v2556
    %v5682 = vunpack.c.h.b16 %v2556
    %v5683 = vunpack.c.l.b16 %v2557
    %v5684 = vunpack.c.h.b16 %v2557
    %v5685 = vunpack.c.l.b16 %v2558
    %v5686 = vunpack.c.h.b16 %v2558
    %v5687 = vunpack.c.l.b16 %v2559
    %v5688 = vunpack.c.h.b16 %v2559
    %v5689 = vunpack.c.l.b16 %v2560
    %v5690 = vunpack.c.h.b16 %v2560
    %v5691 = vunpack.c.l.b16 %v2561
    %v5692 = vunpack.c.h.b16 %v2561
    %v5693 = vunpack.c.l.b16 %v2562
    %v5694 = vunpack.c.h.b16 %v2562
    %v5695 = vunpack.c.l.b16 %v2563
    %v5696 = vunpack.c.h.b16 %v2563
    %v5697 = vunpack.c.l.b16 %v2564
    %v5698 = vunpack.c.h.b16 %v2564
    %v5699 = vunpack.c.l.b16 %v2565
    %v5700 = vunpack.c.h.b16 %v2565
    %v5701 = vunpack.c.l.b16 %v2566
    %v5702 = vunpack.c.h.b16 %v2566
    %v5703 = vunpack.c.l.b16 %v2567
    %v5704 = vunpack.c.h.b16 %v2567
    %v5705 = vunpack.c.l.b16 %v2568
    %v5706 = vunpack.c.h.b16 %v2568
    %v5707 = vunpack.c.l.b16 %v2569
    %v5708 = vunpack.c.h.b16 %v2569
    %v5709 = vunpack.c.l.b16 %v2570
    %v5710 = vunpack.c.h.b16 %v2570
    %v5711 = vunpack.c.l.b16 %v2571
    %v5712 = vunpack.c.h.b16 %v2571
    %v5713 = vunpack.c.l.b16 %v2572
    %v5714 = vunpack.c.h.b16 %v2572
    %v5715 = vunpack.c.l.b16 %v2573
    %v5716 = vunpack.c.h.b16 %v2573
    %v5717 = vunpack.c.l.b16 %v2574
    %v5718 = vunpack.c.h.b16 %v2574
    %v5719 = vpack.c.b16 %v3703, %v3671
    %v5720 = vpack.c.b16 %v3704, %v3672
    %v5721 = vpack.c.b16 %v3705, %v3673
    %v5722 = vpack.c.b16 %v3706, %v3674
    %v5723 = vpack.c.b16 %v3707, %v3675
    %v5724 = vpack.c.b16 %v3708, %v3676
    %v5725 = vpack.c.b16 %v3709, %v3677
    %v5726 = vpack.c.b16 %v3710, %v3678
    %v5727 = vpack.c.b16 %v3711, %v3679
    %v5728 = vpack.c.b16 %v3712, %v3680
    %v5729 = vpack.c.b16 %v3713, %v3681
    %v5730 = vpack.c.b16 %v3714, %v3682
    %v5731 = vpack.c.b16 %v3715, %v3683
    %v5732 = vpack.c.b16 %v3716, %v3684
    %v5733 = vpack.c.b16 %v3717, %v3685
    %v5734 = vpack.c.b16 %v3718, %v3686
    %v5735 = vpack.c.b16 %v3719, %v3687
    %v5736 = vpack.c.b16 %v3720, %v3688
    %v5737 = vpack.c.b16 %v3721, %v3689
    %v5738 = vpack.c.b16 %v3722, %v3690
    %v5739 = vpack.c.b16 %v3723, %v3691
    %v5740 = vpack.c.b16 %v3724, %v3692
    %v5741 = vpack.c.b16 %v3725, %v3693
    %v5742 = vpack.c.b16 %v3726, %v3694
    %v5743 = vpack.c.b16 %v3727, %v3695
    %v5744 = vpack.c.b16 %v3728, %v3696
    %v5745 = vpack.c.b16 %v3729, %v3697
    %v5746 = vpack.c.b16 %v3730, %v3698
    %v5747 = vpack.c.b16 %v3731, %v3699
    %v5748 = vpack.c.b16 %v3732, %v3700
    %v5749 = vpack.c.b16 %v3733, %v3701
    %v5750 = vpack.c.b16 %v3734, %v3702
    %v5751 = vpack.c.b16 %v3767, %v3735
    %v5752 = vpack.c.b16 %v3768, %v3736
    %v5753 = vpack.c.b16 %v3769, %v3737
    %v5754 = vpack.c.b16 %v3770, %v3738
    %v5755 = vpack.c.b16 %v3771, %v3739
    %v5756 = vpack.c.b16 %v3772, %v3740
    %v5757 = vpack.c.b16 %v3773, %v3741
    %v5758 = vpack.c.b16 %v3774, %v3742
    %v5759 = vpack.c.b16 %v3775, %v3743
    %v5760 = vpack.c.b16 %v3776, %v3744
    %v5761 = vpack.c.b16 %v3777, %v3745
    %v5762 = vpack.c.b16 %v3778, %v3746
    %v5763 = vpack.c.b16 %v3779, %v3747
    %v5764 = vpack.c.b16 %v3780, %v3748
    %v5765 = vpack.c.b16 %v3781, %v3749
    %v5766 = vpack.c.b16 %v3782, %v3750
    %v5767 = vpack.c.b16 %v3783, %v3751
    %v5768 = vpack.c.b16 %v3784, %v3752
    %v5769 = vpack.c.b16 %v3785, %v3753
    %v5770 = vpack.c.b16 %v3786, %v3754
    %v5771 = vpack.c.b16 %v3787, %v3755
    %v5772 = vpack.c.b16 %v3788, %v3756
    %v5773 = vpack.c.b16 %v3789, %v3757
    %v5774 = vpack.c.b16 %v3790, %v3758
    %v5775 = vpack.c.b16 %v3791, %v3759
    %v5776 = vpack.c.b16 %v3792, %v3760
    %v5777 = vpack.c.b16 %v3793, %v3761
    %v5778 = vpack.c.b16 %v3794, %v3762
    %v5779 = vpack.c.b16 %v3795, %v3763
    %v5780 = vpack.c.b16 %v3796, %v3764
    %v5781 = vpack.c.b16 %v3797, %v3765
    %v5782 = vpack.c.b16 %v3798, %v3766
    %v5783 = vpack.c.b16 %v3831, %v3799
    %v5784 = vpack.c.b16 %v3832, %v3800
    %v5785 = vpack.c.b16 %v3833, %v3801
    %v5786 = vpack.c.b16 %v3834, %v3802
    %v5787 = vpack.c.b16 %v3835, %v3803
    %v5788 = vpack.c.b16 %v3836, %v3804
    %v5789 = vpack.c.b16 %v3837, %v3805
    %v5790 = vpack.c.b16 %v3838, %v3806
    %v5791 = vpack.c.b16 %v3839, %v3807
    %v5792 = vpack.c.b16 %v3840, %v3808
    %v5793 = vpack.c.b16 %v3841, %v3809
    %v5794 = vpack.c.b16 %v3842, %v3810
    %v5795 = vpack.c.b16 %v3843, %v3811
    %v5796 = vpack.c.b16 %v3844, %v3812
    %v5797 = vpack.c.b16 %v3845, %v3813
    %v5798 = vpack.c.b16 %v3846, %v3814
    %v5799 = vpack.c.b16 %v3847, %v3815
    %v5800 = vpack.c.b16 %v3848, %v3816
    %v5801 = vpack.c.b16 %v3849, %v3817
    %v5802 = vpack.c.b16 %v3850, %v3818
    %v5803 = vpack.c.b16 %v3851, %v3819
    %v5804 = vpack.c.b16 %v3852, %v3820
    %v5805 = vpack.c.b16 %v3853, %v3821
    %v5806 = vpack.c.b16 %v3854, %v3822
    %v5807 = vpack.c.b16 %v3855, %v3823
    %v5808 = vpack.c.b16 %v3856, %v3824
    %v5809 = vpack.c.b16 %v3857, %v3825
    %v5810 = vpack.c.b16 %v3858, %v3826
    %v5811 = vpack.c.b16 %v3859, %v3827
    %v5812 = vpack.c.b16 %v3860, %v3828
    %v5813 = vpack.c.b16 %v3861, %v3829
    %v5814 = vpack.c.b16 %v3862, %v3830
    %v5815 = vpack.c.b16 %v3895, %v3863
    %v5816 = vpack.c.b16 %v3896, %v3864
    %v5817 = vpack.c.b16 %v3897, %v3865
    %v5818 = vpack.c.b16 %v3898, %v3866
    %v5819 = vpack.c.b16 %v3899, %v3867
    %v5820 = vpack.c.b16 %v3900, %v3868
    %v5821 = vpack.c.b16 %v3901, %v3869
    %v5822 = vpack.c.b16 %v3902, %v3870
    %v5823 = vpack.c.b16 %v3903, %v3871
    %v5824 = vpack.c.b16 %v3904, %v3872
    %v5825 = vpack.c.b16 %v3905, %v3873
    %v5826 = vpack.c.b16 %v3906, %v3874
    %v5827 = vpack.c.b16 %v3907, %v3875
    %v5828 = vpack.c.b16 %v3908, %v3876
    %v5829 = vpack.c.b16 %v3909, %v3877
    %v5830 = vpack.c.b16 %v3910, %v3878
    %v5831 = vpack.c.b16 %v3911, %v3879
    %v5832 = vpack.c.b16 %v3912, %v3880
    %v5833 = vpack.c.b16 %v3913, %v3881
    %v5834 = vpack.c.b16 %v3914, %v3882
    %v5835 = vpack.c.b16 %v3915, %v3883
    %v5836 = vpack.c.b16 %v3916, %v3884
    %v5837 = vpack.c.b16 %v3917, %v3885
    %v5838 = vpack.c.b16 %v3918, %v3886
    %v5839 = vpack.c.b16 %v3919, %v3887
    %v5840 = vpack.c.b16 %v3920, %v3888
    %v5841 = vpack.c.b16 %v3921, %v3889
    %v5842 = vpack.c.b16 %v3922, %v3890
    %v5843 = vpack.c.b16 %v3923, %v3891
    %v5844 = vpack.c.b16 %v3924, %v3892
    %v5845 = vpack.c.b16 %v3925, %v3893
    %v5846 = vpack.c.b16 %v3926, %v3894
    %v5847 = vpack.c.b16 %v3959, %v3927
    %v5848 = vpack.c.b16 %v3960, %v3928
    %v5849 = vpack.c.b16 %v3961, %v3929
    %v5850 = vpack.c.b16 %v3962, %v3930
    %v5851 = vpack.c.b16 %v3963, %v3931
    %v5852 = vpack.c.b16 %v3964, %v3932
    %v5853 = vpack.c.b16 %v3965, %v3933
    %v5854 = vpack.c.b16 %v3966, %v3934
    %v5855 = vpack.c.b16 %v3967, %v3935
    %v5856 = vpack.c.b16 %v3968, %v3936
    %v5857 = vpack.c.b16 %v3969, %v3937
    %v5858 = vpack.c.b16 %v3970, %v3938
    %v5859 = vpack.c.b16 %v3971, %v3939
    %v5860 = vpack.c.b16 %v3972, %v3940
    %v5861 = vpack.c.b16 %v3973, %v3941
    %v5862 = vpack.c.b16 %v3974, %v3942
    %v5863 = vpack.c.b16 %v3975, %v3943
    %v5864 = vpack.c.b16 %v3976, %v3944
    %v5865 = vpack.c.b16 %v3977, %v3945
    %v5866 = vpack.c.b16 %v3978, %v3946
    %v5867 = vpack.c.b16 %v3979, %v3947
    %v5868 = vpack.c.b16 %v3980, %v3948
    %v5869 = vpack.c.b16 %v3981, %v3949
    %v5870 = vpack.c.b16 %v3982, %v3950
    %v5871 = vpack.c.b16 %v3983, %v3951
    %v5872 = vpack.c.b16 %v3984, %v3952
    %v5873 = vpack.c.b16 %v3985, %v3953
    %v5874 = vpack.c.b16 %v3986, %v3954
    %v5875 = vpack.c.b16 %v3987, %v3955
    %v5876 = vpack.c.b16 %v3988, %v3956
    %v5877 = vpack.c.b16 %v3989, %v3957
    %v5878 = vpack.c.b16 %v3990, %v3958
    %v5879 = vpack.c.b16 %v4023, %v3991
    %v5880 = vpack.c.b16 %v4024, %v3992
    %v5881 = vpack.c.b16 %v4025, %v3993
    %v5882 = vpack.c.b16 %v4026, %v3994
    %v5883 = vpack.c.b16 %v4027, %v3995
    %v5884 = vpack.c.b16 %v4028, %v3996
    %v5885 = vpack.c.b16 %v4029, %v3997
    %v5886 = vpack.c.b16 %v4030, %v3998
    %v5887 = vpack.c.b16 %v4031, %v3999
    %v5888 = vpack.c.b16 %v4032, %v4000
    %v5889 = vpack.c.b16 %v4033, %v4001
    %v5890 = vpack.c.b16 %v4034, %v4002
    %v5891 = vpack.c.b16 %v4035, %v4003
    %v5892 = vpack.c.b16 %v4036, %v4004
    %v5893 = vpack.c.b16 %v4037, %v4005
    %v5894 = vpack.c.b16 %v4038, %v4006
    %v5895 = vpack.c.b16 %v4039, %v4007
    %v5896 = vpack.c.b16 %v4040, %v4008
    %v5897 = vpack.c.b16 %v4041, %v4009
    %v5898 = vpack.c.b16 %v4042, %v4010
    %v5899 = vpack.c.b16 %v4043, %v4011
    %v5900 = vpack.c.b16 %v4044, %v4012
    %v5901 = vpack.c.b16 %v4045, %v4013
    %v5902 = vpack.c.b16 %v4046, %v4014
    %v5903 = vpack.c.b16 %v4047, %v4015
    %v5904 = vpack.c.b16 %v4048, %v4016
    %v5905 = vpack.c.b16 %v4049, %v4017
    %v5906 = vpack.c.b16 %v4050, %v4018
    %v5907 = vpack.c.b16 %v4051, %v4019
    %v5908 = vpack.c.b16 %v4052, %v4020
    %v5909 = vpack.c.b16 %v4053, %v4021
    %v5910 = vpack.c.b16 %v4054, %v4022
    %v5911 = vpack.c.b16 %v4087, %v4055
    %v5912 = vpack.c.b16 %v4088, %v4056
    %v5913 = vpack.c.b16 %v4089, %v4057
    %v5914 = vpack.c.b16 %v4090, %v4058
    %v5915 = vpack.c.b16 %v4091, %v4059
    %v5916 = vpack.c.b16 %v4092, %v4060
    %v5917 = vpack.c.b16 %v4093, %v4061
    %v5918 = vpack.c.b16 %v4094, %v4062
    %v5919 = vpack.c.b16 %v4095, %v4063
    %v5920 = vpack.c.b16 %v4096, %v4064
    %v5921 = vpack.c.b16 %v4097, %v4065
    %v5922 = vpack.c.b16 %v4098, %v4066
    %v5923 = vpack.c.b16 %v4099, %v4067
    %v5924 = vpack.c.b16 %v4100, %v4068
    %v5925 = vpack.c.b16 %v4101, %v4069
    %v5926 = vpack.c.b16 %v4102, %v4070
    %v5927 = vpack.c.b16 %v4103, %v4071
    %v5928 = vpack.c.b16 %v4104, %v4072
    %v5929 = vpack.c.b16 %v4105, %v4073
    %v5930 = vpack.c.b16 %v4106, %v4074
    %v5931 = vpack.c.b16 %v4107, %v4075
    %v5932 = vpack.c.b16 %v4108, %v4076
    %v5933 = vpack.c.b16 %v4109, %v4077
    %v5934 = vpack.c.b16 %v4110, %v4078
    %v5935 = vpack.c.b16 %v4111, %v4079
    %v5936 = vpack.c.b16 %v4112, %v4080
    %v5937 = vpack.c.b16 %v4113, %v4081
    %v5938 = vpack.c.b16 %v4114, %v4082
    %v5939 = vpack.c.b16 %v4115, %v4083
    %v5940 = vpack.c.b16 %v4116, %v4084
    %v5941 = vpack.c.b16 %v4117, %v4085
    %v5942 = vpack.c.b16 %v4118, %v4086
    %v5943 = vpack.c.b16 %v4151, %v4119
    %v5944 = vpack.c.b16 %v4152, %v4120
    %v5945 = vpack.c.b16 %v4153, %v4121
    %v5946 = vpack.c.b16 %v4154, %v4122
    %v5947 = vpack.c.b16 %v4155, %v4123
    %v5948 = vpack.c.b16 %v4156, %v4124
    %v5949 = vpack.c.b16 %v4157, %v4125
    %v5950 = vpack.c.b16 %v4158, %v4126
    %v5951 = vpack.c.b16 %v4159, %v4127
    %v5952 = vpack.c.b16 %v4160, %v4128
    %v5953 = vpack.c.b16 %v4161, %v4129
    %v5954 = vpack.c.b16 %v4162, %v4130
    %v5955 = vpack.c.b16 %v4163, %v4131
    %v5956 = vpack.c.b16 %v4164, %v4132
    %v5957 = vpack.c.b16 %v4165, %v4133
    %v5958 = vpack.c.b16 %v4166, %v4134
    %v5959 = vpack.c.b16 %v4167, %v4135
    %v5960 = vpack.c.b16 %v4168, %v4136
    %v5961 = vpack.c.b16 %v4169, %v4137
    %v5962 = vpack.c.b16 %v4170, %v4138
    %v5963 = vpack.c.b16 %v4171, %v4139
    %v5964 = vpack.c.b16 %v4172, %v4140
    %v5965 = vpack.c.b16 %v4173, %v4141
    %v5966 = vpack.c.b16 %v4174, %v4142
    %v5967 = vpack.c.b16 %v4175, %v4143
    %v5968 = vpack.c.b16 %v4176, %v4144
    %v5969 = vpack.c.b16 %v4177, %v4145
    %v5970 = vpack.c.b16 %v4178, %v4146
    %v5971 = vpack.c.b16 %v4179, %v4147
    %v5972 = vpack.c.b16 %v4180, %v4148
    %v5973 = vpack.c.b16 %v4181, %v4149
    %v5974 = vpack.c.b16 %v4182, %v4150
    %v5975 = vpack.c.b16 %v4215, %v4183
    %v5976 = vpack.c.b16 %v4216, %v4184
    %v5977 = vpack.c.b16 %v4217, %v4185
    %v5978 = vpack.c.b16 %v4218, %v4186
    %v5979 = vpack.c.b16 %v4219, %v4187
    %v5980 = vpack.c.b16 %v4220, %v4188
    %v5981 = vpack.c.b16 %v4221, %v4189
    %v5982 = vpack.c.b16 %v4222, %v4190
    %v5983 = vpack.c.b16 %v4223, %v4191
    %v5984 = vpack.c.b16 %v4224, %v4192
    %v5985 = vpack.c.b16 %v4225, %v4193
    %v5986 = vpack.c.b16 %v4226, %v4194
    %v5987 = vpack.c.b16 %v4227, %v4195
    %v5988 = vpack.c.b16 %v4228, %v4196
    %v5989 = vpack.c.b16 %v4229, %v4197
    %v5990 = vpack.c.b16 %v4230, %v4198
    %v5991 = vpack.c.b16 %v4231, %v4199
    %v5992 = vpack.c.b16 %v4232, %v4200
    %v5993 = vpack.c.b16 %v4233, %v4201
    %v5994 = vpack.c.b16 %v4234, %v4202
    %v5995 = vpack.c.b16 %v4235, %v4203
    %v5996 = vpack.c.b16 %v4236, %v4204
    %v5997 = vpack.c.b16 %v4237, %v4205
    %v5998 = vpack.c.b16 %v4238, %v4206
    %v5999 = vpack.c.b16 %v4239, %v4207
    %v6000 = vpack.c.b16 %v4240, %v4208
    %v6001 = vpack.c.b16 %v4241, %v4209
    %v6002 = vpack.c.b16 %v4242, %v4210
    %v6003 = vpack.c.b16 %v4243, %v4211
    %v6004 = vpack.c.b16 %v4244, %v4212
    %v6005 = vpack.c.b16 %v4245, %v4213
    %v6006 = vpack.c.b16 %v4246, %v4214
    %v6007 = vpack.c.b16 %v4279, %v4247
    %v6008 = vpack.c.b16 %v4280, %v4248
    %v6009 = vpack.c.b16 %v4281, %v4249
    %v6010 = vpack.c.b16 %v4282, %v4250
    %v6011 = vpack.c.b16 %v4283, %v4251
    %v6012 = vpack.c.b16 %v4284, %v4252
    %v6013 = vpack.c.b16 %v4285, %v4253
    %v6014 = vpack.c.b16 %v4286, %v4254
    %v6015 = vpack.c.b16 %v4287, %v4255
    %v6016 = vpack.c.b16 %v4288, %v4256
    %v6017 = vpack.c.b16 %v4289, %v4257
    %v6018 = vpack.c.b16 %v4290, %v4258
    %v6019 = vpack.c.b16 %v4291, %v4259
    %v6020 = vpack.c.b16 %v4292, %v4260
    %v6021 = vpack.c.b16 %v4293, %v4261
    %v6022 = vpack.c.b16 %v4294, %v4262
    %v6023 = vpack.c.b16 %v4295, %v4263
    %v6024 = vpack.c.b16 %v4296, %v4264
    %v6025 = vpack.c.b16 %v4297, %v4265
    %v6026 = vpack.c.b16 %v4298, %v4266
    %v6027 = vpack.c.b16 %v4299, %v4267
    %v6028 = vpack.c.b16 %v4300, %v4268
    %v6029 = vpack.c.b16 %v4301, %v4269
    %v6030 = vpack.c.b16 %v4302, %v4270
    %v6031 = vpack.c.b16 %v4303, %v4271
    %v6032 = vpack.c.b16 %v4304, %v4272
    %v6033 = vpack.c.b16 %v4305, %v4273
    %v6034 = vpack.c.b16 %v4306, %v4274
    %v6035 = vpack.c.b16 %v4307, %v4275
    %v6036 = vpack.c.b16 %v4308, %v4276
    %v6037 = vpack.c.b16 %v4309, %v4277
    %v6038 = vpack.c.b16 %v4310, %v4278
    %v6039 = vpack.c.b16 %v4343, %v4311
    %v6040 = vpack.c.b16 %v4344, %v4312
    %v6041 = vpack.c.b16 %v4345, %v4313
    %v6042 = vpack.c.b16 %v4346, %v4314
    %v6043 = vpack.c.b16 %v4347, %v4315
    %v6044 = vpack.c.b16 %v4348, %v4316
    %v6045 = vpack.c.b16 %v4349, %v4317
    %v6046 = vpack.c.b16 %v4350, %v4318
    %v6047 = vpack.c.b16 %v4351, %v4319
    %v6048 = vpack.c.b16 %v4352, %v4320
    %v6049 = vpack.c.b16 %v4353, %v4321
    %v6050 = vpack.c.b16 %v4354, %v4322
    %v6051 = vpack.c.b16 %v4355, %v4323
    %v6052 = vpack.c.b16 %v4356, %v4324
    %v6053 = vpack.c.b16 %v4357, %v4325
    %v6054 = vpack.c.b16 %v4358, %v4326
    %v6055 = vpack.c.b16 %v4359, %v4327
    %v6056 = vpack.c.b16 %v4360, %v4328
    %v6057 = vpack.c.b16 %v4361, %v4329
    %v6058 = vpack.c.b16 %v4362, %v4330
    %v6059 = vpack.c.b16 %v4363, %v4331
    %v6060 = vpack.c.b16 %v4364, %v4332
    %v6061 = vpack.c.b16 %v4365, %v4333
    %v6062 = vpack.c.b16 %v4366, %v4334
    %v6063 = vpack.c.b16 %v4367, %v4335
    %v6064 = vpack.c.b16 %v4368, %v4336
    %v6065 = vpack.c.b16 %v4369, %v4337
    %v6066 = vpack.c.b16 %v4370, %v4338
    %v6067 = vpack.c.b16 %v4371, %v4339
    %v6068 = vpack.c.b16 %v4372, %v4340
    %v6069 = vpack.c.b16 %v4373, %v4341
    %v6070 = vpack.c.b16 %v4374, %v4342
    %v6071 = vpack.c.b16 %v4407, %v4375
    %v6072 = vpack.c.b16 %v4408, %v4376
    %v6073 = vpack.c.b16 %v4409, %v4377
    %v6074 = vpack.c.b16 %v4410, %v4378
    %v6075 = vpack.c.b16 %v4411, %v4379
    %v6076 = vpack.c.b16 %v4412, %v4380
    %v6077 = vpack.c.b16 %v4413, %v4381
    %v6078 = vpack.c.b16 %v4414, %v4382
    %v6079 = vpack.c.b16 %v4415, %v4383
    %v6080 = vpack.c.b16 %v4416, %v4384
    %v6081 = vpack.c.b16 %v4417, %v4385
    %v6082 = vpack.c.b16 %v4418, %v4386
    %v6083 = vpack.c.b16 %v4419, %v4387
    %v6084 = vpack.c.b16 %v4420, %v4388
    %v6085 = vpack.c.b16 %v4421, %v4389
    %v6086 = vpack.c.b16 %v4422, %v4390
    %v6087 = vpack.c.b16 %v4423, %v4391
    %v6088 = vpack.c.b16 %v4424, %v4392
    %v6089 = vpack.c.b16 %v4425, %v4393
    %v6090 = vpack.c.b16 %v4426, %v4394
    %v6091 = vpack.c.b16 %v4427, %v4395
    %v6092 = vpack.c.b16 %v4428, %v4396
    %v6093 = vpack.c.b16 %v4429, %v4397
    %v6094 = vpack.c.b16 %v4430, %v4398
    %v6095 = vpack.c.b16 %v4431, %v4399
    %v6096 = vpack.c.b16 %v4432, %v4400
    %v6097 = vpack.c.b16 %v4433, %v4401
    %v6098 = vpack.c.b16 %v4434, %v4402
    %v6099 = vpack.c.b16 %v4435, %v4403
    %v6100 = vpack.c.b16 %v4436, %v4404
    %v6101 = vpack.c.b16 %v4437, %v4405
    %v6102 = vpack.c.b16 %v4438, %v4406
    %v6103 = vpack.c.b16 %v4471, %v4439
    %v6104 = vpack.c.b16 %v4472, %v4440
    %v6105 = vpack.c.b16 %v4473, %v4441
    %v6106 = vpack.c.b16 %v4474, %v4442
    %v6107 = vpack.c.b16 %v4475, %v4443
    %v6108 = vpack.c.b16 %v4476, %v4444
    %v6109 = vpack.c.b16 %v4477, %v4445
    %v6110 = vpack.c.b16 %v4478, %v4446
    %v6111 = vpack.c.b16 %v4479, %v4447
    %v6112 = vpack.c.b16 %v4480, %v4448
    %v6113 = vpack.c.b16 %v4481, %v4449
    %v6114 = vpack.c.b16 %v4482, %v4450
    %v6115 = vpack.c.b16 %v4483, %v4451
    %v6116 = vpack.c.b16 %v4484, %v4452
    %v6117 = vpack.c.b16 %v4485, %v4453
    %v6118 = vpack.c.b16 %v4486, %v4454
    %v6119 = vpack.c.b16 %v4487, %v4455
    %v6120 = vpack.c.b16 %v4488, %v4456
    %v6121 = vpack.c.b16 %v4489, %v4457
    %v6122 = vpack.c.b16 %v4490, %v4458
    %v6123 = vpack.c.b16 %v4491, %v4459
    %v6124 = vpack.c.b16 %v4492, %v4460
    %v6125 = vpack.c.b16 %v4493, %v4461
    %v6126 = vpack.c.b16 %v4494, %v4462
    %v6127 = vpack.c.b16 %v4495, %v4463
    %v6128 = vpack.c.b16 %v4496, %v4464
    %v6129 = vpack.c.b16 %v4497, %v4465
    %v6130 = vpack.c.b16 %v4498, %v4466
    %v6131 = vpack.c.b16 %v4499, %v4467
    %v6132 = vpack.c.b16 %v4500, %v4468
    %v6133 = vpack.c.b16 %v4501, %v4469
    %v6134 = vpack.c.b16 %v4502, %v4470
    %v6135 = vpack.c.b16 %v4535, %v4503
    %v6136 = vpack.c.b16 %v4536, %v4504
    %v6137 = vpack.c.b16 %v4537, %v4505
    %v6138 = vpack.c.b16 %v4538, %v4506
    %v6139 = vpack.c.b16 %v4539, %v4507
    %v6140 = vpack.c.b16 %v4540, %v4508
    %v6141 = vpack.c.b16 %v4541, %v4509
    %v6142 = vpack.c.b16 %v4542, %v4510
    %v6143 = vpack.c.b16 %v4543, %v4511
    %v6144 = vpack.c.b16 %v4544, %v4512
    %v6145 = vpack.c.b16 %v4545, %v4513
    %v6146 = vpack.c.b16 %v4546, %v4514
    %v6147 = vpack.c.b16 %v4547, %v4515
    %v6148 = vpack.c.b16 %v4548, %v4516
    %v6149 = vpack.c.b16 %v4549, %v4517
    %v6150 = vpack.c.b16 %v4550, %v4518
    %v6151 = vpack.c.b16 %v4551, %v4519
    %v6152 = vpack.c.b16 %v4552, %v4520
    %v6153 = vpack.c.b16 %v4553, %v4521
    %v6154 = vpack.c.b16 %v4554, %v4522
    %v6155 = vpack.c.b16 %v4555, %v4523
    %v6156 = vpack.c.b16 %v4556, %v4524
    %v6157 = vpack.c.b16 %v4557, %v4525
    %v6158 = vpack.c.b16 %v4558, %v4526
    %v6159 = vpack.c.b16 %v4559, %v4527
    %v6160 = vpack.c.b16 %v4560, %v4528
    %v6161 = vpack.c.b16 %v4561, %v4529
    %v6162 = vpack.c.b16 %v4562, %v4530
    %v6163 = vpack.c.b16 %v4563, %v4531
    %v6164 = vpack.c.b16 %v4564, %v4532
    %v6165 = vpack.c.b16 %v4565, %v4533
    %v6166 = vpack.c.b16 %v4566, %v4534
    %v6167 = vpack.c.b16 %v4599, %v4567
    %v6168 = vpack.c.b16 %v4600, %v4568
    %v6169 = vpack.c.b16 %v4601, %v4569
    %v6170 = vpack.c.b16 %v4602, %v4570
    %v6171 = vpack.c.b16 %v4603, %v4571
    %v6172 = vpack.c.b16 %v4604, %v4572
    %v6173 = vpack.c.b16 %v4605, %v4573
    %v6174 = vpack.c.b16 %v4606, %v4574
    %v6175 = vpack.c.b16 %v4607, %v4575
    %v6176 = vpack.c.b16 %v4608, %v4576
    %v6177 = vpack.c.b16 %v4609, %v4577
    %v6178 = vpack.c.b16 %v4610, %v4578
    %v6179 = vpack.c.b16 %v4611, %v4579
    %v6180 = vpack.c.b16 %v4612, %v4580
    %v6181 = vpack.c.b16 %v4613, %v4581
    %v6182 = vpack.c.b16 %v4614, %v4582
    %v6183 = vpack.c.b16 %v4615, %v4583
    %v6184 = vpack.c.b16 %v4616, %v4584
    %v6185 = vpack.c.b16 %v4617, %v4585
    %v6186 = vpack.c.b16 %v4618, %v4586
    %v6187 = vpack.c.b16 %v4619, %v4587
    %v6188 = vpack.c.b16 %v4620, %v4588
    %v6189 = vpack.c.b16 %v4621, %v4589
    %v6190 = vpack.c.b16 %v4622, %v4590
    %v6191 = vpack.c.b16 %v4623, %v4591
    %v6192 = vpack.c.b16 %v4624, %v4592
    %v6193 = vpack.c.b16 %v4625, %v4593
    %v6194 = vpack.c.b16 %v4626, %v4594
    %v6195 = vpack.c.b16 %v4627, %v4595
    %v6196 = vpack.c.b16 %v4628, %v4596
    %v6197 = vpack.c.b16 %v4629, %v4597
    %v6198 = vpack.c.b16 %v4630, %v4598
    %v6199 = vpack.c.b16 %v4663, %v4631
    %v6200 = vpack.c.b16 %v4664, %v4632
    %v6201 = vpack.c.b16 %v4665, %v4633
    %v6202 = vpack.c.b16 %v4666, %v4634
    %v6203 = vpack.c.b16 %v4667, %v4635
    %v6204 = vpack.c.b16 %v4668, %v4636
    %v6205 = vpack.c.b16 %v4669, %v4637
    %v6206 = vpack.c.b16 %v4670, %v4638
    %v6207 = vpack.c.b16 %v4671, %v4639
    %v6208 = vpack.c.b16 %v4672, %v4640
    %v6209 = vpack.c.b16 %v4673, %v4641
    %v6210 = vpack.c.b16 %v4674, %v4642
    %v6211 = vpack.c.b16 %v4675, %v4643
    %v6212 = vpack.c.b16 %v4676, %v4644
    %v6213 = vpack.c.b16 %v4677, %v4645
    %v6214 = vpack.c.b16 %v4678, %v4646
    %v6215 = vpack.c.b16 %v4679, %v4647
    %v6216 = vpack.c.b16 %v4680, %v4648
    %v6217 = vpack.c.b16 %v4681, %v4649
    %v6218 = vpack.c.b16 %v4682, %v4650
    %v6219 = vpack.c.b16 %v4683, %v4651
    %v6220 = vpack.c.b16 %v4684, %v4652
    %v6221 = vpack.c.b16 %v4685, %v4653
    %v6222 = vpack.c.b16 %v4686, %v4654
    %v6223 = vpack.c.b16 %v4687, %v4655
    %v6224 = vpack.c.b16 %v4688, %v4656
    %v6225 = vpack.c.b16 %v4689, %v4657
    %v6226 = vpack.c.b16 %v4690, %v4658
    %v6227 = vpack.c.b16 %v4691, %v4659
    %v6228 = vpack.c.b16 %v4692, %v4660
    %v6229 = vpack.c.b16 %v4693, %v4661
    %v6230 = vpack.c.b16 %v4694, %v4662
    %v6231 = vpack.c.b16 %v4727, %v4695
    %v6232 = vpack.c.b16 %v4728, %v4696
    %v6233 = vpack.c.b16 %v4729, %v4697
    %v6234 = vpack.c.b16 %v4730, %v4698
    %v6235 = vpack.c.b16 %v4731, %v4699
    %v6236 = vpack.c.b16 %v4732, %v4700
    %v6237 = vpack.c.b16 %v4733, %v4701
    %v6238 = vpack.c.b16 %v4734, %v4702
    %v6239 = vpack.c.b16 %v4735, %v4703
    %v6240 = vpack.c.b16 %v4736, %v4704
    %v6241 = vpack.c.b16 %v4737, %v4705
    %v6242 = vpack.c.b16 %v4738, %v4706
    %v6243 = vpack.c.b16 %v4739, %v4707
    %v6244 = vpack.c.b16 %v4740, %v4708
    %v6245 = vpack.c.b16 %v4741, %v4709
    %v6246 = vpack.c.b16 %v4742, %v4710
    %v6247 = vpack.c.b16 %v4743, %v4711
    %v6248 = vpack.c.b16 %v4744, %v4712
    %v6249 = vpack.c.b16 %v4745, %v4713
    %v6250 = vpack.c.b16 %v4746, %v4714
    %v6251 = vpack.c.b16 %v4747, %v4715
    %v6252 = vpack.c.b16 %v4748, %v4716
    %v6253 = vpack.c.b16 %v4749, %v4717
    %v6254 = vpack.c.b16 %v4750, %v4718
    %v6255 = vpack.c.b16 %v4751, %v4719
    %v6256 = vpack.c.b16 %v4752, %v4720
    %v6257 = vpack.c.b16 %v4753, %v4721
    %v6258 = vpack.c.b16 %v4754, %v4722
    %v6259 = vpack.c.b16 %v4755, %v4723
    %v6260 = vpack.c.b16 %v4756, %v4724
    %v6261 = vpack.c.b16 %v4757, %v4725
    %v6262 = vpack.c.b16 %v4758, %v4726
    %v6263 = vpack.c.b16 %v4791, %v4759
    %v6264 = vpack.c.b16 %v4792, %v4760
    %v6265 = vpack.c.b16 %v4793, %v4761
    %v6266 = vpack.c.b16 %v4794, %v4762
    %v6267 = vpack.c.b16 %v4795, %v4763
    %v6268 = vpack.c.b16 %v4796, %v4764
    %v6269 = vpack.c.b16 %v4797, %v4765
    %v6270 = vpack.c.b16 %v4798, %v4766
    %v6271 = vpack.c.b16 %v4799, %v4767
    %v6272 = vpack.c.b16 %v4800, %v4768
    %v6273 = vpack.c.b16 %v4801, %v4769
    %v6274 = vpack.c.b16 %v4802, %v4770
    %v6275 = vpack.c.b16 %v4803, %v4771
    %v6276 = vpack.c.b16 %v4804, %v4772
    %v6277 = vpack.c.b16 %v4805, %v4773
    %v6278 = vpack.c.b16 %v4806, %v4774
    %v6279 = vpack.c.b16 %v4807, %v4775
    %v6280 = vpack.c.b16 %v4808, %v4776
    %v6281 = vpack.c.b16 %v4809, %v4777
    %v6282 = vpack.c.b16 %v4810, %v4778
    %v6283 = vpack.c.b16 %v4811, %v4779
    %v6284 = vpack.c.b16 %v4812, %v4780
    %v6285 = vpack.c.b16 %v4813, %v4781
    %v6286 = vpack.c.b16 %v4814, %v4782
    %v6287 = vpack.c.b16 %v4815, %v4783
    %v6288 = vpack.c.b16 %v4816, %v4784
    %v6289 = vpack.c.b16 %v4817, %v4785
    %v6290 = vpack.c.b16 %v4818, %v4786
    %v6291 = vpack.c.b16 %v4819, %v4787
    %v6292 = vpack.c.b16 %v4820, %v4788
    %v6293 = vpack.c.b16 %v4821, %v4789
    %v6294 = vpack.c.b16 %v4822, %v4790
    %v6295 = vpack.c.b16 %v4855, %v4823
    %v6296 = vpack.c.b16 %v4856, %v4824
    %v6297 = vpack.c.b16 %v4857, %v4825
    %v6298 = vpack.c.b16 %v4858, %v4826
    %v6299 = vpack.c.b16 %v4859, %v4827
    %v6300 = vpack.c.b16 %v4860, %v4828
    %v6301 = vpack.c.b16 %v4861, %v4829
    %v6302 = vpack.c.b16 %v4862, %v4830
    %v6303 = vpack.c.b16 %v4863, %v4831
    %v6304 = vpack.c.b16 %v4864, %v4832
    %v6305 = vpack.c.b16 %v4865, %v4833
    %v6306 = vpack.c.b16 %v4866, %v4834
    %v6307 = vpack.c.b16 %v4867, %v4835
    %v6308 = vpack.c.b16 %v4868, %v4836
    %v6309 = vpack.c.b16 %v4869, %v4837
    %v6310 = vpack.c.b16 %v4870, %v4838
    %v6311 = vpack.c.b16 %v4871, %v4839
    %v6312 = vpack.c.b16 %v4872, %v4840
    %v6313 = vpack.c.b16 %v4873, %v4841
    %v6314 = vpack.c.b16 %v4874, %v4842
    %v6315 = vpack.c.b16 %v4875, %v4843
    %v6316 = vpack.c.b16 %v4876, %v4844
    %v6317 = vpack.c.b16 %v4877, %v4845
    %v6318 = vpack.c.b16 %v4878, %v4846
    %v6319 = vpack.c.b16 %v4879, %v4847
    %v6320 = vpack.c.b16 %v4880, %v4848
    %v6321 = vpack.c.b16 %v4881, %v4849
    %v6322 = vpack.c.b16 %v4882, %v4850
    %v6323 = vpack.c.b16 %v4883, %v4851
    %v6324 = vpack.c.b16 %v4884, %v4852
    %v6325 = vpack.c.b16 %v4885, %v4853
    %v6326 = vpack.c.b16 %v4886, %v4854
    %v6327 = vpack.c.b16 %v4919, %v4887
    %v6328 = vpack.c.b16 %v4920, %v4888
    %v6329 = vpack.c.b16 %v4921, %v4889
    %v6330 = vpack.c.b16 %v4922, %v4890
    %v6331 = vpack.c.b16 %v4923, %v4891
    %v6332 = vpack.c.b16 %v4924, %v4892
    %v6333 = vpack.c.b16 %v4925, %v4893
    %v6334 = vpack.c.b16 %v4926, %v4894
    %v6335 = vpack.c.b16 %v4927, %v4895
    %v6336 = vpack.c.b16 %v4928, %v4896
    %v6337 = vpack.c.b16 %v4929, %v4897
    %v6338 = vpack.c.b16 %v4930, %v4898
    %v6339 = vpack.c.b16 %v4931, %v4899
    %v6340 = vpack.c.b16 %v4932, %v4900
    %v6341 = vpack.c.b16 %v4933, %v4901
    %v6342 = vpack.c.b16 %v4934, %v4902
    %v6343 = vpack.c.b16 %v4935, %v4903
    %v6344 = vpack.c.b16 %v4936, %v4904
    %v6345 = vpack.c.b16 %v4937, %v4905
    %v6346 = vpack.c.b16 %v4938, %v4906
    %v6347 = vpack.c.b16 %v4939, %v4907
    %v6348 = vpack.c.b16 %v4940, %v4908
    %v6349 = vpack.c.b16 %v4941, %v4909
    %v6350 = vpack.c.b16 %v4942, %v4910
    %v6351 = vpack.c.b16 %v4943, %v4911
    %v6352 = vpack.c.b16 %v4944, %v4912
    %v6353 = vpack.c.b16 %v4945, %v4913
    %v6354 = vpack.c.b16 %v4946, %v4914
    %v6355 = vpack.c.b16 %v4947, %v4915
    %v6356 = vpack.c.b16 %v4948, %v4916
    %v6357 = vpack.c.b16 %v4949, %v4917
    %v6358 = vpack.c.b16 %v4950, %v4918
    %v6359 = vpack.c.b16 %v4983, %v4951
    %v6360 = vpack.c.b16 %v4984, %v4952
    %v6361 = vpack.c.b16 %v4985, %v4953
    %v6362 = vpack.c.b16 %v4986, %v4954
    %v6363 = vpack.c.b16 %v4987, %v4955
    %v6364 = vpack.c.b16 %v4988, %v4956
    %v6365 = vpack.c.b16 %v4989, %v4957
    %v6366 = vpack.c.b16 %v4990, %v4958
    %v6367 = vpack.c.b16 %v4991, %v4959
    %v6368 = vpack.c.b16 %v4992, %v4960
    %v6369 = vpack.c.b16 %v4993, %v4961
    %v6370 = vpack.c.b16 %v4994, %v4962
    %v6371 = vpack.c.b16 %v4995, %v4963
    %v6372 = vpack.c.b16 %v4996, %v4964
    %v6373 = vpack.c.b16 %v4997, %v4965
    %v6374 = vpack.c.b16 %v4998, %v4966
    %v6375 = vpack.c.b16 %v4999, %v4967
    %v6376 = vpack.c.b16 %v5000, %v4968
    %v6377 = vpack.c.b16 %v5001, %v4969
    %v6378 = vpack.c.b16 %v5002, %v4970
    %v6379 = vpack.c.b16 %v5003, %v4971
    %v6380 = vpack.c.b16 %v5004, %v4972
    %v6381 = vpack.c.b16 %v5005, %v4973
    %v6382 = vpack.c.b16 %v5006, %v4974
    %v6383 = vpack.c.b16 %v5007, %v4975
    %v6384 = vpack.c.b16 %v5008, %v4976
    %v6385 = vpack.c.b16 %v5009, %v4977
    %v6386 = vpack.c.b16 %v5010, %v4978
    %v6387 = vpack.c.b16 %v5011, %v4979
    %v6388 = vpack.c.b16 %v5012, %v4980
    %v6389 = vpack.c.b16 %v5013, %v4981
    %v6390 = vpack.c.b16 %v5014, %v4982
    %v6391 = vpack.c.b16 %v5047, %v5015
    %v6392 = vpack.c.b16 %v5048, %v5016
    %v6393 = vpack.c.b16 %v5049, %v5017
    %v6394 = vpack.c.b16 %v5050, %v5018
    %v6395 = vpack.c.b16 %v5051, %v5019
    %v6396 = vpack.c.b16 %v5052, %v5020
    %v6397 = vpack.c.b16 %v5053, %v5021
    %v6398 = vpack.c.b16 %v5054, %v5022
    %v6399 = vpack.c.b16 %v5055, %v5023
    %v6400 = vpack.c.b16 %v5056, %v5024
    %v6401 = vpack.c.b16 %v5057, %v5025
    %v6402 = vpack.c.b16 %v5058, %v5026
    %v6403 = vpack.c.b16 %v5059, %v5027
    %v6404 = vpack.c.b16 %v5060, %v5028
    %v6405 = vpack.c.b16 %v5061, %v5029
    %v6406 = vpack.c.b16 %v5062, %v5030
    %v6407 = vpack.c.b16 %v5063, %v5031
    %v6408 = vpack.c.b16 %v5064, %v5032
    %v6409 = vpack.c.b16 %v5065, %v5033
    %v6410 = vpack.c.b16 %v5066, %v5034
    %v6411 = vpack.c.b16 %v5067, %v5035
    %v6412 = vpack.c.b16 %v5068, %v5036
    %v6413 = vpack.c.b16 %v5069, %v5037
    %v6414 = vpack.c.b16 %v5070, %v5038
    %v6415 = vpack.c.b16 %v5071, %v5039
    %v6416 = vpack.c.b16 %v5072, %v5040
    %v6417 = vpack.c.b16 %v5073, %v5041
    %v6418 = vpack.c.b16 %v5074, %v5042
    %v6419 = vpack.c.b16 %v5075, %v5043
    %v6420 = vpack.c.b16 %v5076, %v5044
    %v6421 = vpack.c.b16 %v5077, %v5045
    %v6422 = vpack.c.b16 %v5078, %v5046
    %v6423 = vpack.c.b16 %v5111, %v5079
    %v6424 = vpack.c.b16 %v5112, %v5080
    %v6425 = vpack.c.b16 %v5113, %v5081
    %v6426 = vpack.c.b16 %v5114, %v5082
    %v6427 = vpack.c.b16 %v5115, %v5083
    %v6428 = vpack.c.b16 %v5116, %v5084
    %v6429 = vpack.c.b16 %v5117, %v5085
    %v6430 = vpack.c.b16 %v5118, %v5086
    %v6431 = vpack.c.b16 %v5119, %v5087
    %v6432 = vpack.c.b16 %v5120, %v5088
    %v6433 = vpack.c.b16 %v5121, %v5089
    %v6434 = vpack.c.b16 %v5122, %v5090
    %v6435 = vpack.c.b16 %v5123, %v5091
    %v6436 = vpack.c.b16 %v5124, %v5092
    %v6437 = vpack.c.b16 %v5125, %v5093
    %v6438 = vpack.c.b16 %v5126, %v5094
    %v6439 = vpack.c.b16 %v5127, %v5095
    %v6440 = vpack.c.b16 %v5128, %v5096
    %v6441 = vpack.c.b16 %v5129, %v5097
    %v6442 = vpack.c.b16 %v5130, %v5098
    %v6443 = vpack.c.b16 %v5131, %v5099
    %v6444 = vpack.c.b16 %v5132, %v5100
    %v6445 = vpack.c.b16 %v5133, %v5101
    %v6446 = vpack.c.b16 %v5134, %v5102
    %v6447 = vpack.c.b16 %v5135, %v5103
    %v6448 = vpack.c.b16 %v5136, %v5104
    %v6449 = vpack.c.b16 %v5137, %v5105
    %v6450 = vpack.c.b16 %v5138, %v5106
    %v6451 = vpack.c.b16 %v5139, %v5107
    %v6452 = vpack.c.b16 %v5140, %v5108
    %v6453 = vpack.c.b16 %v5141, %v5109
    %v6454 = vpack.c.b16 %v5142, %v5110
    %v6455 = vpack.c.b16 %v5175, %v5143
    %v6456 = vpack.c.b16 %v5176, %v5144
    %v6457 = vpack.c.b16 %v5177, %v5145
    %v6458 = vpack.c.b16 %v5178, %v5146
    %v6459 = vpack.c.b16 %v5179, %v5147
    %v6460 = vpack.c.b16 %v5180, %v5148
    %v6461 = vpack.c.b16 %v5181, %v5149
    %v6462 = vpack.c.b16 %v5182, %v5150
    %v6463 = vpack.c.b16 %v5183, %v5151
    %v6464 = vpack.c.b16 %v5184, %v5152
    %v6465 = vpack.c.b16 %v5185, %v5153
    %v6466 = vpack.c.b16 %v5186, %v5154
    %v6467 = vpack.c.b16 %v5187, %v5155
    %v6468 = vpack.c.b16 %v5188, %v5156
    %v6469 = vpack.c.b16 %v5189, %v5157
    %v6470 = vpack.c.b16 %v5190, %v5158
    %v6471 = vpack.c.b16 %v5191, %v5159
    %v6472 = vpack.c.b16 %v5192, %v5160
    %v6473 = vpack.c.b16 %v5193, %v5161
    %v6474 = vpack.c.b16 %v5194, %v5162
    %v6475 = vpack.c.b16 %v5195, %v5163
    %v6476 = vpack.c.b16 %v5196, %v5164
    %v6477 = vpack.c.b16 %v5197, %v5165
    %v6478 = vpack.c.b16 %v5198, %v5166
    %v6479 = vpack.c.b16 %v5199, %v5167
    %v6480 = vpack.c.b16 %v5200, %v5168
    %v6481 = vpack.c.b16 %v5201, %v5169
    %v6482 = vpack.c.b16 %v5202, %v5170
    %v6483 = vpack.c.b16 %v5203, %v5171
    %v6484 = vpack.c.b16 %v5204, %v5172
    %v6485 = vpack.c.b16 %v5205, %v5173
    %v6486 = vpack.c.b16 %v5206, %v5174
    %v6487 = vpack.c.b16 %v5239, %v5207
    %v6488 = vpack.c.b16 %v5240, %v5208
    %v6489 = vpack.c.b16 %v5241, %v5209
    %v6490 = vpack.c.b16 %v5242, %v5210
    %v6491 = vpack.c.b16 %v5243, %v5211
    %v6492 = vpack.c.b16 %v5244, %v5212
    %v6493 = vpack.c.b16 %v5245, %v5213
    %v6494 = vpack.c.b16 %v5246, %v5214
    %v6495 = vpack.c.b16 %v5247, %v5215
    %v6496 = vpack.c.b16 %v5248, %v5216
    %v6497 = vpack.c.b16 %v5249, %v5217
    %v6498 = vpack.c.b16 %v5250, %v5218
    %v6499 = vpack.c.b16 %v5251, %v5219
    %v6500 = vpack.c.b16 %v5252, %v5220
    %v6501 = vpack.c.b16 %v5253, %v5221
    %v6502 = vpack.c.b16 %v5254, %v5222
    %v6503 = vpack.c.b16 %v5255, %v5223
    %v6504 = vpack.c.b16 %v5256, %v5224
    %v6505 = vpack.c.b16 %v5257, %v5225
    %v6506 = vpack.c.b16 %v5258, %v5226
    %v6507 = vpack.c.b16 %v5259, %v5227
    %v6508 = vpack.c.b16 %v5260, %v5228
    %v6509 = vpack.c.b16 %v5261, %v5229
    %v6510 = vpack.c.b16 %v5262, %v5230
    %v6511 = vpack.c.b16 %v5263, %v5231
    %v6512 = vpack.c.b16 %v5264, %v5232
    %v6513 = vpack.c.b16 %v5265, %v5233
    %v6514 = vpack.c.b16 %v5266, %v5234
    %v6515 = vpack.c.b16 %v5267, %v5235
    %v6516 = vpack.c.b16 %v5268, %v5236
    %v6517 = vpack.c.b16 %v5269, %v5237
    %v6518 = vpack.c.b16 %v5270, %v5238
    %v6519 = vpack.c.b16 %v5303, %v5271
    %v6520 = vpack.c.b16 %v5304, %v5272
    %v6521 = vpack.c.b16 %v5305, %v5273
    %v6522 = vpack.c.b16 %v5306, %v5274
    %v6523 = vpack.c.b16 %v5307, %v5275
    %v6524 = vpack.c.b16 %v5308, %v5276
    %v6525 = vpack.c.b16 %v5309, %v5277
    %v6526 = vpack.c.b16 %v5310, %v5278
    %v6527 = vpack.c.b16 %v5311, %v5279
    %v6528 = vpack.c.b16 %v5312, %v5280
    %v6529 = vpack.c.b16 %v5313, %v5281
    %v6530 = vpack.c.b16 %v5314, %v5282
    %v6531 = vpack.c.b16 %v5315, %v5283
    %v6532 = vpack.c.b16 %v5316, %v5284
    %v6533 = vpack.c.b16 %v5317, %v5285
    %v6534 = vpack.c.b16 %v5318, %v5286
    %v6535 = vpack.c.b16 %v5319, %v5287
    %v6536 = vpack.c.b16 %v5320, %v5288
    %v6537 = vpack.c.b16 %v5321, %v5289
    %v6538 = vpack.c.b16 %v5322, %v5290
    %v6539 = vpack.c.b16 %v5323, %v5291
    %v6540 = vpack.c.b16 %v5324, %v5292
    %v6541 = vpack.c.b16 %v5325, %v5293
    %v6542 = vpack.c.b16 %v5326, %v5294
    %v6543 = vpack.c.b16 %v5327, %v5295
    %v6544 = vpack.c.b16 %v5328, %v5296
    %v6545 = vpack.c.b16 %v5329, %v5297
    %v6546 = vpack.c.b16 %v5330, %v5298
    %v6547 = vpack.c.b16 %v5331, %v5299
    %v6548 = vpack.c.b16 %v5332, %v5300
    %v6549 = vpack.c.b16 %v5333, %v5301
    %v6550 = vpack.c.b16 %v5334, %v5302
    %v6551 = vpack.c.b16 %v5367, %v5335
    %v6552 = vpack.c.b16 %v5368, %v5336
    %v6553 = vpack.c.b16 %v5369, %v5337
    %v6554 = vpack.c.b16 %v5370, %v5338
    %v6555 = vpack.c.b16 %v5371, %v5339
    %v6556 = vpack.c.b16 %v5372, %v5340
    %v6557 = vpack.c.b16 %v5373, %v5341
    %v6558 = vpack.c.b16 %v5374, %v5342
    %v6559 = vpack.c.b16 %v5375, %v5343
    %v6560 = vpack.c.b16 %v5376, %v5344
    %v6561 = vpack.c.b16 %v5377, %v5345
    %v6562 = vpack.c.b16 %v5378, %v5346
    %v6563 = vpack.c.b16 %v5379, %v5347
    %v6564 = vpack.c.b16 %v5380, %v5348
    %v6565 = vpack.c.b16 %v5381, %v5349
    %v6566 = vpack.c.b16 %v5382, %v5350
    %v6567 = vpack.c.b16 %v5383, %v5351
    %v6568 = vpack.c.b16 %v5384, %v5352
    %v6569 = vpack.c.b16 %v5385, %v5353
    %v6570 = vpack.c.b16 %v5386, %v5354
    %v6571 = vpack.c.b16 %v5387, %v5355
    %v6572 = vpack.c.b16 %v5388, %v5356
    %v6573 = vpack.c.b16 %v5389, %v5357
    %v6574 = vpack.c.b16 %v5390, %v5358
    %v6575 = vpack.c.b16 %v5391, %v5359
    %v6576 = vpack.c.b16 %v5392, %v5360
    %v6577 = vpack.c.b16 %v5393, %v5361
    %v6578 = vpack.c.b16 %v5394, %v5362
    %v6579 = vpack.c.b16 %v5395, %v5363
    %v6580 = vpack.c.b16 %v5396, %v5364
    %v6581 = vpack.c.b16 %v5397, %v5365
    %v6582 = vpack.c.b16 %v5398, %v5366
    %v6583 = vpack.c.b16 %v5431, %v5399
    %v6584 = vpack.c.b16 %v5432, %v5400
    %v6585 = vpack.c.b16 %v5433, %v5401
    %v6586 = vpack.c.b16 %v5434, %v5402
    %v6587 = vpack.c.b16 %v5435, %v5403
    %v6588 = vpack.c.b16 %v5436, %v5404
    %v6589 = vpack.c.b16 %v5437, %v5405
    %v6590 = vpack.c.b16 %v5438, %v5406
    %v6591 = vpack.c.b16 %v5439, %v5407
    %v6592 = vpack.c.b16 %v5440, %v5408
    %v6593 = vpack.c.b16 %v5441, %v5409
    %v6594 = vpack.c.b16 %v5442, %v5410
    %v6595 = vpack.c.b16 %v5443, %v5411
    %v6596 = vpack.c.b16 %v5444, %v5412
    %v6597 = vpack.c.b16 %v5445, %v5413
    %v6598 = vpack.c.b16 %v5446, %v5414
    %v6599 = vpack.c.b16 %v5447, %v5415
    %v6600 = vpack.c.b16 %v5448, %v5416
    %v6601 = vpack.c.b16 %v5449, %v5417
    %v6602 = vpack.c.b16 %v5450, %v5418
    %v6603 = vpack.c.b16 %v5451, %v5419
    %v6604 = vpack.c.b16 %v5452, %v5420
    %v6605 = vpack.c.b16 %v5453, %v5421
    %v6606 = vpack.c.b16 %v5454, %v5422
    %v6607 = vpack.c.b16 %v5455, %v5423
    %v6608 = vpack.c.b16 %v5456, %v5424
    %v6609 = vpack.c.b16 %v5457, %v5425
    %v6610 = vpack.c.b16 %v5458, %v5426
    %v6611 = vpack.c.b16 %v5459, %v5427
    %v6612 = vpack.c.b16 %v5460, %v5428
    %v6613 = vpack.c.b16 %v5461, %v5429
    %v6614 = vpack.c.b16 %v5462, %v5430
    %v6615 = vpack.c.b16 %v5495, %v5463
    %v6616 = vpack.c.b16 %v5496, %v5464
    %v6617 = vpack.c.b16 %v5497, %v5465
    %v6618 = vpack.c.b16 %v5498, %v5466
    %v6619 = vpack.c.b16 %v5499, %v5467
    %v6620 = vpack.c.b16 %v5500, %v5468
    %v6621 = vpack.c.b16 %v5501, %v5469
    %v6622 = vpack.c.b16 %v5502, %v5470
    %v6623 = vpack.c.b16 %v5503, %v5471
    %v6624 = vpack.c.b16 %v5504, %v5472
    %v6625 = vpack.c.b16 %v5505, %v5473
    %v6626 = vpack.c.b16 %v5506, %v5474
    %v6627 = vpack.c.b16 %v5507, %v5475
    %v6628 = vpack.c.b16 %v5508, %v5476
    %v6629 = vpack.c.b16 %v5509, %v5477
    %v6630 = vpack.c.b16 %v5510, %v5478
    %v6631 = vpack.c.b16 %v5511, %v5479
    %v6632 = vpack.c.b16 %v5512, %v5480
    %v6633 = vpack.c.b16 %v5513, %v5481
    %v6634 = vpack.c.b16 %v5514, %v5482
    %v6635 = vpack.c.b16 %v5515, %v5483
    %v6636 = vpack.c.b16 %v5516, %v5484
    %v6637 = vpack.c.b16 %v5517, %v5485
    %v6638 = vpack.c.b16 %v5518, %v5486
    %v6639 = vpack.c.b16 %v5519, %v5487
    %v6640 = vpack.c.b16 %v5520, %v5488
    %v6641 = vpack.c.b16 %v5521, %v5489
    %v6642 = vpack.c.b16 %v5522, %v5490
    %v6643 = vpack.c.b16 %v5523, %v5491
    %v6644 = vpack.c.b16 %v5524, %v5492
    %v6645 = vpack.c.b16 %v5525, %v5493
    %v6646 = vpack.c.b16 %v5526, %v5494
    %v6647 = vpack.c.b16 %v5559, %v5527
    %v6648 = vpack.c.b16 %v5560, %v5528
    %v6649 = vpack.c.b16 %v5561, %v5529
    %v6650 = vpack.c.b16 %v5562, %v5530
    %v6651 = vpack.c.b16 %v5563, %v5531
    %v6652 = vpack.c.b16 %v5564, %v5532
    %v6653 = vpack.c.b16 %v5565, %v5533
    %v6654 = vpack.c.b16 %v5566, %v5534
    %v6655 = vpack.c.b16 %v5567, %v5535
    %v6656 = vpack.c.b16 %v5568, %v5536
    %v6657 = vpack.c.b16 %v5569, %v5537
    %v6658 = vpack.c.b16 %v5570, %v5538
    %v6659 = vpack.c.b16 %v5571, %v5539
    %v6660 = vpack.c.b16 %v5572, %v5540
    %v6661 = vpack.c.b16 %v5573, %v5541
    %v6662 = vpack.c.b16 %v5574, %v5542
    %v6663 = vpack.c.b16 %v5575, %v5543
    %v6664 = vpack.c.b16 %v5576, %v5544
    %v6665 = vpack.c.b16 %v5577, %v5545
    %v6666 = vpack.c.b16 %v5578, %v5546
    %v6667 = vpack.c.b16 %v5579, %v5547
    %v6668 = vpack.c.b16 %v5580, %v5548
    %v6669 = vpack.c.b16 %v5581, %v5549
    %v6670 = vpack.c.b16 %v5582, %v5550
    %v6671 = vpack.c.b16 %v5583, %v5551
    %v6672 = vpack.c.b16 %v5584, %v5552
    %v6673 = vpack.c.b16 %v5585, %v5553
    %v6674 = vpack.c.b16 %v5586, %v5554
    %v6675 = vpack.c.b16 %v5587, %v5555
    %v6676 = vpack.c.b16 %v5588, %v5556
    %v6677 = vpack.c.b16 %v5589, %v5557
    %v6678 = vpack.c.b16 %v5590, %v5558
    %v6679 = vpack.c.b16 %v5623, %v5591
    %v6680 = vpack.c.b16 %v5624, %v5592
    %v6681 = vpack.c.b16 %v5625, %v5593
    %v6682 = vpack.c.b16 %v5626, %v5594
    %v6683 = vpack.c.b16 %v5627, %v5595
    %v6684 = vpack.c.b16 %v5628, %v5596
    %v6685 = vpack.c.b16 %v5629, %v5597
    %v6686 = vpack.c.b16 %v5630, %v5598
    %v6687 = vpack.c.b16 %v5631, %v5599
    %v6688 = vpack.c.b16 %v5632, %v5600
    %v6689 = vpack.c.b16 %v5633, %v5601
    %v6690 = vpack.c.b16 %v5634, %v5602
    %v6691 = vpack.c.b16 %v5635, %v5603
    %v6692 = vpack.c.b16 %v5636, %v5604
    %v6693 = vpack.c.b16 %v5637, %v5605
    %v6694 = vpack.c.b16 %v5638, %v5606
    %v6695 = vpack.c.b16 %v5639, %v5607
    %v6696 = vpack.c.b16 %v5640, %v5608
    %v6697 = vpack.c.b16 %v5641, %v5609
    %v6698 = vpack.c.b16 %v5642, %v5610
    %v6699 = vpack.c.b16 %v5643, %v5611
    %v6700 = vpack.c.b16 %v5644, %v5612
    %v6701 = vpack.c.b16 %v5645, %v5613
    %v6702 = vpack.c.b16 %v5646, %v5614
    %v6703 = vpack.c.b16 %v5647, %v5615
    %v6704 = vpack.c.b16 %v5648, %v5616
    %v6705 = vpack.c.b16 %v5649, %v5617
    %v6706 = vpack.c.b16 %v5650, %v5618
    %v6707 = vpack.c.b16 %v5651, %v5619
    %v6708 = vpack.c.b16 %v5652, %v5620
    %v6709 = vpack.c.b16 %v5653, %v5621
    %v6710 = vpack.c.b16 %v5654, %v5622
    %v6711 = vpack.c.b16 %v5687, %v5655
    %v6712 = vpack.c.b16 %v5688, %v5656
    %v6713 = vpack.c.b16 %v5689, %v5657
    %v6714 = vpack.c.b16 %v5690, %v5658
    %v6715 = vpack.c.b16 %v5691, %v5659
    %v6716 = vpack.c.b16 %v5692, %v5660
    %v6717 = vpack.c.b16 %v5693, %v5661
    %v6718 = vpack.c.b16 %v5694, %v5662
    %v6719 = vpack.c.b16 %v5695, %v5663
    %v6720 = vpack.c.b16 %v5696, %v5664
    %v6721 = vpack.c.b16 %v5697, %v5665
    %v6722 = vpack.c.b16 %v5698, %v5666
    %v6723 = vpack.c.b16 %v5699, %v5667
    %v6724 = vpack.c.b16 %v5700, %v5668
    %v6725 = vpack.c.b16 %v5701, %v5669
    %v6726 = vpack.c.b16 %v5702, %v5670
    %v6727 = vpack.c.b16 %v5703, %v5671
    %v6728 = vpack.c.b16 %v5704, %v5672
    %v6729 = vpack.c.b16 %v5705, %v5673
    %v6730 = vpack.c.b16 %v5706, %v5674
    %v6731 = vpack.c.b16 %v5707, %v5675
    %v6732 = vpack.c.b16 %v5708, %v5676
    %v6733 = vpack.c.b16 %v5709, %v5677
    %v6734 = vpack.c.b16 %v5710, %v5678
    %v6735 = vpack.c.b16 %v5711, %v5679
    %v6736 = vpack.c.b16 %v5712, %v5680
    %v6737 = vpack.c.b16 %v5713, %v5681
    %v6738 = vpack.c.b16 %v5714, %v5682
    %v6739 = vpack.c.b16 %v5715, %v5683
    %v6740 = vpack.c.b16 %v5716, %v5684
    %v6741 = vpack.c.b16 %v5717, %v5685
    %v6742 = vpack.c.b16 %v5718, %v5686
    %7767 = vmatpush.bf16.msra.mxu0 %v5943
    %7768 = vmatpush.bf16.msra.mxu0 %v5911
    %7769 = vmatpush.bf16.msra.mxu0 %v5879
    %7770 = vmatpush.bf16.msra.mxu0 %v5847
    %7771 = vmatpush.bf16.msra.mxu0 %v5815
    %7772 = vmatpush.bf16.msra.mxu0 %v5783
    %7773 = vmatpush.bf16.msra.mxu0 %v5751
    %7774 = vmatpush.bf16.msra.mxu0 %v5719
    %7775 = vmatmul.bf16.gmra.mxu0 %v1547
    %v7776 = vpop.f32.mrf.mxu0
    %v7777 = vadd.f32 %v2583, %v7776
    %v7778 = vpop.f32.mrf.mxu0
    %7779 = vdwg.mxu0
    %7780 = vmatpush.bf16.msra.mxu0 %v6199
    %7781 = vmatpush.bf16.msra.mxu0 %v6167
    %7782 = vmatpush.bf16.msra.mxu0 %v6135
    %7783 = vmatpush.bf16.msra.mxu0 %v6103
    %7784 = vmatpush.bf16.msra.mxu0 %v6071
    %7785 = vmatpush.bf16.msra.mxu0 %v6039
    %7786 = vmatpush.bf16.msra.mxu0 %v6007
    %7787 = vmatpush.bf16.msra.mxu0 %v5975
    %7788 = vmatmul.bf16.gmra.mxu0 %v1548
    %v7789 = vpop.f32.mrf.mxu0
    %v7790 = vadd.f32 %v7777, %v7789
    %v7791 = vpop.f32.mrf.mxu0
    %7792 = vdwg.mxu0
    %7793 = vmatpush.bf16.msra.mxu0 %v6455
    %7794 = vmatpush.bf16.msra.mxu0 %v6423
    %7795 = vmatpush.bf16.msra.mxu0 %v6391
    %7796 = vmatpush.bf16.msra.mxu0 %v6359
    %7797 = vmatpush.bf16.msra.mxu0 %v6327
    %7798 = vmatpush.bf16.msra.mxu0 %v6295
    %7799 = vmatpush.bf16.msra.mxu0 %v6263
    %7800 = vmatpush.bf16.msra.mxu0 %v6231
    %7801 = vmatmul.bf16.gmra.mxu0 %v1549
    %v7802 = vpop.f32.mrf.mxu0
    %v7803 = vadd.f32 %v7790, %v7802
    %v7804 = vpop.f32.mrf.mxu0
    %7805 = vdwg.mxu0
    %7806 = vmatpush.bf16.msra.mxu0 %v6711
    %7807 = vmatpush.bf16.msra.mxu0 %v6679
    %7808 = vmatpush.bf16.msra.mxu0 %v6647
    %7809 = vmatpush.bf16.msra.mxu0 %v6615
    %7810 = vmatpush.bf16.msra.mxu0 %v6583
    %7811 = vmatpush.bf16.msra.mxu0 %v6551
    %7812 = vmatpush.bf16.msra.mxu0 %v6519
    %7813 = vmatpush.bf16.msra.mxu0 %v6487
    %7814 = vmatmul.bf16.gmra.mxu0 %v1550
    %v7815 = vpop.f32.mrf.mxu0
    %v7816 = vadd.f32 %v7803, %v7815
    %v7817 = vpop.f32.mrf.mxu0
    %7818 = vdwg.mxu0
    %7819 = vmatpush.bf16.msra.mxu0 %v5944
    %7820 = vmatpush.bf16.msra.mxu0 %v5912
    %7821 = vmatpush.bf16.msra.mxu0 %v5880
    %7822 = vmatpush.bf16.msra.mxu0 %v5848
    %7823 = vmatpush.bf16.msra.mxu0 %v5816
    %7824 = vmatpush.bf16.msra.mxu0 %v5784
    %7825 = vmatpush.bf16.msra.mxu0 %v5752
    %7826 = vmatpush.bf16.msra.mxu0 %v5720
    %7827 = vmatmul.bf16.gmra.mxu0 %v1547
    %v7828 = vpop.f32.mrf.mxu0
    %v7829 = vadd.f32 %v2584, %v7828
    %v7830 = vpop.f32.mrf.mxu0
    %7831 = vdwg.mxu0
    %7832 = vmatpush.bf16.msra.mxu0 %v6200
    %7833 = vmatpush.bf16.msra.mxu0 %v6168
    %7834 = vmatpush.bf16.msra.mxu0 %v6136
    %7835 = vmatpush.bf16.msra.mxu0 %v6104
    %7836 = vmatpush.bf16.msra.mxu0 %v6072
    %7837 = vmatpush.bf16.msra.mxu0 %v6040
    %7838 = vmatpush.bf16.msra.mxu0 %v6008
    %7839 = vmatpush.bf16.msra.mxu0 %v5976
    %7840 = vmatmul.bf16.gmra.mxu0 %v1548
    %v7841 = vpop.f32.mrf.mxu0
    %v7842 = vadd.f32 %v7829, %v7841
    %v7843 = vpop.f32.mrf.mxu0
    %7844 = vdwg.mxu0
    %7845 = vmatpush.bf16.msra.mxu0 %v6456
    %7846 = vmatpush.bf16.msra.mxu0 %v6424
    %7847 = vmatpush.bf16.msra.mxu0 %v6392
    %7848 = vmatpush.bf16.msra.mxu0 %v6360
    %7849 = vmatpush.bf16.msra.mxu0 %v6328
    %7850 = vmatpush.bf16.msra.mxu0 %v6296
    %7851 = vmatpush.bf16.msra.mxu0 %v6264
    %7852 = vmatpush.bf16.msra.mxu0 %v6232
    %7853 = vmatmul.bf16.gmra.mxu0 %v1549
    %v7854 = vpop.f32.mrf.mxu0
    %v7855 = vadd.f32 %v7842, %v7854
    %v7856 = vpop.f32.mrf.mxu0
    %7857 = vdwg.mxu0
    %7858 = vmatpush.bf16.msra.mxu0 %v6712
    %7859 = vmatpush.bf16.msra.mxu0 %v6680
    %7860 = vmatpush.bf16.msra.mxu0 %v6648
    %7861 = vmatpush.bf16.msra.mxu0 %v6616
    %7862 = vmatpush.bf16.msra.mxu0 %v6584
    %7863 = vmatpush.bf16.msra.mxu0 %v6552
    %7864 = vmatpush.bf16.msra.mxu0 %v6520
    %7865 = vmatpush.bf16.msra.mxu0 %v6488
    %7866 = vmatmul.bf16.gmra.mxu0 %v1550
    %v7867 = vpop.f32.mrf.mxu0
    %v7868 = vadd.f32 %v7855, %v7867
    %v7869 = vpop.f32.mrf.mxu0
    %7870 = vdwg.mxu0
    %7871 = vmatpush.bf16.msra.mxu0 %v5945
    %7872 = vmatpush.bf16.msra.mxu0 %v5913
    %7873 = vmatpush.bf16.msra.mxu0 %v5881
    %7874 = vmatpush.bf16.msra.mxu0 %v5849
    %7875 = vmatpush.bf16.msra.mxu0 %v5817
    %7876 = vmatpush.bf16.msra.mxu0 %v5785
    %7877 = vmatpush.bf16.msra.mxu0 %v5753
    %7878 = vmatpush.bf16.msra.mxu0 %v5721
    %7879 = vmatmul.bf16.gmra.mxu0 %v1547
    %v7880 = vpop.f32.mrf.mxu0
    %v7881 = vadd.f32 %v2585, %v7880
    %v7882 = vpop.f32.mrf.mxu0
    %7883 = vdwg.mxu0
    %7884 = vmatpush.bf16.msra.mxu0 %v6201
    %7885 = vmatpush.bf16.msra.mxu0 %v6169
    %7886 = vmatpush.bf16.msra.mxu0 %v6137
    %7887 = vmatpush.bf16.msra.mxu0 %v6105
    %7888 = vmatpush.bf16.msra.mxu0 %v6073
    %7889 = vmatpush.bf16.msra.mxu0 %v6041
    %7890 = vmatpush.bf16.msra.mxu0 %v6009
    %7891 = vmatpush.bf16.msra.mxu0 %v5977
    %7892 = vmatmul.bf16.gmra.mxu0 %v1548
    %v7893 = vpop.f32.mrf.mxu0
    %v7894 = vadd.f32 %v7881, %v7893
    %v7895 = vpop.f32.mrf.mxu0
    %7896 = vdwg.mxu0
    %7897 = vmatpush.bf16.msra.mxu0 %v6457
    %7898 = vmatpush.bf16.msra.mxu0 %v6425
    %7899 = vmatpush.bf16.msra.mxu0 %v6393
    %7900 = vmatpush.bf16.msra.mxu0 %v6361
    %7901 = vmatpush.bf16.msra.mxu0 %v6329
    %7902 = vmatpush.bf16.msra.mxu0 %v6297
    %7903 = vmatpush.bf16.msra.mxu0 %v6265
    %7904 = vmatpush.bf16.msra.mxu0 %v6233
    %7905 = vmatmul.bf16.gmra.mxu0 %v1549
    %v7906 = vpop.f32.mrf.mxu0
    %v7907 = vadd.f32 %v7894, %v7906
    %v7908 = vpop.f32.mrf.mxu0
    %7909 = vdwg.mxu0
    %7910 = vmatpush.bf16.msra.mxu0 %v6713
    %7911 = vmatpush.bf16.msra.mxu0 %v6681
    %7912 = vmatpush.bf16.msra.mxu0 %v6649
    %7913 = vmatpush.bf16.msra.mxu0 %v6617
    %7914 = vmatpush.bf16.msra.mxu0 %v6585
    %7915 = vmatpush.bf16.msra.mxu0 %v6553
    %7916 = vmatpush.bf16.msra.mxu0 %v6521
    %7917 = vmatpush.bf16.msra.mxu0 %v6489
    %7918 = vmatmul.bf16.gmra.mxu0 %v1550
    %v7919 = vpop.f32.mrf.mxu0
    %v7920 = vadd.f32 %v7907, %v7919
    %v7921 = vpop.f32.mrf.mxu0
    %7922 = vdwg.mxu0
    %7923 = vmatpush.bf16.msra.mxu0 %v5946
    %7924 = vmatpush.bf16.msra.mxu0 %v5914
    %7925 = vmatpush.bf16.msra.mxu0 %v5882
    %7926 = vmatpush.bf16.msra.mxu0 %v5850
    %7927 = vmatpush.bf16.msra.mxu0 %v5818
    %7928 = vmatpush.bf16.msra.mxu0 %v5786
    %7929 = vmatpush.bf16.msra.mxu0 %v5754
    %7930 = vmatpush.bf16.msra.mxu0 %v5722
    %7931 = vmatmul.bf16.gmra.mxu0 %v1547
    %v7932 = vpop.f32.mrf.mxu0
    %v7933 = vadd.f32 %v2586, %v7932
    %v7934 = vpop.f32.mrf.mxu0
    %7935 = vdwg.mxu0
    %7936 = vmatpush.bf16.msra.mxu0 %v6202
    %7937 = vmatpush.bf16.msra.mxu0 %v6170
    %7938 = vmatpush.bf16.msra.mxu0 %v6138
    %7939 = vmatpush.bf16.msra.mxu0 %v6106
    %7940 = vmatpush.bf16.msra.mxu0 %v6074
    %7941 = vmatpush.bf16.msra.mxu0 %v6042
    %7942 = vmatpush.bf16.msra.mxu0 %v6010
    %7943 = vmatpush.bf16.msra.mxu0 %v5978
    %7944 = vmatmul.bf16.gmra.mxu0 %v1548
    %v7945 = vpop.f32.mrf.mxu0
    %v7946 = vadd.f32 %v7933, %v7945
    %v7947 = vpop.f32.mrf.mxu0
    %7948 = vdwg.mxu0
    %7949 = vmatpush.bf16.msra.mxu0 %v6458
    %7950 = vmatpush.bf16.msra.mxu0 %v6426
    %7951 = vmatpush.bf16.msra.mxu0 %v6394
    %7952 = vmatpush.bf16.msra.mxu0 %v6362
    %7953 = vmatpush.bf16.msra.mxu0 %v6330
    %7954 = vmatpush.bf16.msra.mxu0 %v6298
    %7955 = vmatpush.bf16.msra.mxu0 %v6266
    %7956 = vmatpush.bf16.msra.mxu0 %v6234
    %7957 = vmatmul.bf16.gmra.mxu0 %v1549
    %v7958 = vpop.f32.mrf.mxu0
    %v7959 = vadd.f32 %v7946, %v7958
    %v7960 = vpop.f32.mrf.mxu0
    %7961 = vdwg.mxu0
    %7962 = vmatpush.bf16.msra.mxu0 %v6714
    %7963 = vmatpush.bf16.msra.mxu0 %v6682
    %7964 = vmatpush.bf16.msra.mxu0 %v6650
    %7965 = vmatpush.bf16.msra.mxu0 %v6618
    %7966 = vmatpush.bf16.msra.mxu0 %v6586
    %7967 = vmatpush.bf16.msra.mxu0 %v6554
    %7968 = vmatpush.bf16.msra.mxu0 %v6522
    %7969 = vmatpush.bf16.msra.mxu0 %v6490
    %7970 = vmatmul.bf16.gmra.mxu0 %v1550
    %v7971 = vpop.f32.mrf.mxu0
    %v7972 = vadd.f32 %v7959, %v7971
    %v7973 = vpop.f32.mrf.mxu0
    %7974 = vdwg.mxu0
    %7975 = vmatpush.bf16.msra.mxu0 %v5947
    %7976 = vmatpush.bf16.msra.mxu0 %v5915
    %7977 = vmatpush.bf16.msra.mxu0 %v5883
    %7978 = vmatpush.bf16.msra.mxu0 %v5851
    %7979 = vmatpush.bf16.msra.mxu0 %v5819
    %7980 = vmatpush.bf16.msra.mxu0 %v5787
    %7981 = vmatpush.bf16.msra.mxu0 %v5755
    %7982 = vmatpush.bf16.msra.mxu0 %v5723
    %7983 = vmatmul.bf16.gmra.mxu0 %v1547
    %v7984 = vpop.f32.mrf.mxu0
    %v7985 = vadd.f32 %v2587, %v7984
    %v7986 = vpop.f32.mrf.mxu0
    %7987 = vdwg.mxu0
    %7988 = vmatpush.bf16.msra.mxu0 %v6203
    %7989 = vmatpush.bf16.msra.mxu0 %v6171
    %7990 = vmatpush.bf16.msra.mxu0 %v6139
    %7991 = vmatpush.bf16.msra.mxu0 %v6107
    %7992 = vmatpush.bf16.msra.mxu0 %v6075
    %7993 = vmatpush.bf16.msra.mxu0 %v6043
    %7994 = vmatpush.bf16.msra.mxu0 %v6011
    %7995 = vmatpush.bf16.msra.mxu0 %v5979
    %7996 = vmatmul.bf16.gmra.mxu0 %v1548
    %v7997 = vpop.f32.mrf.mxu0
    %v7998 = vadd.f32 %v7985, %v7997
    %v7999 = vpop.f32.mrf.mxu0
    %8000 = vdwg.mxu0
    %8001 = vmatpush.bf16.msra.mxu0 %v6459
    %8002 = vmatpush.bf16.msra.mxu0 %v6427
    %8003 = vmatpush.bf16.msra.mxu0 %v6395
    %8004 = vmatpush.bf16.msra.mxu0 %v6363
    %8005 = vmatpush.bf16.msra.mxu0 %v6331
    %8006 = vmatpush.bf16.msra.mxu0 %v6299
    %8007 = vmatpush.bf16.msra.mxu0 %v6267
    %8008 = vmatpush.bf16.msra.mxu0 %v6235
    %8009 = vmatmul.bf16.gmra.mxu0 %v1549
    %v8010 = vpop.f32.mrf.mxu0
    %v8011 = vadd.f32 %v7998, %v8010
    %v8012 = vpop.f32.mrf.mxu0
    %8013 = vdwg.mxu0
    %8014 = vmatpush.bf16.msra.mxu0 %v6715
    %8015 = vmatpush.bf16.msra.mxu0 %v6683
    %8016 = vmatpush.bf16.msra.mxu0 %v6651
    %8017 = vmatpush.bf16.msra.mxu0 %v6619
    %8018 = vmatpush.bf16.msra.mxu0 %v6587
    %8019 = vmatpush.bf16.msra.mxu0 %v6555
    %8020 = vmatpush.bf16.msra.mxu0 %v6523
    %8021 = vmatpush.bf16.msra.mxu0 %v6491
    %8022 = vmatmul.bf16.gmra.mxu0 %v1550
    %v8023 = vpop.f32.mrf.mxu0
    %v8024 = vadd.f32 %v8011, %v8023
    %v8025 = vpop.f32.mrf.mxu0
    %8026 = vdwg.mxu0
    %8027 = vmatpush.bf16.msra.mxu0 %v5948
    %8028 = vmatpush.bf16.msra.mxu0 %v5916
    %8029 = vmatpush.bf16.msra.mxu0 %v5884
    %8030 = vmatpush.bf16.msra.mxu0 %v5852
    %8031 = vmatpush.bf16.msra.mxu0 %v5820
    %8032 = vmatpush.bf16.msra.mxu0 %v5788
    %8033 = vmatpush.bf16.msra.mxu0 %v5756
    %8034 = vmatpush.bf16.msra.mxu0 %v5724
    %8035 = vmatmul.bf16.gmra.mxu0 %v1547
    %v8036 = vpop.f32.mrf.mxu0
    %v8037 = vadd.f32 %v2588, %v8036
    %v8038 = vpop.f32.mrf.mxu0
    %8039 = vdwg.mxu0
    %8040 = vmatpush.bf16.msra.mxu0 %v6204
    %8041 = vmatpush.bf16.msra.mxu0 %v6172
    %8042 = vmatpush.bf16.msra.mxu0 %v6140
    %8043 = vmatpush.bf16.msra.mxu0 %v6108
    %8044 = vmatpush.bf16.msra.mxu0 %v6076
    %8045 = vmatpush.bf16.msra.mxu0 %v6044
    %8046 = vmatpush.bf16.msra.mxu0 %v6012
    %8047 = vmatpush.bf16.msra.mxu0 %v5980
    %8048 = vmatmul.bf16.gmra.mxu0 %v1548
    %v8049 = vpop.f32.mrf.mxu0
    %v8050 = vadd.f32 %v8037, %v8049
    %v8051 = vpop.f32.mrf.mxu0
    %8052 = vdwg.mxu0
    %8053 = vmatpush.bf16.msra.mxu0 %v6460
    %8054 = vmatpush.bf16.msra.mxu0 %v6428
    %8055 = vmatpush.bf16.msra.mxu0 %v6396
    %8056 = vmatpush.bf16.msra.mxu0 %v6364
    %8057 = vmatpush.bf16.msra.mxu0 %v6332
    %8058 = vmatpush.bf16.msra.mxu0 %v6300
    %8059 = vmatpush.bf16.msra.mxu0 %v6268
    %8060 = vmatpush.bf16.msra.mxu0 %v6236
    %8061 = vmatmul.bf16.gmra.mxu0 %v1549
    %v8062 = vpop.f32.mrf.mxu0
    %v8063 = vadd.f32 %v8050, %v8062
    %v8064 = vpop.f32.mrf.mxu0
    %8065 = vdwg.mxu0
    %8066 = vmatpush.bf16.msra.mxu0 %v6716
    %8067 = vmatpush.bf16.msra.mxu0 %v6684
    %8068 = vmatpush.bf16.msra.mxu0 %v6652
    %8069 = vmatpush.bf16.msra.mxu0 %v6620
    %8070 = vmatpush.bf16.msra.mxu0 %v6588
    %8071 = vmatpush.bf16.msra.mxu0 %v6556
    %8072 = vmatpush.bf16.msra.mxu0 %v6524
    %8073 = vmatpush.bf16.msra.mxu0 %v6492
    %8074 = vmatmul.bf16.gmra.mxu0 %v1550
    %v8075 = vpop.f32.mrf.mxu0
    %v8076 = vadd.f32 %v8063, %v8075
    %v8077 = vpop.f32.mrf.mxu0
    %8078 = vdwg.mxu0
    %8079 = vmatpush.bf16.msra.mxu0 %v5949
    %8080 = vmatpush.bf16.msra.mxu0 %v5917
    %8081 = vmatpush.bf16.msra.mxu0 %v5885
    %8082 = vmatpush.bf16.msra.mxu0 %v5853
    %8083 = vmatpush.bf16.msra.mxu0 %v5821
    %8084 = vmatpush.bf16.msra.mxu0 %v5789
    %8085 = vmatpush.bf16.msra.mxu0 %v5757
    %8086 = vmatpush.bf16.msra.mxu0 %v5725
    %8087 = vmatmul.bf16.gmra.mxu0 %v1547
    %v8088 = vpop.f32.mrf.mxu0
    %v8089 = vadd.f32 %v2589, %v8088
    %v8090 = vpop.f32.mrf.mxu0
    %8091 = vdwg.mxu0
    %8092 = vmatpush.bf16.msra.mxu0 %v6205
    %8093 = vmatpush.bf16.msra.mxu0 %v6173
    %8094 = vmatpush.bf16.msra.mxu0 %v6141
    %8095 = vmatpush.bf16.msra.mxu0 %v6109
    %8096 = vmatpush.bf16.msra.mxu0 %v6077
    %8097 = vmatpush.bf16.msra.mxu0 %v6045
    %8098 = vmatpush.bf16.msra.mxu0 %v6013
    %8099 = vmatpush.bf16.msra.mxu0 %v5981
    %8100 = vmatmul.bf16.gmra.mxu0 %v1548
    %v8101 = vpop.f32.mrf.mxu0
    %v8102 = vadd.f32 %v8089, %v8101
    %v8103 = vpop.f32.mrf.mxu0
    %8104 = vdwg.mxu0
    %8105 = vmatpush.bf16.msra.mxu0 %v6461
    %8106 = vmatpush.bf16.msra.mxu0 %v6429
    %8107 = vmatpush.bf16.msra.mxu0 %v6397
    %8108 = vmatpush.bf16.msra.mxu0 %v6365
    %8109 = vmatpush.bf16.msra.mxu0 %v6333
    %8110 = vmatpush.bf16.msra.mxu0 %v6301
    %8111 = vmatpush.bf16.msra.mxu0 %v6269
    %8112 = vmatpush.bf16.msra.mxu0 %v6237
    %8113 = vmatmul.bf16.gmra.mxu0 %v1549
    %v8114 = vpop.f32.mrf.mxu0
    %v8115 = vadd.f32 %v8102, %v8114
    %v8116 = vpop.f32.mrf.mxu0
    %8117 = vdwg.mxu0
    %8118 = vmatpush.bf16.msra.mxu0 %v6717
    %8119 = vmatpush.bf16.msra.mxu0 %v6685
    %8120 = vmatpush.bf16.msra.mxu0 %v6653
    %8121 = vmatpush.bf16.msra.mxu0 %v6621
    %8122 = vmatpush.bf16.msra.mxu0 %v6589
    %8123 = vmatpush.bf16.msra.mxu0 %v6557
    %8124 = vmatpush.bf16.msra.mxu0 %v6525
    %8125 = vmatpush.bf16.msra.mxu0 %v6493
    %8126 = vmatmul.bf16.gmra.mxu0 %v1550
    %v8127 = vpop.f32.mrf.mxu0
    %v8128 = vadd.f32 %v8115, %v8127
    %v8129 = vpop.f32.mrf.mxu0
    %8130 = vdwg.mxu0
    %8131 = vmatpush.bf16.msra.mxu0 %v5950
    %8132 = vmatpush.bf16.msra.mxu0 %v5918
    %8133 = vmatpush.bf16.msra.mxu0 %v5886
    %8134 = vmatpush.bf16.msra.mxu0 %v5854
    %8135 = vmatpush.bf16.msra.mxu0 %v5822
    %8136 = vmatpush.bf16.msra.mxu0 %v5790
    %8137 = vmatpush.bf16.msra.mxu0 %v5758
    %8138 = vmatpush.bf16.msra.mxu0 %v5726
    %8139 = vmatmul.bf16.gmra.mxu0 %v1547
    %v8140 = vpop.f32.mrf.mxu0
    %v8141 = vadd.f32 %v2590, %v8140
    %v8142 = vpop.f32.mrf.mxu0
    %8143 = vdwg.mxu0
    %8144 = vmatpush.bf16.msra.mxu0 %v6206
    %8145 = vmatpush.bf16.msra.mxu0 %v6174
    %8146 = vmatpush.bf16.msra.mxu0 %v6142
    %8147 = vmatpush.bf16.msra.mxu0 %v6110
    %8148 = vmatpush.bf16.msra.mxu0 %v6078
    %8149 = vmatpush.bf16.msra.mxu0 %v6046
    %8150 = vmatpush.bf16.msra.mxu0 %v6014
    %8151 = vmatpush.bf16.msra.mxu0 %v5982
    %8152 = vmatmul.bf16.gmra.mxu0 %v1548
    %v8153 = vpop.f32.mrf.mxu0
    %v8154 = vadd.f32 %v8141, %v8153
    %v8155 = vpop.f32.mrf.mxu0
    %8156 = vdwg.mxu0
    %8157 = vmatpush.bf16.msra.mxu0 %v6462
    %8158 = vmatpush.bf16.msra.mxu0 %v6430
    %8159 = vmatpush.bf16.msra.mxu0 %v6398
    %8160 = vmatpush.bf16.msra.mxu0 %v6366
    %8161 = vmatpush.bf16.msra.mxu0 %v6334
    %8162 = vmatpush.bf16.msra.mxu0 %v6302
    %8163 = vmatpush.bf16.msra.mxu0 %v6270
    %8164 = vmatpush.bf16.msra.mxu0 %v6238
    %8165 = vmatmul.bf16.gmra.mxu0 %v1549
    %v8166 = vpop.f32.mrf.mxu0
    %v8167 = vadd.f32 %v8154, %v8166
    %v8168 = vpop.f32.mrf.mxu0
    %8169 = vdwg.mxu0
    %8170 = vmatpush.bf16.msra.mxu0 %v6718
    %8171 = vmatpush.bf16.msra.mxu0 %v6686
    %8172 = vmatpush.bf16.msra.mxu0 %v6654
    %8173 = vmatpush.bf16.msra.mxu0 %v6622
    %8174 = vmatpush.bf16.msra.mxu0 %v6590
    %8175 = vmatpush.bf16.msra.mxu0 %v6558
    %8176 = vmatpush.bf16.msra.mxu0 %v6526
    %8177 = vmatpush.bf16.msra.mxu0 %v6494
    %8178 = vmatmul.bf16.gmra.mxu0 %v1550
    %v8179 = vpop.f32.mrf.mxu0
    %v8180 = vadd.f32 %v8167, %v8179
    %v8181 = vpop.f32.mrf.mxu0
    %8182 = vdwg.mxu0
    %8183 = vmatpush.bf16.msra.mxu0 %v5951
    %8184 = vmatpush.bf16.msra.mxu0 %v5919
    %8185 = vmatpush.bf16.msra.mxu0 %v5887
    %8186 = vmatpush.bf16.msra.mxu0 %v5855
    %8187 = vmatpush.bf16.msra.mxu0 %v5823
    %8188 = vmatpush.bf16.msra.mxu0 %v5791
    %8189 = vmatpush.bf16.msra.mxu0 %v5759
    %8190 = vmatpush.bf16.msra.mxu0 %v5727
    %8191 = vmatmul.bf16.gmra.mxu0 %v1547
    %v8192 = vpop.f32.mrf.mxu0
    %v8193 = vadd.f32 %v2591, %v8192
    %v8194 = vpop.f32.mrf.mxu0
    %8195 = vdwg.mxu0
    %8196 = vmatpush.bf16.msra.mxu0 %v6207
    %8197 = vmatpush.bf16.msra.mxu0 %v6175
    %8198 = vmatpush.bf16.msra.mxu0 %v6143
    %8199 = vmatpush.bf16.msra.mxu0 %v6111
    %8200 = vmatpush.bf16.msra.mxu0 %v6079
    %8201 = vmatpush.bf16.msra.mxu0 %v6047
    %8202 = vmatpush.bf16.msra.mxu0 %v6015
    %8203 = vmatpush.bf16.msra.mxu0 %v5983
    %8204 = vmatmul.bf16.gmra.mxu0 %v1548
    %v8205 = vpop.f32.mrf.mxu0
    %v8206 = vadd.f32 %v8193, %v8205
    %v8207 = vpop.f32.mrf.mxu0
    %8208 = vdwg.mxu0
    %8209 = vmatpush.bf16.msra.mxu0 %v6463
    %8210 = vmatpush.bf16.msra.mxu0 %v6431
    %8211 = vmatpush.bf16.msra.mxu0 %v6399
    %8212 = vmatpush.bf16.msra.mxu0 %v6367
    %8213 = vmatpush.bf16.msra.mxu0 %v6335
    %8214 = vmatpush.bf16.msra.mxu0 %v6303
    %8215 = vmatpush.bf16.msra.mxu0 %v6271
    %8216 = vmatpush.bf16.msra.mxu0 %v6239
    %8217 = vmatmul.bf16.gmra.mxu0 %v1549
    %v8218 = vpop.f32.mrf.mxu0
    %v8219 = vadd.f32 %v8206, %v8218
    %v8220 = vpop.f32.mrf.mxu0
    %8221 = vdwg.mxu0
    %8222 = vmatpush.bf16.msra.mxu0 %v6719
    %8223 = vmatpush.bf16.msra.mxu0 %v6687
    %8224 = vmatpush.bf16.msra.mxu0 %v6655
    %8225 = vmatpush.bf16.msra.mxu0 %v6623
    %8226 = vmatpush.bf16.msra.mxu0 %v6591
    %8227 = vmatpush.bf16.msra.mxu0 %v6559
    %8228 = vmatpush.bf16.msra.mxu0 %v6527
    %8229 = vmatpush.bf16.msra.mxu0 %v6495
    %8230 = vmatmul.bf16.gmra.mxu0 %v1550
    %v8231 = vpop.f32.mrf.mxu0
    %v8232 = vadd.f32 %v8219, %v8231
    %v8233 = vpop.f32.mrf.mxu0
    %8234 = vdwg.mxu0
    %8235 = vmatpush.bf16.msra.mxu0 %v5952
    %8236 = vmatpush.bf16.msra.mxu0 %v5920
    %8237 = vmatpush.bf16.msra.mxu0 %v5888
    %8238 = vmatpush.bf16.msra.mxu0 %v5856
    %8239 = vmatpush.bf16.msra.mxu0 %v5824
    %8240 = vmatpush.bf16.msra.mxu0 %v5792
    %8241 = vmatpush.bf16.msra.mxu0 %v5760
    %8242 = vmatpush.bf16.msra.mxu0 %v5728
    %8243 = vmatmul.bf16.gmra.mxu0 %v1547
    %v8244 = vpop.f32.mrf.mxu0
    %v8245 = vadd.f32 %v2592, %v8244
    %v8246 = vpop.f32.mrf.mxu0
    %8247 = vdwg.mxu0
    %8248 = vmatpush.bf16.msra.mxu0 %v6208
    %8249 = vmatpush.bf16.msra.mxu0 %v6176
    %8250 = vmatpush.bf16.msra.mxu0 %v6144
    %8251 = vmatpush.bf16.msra.mxu0 %v6112
    %8252 = vmatpush.bf16.msra.mxu0 %v6080
    %8253 = vmatpush.bf16.msra.mxu0 %v6048
    %8254 = vmatpush.bf16.msra.mxu0 %v6016
    %8255 = vmatpush.bf16.msra.mxu0 %v5984
    %8256 = vmatmul.bf16.gmra.mxu0 %v1548
    %v8257 = vpop.f32.mrf.mxu0
    %v8258 = vadd.f32 %v8245, %v8257
    %v8259 = vpop.f32.mrf.mxu0
    %8260 = vdwg.mxu0
    %8261 = vmatpush.bf16.msra.mxu0 %v6464
    %8262 = vmatpush.bf16.msra.mxu0 %v6432
    %8263 = vmatpush.bf16.msra.mxu0 %v6400
    %8264 = vmatpush.bf16.msra.mxu0 %v6368
    %8265 = vmatpush.bf16.msra.mxu0 %v6336
    %8266 = vmatpush.bf16.msra.mxu0 %v6304
    %8267 = vmatpush.bf16.msra.mxu0 %v6272
    %8268 = vmatpush.bf16.msra.mxu0 %v6240
    %8269 = vmatmul.bf16.gmra.mxu0 %v1549
    %v8270 = vpop.f32.mrf.mxu0
    %v8271 = vadd.f32 %v8258, %v8270
    %v8272 = vpop.f32.mrf.mxu0
    %8273 = vdwg.mxu0
    %8274 = vmatpush.bf16.msra.mxu0 %v6720
    %8275 = vmatpush.bf16.msra.mxu0 %v6688
    %8276 = vmatpush.bf16.msra.mxu0 %v6656
    %8277 = vmatpush.bf16.msra.mxu0 %v6624
    %8278 = vmatpush.bf16.msra.mxu0 %v6592
    %8279 = vmatpush.bf16.msra.mxu0 %v6560
    %8280 = vmatpush.bf16.msra.mxu0 %v6528
    %8281 = vmatpush.bf16.msra.mxu0 %v6496
    %8282 = vmatmul.bf16.gmra.mxu0 %v1550
    %v8283 = vpop.f32.mrf.mxu0
    %v8284 = vadd.f32 %v8271, %v8283
    %v8285 = vpop.f32.mrf.mxu0
    %8286 = vdwg.mxu0
    %8287 = vmatpush.bf16.msra.mxu0 %v5953
    %8288 = vmatpush.bf16.msra.mxu0 %v5921
    %8289 = vmatpush.bf16.msra.mxu0 %v5889
    %8290 = vmatpush.bf16.msra.mxu0 %v5857
    %8291 = vmatpush.bf16.msra.mxu0 %v5825
    %8292 = vmatpush.bf16.msra.mxu0 %v5793
    %8293 = vmatpush.bf16.msra.mxu0 %v5761
    %8294 = vmatpush.bf16.msra.mxu0 %v5729
    %8295 = vmatmul.bf16.gmra.mxu0 %v1547
    %v8296 = vpop.f32.mrf.mxu0
    %v8297 = vadd.f32 %v2593, %v8296
    %v8298 = vpop.f32.mrf.mxu0
    %8299 = vdwg.mxu0
    %8300 = vmatpush.bf16.msra.mxu0 %v6209
    %8301 = vmatpush.bf16.msra.mxu0 %v6177
    %8302 = vmatpush.bf16.msra.mxu0 %v6145
    %8303 = vmatpush.bf16.msra.mxu0 %v6113
    %8304 = vmatpush.bf16.msra.mxu0 %v6081
    %8305 = vmatpush.bf16.msra.mxu0 %v6049
    %8306 = vmatpush.bf16.msra.mxu0 %v6017
    %8307 = vmatpush.bf16.msra.mxu0 %v5985
    %8308 = vmatmul.bf16.gmra.mxu0 %v1548
    %v8309 = vpop.f32.mrf.mxu0
    %v8310 = vadd.f32 %v8297, %v8309
    %v8311 = vpop.f32.mrf.mxu0
    %8312 = vdwg.mxu0
    %8313 = vmatpush.bf16.msra.mxu0 %v6465
    %8314 = vmatpush.bf16.msra.mxu0 %v6433
    %8315 = vmatpush.bf16.msra.mxu0 %v6401
    %8316 = vmatpush.bf16.msra.mxu0 %v6369
    %8317 = vmatpush.bf16.msra.mxu0 %v6337
    %8318 = vmatpush.bf16.msra.mxu0 %v6305
    %8319 = vmatpush.bf16.msra.mxu0 %v6273
    %8320 = vmatpush.bf16.msra.mxu0 %v6241
    %8321 = vmatmul.bf16.gmra.mxu0 %v1549
    %v8322 = vpop.f32.mrf.mxu0
    %v8323 = vadd.f32 %v8310, %v8322
    %v8324 = vpop.f32.mrf.mxu0
    %8325 = vdwg.mxu0
    %8326 = vmatpush.bf16.msra.mxu0 %v6721
    %8327 = vmatpush.bf16.msra.mxu0 %v6689
    %8328 = vmatpush.bf16.msra.mxu0 %v6657
    %8329 = vmatpush.bf16.msra.mxu0 %v6625
    %8330 = vmatpush.bf16.msra.mxu0 %v6593
    %8331 = vmatpush.bf16.msra.mxu0 %v6561
    %8332 = vmatpush.bf16.msra.mxu0 %v6529
    %8333 = vmatpush.bf16.msra.mxu0 %v6497
    %8334 = vmatmul.bf16.gmra.mxu0 %v1550
    %v8335 = vpop.f32.mrf.mxu0
    %v8336 = vadd.f32 %v8323, %v8335
    %v8337 = vpop.f32.mrf.mxu0
    %8338 = vdwg.mxu0
    %8339 = vmatpush.bf16.msra.mxu0 %v5954
    %8340 = vmatpush.bf16.msra.mxu0 %v5922
    %8341 = vmatpush.bf16.msra.mxu0 %v5890
    %8342 = vmatpush.bf16.msra.mxu0 %v5858
    %8343 = vmatpush.bf16.msra.mxu0 %v5826
    %8344 = vmatpush.bf16.msra.mxu0 %v5794
    %8345 = vmatpush.bf16.msra.mxu0 %v5762
    %8346 = vmatpush.bf16.msra.mxu0 %v5730
    %8347 = vmatmul.bf16.gmra.mxu0 %v1547
    %v8348 = vpop.f32.mrf.mxu0
    %v8349 = vadd.f32 %v2594, %v8348
    %v8350 = vpop.f32.mrf.mxu0
    %8351 = vdwg.mxu0
    %8352 = vmatpush.bf16.msra.mxu0 %v6210
    %8353 = vmatpush.bf16.msra.mxu0 %v6178
    %8354 = vmatpush.bf16.msra.mxu0 %v6146
    %8355 = vmatpush.bf16.msra.mxu0 %v6114
    %8356 = vmatpush.bf16.msra.mxu0 %v6082
    %8357 = vmatpush.bf16.msra.mxu0 %v6050
    %8358 = vmatpush.bf16.msra.mxu0 %v6018
    %8359 = vmatpush.bf16.msra.mxu0 %v5986
    %8360 = vmatmul.bf16.gmra.mxu0 %v1548
    %v8361 = vpop.f32.mrf.mxu0
    %v8362 = vadd.f32 %v8349, %v8361
    %v8363 = vpop.f32.mrf.mxu0
    %8364 = vdwg.mxu0
    %8365 = vmatpush.bf16.msra.mxu0 %v6466
    %8366 = vmatpush.bf16.msra.mxu0 %v6434
    %8367 = vmatpush.bf16.msra.mxu0 %v6402
    %8368 = vmatpush.bf16.msra.mxu0 %v6370
    %8369 = vmatpush.bf16.msra.mxu0 %v6338
    %8370 = vmatpush.bf16.msra.mxu0 %v6306
    %8371 = vmatpush.bf16.msra.mxu0 %v6274
    %8372 = vmatpush.bf16.msra.mxu0 %v6242
    %8373 = vmatmul.bf16.gmra.mxu0 %v1549
    %v8374 = vpop.f32.mrf.mxu0
    %v8375 = vadd.f32 %v8362, %v8374
    %v8376 = vpop.f32.mrf.mxu0
    %8377 = vdwg.mxu0
    %8378 = vmatpush.bf16.msra.mxu0 %v6722
    %8379 = vmatpush.bf16.msra.mxu0 %v6690
    %8380 = vmatpush.bf16.msra.mxu0 %v6658
    %8381 = vmatpush.bf16.msra.mxu0 %v6626
    %8382 = vmatpush.bf16.msra.mxu0 %v6594
    %8383 = vmatpush.bf16.msra.mxu0 %v6562
    %8384 = vmatpush.bf16.msra.mxu0 %v6530
    %8385 = vmatpush.bf16.msra.mxu0 %v6498
    %8386 = vmatmul.bf16.gmra.mxu0 %v1550
    %v8387 = vpop.f32.mrf.mxu0
    %v8388 = vadd.f32 %v8375, %v8387
    %v8389 = vpop.f32.mrf.mxu0
    %8390 = vdwg.mxu0
    %8391 = vmatpush.bf16.msra.mxu0 %v5955
    %8392 = vmatpush.bf16.msra.mxu0 %v5923
    %8393 = vmatpush.bf16.msra.mxu0 %v5891
    %8394 = vmatpush.bf16.msra.mxu0 %v5859
    %8395 = vmatpush.bf16.msra.mxu0 %v5827
    %8396 = vmatpush.bf16.msra.mxu0 %v5795
    %8397 = vmatpush.bf16.msra.mxu0 %v5763
    %8398 = vmatpush.bf16.msra.mxu0 %v5731
    %8399 = vmatmul.bf16.gmra.mxu0 %v1547
    %v8400 = vpop.f32.mrf.mxu0
    %v8401 = vadd.f32 %v2595, %v8400
    %v8402 = vpop.f32.mrf.mxu0
    %8403 = vdwg.mxu0
    %8404 = vmatpush.bf16.msra.mxu0 %v6211
    %8405 = vmatpush.bf16.msra.mxu0 %v6179
    %8406 = vmatpush.bf16.msra.mxu0 %v6147
    %8407 = vmatpush.bf16.msra.mxu0 %v6115
    %8408 = vmatpush.bf16.msra.mxu0 %v6083
    %8409 = vmatpush.bf16.msra.mxu0 %v6051
    %8410 = vmatpush.bf16.msra.mxu0 %v6019
    %8411 = vmatpush.bf16.msra.mxu0 %v5987
    %8412 = vmatmul.bf16.gmra.mxu0 %v1548
    %v8413 = vpop.f32.mrf.mxu0
    %v8414 = vadd.f32 %v8401, %v8413
    %v8415 = vpop.f32.mrf.mxu0
    %8416 = vdwg.mxu0
    %8417 = vmatpush.bf16.msra.mxu0 %v6467
    %8418 = vmatpush.bf16.msra.mxu0 %v6435
    %8419 = vmatpush.bf16.msra.mxu0 %v6403
    %8420 = vmatpush.bf16.msra.mxu0 %v6371
    %8421 = vmatpush.bf16.msra.mxu0 %v6339
    %8422 = vmatpush.bf16.msra.mxu0 %v6307
    %8423 = vmatpush.bf16.msra.mxu0 %v6275
    %8424 = vmatpush.bf16.msra.mxu0 %v6243
    %8425 = vmatmul.bf16.gmra.mxu0 %v1549
    %v8426 = vpop.f32.mrf.mxu0
    %v8427 = vadd.f32 %v8414, %v8426
    %v8428 = vpop.f32.mrf.mxu0
    %8429 = vdwg.mxu0
    %8430 = vmatpush.bf16.msra.mxu0 %v6723
    %8431 = vmatpush.bf16.msra.mxu0 %v6691
    %8432 = vmatpush.bf16.msra.mxu0 %v6659
    %8433 = vmatpush.bf16.msra.mxu0 %v6627
    %8434 = vmatpush.bf16.msra.mxu0 %v6595
    %8435 = vmatpush.bf16.msra.mxu0 %v6563
    %8436 = vmatpush.bf16.msra.mxu0 %v6531
    %8437 = vmatpush.bf16.msra.mxu0 %v6499
    %8438 = vmatmul.bf16.gmra.mxu0 %v1550
    %v8439 = vpop.f32.mrf.mxu0
    %v8440 = vadd.f32 %v8427, %v8439
    %v8441 = vpop.f32.mrf.mxu0
    %8442 = vdwg.mxu0
    %8443 = vmatpush.bf16.msra.mxu0 %v5956
    %8444 = vmatpush.bf16.msra.mxu0 %v5924
    %8445 = vmatpush.bf16.msra.mxu0 %v5892
    %8446 = vmatpush.bf16.msra.mxu0 %v5860
    %8447 = vmatpush.bf16.msra.mxu0 %v5828
    %8448 = vmatpush.bf16.msra.mxu0 %v5796
    %8449 = vmatpush.bf16.msra.mxu0 %v5764
    %8450 = vmatpush.bf16.msra.mxu0 %v5732
    %8451 = vmatmul.bf16.gmra.mxu0 %v1547
    %v8452 = vpop.f32.mrf.mxu0
    %v8453 = vadd.f32 %v2596, %v8452
    %v8454 = vpop.f32.mrf.mxu0
    %8455 = vdwg.mxu0
    %8456 = vmatpush.bf16.msra.mxu0 %v6212
    %8457 = vmatpush.bf16.msra.mxu0 %v6180
    %8458 = vmatpush.bf16.msra.mxu0 %v6148
    %8459 = vmatpush.bf16.msra.mxu0 %v6116
    %8460 = vmatpush.bf16.msra.mxu0 %v6084
    %8461 = vmatpush.bf16.msra.mxu0 %v6052
    %8462 = vmatpush.bf16.msra.mxu0 %v6020
    %8463 = vmatpush.bf16.msra.mxu0 %v5988
    %8464 = vmatmul.bf16.gmra.mxu0 %v1548
    %v8465 = vpop.f32.mrf.mxu0
    %v8466 = vadd.f32 %v8453, %v8465
    %v8467 = vpop.f32.mrf.mxu0
    %8468 = vdwg.mxu0
    %8469 = vmatpush.bf16.msra.mxu0 %v6468
    %8470 = vmatpush.bf16.msra.mxu0 %v6436
    %8471 = vmatpush.bf16.msra.mxu0 %v6404
    %8472 = vmatpush.bf16.msra.mxu0 %v6372
    %8473 = vmatpush.bf16.msra.mxu0 %v6340
    %8474 = vmatpush.bf16.msra.mxu0 %v6308
    %8475 = vmatpush.bf16.msra.mxu0 %v6276
    %8476 = vmatpush.bf16.msra.mxu0 %v6244
    %8477 = vmatmul.bf16.gmra.mxu0 %v1549
    %v8478 = vpop.f32.mrf.mxu0
    %v8479 = vadd.f32 %v8466, %v8478
    %v8480 = vpop.f32.mrf.mxu0
    %8481 = vdwg.mxu0
    %8482 = vmatpush.bf16.msra.mxu0 %v6724
    %8483 = vmatpush.bf16.msra.mxu0 %v6692
    %8484 = vmatpush.bf16.msra.mxu0 %v6660
    %8485 = vmatpush.bf16.msra.mxu0 %v6628
    %8486 = vmatpush.bf16.msra.mxu0 %v6596
    %8487 = vmatpush.bf16.msra.mxu0 %v6564
    %8488 = vmatpush.bf16.msra.mxu0 %v6532
    %8489 = vmatpush.bf16.msra.mxu0 %v6500
    %8490 = vmatmul.bf16.gmra.mxu0 %v1550
    %v8491 = vpop.f32.mrf.mxu0
    %v8492 = vadd.f32 %v8479, %v8491
    %v8493 = vpop.f32.mrf.mxu0
    %8494 = vdwg.mxu0
    %8495 = vmatpush.bf16.msra.mxu0 %v5957
    %8496 = vmatpush.bf16.msra.mxu0 %v5925
    %8497 = vmatpush.bf16.msra.mxu0 %v5893
    %8498 = vmatpush.bf16.msra.mxu0 %v5861
    %8499 = vmatpush.bf16.msra.mxu0 %v5829
    %8500 = vmatpush.bf16.msra.mxu0 %v5797
    %8501 = vmatpush.bf16.msra.mxu0 %v5765
    %8502 = vmatpush.bf16.msra.mxu0 %v5733
    %8503 = vmatmul.bf16.gmra.mxu0 %v1547
    %v8504 = vpop.f32.mrf.mxu0
    %v8505 = vadd.f32 %v2597, %v8504
    %v8506 = vpop.f32.mrf.mxu0
    %8507 = vdwg.mxu0
    %8508 = vmatpush.bf16.msra.mxu0 %v6213
    %8509 = vmatpush.bf16.msra.mxu0 %v6181
    %8510 = vmatpush.bf16.msra.mxu0 %v6149
    %8511 = vmatpush.bf16.msra.mxu0 %v6117
    %8512 = vmatpush.bf16.msra.mxu0 %v6085
    %8513 = vmatpush.bf16.msra.mxu0 %v6053
    %8514 = vmatpush.bf16.msra.mxu0 %v6021
    %8515 = vmatpush.bf16.msra.mxu0 %v5989
    %8516 = vmatmul.bf16.gmra.mxu0 %v1548
    %v8517 = vpop.f32.mrf.mxu0
    %v8518 = vadd.f32 %v8505, %v8517
    %v8519 = vpop.f32.mrf.mxu0
    %8520 = vdwg.mxu0
    %8521 = vmatpush.bf16.msra.mxu0 %v6469
    %8522 = vmatpush.bf16.msra.mxu0 %v6437
    %8523 = vmatpush.bf16.msra.mxu0 %v6405
    %8524 = vmatpush.bf16.msra.mxu0 %v6373
    %8525 = vmatpush.bf16.msra.mxu0 %v6341
    %8526 = vmatpush.bf16.msra.mxu0 %v6309
    %8527 = vmatpush.bf16.msra.mxu0 %v6277
    %8528 = vmatpush.bf16.msra.mxu0 %v6245
    %8529 = vmatmul.bf16.gmra.mxu0 %v1549
    %v8530 = vpop.f32.mrf.mxu0
    %v8531 = vadd.f32 %v8518, %v8530
    %v8532 = vpop.f32.mrf.mxu0
    %8533 = vdwg.mxu0
    %8534 = vmatpush.bf16.msra.mxu0 %v6725
    %8535 = vmatpush.bf16.msra.mxu0 %v6693
    %8536 = vmatpush.bf16.msra.mxu0 %v6661
    %8537 = vmatpush.bf16.msra.mxu0 %v6629
    %8538 = vmatpush.bf16.msra.mxu0 %v6597
    %8539 = vmatpush.bf16.msra.mxu0 %v6565
    %8540 = vmatpush.bf16.msra.mxu0 %v6533
    %8541 = vmatpush.bf16.msra.mxu0 %v6501
    %8542 = vmatmul.bf16.gmra.mxu0 %v1550
    %v8543 = vpop.f32.mrf.mxu0
    %v8544 = vadd.f32 %v8531, %v8543
    %v8545 = vpop.f32.mrf.mxu0
    %8546 = vdwg.mxu0
    %8547 = vmatpush.bf16.msra.mxu0 %v5958
    %8548 = vmatpush.bf16.msra.mxu0 %v5926
    %8549 = vmatpush.bf16.msra.mxu0 %v5894
    %8550 = vmatpush.bf16.msra.mxu0 %v5862
    %8551 = vmatpush.bf16.msra.mxu0 %v5830
    %8552 = vmatpush.bf16.msra.mxu0 %v5798
    %8553 = vmatpush.bf16.msra.mxu0 %v5766
    %8554 = vmatpush.bf16.msra.mxu0 %v5734
    %8555 = vmatmul.bf16.gmra.mxu0 %v1547
    %v8556 = vpop.f32.mrf.mxu0
    %v8557 = vadd.f32 %v2598, %v8556
    %v8558 = vpop.f32.mrf.mxu0
    %8559 = vdwg.mxu0
    %8560 = vmatpush.bf16.msra.mxu0 %v6214
    %8561 = vmatpush.bf16.msra.mxu0 %v6182
    %8562 = vmatpush.bf16.msra.mxu0 %v6150
    %8563 = vmatpush.bf16.msra.mxu0 %v6118
    %8564 = vmatpush.bf16.msra.mxu0 %v6086
    %8565 = vmatpush.bf16.msra.mxu0 %v6054
    %8566 = vmatpush.bf16.msra.mxu0 %v6022
    %8567 = vmatpush.bf16.msra.mxu0 %v5990
    %8568 = vmatmul.bf16.gmra.mxu0 %v1548
    %v8569 = vpop.f32.mrf.mxu0
    %v8570 = vadd.f32 %v8557, %v8569
    %v8571 = vpop.f32.mrf.mxu0
    %8572 = vdwg.mxu0
    %8573 = vmatpush.bf16.msra.mxu0 %v6470
    %8574 = vmatpush.bf16.msra.mxu0 %v6438
    %8575 = vmatpush.bf16.msra.mxu0 %v6406
    %8576 = vmatpush.bf16.msra.mxu0 %v6374
    %8577 = vmatpush.bf16.msra.mxu0 %v6342
    %8578 = vmatpush.bf16.msra.mxu0 %v6310
    %8579 = vmatpush.bf16.msra.mxu0 %v6278
    %8580 = vmatpush.bf16.msra.mxu0 %v6246
    %8581 = vmatmul.bf16.gmra.mxu0 %v1549
    %v8582 = vpop.f32.mrf.mxu0
    %v8583 = vadd.f32 %v8570, %v8582
    %v8584 = vpop.f32.mrf.mxu0
    %8585 = vdwg.mxu0
    %8586 = vmatpush.bf16.msra.mxu0 %v6726
    %8587 = vmatpush.bf16.msra.mxu0 %v6694
    %8588 = vmatpush.bf16.msra.mxu0 %v6662
    %8589 = vmatpush.bf16.msra.mxu0 %v6630
    %8590 = vmatpush.bf16.msra.mxu0 %v6598
    %8591 = vmatpush.bf16.msra.mxu0 %v6566
    %8592 = vmatpush.bf16.msra.mxu0 %v6534
    %8593 = vmatpush.bf16.msra.mxu0 %v6502
    %8594 = vmatmul.bf16.gmra.mxu0 %v1550
    %v8595 = vpop.f32.mrf.mxu0
    %v8596 = vadd.f32 %v8583, %v8595
    %v8597 = vpop.f32.mrf.mxu0
    %8598 = vdwg.mxu0
    %8599 = vmatpush.bf16.msra.mxu0 %v5959
    %8600 = vmatpush.bf16.msra.mxu0 %v5927
    %8601 = vmatpush.bf16.msra.mxu0 %v5895
    %8602 = vmatpush.bf16.msra.mxu0 %v5863
    %8603 = vmatpush.bf16.msra.mxu0 %v5831
    %8604 = vmatpush.bf16.msra.mxu0 %v5799
    %8605 = vmatpush.bf16.msra.mxu0 %v5767
    %8606 = vmatpush.bf16.msra.mxu0 %v5735
    %8607 = vmatmul.bf16.gmra.mxu0 %v1547
    %v8608 = vpop.f32.mrf.mxu0
    %v8609 = vadd.f32 %v2599, %v8608
    %v8610 = vpop.f32.mrf.mxu0
    %8611 = vdwg.mxu0
    %8612 = vmatpush.bf16.msra.mxu0 %v6215
    %8613 = vmatpush.bf16.msra.mxu0 %v6183
    %8614 = vmatpush.bf16.msra.mxu0 %v6151
    %8615 = vmatpush.bf16.msra.mxu0 %v6119
    %8616 = vmatpush.bf16.msra.mxu0 %v6087
    %8617 = vmatpush.bf16.msra.mxu0 %v6055
    %8618 = vmatpush.bf16.msra.mxu0 %v6023
    %8619 = vmatpush.bf16.msra.mxu0 %v5991
    %8620 = vmatmul.bf16.gmra.mxu0 %v1548
    %v8621 = vpop.f32.mrf.mxu0
    %v8622 = vadd.f32 %v8609, %v8621
    %v8623 = vpop.f32.mrf.mxu0
    %8624 = vdwg.mxu0
    %8625 = vmatpush.bf16.msra.mxu0 %v6471
    %8626 = vmatpush.bf16.msra.mxu0 %v6439
    %8627 = vmatpush.bf16.msra.mxu0 %v6407
    %8628 = vmatpush.bf16.msra.mxu0 %v6375
    %8629 = vmatpush.bf16.msra.mxu0 %v6343
    %8630 = vmatpush.bf16.msra.mxu0 %v6311
    %8631 = vmatpush.bf16.msra.mxu0 %v6279
    %8632 = vmatpush.bf16.msra.mxu0 %v6247
    %8633 = vmatmul.bf16.gmra.mxu0 %v1549
    %v8634 = vpop.f32.mrf.mxu0
    %v8635 = vadd.f32 %v8622, %v8634
    %v8636 = vpop.f32.mrf.mxu0
    %8637 = vdwg.mxu0
    %8638 = vmatpush.bf16.msra.mxu0 %v6727
    %8639 = vmatpush.bf16.msra.mxu0 %v6695
    %8640 = vmatpush.bf16.msra.mxu0 %v6663
    %8641 = vmatpush.bf16.msra.mxu0 %v6631
    %8642 = vmatpush.bf16.msra.mxu0 %v6599
    %8643 = vmatpush.bf16.msra.mxu0 %v6567
    %8644 = vmatpush.bf16.msra.mxu0 %v6535
    %8645 = vmatpush.bf16.msra.mxu0 %v6503
    %8646 = vmatmul.bf16.gmra.mxu0 %v1550
    %v8647 = vpop.f32.mrf.mxu0
    %v8648 = vadd.f32 %v8635, %v8647
    %v8649 = vpop.f32.mrf.mxu0
    %8650 = vdwg.mxu0
    %8651 = vmatpush.bf16.msra.mxu0 %v5960
    %8652 = vmatpush.bf16.msra.mxu0 %v5928
    %8653 = vmatpush.bf16.msra.mxu0 %v5896
    %8654 = vmatpush.bf16.msra.mxu0 %v5864
    %8655 = vmatpush.bf16.msra.mxu0 %v5832
    %8656 = vmatpush.bf16.msra.mxu0 %v5800
    %8657 = vmatpush.bf16.msra.mxu0 %v5768
    %8658 = vmatpush.bf16.msra.mxu0 %v5736
    %8659 = vmatmul.bf16.gmra.mxu0 %v1547
    %v8660 = vpop.f32.mrf.mxu0
    %v8661 = vadd.f32 %v2600, %v8660
    %v8662 = vpop.f32.mrf.mxu0
    %8663 = vdwg.mxu0
    %8664 = vmatpush.bf16.msra.mxu0 %v6216
    %8665 = vmatpush.bf16.msra.mxu0 %v6184
    %8666 = vmatpush.bf16.msra.mxu0 %v6152
    %8667 = vmatpush.bf16.msra.mxu0 %v6120
    %8668 = vmatpush.bf16.msra.mxu0 %v6088
    %8669 = vmatpush.bf16.msra.mxu0 %v6056
    %8670 = vmatpush.bf16.msra.mxu0 %v6024
    %8671 = vmatpush.bf16.msra.mxu0 %v5992
    %8672 = vmatmul.bf16.gmra.mxu0 %v1548
    %v8673 = vpop.f32.mrf.mxu0
    %v8674 = vadd.f32 %v8661, %v8673
    %v8675 = vpop.f32.mrf.mxu0
    %8676 = vdwg.mxu0
    %8677 = vmatpush.bf16.msra.mxu0 %v6472
    %8678 = vmatpush.bf16.msra.mxu0 %v6440
    %8679 = vmatpush.bf16.msra.mxu0 %v6408
    %8680 = vmatpush.bf16.msra.mxu0 %v6376
    %8681 = vmatpush.bf16.msra.mxu0 %v6344
    %8682 = vmatpush.bf16.msra.mxu0 %v6312
    %8683 = vmatpush.bf16.msra.mxu0 %v6280
    %8684 = vmatpush.bf16.msra.mxu0 %v6248
    %8685 = vmatmul.bf16.gmra.mxu0 %v1549
    %v8686 = vpop.f32.mrf.mxu0
    %v8687 = vadd.f32 %v8674, %v8686
    %v8688 = vpop.f32.mrf.mxu0
    %8689 = vdwg.mxu0
    %8690 = vmatpush.bf16.msra.mxu0 %v6728
    %8691 = vmatpush.bf16.msra.mxu0 %v6696
    %8692 = vmatpush.bf16.msra.mxu0 %v6664
    %8693 = vmatpush.bf16.msra.mxu0 %v6632
    %8694 = vmatpush.bf16.msra.mxu0 %v6600
    %8695 = vmatpush.bf16.msra.mxu0 %v6568
    %8696 = vmatpush.bf16.msra.mxu0 %v6536
    %8697 = vmatpush.bf16.msra.mxu0 %v6504
    %8698 = vmatmul.bf16.gmra.mxu0 %v1550
    %v8699 = vpop.f32.mrf.mxu0
    %v8700 = vadd.f32 %v8687, %v8699
    %v8701 = vpop.f32.mrf.mxu0
    %8702 = vdwg.mxu0
    %8703 = vmatpush.bf16.msra.mxu0 %v5961
    %8704 = vmatpush.bf16.msra.mxu0 %v5929
    %8705 = vmatpush.bf16.msra.mxu0 %v5897
    %8706 = vmatpush.bf16.msra.mxu0 %v5865
    %8707 = vmatpush.bf16.msra.mxu0 %v5833
    %8708 = vmatpush.bf16.msra.mxu0 %v5801
    %8709 = vmatpush.bf16.msra.mxu0 %v5769
    %8710 = vmatpush.bf16.msra.mxu0 %v5737
    %8711 = vmatmul.bf16.gmra.mxu0 %v1547
    %v8712 = vpop.f32.mrf.mxu0
    %v8713 = vadd.f32 %v2601, %v8712
    %v8714 = vpop.f32.mrf.mxu0
    %8715 = vdwg.mxu0
    %8716 = vmatpush.bf16.msra.mxu0 %v6217
    %8717 = vmatpush.bf16.msra.mxu0 %v6185
    %8718 = vmatpush.bf16.msra.mxu0 %v6153
    %8719 = vmatpush.bf16.msra.mxu0 %v6121
    %8720 = vmatpush.bf16.msra.mxu0 %v6089
    %8721 = vmatpush.bf16.msra.mxu0 %v6057
    %8722 = vmatpush.bf16.msra.mxu0 %v6025
    %8723 = vmatpush.bf16.msra.mxu0 %v5993
    %8724 = vmatmul.bf16.gmra.mxu0 %v1548
    %v8725 = vpop.f32.mrf.mxu0
    %v8726 = vadd.f32 %v8713, %v8725
    %v8727 = vpop.f32.mrf.mxu0
    %8728 = vdwg.mxu0
    %8729 = vmatpush.bf16.msra.mxu0 %v6473
    %8730 = vmatpush.bf16.msra.mxu0 %v6441
    %8731 = vmatpush.bf16.msra.mxu0 %v6409
    %8732 = vmatpush.bf16.msra.mxu0 %v6377
    %8733 = vmatpush.bf16.msra.mxu0 %v6345
    %8734 = vmatpush.bf16.msra.mxu0 %v6313
    %8735 = vmatpush.bf16.msra.mxu0 %v6281
    %8736 = vmatpush.bf16.msra.mxu0 %v6249
    %8737 = vmatmul.bf16.gmra.mxu0 %v1549
    %v8738 = vpop.f32.mrf.mxu0
    %v8739 = vadd.f32 %v8726, %v8738
    %v8740 = vpop.f32.mrf.mxu0
    %8741 = vdwg.mxu0
    %8742 = vmatpush.bf16.msra.mxu0 %v6729
    %8743 = vmatpush.bf16.msra.mxu0 %v6697
    %8744 = vmatpush.bf16.msra.mxu0 %v6665
    %8745 = vmatpush.bf16.msra.mxu0 %v6633
    %8746 = vmatpush.bf16.msra.mxu0 %v6601
    %8747 = vmatpush.bf16.msra.mxu0 %v6569
    %8748 = vmatpush.bf16.msra.mxu0 %v6537
    %8749 = vmatpush.bf16.msra.mxu0 %v6505
    %8750 = vmatmul.bf16.gmra.mxu0 %v1550
    %v8751 = vpop.f32.mrf.mxu0
    %v8752 = vadd.f32 %v8739, %v8751
    %v8753 = vpop.f32.mrf.mxu0
    %8754 = vdwg.mxu0
    %8755 = vmatpush.bf16.msra.mxu0 %v5962
    %8756 = vmatpush.bf16.msra.mxu0 %v5930
    %8757 = vmatpush.bf16.msra.mxu0 %v5898
    %8758 = vmatpush.bf16.msra.mxu0 %v5866
    %8759 = vmatpush.bf16.msra.mxu0 %v5834
    %8760 = vmatpush.bf16.msra.mxu0 %v5802
    %8761 = vmatpush.bf16.msra.mxu0 %v5770
    %8762 = vmatpush.bf16.msra.mxu0 %v5738
    %8763 = vmatmul.bf16.gmra.mxu0 %v1547
    %v8764 = vpop.f32.mrf.mxu0
    %v8765 = vadd.f32 %v2602, %v8764
    %v8766 = vpop.f32.mrf.mxu0
    %8767 = vdwg.mxu0
    %8768 = vmatpush.bf16.msra.mxu0 %v6218
    %8769 = vmatpush.bf16.msra.mxu0 %v6186
    %8770 = vmatpush.bf16.msra.mxu0 %v6154
    %8771 = vmatpush.bf16.msra.mxu0 %v6122
    %8772 = vmatpush.bf16.msra.mxu0 %v6090
    %8773 = vmatpush.bf16.msra.mxu0 %v6058
    %8774 = vmatpush.bf16.msra.mxu0 %v6026
    %8775 = vmatpush.bf16.msra.mxu0 %v5994
    %8776 = vmatmul.bf16.gmra.mxu0 %v1548
    %v8777 = vpop.f32.mrf.mxu0
    %v8778 = vadd.f32 %v8765, %v8777
    %v8779 = vpop.f32.mrf.mxu0
    %8780 = vdwg.mxu0
    %8781 = vmatpush.bf16.msra.mxu0 %v6474
    %8782 = vmatpush.bf16.msra.mxu0 %v6442
    %8783 = vmatpush.bf16.msra.mxu0 %v6410
    %8784 = vmatpush.bf16.msra.mxu0 %v6378
    %8785 = vmatpush.bf16.msra.mxu0 %v6346
    %8786 = vmatpush.bf16.msra.mxu0 %v6314
    %8787 = vmatpush.bf16.msra.mxu0 %v6282
    %8788 = vmatpush.bf16.msra.mxu0 %v6250
    %8789 = vmatmul.bf16.gmra.mxu0 %v1549
    %v8790 = vpop.f32.mrf.mxu0
    %v8791 = vadd.f32 %v8778, %v8790
    %v8792 = vpop.f32.mrf.mxu0
    %8793 = vdwg.mxu0
    %8794 = vmatpush.bf16.msra.mxu0 %v6730
    %8795 = vmatpush.bf16.msra.mxu0 %v6698
    %8796 = vmatpush.bf16.msra.mxu0 %v6666
    %8797 = vmatpush.bf16.msra.mxu0 %v6634
    %8798 = vmatpush.bf16.msra.mxu0 %v6602
    %8799 = vmatpush.bf16.msra.mxu0 %v6570
    %8800 = vmatpush.bf16.msra.mxu0 %v6538
    %8801 = vmatpush.bf16.msra.mxu0 %v6506
    %8802 = vmatmul.bf16.gmra.mxu0 %v1550
    %v8803 = vpop.f32.mrf.mxu0
    %v8804 = vadd.f32 %v8791, %v8803
    %v8805 = vpop.f32.mrf.mxu0
    %8806 = vdwg.mxu0
    %8807 = vmatpush.bf16.msra.mxu0 %v5963
    %8808 = vmatpush.bf16.msra.mxu0 %v5931
    %8809 = vmatpush.bf16.msra.mxu0 %v5899
    %8810 = vmatpush.bf16.msra.mxu0 %v5867
    %8811 = vmatpush.bf16.msra.mxu0 %v5835
    %8812 = vmatpush.bf16.msra.mxu0 %v5803
    %8813 = vmatpush.bf16.msra.mxu0 %v5771
    %8814 = vmatpush.bf16.msra.mxu0 %v5739
    %8815 = vmatmul.bf16.gmra.mxu0 %v1547
    %v8816 = vpop.f32.mrf.mxu0
    %v8817 = vadd.f32 %v2603, %v8816
    %v8818 = vpop.f32.mrf.mxu0
    %8819 = vdwg.mxu0
    %8820 = vmatpush.bf16.msra.mxu0 %v6219
    %8821 = vmatpush.bf16.msra.mxu0 %v6187
    %8822 = vmatpush.bf16.msra.mxu0 %v6155
    %8823 = vmatpush.bf16.msra.mxu0 %v6123
    %8824 = vmatpush.bf16.msra.mxu0 %v6091
    %8825 = vmatpush.bf16.msra.mxu0 %v6059
    %8826 = vmatpush.bf16.msra.mxu0 %v6027
    %8827 = vmatpush.bf16.msra.mxu0 %v5995
    %8828 = vmatmul.bf16.gmra.mxu0 %v1548
    %v8829 = vpop.f32.mrf.mxu0
    %v8830 = vadd.f32 %v8817, %v8829
    %v8831 = vpop.f32.mrf.mxu0
    %8832 = vdwg.mxu0
    %8833 = vmatpush.bf16.msra.mxu0 %v6475
    %8834 = vmatpush.bf16.msra.mxu0 %v6443
    %8835 = vmatpush.bf16.msra.mxu0 %v6411
    %8836 = vmatpush.bf16.msra.mxu0 %v6379
    %8837 = vmatpush.bf16.msra.mxu0 %v6347
    %8838 = vmatpush.bf16.msra.mxu0 %v6315
    %8839 = vmatpush.bf16.msra.mxu0 %v6283
    %8840 = vmatpush.bf16.msra.mxu0 %v6251
    %8841 = vmatmul.bf16.gmra.mxu0 %v1549
    %v8842 = vpop.f32.mrf.mxu0
    %v8843 = vadd.f32 %v8830, %v8842
    %v8844 = vpop.f32.mrf.mxu0
    %8845 = vdwg.mxu0
    %8846 = vmatpush.bf16.msra.mxu0 %v6731
    %8847 = vmatpush.bf16.msra.mxu0 %v6699
    %8848 = vmatpush.bf16.msra.mxu0 %v6667
    %8849 = vmatpush.bf16.msra.mxu0 %v6635
    %8850 = vmatpush.bf16.msra.mxu0 %v6603
    %8851 = vmatpush.bf16.msra.mxu0 %v6571
    %8852 = vmatpush.bf16.msra.mxu0 %v6539
    %8853 = vmatpush.bf16.msra.mxu0 %v6507
    %8854 = vmatmul.bf16.gmra.mxu0 %v1550
    %v8855 = vpop.f32.mrf.mxu0
    %v8856 = vadd.f32 %v8843, %v8855
    %v8857 = vpop.f32.mrf.mxu0
    %8858 = vdwg.mxu0
    %8859 = vmatpush.bf16.msra.mxu0 %v5964
    %8860 = vmatpush.bf16.msra.mxu0 %v5932
    %8861 = vmatpush.bf16.msra.mxu0 %v5900
    %8862 = vmatpush.bf16.msra.mxu0 %v5868
    %8863 = vmatpush.bf16.msra.mxu0 %v5836
    %8864 = vmatpush.bf16.msra.mxu0 %v5804
    %8865 = vmatpush.bf16.msra.mxu0 %v5772
    %8866 = vmatpush.bf16.msra.mxu0 %v5740
    %8867 = vmatmul.bf16.gmra.mxu0 %v1547
    %v8868 = vpop.f32.mrf.mxu0
    %v8869 = vadd.f32 %v2604, %v8868
    %v8870 = vpop.f32.mrf.mxu0
    %8871 = vdwg.mxu0
    %8872 = vmatpush.bf16.msra.mxu0 %v6220
    %8873 = vmatpush.bf16.msra.mxu0 %v6188
    %8874 = vmatpush.bf16.msra.mxu0 %v6156
    %8875 = vmatpush.bf16.msra.mxu0 %v6124
    %8876 = vmatpush.bf16.msra.mxu0 %v6092
    %8877 = vmatpush.bf16.msra.mxu0 %v6060
    %8878 = vmatpush.bf16.msra.mxu0 %v6028
    %8879 = vmatpush.bf16.msra.mxu0 %v5996
    %8880 = vmatmul.bf16.gmra.mxu0 %v1548
    %v8881 = vpop.f32.mrf.mxu0
    %v8882 = vadd.f32 %v8869, %v8881
    %v8883 = vpop.f32.mrf.mxu0
    %8884 = vdwg.mxu0
    %8885 = vmatpush.bf16.msra.mxu0 %v6476
    %8886 = vmatpush.bf16.msra.mxu0 %v6444
    %8887 = vmatpush.bf16.msra.mxu0 %v6412
    %8888 = vmatpush.bf16.msra.mxu0 %v6380
    %8889 = vmatpush.bf16.msra.mxu0 %v6348
    %8890 = vmatpush.bf16.msra.mxu0 %v6316
    %8891 = vmatpush.bf16.msra.mxu0 %v6284
    %8892 = vmatpush.bf16.msra.mxu0 %v6252
    %8893 = vmatmul.bf16.gmra.mxu0 %v1549
    %v8894 = vpop.f32.mrf.mxu0
    %v8895 = vadd.f32 %v8882, %v8894
    %v8896 = vpop.f32.mrf.mxu0
    %8897 = vdwg.mxu0
    %8898 = vmatpush.bf16.msra.mxu0 %v6732
    %8899 = vmatpush.bf16.msra.mxu0 %v6700
    %8900 = vmatpush.bf16.msra.mxu0 %v6668
    %8901 = vmatpush.bf16.msra.mxu0 %v6636
    %8902 = vmatpush.bf16.msra.mxu0 %v6604
    %8903 = vmatpush.bf16.msra.mxu0 %v6572
    %8904 = vmatpush.bf16.msra.mxu0 %v6540
    %8905 = vmatpush.bf16.msra.mxu0 %v6508
    %8906 = vmatmul.bf16.gmra.mxu0 %v1550
    %v8907 = vpop.f32.mrf.mxu0
    %v8908 = vadd.f32 %v8895, %v8907
    %v8909 = vpop.f32.mrf.mxu0
    %8910 = vdwg.mxu0
    %8911 = vmatpush.bf16.msra.mxu0 %v5965
    %8912 = vmatpush.bf16.msra.mxu0 %v5933
    %8913 = vmatpush.bf16.msra.mxu0 %v5901
    %8914 = vmatpush.bf16.msra.mxu0 %v5869
    %8915 = vmatpush.bf16.msra.mxu0 %v5837
    %8916 = vmatpush.bf16.msra.mxu0 %v5805
    %8917 = vmatpush.bf16.msra.mxu0 %v5773
    %8918 = vmatpush.bf16.msra.mxu0 %v5741
    %8919 = vmatmul.bf16.gmra.mxu0 %v1547
    %v8920 = vpop.f32.mrf.mxu0
    %v8921 = vadd.f32 %v2605, %v8920
    %v8922 = vpop.f32.mrf.mxu0
    %8923 = vdwg.mxu0
    %8924 = vmatpush.bf16.msra.mxu0 %v6221
    %8925 = vmatpush.bf16.msra.mxu0 %v6189
    %8926 = vmatpush.bf16.msra.mxu0 %v6157
    %8927 = vmatpush.bf16.msra.mxu0 %v6125
    %8928 = vmatpush.bf16.msra.mxu0 %v6093
    %8929 = vmatpush.bf16.msra.mxu0 %v6061
    %8930 = vmatpush.bf16.msra.mxu0 %v6029
    %8931 = vmatpush.bf16.msra.mxu0 %v5997
    %8932 = vmatmul.bf16.gmra.mxu0 %v1548
    %v8933 = vpop.f32.mrf.mxu0
    %v8934 = vadd.f32 %v8921, %v8933
    %v8935 = vpop.f32.mrf.mxu0
    %8936 = vdwg.mxu0
    %8937 = vmatpush.bf16.msra.mxu0 %v6477
    %8938 = vmatpush.bf16.msra.mxu0 %v6445
    %8939 = vmatpush.bf16.msra.mxu0 %v6413
    %8940 = vmatpush.bf16.msra.mxu0 %v6381
    %8941 = vmatpush.bf16.msra.mxu0 %v6349
    %8942 = vmatpush.bf16.msra.mxu0 %v6317
    %8943 = vmatpush.bf16.msra.mxu0 %v6285
    %8944 = vmatpush.bf16.msra.mxu0 %v6253
    %8945 = vmatmul.bf16.gmra.mxu0 %v1549
    %v8946 = vpop.f32.mrf.mxu0
    %v8947 = vadd.f32 %v8934, %v8946
    %v8948 = vpop.f32.mrf.mxu0
    %8949 = vdwg.mxu0
    %8950 = vmatpush.bf16.msra.mxu0 %v6733
    %8951 = vmatpush.bf16.msra.mxu0 %v6701
    %8952 = vmatpush.bf16.msra.mxu0 %v6669
    %8953 = vmatpush.bf16.msra.mxu0 %v6637
    %8954 = vmatpush.bf16.msra.mxu0 %v6605
    %8955 = vmatpush.bf16.msra.mxu0 %v6573
    %8956 = vmatpush.bf16.msra.mxu0 %v6541
    %8957 = vmatpush.bf16.msra.mxu0 %v6509
    %8958 = vmatmul.bf16.gmra.mxu0 %v1550
    %v8959 = vpop.f32.mrf.mxu0
    %v8960 = vadd.f32 %v8947, %v8959
    %v8961 = vpop.f32.mrf.mxu0
    %8962 = vdwg.mxu0
    %8963 = vmatpush.bf16.msra.mxu0 %v5966
    %8964 = vmatpush.bf16.msra.mxu0 %v5934
    %8965 = vmatpush.bf16.msra.mxu0 %v5902
    %8966 = vmatpush.bf16.msra.mxu0 %v5870
    %8967 = vmatpush.bf16.msra.mxu0 %v5838
    %8968 = vmatpush.bf16.msra.mxu0 %v5806
    %8969 = vmatpush.bf16.msra.mxu0 %v5774
    %8970 = vmatpush.bf16.msra.mxu0 %v5742
    %8971 = vmatmul.bf16.gmra.mxu0 %v1547
    %v8972 = vpop.f32.mrf.mxu0
    %v8973 = vadd.f32 %v2606, %v8972
    %v8974 = vpop.f32.mrf.mxu0
    %8975 = vdwg.mxu0
    %8976 = vmatpush.bf16.msra.mxu0 %v6222
    %8977 = vmatpush.bf16.msra.mxu0 %v6190
    %8978 = vmatpush.bf16.msra.mxu0 %v6158
    %8979 = vmatpush.bf16.msra.mxu0 %v6126
    %8980 = vmatpush.bf16.msra.mxu0 %v6094
    %8981 = vmatpush.bf16.msra.mxu0 %v6062
    %8982 = vmatpush.bf16.msra.mxu0 %v6030
    %8983 = vmatpush.bf16.msra.mxu0 %v5998
    %8984 = vmatmul.bf16.gmra.mxu0 %v1548
    %v8985 = vpop.f32.mrf.mxu0
    %v8986 = vadd.f32 %v8973, %v8985
    %v8987 = vpop.f32.mrf.mxu0
    %8988 = vdwg.mxu0
    %8989 = vmatpush.bf16.msra.mxu0 %v6478
    %8990 = vmatpush.bf16.msra.mxu0 %v6446
    %8991 = vmatpush.bf16.msra.mxu0 %v6414
    %8992 = vmatpush.bf16.msra.mxu0 %v6382
    %8993 = vmatpush.bf16.msra.mxu0 %v6350
    %8994 = vmatpush.bf16.msra.mxu0 %v6318
    %8995 = vmatpush.bf16.msra.mxu0 %v6286
    %8996 = vmatpush.bf16.msra.mxu0 %v6254
    %8997 = vmatmul.bf16.gmra.mxu0 %v1549
    %v8998 = vpop.f32.mrf.mxu0
    %v8999 = vadd.f32 %v8986, %v8998
    %v9000 = vpop.f32.mrf.mxu0
    %9001 = vdwg.mxu0
    %9002 = vmatpush.bf16.msra.mxu0 %v6734
    %9003 = vmatpush.bf16.msra.mxu0 %v6702
    %9004 = vmatpush.bf16.msra.mxu0 %v6670
    %9005 = vmatpush.bf16.msra.mxu0 %v6638
    %9006 = vmatpush.bf16.msra.mxu0 %v6606
    %9007 = vmatpush.bf16.msra.mxu0 %v6574
    %9008 = vmatpush.bf16.msra.mxu0 %v6542
    %9009 = vmatpush.bf16.msra.mxu0 %v6510
    %9010 = vmatmul.bf16.gmra.mxu0 %v1550
    %v9011 = vpop.f32.mrf.mxu0
    %v9012 = vadd.f32 %v8999, %v9011
    %v9013 = vpop.f32.mrf.mxu0
    %9014 = vdwg.mxu0
    %9015 = vmatpush.bf16.msra.mxu0 %v5967
    %9016 = vmatpush.bf16.msra.mxu0 %v5935
    %9017 = vmatpush.bf16.msra.mxu0 %v5903
    %9018 = vmatpush.bf16.msra.mxu0 %v5871
    %9019 = vmatpush.bf16.msra.mxu0 %v5839
    %9020 = vmatpush.bf16.msra.mxu0 %v5807
    %9021 = vmatpush.bf16.msra.mxu0 %v5775
    %9022 = vmatpush.bf16.msra.mxu0 %v5743
    %9023 = vmatmul.bf16.gmra.mxu0 %v1547
    %v9024 = vpop.f32.mrf.mxu0
    %v9025 = vadd.f32 %v2607, %v9024
    %v9026 = vpop.f32.mrf.mxu0
    %9027 = vdwg.mxu0
    %9028 = vmatpush.bf16.msra.mxu0 %v6223
    %9029 = vmatpush.bf16.msra.mxu0 %v6191
    %9030 = vmatpush.bf16.msra.mxu0 %v6159
    %9031 = vmatpush.bf16.msra.mxu0 %v6127
    %9032 = vmatpush.bf16.msra.mxu0 %v6095
    %9033 = vmatpush.bf16.msra.mxu0 %v6063
    %9034 = vmatpush.bf16.msra.mxu0 %v6031
    %9035 = vmatpush.bf16.msra.mxu0 %v5999
    %9036 = vmatmul.bf16.gmra.mxu0 %v1548
    %v9037 = vpop.f32.mrf.mxu0
    %v9038 = vadd.f32 %v9025, %v9037
    %v9039 = vpop.f32.mrf.mxu0
    %9040 = vdwg.mxu0
    %9041 = vmatpush.bf16.msra.mxu0 %v6479
    %9042 = vmatpush.bf16.msra.mxu0 %v6447
    %9043 = vmatpush.bf16.msra.mxu0 %v6415
    %9044 = vmatpush.bf16.msra.mxu0 %v6383
    %9045 = vmatpush.bf16.msra.mxu0 %v6351
    %9046 = vmatpush.bf16.msra.mxu0 %v6319
    %9047 = vmatpush.bf16.msra.mxu0 %v6287
    %9048 = vmatpush.bf16.msra.mxu0 %v6255
    %9049 = vmatmul.bf16.gmra.mxu0 %v1549
    %v9050 = vpop.f32.mrf.mxu0
    %v9051 = vadd.f32 %v9038, %v9050
    %v9052 = vpop.f32.mrf.mxu0
    %9053 = vdwg.mxu0
    %9054 = vmatpush.bf16.msra.mxu0 %v6735
    %9055 = vmatpush.bf16.msra.mxu0 %v6703
    %9056 = vmatpush.bf16.msra.mxu0 %v6671
    %9057 = vmatpush.bf16.msra.mxu0 %v6639
    %9058 = vmatpush.bf16.msra.mxu0 %v6607
    %9059 = vmatpush.bf16.msra.mxu0 %v6575
    %9060 = vmatpush.bf16.msra.mxu0 %v6543
    %9061 = vmatpush.bf16.msra.mxu0 %v6511
    %9062 = vmatmul.bf16.gmra.mxu0 %v1550
    %v9063 = vpop.f32.mrf.mxu0
    %v9064 = vadd.f32 %v9051, %v9063
    %v9065 = vpop.f32.mrf.mxu0
    %9066 = vdwg.mxu0
    %9067 = vmatpush.bf16.msra.mxu0 %v5968
    %9068 = vmatpush.bf16.msra.mxu0 %v5936
    %9069 = vmatpush.bf16.msra.mxu0 %v5904
    %9070 = vmatpush.bf16.msra.mxu0 %v5872
    %9071 = vmatpush.bf16.msra.mxu0 %v5840
    %9072 = vmatpush.bf16.msra.mxu0 %v5808
    %9073 = vmatpush.bf16.msra.mxu0 %v5776
    %9074 = vmatpush.bf16.msra.mxu0 %v5744
    %9075 = vmatmul.bf16.gmra.mxu0 %v1547
    %v9076 = vpop.f32.mrf.mxu0
    %v9077 = vadd.f32 %v2608, %v9076
    %v9078 = vpop.f32.mrf.mxu0
    %9079 = vdwg.mxu0
    %9080 = vmatpush.bf16.msra.mxu0 %v6224
    %9081 = vmatpush.bf16.msra.mxu0 %v6192
    %9082 = vmatpush.bf16.msra.mxu0 %v6160
    %9083 = vmatpush.bf16.msra.mxu0 %v6128
    %9084 = vmatpush.bf16.msra.mxu0 %v6096
    %9085 = vmatpush.bf16.msra.mxu0 %v6064
    %9086 = vmatpush.bf16.msra.mxu0 %v6032
    %9087 = vmatpush.bf16.msra.mxu0 %v6000
    %9088 = vmatmul.bf16.gmra.mxu0 %v1548
    %v9089 = vpop.f32.mrf.mxu0
    %v9090 = vadd.f32 %v9077, %v9089
    %v9091 = vpop.f32.mrf.mxu0
    %9092 = vdwg.mxu0
    %9093 = vmatpush.bf16.msra.mxu0 %v6480
    %9094 = vmatpush.bf16.msra.mxu0 %v6448
    %9095 = vmatpush.bf16.msra.mxu0 %v6416
    %9096 = vmatpush.bf16.msra.mxu0 %v6384
    %9097 = vmatpush.bf16.msra.mxu0 %v6352
    %9098 = vmatpush.bf16.msra.mxu0 %v6320
    %9099 = vmatpush.bf16.msra.mxu0 %v6288
    %9100 = vmatpush.bf16.msra.mxu0 %v6256
    %9101 = vmatmul.bf16.gmra.mxu0 %v1549
    %v9102 = vpop.f32.mrf.mxu0
    %v9103 = vadd.f32 %v9090, %v9102
    %v9104 = vpop.f32.mrf.mxu0
    %9105 = vdwg.mxu0
    %9106 = vmatpush.bf16.msra.mxu0 %v6736
    %9107 = vmatpush.bf16.msra.mxu0 %v6704
    %9108 = vmatpush.bf16.msra.mxu0 %v6672
    %9109 = vmatpush.bf16.msra.mxu0 %v6640
    %9110 = vmatpush.bf16.msra.mxu0 %v6608
    %9111 = vmatpush.bf16.msra.mxu0 %v6576
    %9112 = vmatpush.bf16.msra.mxu0 %v6544
    %9113 = vmatpush.bf16.msra.mxu0 %v6512
    %9114 = vmatmul.bf16.gmra.mxu0 %v1550
    %v9115 = vpop.f32.mrf.mxu0
    %v9116 = vadd.f32 %v9103, %v9115
    %v9117 = vpop.f32.mrf.mxu0
    %9118 = vdwg.mxu0
    %9119 = vmatpush.bf16.msra.mxu0 %v5969
    %9120 = vmatpush.bf16.msra.mxu0 %v5937
    %9121 = vmatpush.bf16.msra.mxu0 %v5905
    %9122 = vmatpush.bf16.msra.mxu0 %v5873
    %9123 = vmatpush.bf16.msra.mxu0 %v5841
    %9124 = vmatpush.bf16.msra.mxu0 %v5809
    %9125 = vmatpush.bf16.msra.mxu0 %v5777
    %9126 = vmatpush.bf16.msra.mxu0 %v5745
    %9127 = vmatmul.bf16.gmra.mxu0 %v1547
    %v9128 = vpop.f32.mrf.mxu0
    %v9129 = vadd.f32 %v2609, %v9128
    %v9130 = vpop.f32.mrf.mxu0
    %9131 = vdwg.mxu0
    %9132 = vmatpush.bf16.msra.mxu0 %v6225
    %9133 = vmatpush.bf16.msra.mxu0 %v6193
    %9134 = vmatpush.bf16.msra.mxu0 %v6161
    %9135 = vmatpush.bf16.msra.mxu0 %v6129
    %9136 = vmatpush.bf16.msra.mxu0 %v6097
    %9137 = vmatpush.bf16.msra.mxu0 %v6065
    %9138 = vmatpush.bf16.msra.mxu0 %v6033
    %9139 = vmatpush.bf16.msra.mxu0 %v6001
    %9140 = vmatmul.bf16.gmra.mxu0 %v1548
    %v9141 = vpop.f32.mrf.mxu0
    %v9142 = vadd.f32 %v9129, %v9141
    %v9143 = vpop.f32.mrf.mxu0
    %9144 = vdwg.mxu0
    %9145 = vmatpush.bf16.msra.mxu0 %v6481
    %9146 = vmatpush.bf16.msra.mxu0 %v6449
    %9147 = vmatpush.bf16.msra.mxu0 %v6417
    %9148 = vmatpush.bf16.msra.mxu0 %v6385
    %9149 = vmatpush.bf16.msra.mxu0 %v6353
    %9150 = vmatpush.bf16.msra.mxu0 %v6321
    %9151 = vmatpush.bf16.msra.mxu0 %v6289
    %9152 = vmatpush.bf16.msra.mxu0 %v6257
    %9153 = vmatmul.bf16.gmra.mxu0 %v1549
    %v9154 = vpop.f32.mrf.mxu0
    %v9155 = vadd.f32 %v9142, %v9154
    %v9156 = vpop.f32.mrf.mxu0
    %9157 = vdwg.mxu0
    %9158 = vmatpush.bf16.msra.mxu0 %v6737
    %9159 = vmatpush.bf16.msra.mxu0 %v6705
    %9160 = vmatpush.bf16.msra.mxu0 %v6673
    %9161 = vmatpush.bf16.msra.mxu0 %v6641
    %9162 = vmatpush.bf16.msra.mxu0 %v6609
    %9163 = vmatpush.bf16.msra.mxu0 %v6577
    %9164 = vmatpush.bf16.msra.mxu0 %v6545
    %9165 = vmatpush.bf16.msra.mxu0 %v6513
    %9166 = vmatmul.bf16.gmra.mxu0 %v1550
    %v9167 = vpop.f32.mrf.mxu0
    %v9168 = vadd.f32 %v9155, %v9167
    %v9169 = vpop.f32.mrf.mxu0
    %9170 = vdwg.mxu0
    %9171 = vmatpush.bf16.msra.mxu0 %v5970
    %9172 = vmatpush.bf16.msra.mxu0 %v5938
    %9173 = vmatpush.bf16.msra.mxu0 %v5906
    %9174 = vmatpush.bf16.msra.mxu0 %v5874
    %9175 = vmatpush.bf16.msra.mxu0 %v5842
    %9176 = vmatpush.bf16.msra.mxu0 %v5810
    %9177 = vmatpush.bf16.msra.mxu0 %v5778
    %9178 = vmatpush.bf16.msra.mxu0 %v5746
    %9179 = vmatmul.bf16.gmra.mxu0 %v1547
    %v9180 = vpop.f32.mrf.mxu0
    %v9181 = vadd.f32 %v2610, %v9180
    %v9182 = vpop.f32.mrf.mxu0
    %9183 = vdwg.mxu0
    %9184 = vmatpush.bf16.msra.mxu0 %v6226
    %9185 = vmatpush.bf16.msra.mxu0 %v6194
    %9186 = vmatpush.bf16.msra.mxu0 %v6162
    %9187 = vmatpush.bf16.msra.mxu0 %v6130
    %9188 = vmatpush.bf16.msra.mxu0 %v6098
    %9189 = vmatpush.bf16.msra.mxu0 %v6066
    %9190 = vmatpush.bf16.msra.mxu0 %v6034
    %9191 = vmatpush.bf16.msra.mxu0 %v6002
    %9192 = vmatmul.bf16.gmra.mxu0 %v1548
    %v9193 = vpop.f32.mrf.mxu0
    %v9194 = vadd.f32 %v9181, %v9193
    %v9195 = vpop.f32.mrf.mxu0
    %9196 = vdwg.mxu0
    %9197 = vmatpush.bf16.msra.mxu0 %v6482
    %9198 = vmatpush.bf16.msra.mxu0 %v6450
    %9199 = vmatpush.bf16.msra.mxu0 %v6418
    %9200 = vmatpush.bf16.msra.mxu0 %v6386
    %9201 = vmatpush.bf16.msra.mxu0 %v6354
    %9202 = vmatpush.bf16.msra.mxu0 %v6322
    %9203 = vmatpush.bf16.msra.mxu0 %v6290
    %9204 = vmatpush.bf16.msra.mxu0 %v6258
    %9205 = vmatmul.bf16.gmra.mxu0 %v1549
    %v9206 = vpop.f32.mrf.mxu0
    %v9207 = vadd.f32 %v9194, %v9206
    %v9208 = vpop.f32.mrf.mxu0
    %9209 = vdwg.mxu0
    %9210 = vmatpush.bf16.msra.mxu0 %v6738
    %9211 = vmatpush.bf16.msra.mxu0 %v6706
    %9212 = vmatpush.bf16.msra.mxu0 %v6674
    %9213 = vmatpush.bf16.msra.mxu0 %v6642
    %9214 = vmatpush.bf16.msra.mxu0 %v6610
    %9215 = vmatpush.bf16.msra.mxu0 %v6578
    %9216 = vmatpush.bf16.msra.mxu0 %v6546
    %9217 = vmatpush.bf16.msra.mxu0 %v6514
    %9218 = vmatmul.bf16.gmra.mxu0 %v1550
    %v9219 = vpop.f32.mrf.mxu0
    %v9220 = vadd.f32 %v9207, %v9219
    %v9221 = vpop.f32.mrf.mxu0
    %9222 = vdwg.mxu0
    %9223 = vmatpush.bf16.msra.mxu0 %v5971
    %9224 = vmatpush.bf16.msra.mxu0 %v5939
    %9225 = vmatpush.bf16.msra.mxu0 %v5907
    %9226 = vmatpush.bf16.msra.mxu0 %v5875
    %9227 = vmatpush.bf16.msra.mxu0 %v5843
    %9228 = vmatpush.bf16.msra.mxu0 %v5811
    %9229 = vmatpush.bf16.msra.mxu0 %v5779
    %9230 = vmatpush.bf16.msra.mxu0 %v5747
    %9231 = vmatmul.bf16.gmra.mxu0 %v1547
    %v9232 = vpop.f32.mrf.mxu0
    %v9233 = vadd.f32 %v2611, %v9232
    %v9234 = vpop.f32.mrf.mxu0
    %9235 = vdwg.mxu0
    %9236 = vmatpush.bf16.msra.mxu0 %v6227
    %9237 = vmatpush.bf16.msra.mxu0 %v6195
    %9238 = vmatpush.bf16.msra.mxu0 %v6163
    %9239 = vmatpush.bf16.msra.mxu0 %v6131
    %9240 = vmatpush.bf16.msra.mxu0 %v6099
    %9241 = vmatpush.bf16.msra.mxu0 %v6067
    %9242 = vmatpush.bf16.msra.mxu0 %v6035
    %9243 = vmatpush.bf16.msra.mxu0 %v6003
    %9244 = vmatmul.bf16.gmra.mxu0 %v1548
    %v9245 = vpop.f32.mrf.mxu0
    %v9246 = vadd.f32 %v9233, %v9245
    %v9247 = vpop.f32.mrf.mxu0
    %9248 = vdwg.mxu0
    %9249 = vmatpush.bf16.msra.mxu0 %v6483
    %9250 = vmatpush.bf16.msra.mxu0 %v6451
    %9251 = vmatpush.bf16.msra.mxu0 %v6419
    %9252 = vmatpush.bf16.msra.mxu0 %v6387
    %9253 = vmatpush.bf16.msra.mxu0 %v6355
    %9254 = vmatpush.bf16.msra.mxu0 %v6323
    %9255 = vmatpush.bf16.msra.mxu0 %v6291
    %9256 = vmatpush.bf16.msra.mxu0 %v6259
    %9257 = vmatmul.bf16.gmra.mxu0 %v1549
    %v9258 = vpop.f32.mrf.mxu0
    %v9259 = vadd.f32 %v9246, %v9258
    %v9260 = vpop.f32.mrf.mxu0
    %9261 = vdwg.mxu0
    %9262 = vmatpush.bf16.msra.mxu0 %v6739
    %9263 = vmatpush.bf16.msra.mxu0 %v6707
    %9264 = vmatpush.bf16.msra.mxu0 %v6675
    %9265 = vmatpush.bf16.msra.mxu0 %v6643
    %9266 = vmatpush.bf16.msra.mxu0 %v6611
    %9267 = vmatpush.bf16.msra.mxu0 %v6579
    %9268 = vmatpush.bf16.msra.mxu0 %v6547
    %9269 = vmatpush.bf16.msra.mxu0 %v6515
    %9270 = vmatmul.bf16.gmra.mxu0 %v1550
    %v9271 = vpop.f32.mrf.mxu0
    %v9272 = vadd.f32 %v9259, %v9271
    %v9273 = vpop.f32.mrf.mxu0
    %9274 = vdwg.mxu0
    %9275 = vmatpush.bf16.msra.mxu0 %v5972
    %9276 = vmatpush.bf16.msra.mxu0 %v5940
    %9277 = vmatpush.bf16.msra.mxu0 %v5908
    %9278 = vmatpush.bf16.msra.mxu0 %v5876
    %9279 = vmatpush.bf16.msra.mxu0 %v5844
    %9280 = vmatpush.bf16.msra.mxu0 %v5812
    %9281 = vmatpush.bf16.msra.mxu0 %v5780
    %9282 = vmatpush.bf16.msra.mxu0 %v5748
    %9283 = vmatmul.bf16.gmra.mxu0 %v1547
    %v9284 = vpop.f32.mrf.mxu0
    %v9285 = vadd.f32 %v2612, %v9284
    %v9286 = vpop.f32.mrf.mxu0
    %9287 = vdwg.mxu0
    %9288 = vmatpush.bf16.msra.mxu0 %v6228
    %9289 = vmatpush.bf16.msra.mxu0 %v6196
    %9290 = vmatpush.bf16.msra.mxu0 %v6164
    %9291 = vmatpush.bf16.msra.mxu0 %v6132
    %9292 = vmatpush.bf16.msra.mxu0 %v6100
    %9293 = vmatpush.bf16.msra.mxu0 %v6068
    %9294 = vmatpush.bf16.msra.mxu0 %v6036
    %9295 = vmatpush.bf16.msra.mxu0 %v6004
    %9296 = vmatmul.bf16.gmra.mxu0 %v1548
    %v9297 = vpop.f32.mrf.mxu0
    %v9298 = vadd.f32 %v9285, %v9297
    %v9299 = vpop.f32.mrf.mxu0
    %9300 = vdwg.mxu0
    %9301 = vmatpush.bf16.msra.mxu0 %v6484
    %9302 = vmatpush.bf16.msra.mxu0 %v6452
    %9303 = vmatpush.bf16.msra.mxu0 %v6420
    %9304 = vmatpush.bf16.msra.mxu0 %v6388
    %9305 = vmatpush.bf16.msra.mxu0 %v6356
    %9306 = vmatpush.bf16.msra.mxu0 %v6324
    %9307 = vmatpush.bf16.msra.mxu0 %v6292
    %9308 = vmatpush.bf16.msra.mxu0 %v6260
    %9309 = vmatmul.bf16.gmra.mxu0 %v1549
    %v9310 = vpop.f32.mrf.mxu0
    %v9311 = vadd.f32 %v9298, %v9310
    %v9312 = vpop.f32.mrf.mxu0
    %9313 = vdwg.mxu0
    %9314 = vmatpush.bf16.msra.mxu0 %v6740
    %9315 = vmatpush.bf16.msra.mxu0 %v6708
    %9316 = vmatpush.bf16.msra.mxu0 %v6676
    %9317 = vmatpush.bf16.msra.mxu0 %v6644
    %9318 = vmatpush.bf16.msra.mxu0 %v6612
    %9319 = vmatpush.bf16.msra.mxu0 %v6580
    %9320 = vmatpush.bf16.msra.mxu0 %v6548
    %9321 = vmatpush.bf16.msra.mxu0 %v6516
    %9322 = vmatmul.bf16.gmra.mxu0 %v1550
    %v9323 = vpop.f32.mrf.mxu0
    %v9324 = vadd.f32 %v9311, %v9323
    %v9325 = vpop.f32.mrf.mxu0
    %9326 = vdwg.mxu0
    %9327 = vmatpush.bf16.msra.mxu0 %v5973
    %9328 = vmatpush.bf16.msra.mxu0 %v5941
    %9329 = vmatpush.bf16.msra.mxu0 %v5909
    %9330 = vmatpush.bf16.msra.mxu0 %v5877
    %9331 = vmatpush.bf16.msra.mxu0 %v5845
    %9332 = vmatpush.bf16.msra.mxu0 %v5813
    %9333 = vmatpush.bf16.msra.mxu0 %v5781
    %9334 = vmatpush.bf16.msra.mxu0 %v5749
    %9335 = vmatmul.bf16.gmra.mxu0 %v1547
    %v9336 = vpop.f32.mrf.mxu0
    %v9337 = vadd.f32 %v2613, %v9336
    %v9338 = vpop.f32.mrf.mxu0
    %9339 = vdwg.mxu0
    %9340 = vmatpush.bf16.msra.mxu0 %v6229
    %9341 = vmatpush.bf16.msra.mxu0 %v6197
    %9342 = vmatpush.bf16.msra.mxu0 %v6165
    %9343 = vmatpush.bf16.msra.mxu0 %v6133
    %9344 = vmatpush.bf16.msra.mxu0 %v6101
    %9345 = vmatpush.bf16.msra.mxu0 %v6069
    %9346 = vmatpush.bf16.msra.mxu0 %v6037
    %9347 = vmatpush.bf16.msra.mxu0 %v6005
    %9348 = vmatmul.bf16.gmra.mxu0 %v1548
    %v9349 = vpop.f32.mrf.mxu0
    %v9350 = vadd.f32 %v9337, %v9349
    %v9351 = vpop.f32.mrf.mxu0
    %9352 = vdwg.mxu0
    %9353 = vmatpush.bf16.msra.mxu0 %v6485
    %9354 = vmatpush.bf16.msra.mxu0 %v6453
    %9355 = vmatpush.bf16.msra.mxu0 %v6421
    %9356 = vmatpush.bf16.msra.mxu0 %v6389
    %9357 = vmatpush.bf16.msra.mxu0 %v6357
    %9358 = vmatpush.bf16.msra.mxu0 %v6325
    %9359 = vmatpush.bf16.msra.mxu0 %v6293
    %9360 = vmatpush.bf16.msra.mxu0 %v6261
    %9361 = vmatmul.bf16.gmra.mxu0 %v1549
    %v9362 = vpop.f32.mrf.mxu0
    %v9363 = vadd.f32 %v9350, %v9362
    %v9364 = vpop.f32.mrf.mxu0
    %9365 = vdwg.mxu0
    %9366 = vmatpush.bf16.msra.mxu0 %v6741
    %9367 = vmatpush.bf16.msra.mxu0 %v6709
    %9368 = vmatpush.bf16.msra.mxu0 %v6677
    %9369 = vmatpush.bf16.msra.mxu0 %v6645
    %9370 = vmatpush.bf16.msra.mxu0 %v6613
    %9371 = vmatpush.bf16.msra.mxu0 %v6581
    %9372 = vmatpush.bf16.msra.mxu0 %v6549
    %9373 = vmatpush.bf16.msra.mxu0 %v6517
    %9374 = vmatmul.bf16.gmra.mxu0 %v1550
    %v9375 = vpop.f32.mrf.mxu0
    %v9376 = vadd.f32 %v9363, %v9375
    %v9377 = vpop.f32.mrf.mxu0
    %9378 = vdwg.mxu0
    %9379 = vmatpush.bf16.msra.mxu0 %v5974
    %9380 = vmatpush.bf16.msra.mxu0 %v5942
    %9381 = vmatpush.bf16.msra.mxu0 %v5910
    %9382 = vmatpush.bf16.msra.mxu0 %v5878
    %9383 = vmatpush.bf16.msra.mxu0 %v5846
    %9384 = vmatpush.bf16.msra.mxu0 %v5814
    %9385 = vmatpush.bf16.msra.mxu0 %v5782
    %9386 = vmatpush.bf16.msra.mxu0 %v5750
    %9387 = vmatmul.bf16.gmra.mxu0 %v1547
    %v9388 = vpop.f32.mrf.mxu0
    %v9389 = vadd.f32 %v2614, %v9388
    %v9390 = vpop.f32.mrf.mxu0
    %9391 = vdwg.mxu0
    %9392 = vmatpush.bf16.msra.mxu0 %v6230
    %9393 = vmatpush.bf16.msra.mxu0 %v6198
    %9394 = vmatpush.bf16.msra.mxu0 %v6166
    %9395 = vmatpush.bf16.msra.mxu0 %v6134
    %9396 = vmatpush.bf16.msra.mxu0 %v6102
    %9397 = vmatpush.bf16.msra.mxu0 %v6070
    %9398 = vmatpush.bf16.msra.mxu0 %v6038
    %9399 = vmatpush.bf16.msra.mxu0 %v6006
    %9400 = vmatmul.bf16.gmra.mxu0 %v1548
    %v9401 = vpop.f32.mrf.mxu0
    %v9402 = vadd.f32 %v9389, %v9401
    %v9403 = vpop.f32.mrf.mxu0
    %9404 = vdwg.mxu0
    %9405 = vmatpush.bf16.msra.mxu0 %v6486
    %9406 = vmatpush.bf16.msra.mxu0 %v6454
    %9407 = vmatpush.bf16.msra.mxu0 %v6422
    %9408 = vmatpush.bf16.msra.mxu0 %v6390
    %9409 = vmatpush.bf16.msra.mxu0 %v6358
    %9410 = vmatpush.bf16.msra.mxu0 %v6326
    %9411 = vmatpush.bf16.msra.mxu0 %v6294
    %9412 = vmatpush.bf16.msra.mxu0 %v6262
    %9413 = vmatmul.bf16.gmra.mxu0 %v1549
    %v9414 = vpop.f32.mrf.mxu0
    %v9415 = vadd.f32 %v9402, %v9414
    %v9416 = vpop.f32.mrf.mxu0
    %9417 = vdwg.mxu0
    %9418 = vmatpush.bf16.msra.mxu0 %v6742
    %9419 = vmatpush.bf16.msra.mxu0 %v6710
    %9420 = vmatpush.bf16.msra.mxu0 %v6678
    %9421 = vmatpush.bf16.msra.mxu0 %v6646
    %9422 = vmatpush.bf16.msra.mxu0 %v6614
    %9423 = vmatpush.bf16.msra.mxu0 %v6582
    %9424 = vmatpush.bf16.msra.mxu0 %v6550
    %9425 = vmatpush.bf16.msra.mxu0 %v6518
    %9426 = vmatmul.bf16.gmra.mxu0 %v1550
    %v9427 = vpop.f32.mrf.mxu0
    %v9428 = vadd.f32 %v9415, %v9427
    %v9429 = vpop.f32.mrf.mxu0
    %9430 = vdwg.mxu0
    %v9431 = vtanh.pop %v7816
    %v9432 = vtanh.pop %v7868
    %v9433 = vtanh.pop %v7920
    %v9434 = vtanh.pop %v7972
    %v9435 = vtanh.pop %v8024
    %v9436 = vtanh.pop %v8076
    %v9437 = vtanh.pop %v8128
    %v9438 = vtanh.pop %v8180
    %v9439 = vtanh.pop %v8232
    %v9440 = vtanh.pop %v8284
    %v9441 = vtanh.pop %v8336
    %v9442 = vtanh.pop %v8388
    %v9443 = vtanh.pop %v8440
    %v9444 = vtanh.pop %v8492
    %v9445 = vtanh.pop %v8544
    %v9446 = vtanh.pop %v8596
    %v9447 = vtanh.pop %v8648
    %v9448 = vtanh.pop %v8700
    %v9449 = vtanh.pop %v8752
    %v9450 = vtanh.pop %v8804
    %v9451 = vtanh.pop %v8856
    %v9452 = vtanh.pop %v8908
    %v9453 = vtanh.pop %v8960
    %v9454 = vtanh.pop %v9012
    %v9455 = vtanh.pop %v9064
    %v9456 = vtanh.pop %v9116
    %v9457 = vtanh.pop %v9168
    %v9458 = vtanh.pop %v9220
    %v9459 = vtanh.pop %v9272
    %v9460 = vtanh.pop %v9324
    %v9461 = vtanh.pop %v9376
    %v9462 = vtanh.pop %v9428
    %v9463 = vpack.c.bf16 %v9432, %v9431
    %v9464 = vpack.c.bf16 %v9434, %v9433
    %v9465 = vpack.c.bf16 %v9436, %v9435
    %v9466 = vpack.c.bf16 %v9438, %v9437
    %v9467 = vpack.c.bf16 %v9440, %v9439
    %v9468 = vpack.c.bf16 %v9442, %v9441
    %v9469 = vpack.c.bf16 %v9444, %v9443
    %v9470 = vpack.c.bf16 %v9446, %v9445
    %v9471 = vpack.c.bf16 %v9448, %v9447
    %v9472 = vpack.c.bf16 %v9450, %v9449
    %v9473 = vpack.c.bf16 %v9452, %v9451
    %v9474 = vpack.c.bf16 %v9454, %v9453
    %v9475 = vpack.c.bf16 %v9456, %v9455
    %v9476 = vpack.c.bf16 %v9458, %v9457
    %v9477 = vpack.c.bf16 %v9460, %v9459
    %v9478 = vpack.c.bf16 %v9462, %v9461
    %v9495 = vrot.slane %v9463, 3
    %v9496 = vrot.slane %v9464, 6
    %v9497 = vrot.slane %v9464, 1
    %v9498 = vrot.slane %v9465, 4
    %v9499 = vrot.slane %v9465, 7
    %v9500 = vrot.slane %v9466, 2
    %v9501 = vrot.slane %v9466, 5
    %v9502 = vrot.slane %v9467, 3
    %v9503 = vrot.slane %v9468, 6
    %v9504 = vrot.slane %v9468, 1
    %v9505 = vrot.slane %v9469, 4
    %v9506 = vrot.slane %v9469, 7
    %v9507 = vrot.slane %v9470, 2
    %v9508 = vrot.slane %v9470, 5
    %v9509 = vrot.slane %v9471, 3
    %v9510 = vrot.slane %v9472, 6
    %v9511 = vrot.slane %v9472, 1
    %v9512 = vrot.slane %v9473, 4
    %v9513 = vrot.slane %v9473, 7
    %v9514 = vrot.slane %v9474, 2
    %v9515 = vrot.slane %v9474, 5
    %v9516 = vrot.slane %v9475, 3
    %v9517 = vrot.slane %v9476, 6
    %v9518 = vrot.slane %v9476, 1
    %v9519 = vrot.slane %v9477, 4
    %v9520 = vrot.slane %v9477, 7
    %v9521 = vrot.slane %v9478, 2
    %v9522 = vrot.slane %v9478, 5
    %vm9523 = vcmask 1040384
    %v9526 = vsel %vm9523, %v9463, %v9495
    %vm9527 = vcmask 1042434
    %v9530 = vsel %vm9527, %v9496, %v9497
    %vm9531 = vcmask 1041408
    %v9532 = vsel %vm9531, %v9526, %v9530
    %vm9533 = vcmask 1044484
    %v9536 = vsel %vm9533, %v9498, %v9499
    %vm9537 = vcmask 1046534
    %v9540 = vsel %vm9537, %v9500, %v9501
    %vm9541 = vcmask 1045508
    %v9542 = vsel %vm9541, %v9536, %v9540
    %vm9543 = vcmask 1043456
    %v9544 = vsel %vm9543, %v9532, %v9542
    %v9547 = vsel %vm9523, %v9467, %v9502
    %v9550 = vsel %vm9527, %v9503, %v9504
    %v9551 = vsel %vm9531, %v9547, %v9550
    %v9554 = vsel %vm9533, %v9505, %v9506
    %v9557 = vsel %vm9537, %v9507, %v9508
    %v9558 = vsel %vm9541, %v9554, %v9557
    %v9559 = vsel %vm9543, %v9551, %v9558
    %v9562 = vsel %vm9523, %v9471, %v9509
    %v9565 = vsel %vm9527, %v9510, %v9511
    %v9566 = vsel %vm9531, %v9562, %v9565
    %v9569 = vsel %vm9533, %v9512, %v9513
    %v9572 = vsel %vm9537, %v9514, %v9515
    %v9573 = vsel %vm9541, %v9569, %v9572
    %v9574 = vsel %vm9543, %v9566, %v9573
    %v9577 = vsel %vm9523, %v9475, %v9516
    %v9580 = vsel %vm9527, %v9517, %v9518
    %v9581 = vsel %vm9531, %v9577, %v9580
    %v9584 = vsel %vm9533, %v9519, %v9520
    %v9587 = vsel %vm9537, %v9521, %v9522
    %v9588 = vsel %vm9541, %v9584, %v9587
    %v9589 = vsel %vm9543, %v9581, %v9588
    %9594 = vst [vmem:[#allocation17] sm:$0xff] %v9544
    %9595 = vst [vmem:[#allocation17 + $0x8] sm:$0xff] %v9559
    %9596 = vst [vmem:[#allocation17 + $0x10] sm:$0xff] %v9574
    %9597 = vst [vmem:[#allocation17 + $0x18] sm:$0xff] %v9589
    // Predicated region
    $region74: #{tpu_custom_call.1} parent=1 // pred_check
      _
    $region75: #{tpu_custom_call.1} parent=1 // pred_check_branch
      %9599 = sbr.rel (0) target = $region77
    $region76: #{tpu_custom_call.1} parent=1 // pred_region
      %9601 = vsyncadd [#allocation4], 0
      %s9603 = sshll.u32 [#allocation17], 4
      %s9604 = int_to_ptr.vmem [resolvable:$true] %s9603
      %s9605 = sshll.u32 %s9, 4
      %s9606 = int_to_ptr.hbm [resolvable:$true] %s9605
      %9608 = dma.vmem_to_hbm [thread:$0]  %s9604, 512, %s9606, [#allocation4]
    $region77: #{tpu_custom_call.1} parent=1 // pred_fallthru
      _
    // Predicated region
    $region78: #{tpu_custom_call.1} parent=1 // pred_check
      _
    $region79: #{tpu_custom_call.1} parent=1 // pred_check_branch
      %9610 = sbr.rel (0) target = $region81
    $region80: #{tpu_custom_call.1} parent=1 // pred_region
      %9612 = dma.done [#allocation4], 512
    $region81: #{tpu_custom_call.1} parent=1 // pred_fallthru
      _
    %9613 = vsyncpa [#allocation3], 1
    %9614 = vsyncpa [#allocation6], 1
    %9615 = vsyncpa [#allocation9], 1
    %9616 = vsyncpa [#allocation12], 1
    %9617 = vsyncpa [#allocation15], 1
    %9618 = vsyncpa [#allocation4], 1

</llo_original>
